<compile_context>
chip_gen: v6e
topology: v6e:2x2x1
jax: 0.10.0
libtpu: 0.0.40
codegen_flags: <defaults>
</compile_context>

<pallas_src>
import functools

import jax
import jax.numpy as jnp
from jax.experimental import pallas as pl
from jax.experimental.pallas import tpu as pltpu


def _fused_net_kernel(alpha_ref, x_ref,
                      w1_ref, b1_ref, w2_ref, b2_ref, w3_ref, b3_ref,
                      o_ref,
                      slab1_ref, slab2_ref, act_ref,
                      *, K, P, N, H, W, CMID):
    """Whole 3-layer conv+PReLU net, whole batch, single invocation.

    alpha_ref : (3,) f32 SMEM           -- PReLU scalars.
    x_ref     : (N, H, W, 1) f32 VMEM   -- input images (NHWC).
    w*_ref    : (K*K*cin, cout) f32     -- conv weights as matmul tiles.
    b*_ref    : (1, cout) f32           -- conv biases.
    o_ref     : (N*H*W, 1) f32          -- output pixels.
    slab1_ref : (N, H, W, K*K*1)        -- im2col slab, layer 1.
    slab2_ref : (N, H, W, K*K*CMID)     -- im2col slab, layers 2 & 3 (shared).
    act_ref   : (N, H, W, CMID)         -- inter-layer activations (unpadded).
    """
    NHW = N * H * W

    # Zero the im2col slabs exactly once.  Only the border-tap regions (the
    # conv zero-padding) rely on these zeros and they are never overwritten,
    # so layers 2 and 3 can share slab2 without re-clearing.
    slab1_ref[...] = jnp.zeros(slab1_ref.shape, slab1_ref.dtype)
    slab2_ref[...] = jnp.zeros(slab2_ref.shape, slab2_ref.dtype)

    def conv_prelu(src_ref, slab_ref, w_ref, b_ref, alpha):
        """One conv+PReLU layer.  src_ref: (N,H,W,cin).  Returns (NHW,cout)."""
        cin = src_ref.shape[-1]
        # Scatter the K*K shifted windows into the im2col slab: per tap only
        # the in-bounds sub-rectangle is copied (ref->ref, small XLU rotate
        # for the unaligned column offsets); out-of-bounds stays zero.
        for ky in range(K):
            dy = ky - P
            y0, y1 = max(0, -dy), H - max(0, dy)
            for kx in range(K):
                dx = kx - P
                x0, x1 = max(0, -dx), W - max(0, dx)
                t = ky * K + kx
                slab_ref[:, y0:y1, x0:x1, t * cin:(t + 1) * cin] = (
                    src_ref[:, y0 + dy:y1 + dy, x0 + dx:x1 + dx, :])
        # One MXU matmul per layer: contraction = K*K*cin (9 or 72).
        patches = slab_ref[...].reshape(NHW, K * K * cin)
        y = jnp.dot(patches, w_ref[...], preferred_element_type=jnp.float32)
        y = y + b_ref[...]                         # (1, cout) broadcast (VPU)
        return jnp.where(y > 0.0, y, alpha * y)    # PReLU, scalar alpha

    # Layer 1: 1 -> CMID
    a1 = conv_prelu(x_ref, slab1_ref, w1_ref, b1_ref, alpha_ref[0])
    act_ref[...] = a1.reshape(N, H, W, CMID)
    # Layer 2: CMID -> CMID  (the dominant layer -> single (NHW,72)x(72,8) dot)
    a2 = conv_prelu(act_ref, slab2_ref, w2_ref, b2_ref, alpha_ref[1])
    act_ref[...] = a2.reshape(N, H, W, CMID)
    # Layer 3: CMID -> 1  (reuses slab2; same tap geometry, borders still zero)
    a3 = conv_prelu(act_ref, slab2_ref, w3_ref, b3_ref, alpha_ref[2])
    o_ref[...] = a3


@functools.partial(jax.jit, static_argnums=(2,))
def convolution_4_forward(x_nchw, params, kernel_size):
    """Matches Convolution_4.forward: three (conv + PReLU) layers, fused."""
    N, Cin, H, W = x_nchw.shape
    K = int(kernel_size)
    P = K // 2
    assert Cin == 1, "module takes 1-channel images"
    assert K % 2 == 1, "only odd kernel_size supported (see TODO above)"
    assert len(params) == 3

    (w1, b1, a1), (w2, b2, a2), (w3, b3, a3) = params
    cmid = int(w1.shape[3])
    f32 = jnp.float32

    # Weights as lane-aligned VMEM matmul tiles (row index = (ky*K+kx)*cin+ci,
    # matching the im2col column order built in the kernel).
    w1m = jnp.reshape(w1, (K * K * 1, cmid)).astype(f32)
    w2m = jnp.reshape(w2, (K * K * cmid, cmid)).astype(f32)
    w3m = jnp.reshape(w3, (K * K * cmid, 1)).astype(f32)
    b1v = jnp.reshape(b1, (1, cmid)).astype(f32)
    b2v = jnp.reshape(b2, (1, cmid)).astype(f32)
    b3v = jnp.reshape(b3, (1, 1)).astype(f32)
    alphas = jnp.stack([jnp.asarray(a1, f32).reshape(()),
                        jnp.asarray(a2, f32).reshape(()),
                        jnp.asarray(a3, f32).reshape(())])

    x_nhwc = jnp.transpose(x_nchw, (0, 2, 3, 1)).astype(f32)    # (N, H, W, 1)

    kern = functools.partial(_fused_net_kernel,
                             K=K, P=P, N=N, H=H, W=W, CMID=cmid)
    vmem = pl.BlockSpec(memory_space=pltpu.MemorySpace.VMEM)
    smem = pl.BlockSpec(memory_space=pltpu.MemorySpace.SMEM)

    out = pl.pallas_call(
        kern,
        out_shape=jax.ShapeDtypeStruct((N * H * W, 1), f32),
        # Single invocation (no grid): whole batch in one fused step.
        in_specs=[smem, vmem, vmem, vmem, vmem, vmem, vmem, vmem],
        out_specs=vmem,
        scratch_shapes=[
            pltpu.VMEM((N, H, W, K * K * 1), f32),      # im2col slab, layer 1
            pltpu.VMEM((N, H, W, K * K * cmid), f32),   # im2col slab, layers 2/3
            pltpu.VMEM((N, H, W, cmid), f32),           # inter-layer activations
        ],
    )(alphas, x_nhwc, w1m, b1v, w2m, b2v, w3m, b3v)

    return out.reshape(N, H, W)[:, None, :, :]            # NCHW (N, 1, H, W)


def init_params(key, kernel_size, n_feature=8):
    """Deterministic parameter init (PyTorch-like uniform bounds), HWIO."""
    params = []
    chans = [(1, n_feature), (n_feature, n_feature), (n_feature, 1)]
    for (cin, cout) in chans:
        key, kw, kb = jax.random.split(key, 3)
        fan_in = cin * kernel_size * kernel_size
        bound = 1.0 / jnp.sqrt(jnp.float32(fan_in))
        w = jax.random.uniform(kw, (kernel_size, kernel_size, cin, cout),
                               jnp.float32, -bound, bound)       # HWIO
        b = jax.random.uniform(kb, (cout,), jnp.float32, -bound, bound)
        a = jnp.float32(0.25)                                    # PReLU default
        params.append((w, b, a))
    return params


def _reference_forward(x_nchw, params, kernel_size):
    """Pure-JAX reference (lax conv) for correctness checking."""
    x = jnp.transpose(x_nchw, (0, 2, 3, 1))
    p = kernel_size // 2
    for (w, b, a) in params:
        y = jax.lax.conv_general_dilated(
            x, w, window_strides=(1, 1), padding=[(p, p), (p, p)],
            dimension_numbers=("NHWC", "HWIO", "NHWC"),
            precision=jax.lax.Precision.HIGHEST)
        y = y + b[None, None, None, :]
        x = jnp.where(y > 0, y, a * y)
    return jnp.transpose(x, (0, 3, 1, 2))


if __name__ == "__main__":
    kernel_size = 3
    key = jax.random.PRNGKey(0)
    key, kx = jax.random.split(key)

    # Module takes 1-channel images: NCHW = (2, 1, 16, 16)
    x = jax.random.normal(kx, (2, 1, 16, 16), jnp.float32)
    params = init_params(key, kernel_size)

    out = convolution_4_forward(x, params, kernel_size)
    out = jax.block_until_ready(out)

    ref = _reference_forward(x, params, kernel_size)
    assert out.shape == (2, 1, 16, 16)
    # Tolerance covers MXU bf16-pass vs HIGHEST-precision reference; any
    # indexing/weight-layout bug would show up as O(0.1-1) errors.
    assert jnp.allclose(out, ref, atol=1e-2, rtol=1e-2), "mismatch vs reference"

    print("KERNEL_OK")
</pallas_src>

<mosaic_0001>
module attributes {stable_mosaic.version = 11 : i64} {
  func.func @_fused_net_kernel(%arg0: memref<3xf32, #tpu.memory_space<smem>>, %arg1: memref<2x16x16x1xf32, #tpu.memory_space<vmem>>, %arg2: memref<9x8xf32, #tpu.memory_space<vmem>>, %arg3: memref<1x8xf32, #tpu.memory_space<vmem>>, %arg4: memref<72x8xf32, #tpu.memory_space<vmem>>, %arg5: memref<1x8xf32, #tpu.memory_space<vmem>>, %arg6: memref<72x1xf32, #tpu.memory_space<vmem>>, %arg7: memref<1x1xf32, #tpu.memory_space<vmem>>, %arg8: memref<512x1xf32, #tpu.memory_space<vmem>>, %arg9: memref<2x16x16x9xf32, #tpu.memory_space<vmem>>, %arg10: memref<2x16x16x72xf32, #tpu.memory_space<vmem>>, %arg11: memref<2x16x16x8xf32, #tpu.memory_space<vmem>>) attributes {dimension_semantics = [], scalar_prefetch = 0 : i64, scratch_operands = 3 : i64, tpu.core_type = #tpu.core_type<tc>} {
    %cst = arith.constant 0.000000e+00 : f32
    %0 = vector.broadcast %cst : f32 to vector<2x16x16x9xf32>
    %c0 = arith.constant 0 : index
    %c0_0 = arith.constant 0 : index
    %c0_1 = arith.constant 0 : index
    %c0_2 = arith.constant 0 : index
    %1 = vector.load %arg9[%c0, %c0_0, %c0_1, %c0_2] : memref<2x16x16x9xf32, #tpu.memory_space<vmem>>, vector<2x16x16x9xf32>
    tpu.vector_store %arg9[%c0, %c0_0, %c0_1, %c0_2], %0 {strides = array<i32>} : memref<2x16x16x9xf32, #tpu.memory_space<vmem>>, vector<2x16x16x9xf32>,
    %cst_3 = arith.constant 0.000000e+00 : f32
    %2 = vector.broadcast %cst_3 : f32 to vector<2x16x16x72xf32>
    %c0_4 = arith.constant 0 : index
    %c0_5 = arith.constant 0 : index
    %c0_6 = arith.constant 0 : index
    %c0_7 = arith.constant 0 : index
    %3 = vector.load %arg10[%c0_4, %c0_5, %c0_6, %c0_7] : memref<2x16x16x72xf32, #tpu.memory_space<vmem>>, vector<2x16x16x72xf32>
    tpu.vector_store %arg10[%c0_4, %c0_5, %c0_6, %c0_7], %2 {strides = array<i32>} : memref<2x16x16x72xf32, #tpu.memory_space<vmem>>, vector<2x16x16x72xf32>,
    %c0_8 = arith.constant 0 : index
    %4 = memref.load %arg0[%c0_8] : memref<3xf32, #tpu.memory_space<smem>>
    %c0_9 = arith.constant 0 : index
    %c0_10 = arith.constant 0 : index
    %c0_11 = arith.constant 0 : index
    %c0_12 = arith.constant 0 : index
    %5 = vector.load %arg1[%c0_9, %c0_10, %c0_11, %c0_12] : memref<2x16x16x1xf32, #tpu.memory_space<vmem>>, vector<2x15x15x1xf32>
    %c0_13 = arith.constant 0 : index
    %c1 = arith.constant 1 : index
    %c1_14 = arith.constant 1 : index
    %c0_15 = arith.constant 0 : index
    %6 = vector.load %arg9[%c0_13, %c1, %c1_14, %c0_15] : memref<2x16x16x9xf32, #tpu.memory_space<vmem>>, vector<2x15x15x1xf32>
    tpu.vector_store %arg9[%c0_13, %c1, %c1_14, %c0_15], %5 {strides = array<i32>} : memref<2x16x16x9xf32, #tpu.memory_space<vmem>>, vector<2x15x15x1xf32>,
    %c0_16 = arith.constant 0 : index
    %c0_17 = arith.constant 0 : index
    %c0_18 = arith.constant 0 : index
    %c0_19 = arith.constant 0 : index
    %7 = vector.load %arg1[%c0_16, %c0_17, %c0_18, %c0_19] : memref<2x16x16x1xf32, #tpu.memory_space<vmem>>, vector<2x15x16x1xf32>
    %c0_20 = arith.constant 0 : index
    %c1_21 = arith.constant 1 : index
    %c0_22 = arith.constant 0 : index
    %c1_23 = arith.constant 1 : index
    %8 = vector.load %arg9[%c0_20, %c1_21, %c0_22, %c1_23] : memref<2x16x16x9xf32, #tpu.memory_space<vmem>>, vector<2x15x16x1xf32>
    tpu.vector_store %arg9[%c0_20, %c1_21, %c0_22, %c1_23], %7 {strides = array<i32>} : memref<2x16x16x9xf32, #tpu.memory_space<vmem>>, vector<2x15x16x1xf32>,
    %c0_24 = arith.constant 0 : index
    %c0_25 = arith.constant 0 : index
    %c1_26 = arith.constant 1 : index
    %c0_27 = arith.constant 0 : index
    %9 = vector.load %arg1[%c0_24, %c0_25, %c1_26, %c0_27] : memref<2x16x16x1xf32, #tpu.memory_space<vmem>>, vector<2x15x15x1xf32>
    %c0_28 = arith.constant 0 : index
    %c1_29 = arith.constant 1 : index
    %c0_30 = arith.constant 0 : index
    %c2 = arith.constant 2 : index
    %10 = vector.load %arg9[%c0_28, %c1_29, %c0_30, %c2] : memref<2x16x16x9xf32, #tpu.memory_space<vmem>>, vector<2x15x15x1xf32>
    tpu.vector_store %arg9[%c0_28, %c1_29, %c0_30, %c2], %9 {strides = array<i32>} : memref<2x16x16x9xf32, #tpu.memory_space<vmem>>, vector<2x15x15x1xf32>,
    %c0_31 = arith.constant 0 : index
    %c0_32 = arith.constant 0 : index
    %c0_33 = arith.constant 0 : index
    %c0_34 = arith.constant 0 : index
    %11 = vector.load %arg1[%c0_31, %c0_32, %c0_33, %c0_34] : memref<2x16x16x1xf32, #tpu.memory_space<vmem>>, vector<2x16x15x1xf32>
    %c0_35 = arith.constant 0 : index
    %c0_36 = arith.constant 0 : index
    %c1_37 = arith.constant 1 : index
    %c3 = arith.constant 3 : index
    %12 = vector.load %arg9[%c0_35, %c0_36, %c1_37, %c3] : memref<2x16x16x9xf32, #tpu.memory_space<vmem>>, vector<2x16x15x1xf32>
    tpu.vector_store %arg9[%c0_35, %c0_36, %c1_37, %c3], %11 {strides = array<i32>} : memref<2x16x16x9xf32, #tpu.memory_space<vmem>>, vector<2x16x15x1xf32>,
    %c0_38 = arith.constant 0 : index
    %c0_39 = arith.constant 0 : index
    %c0_40 = arith.constant 0 : index
    %c0_41 = arith.constant 0 : index
    %13 = vector.load %arg1[%c0_38, %c0_39, %c0_40, %c0_41] : memref<2x16x16x1xf32, #tpu.memory_space<vmem>>, vector<2x16x16x1xf32>
    %c0_42 = arith.constant 0 : index
    %c0_43 = arith.constant 0 : index
    %c0_44 = arith.constant 0 : index
    %c4 = arith.constant 4 : index
    %14 = vector.load %arg9[%c0_42, %c0_43, %c0_44, %c4] : memref<2x16x16x9xf32, #tpu.memory_space<vmem>>, vector<2x16x16x1xf32>
    tpu.vector_store %arg9[%c0_42, %c0_43, %c0_44, %c4], %13 {strides = array<i32>} : memref<2x16x16x9xf32, #tpu.memory_space<vmem>>, vector<2x16x16x1xf32>,
    %c0_45 = arith.constant 0 : index
    %c0_46 = arith.constant 0 : index
    %c1_47 = arith.constant 1 : index
    %c0_48 = arith.constant 0 : index
    %15 = vector.load %arg1[%c0_45, %c0_46, %c1_47, %c0_48] : memref<2x16x16x1xf32, #tpu.memory_space<vmem>>, vector<2x16x15x1xf32>
    %c0_49 = arith.constant 0 : index
    %c0_50 = arith.constant 0 : index
    %c0_51 = arith.constant 0 : index
    %c5 = arith.constant 5 : index
    %16 = vector.load %arg9[%c0_49, %c0_50, %c0_51, %c5] : memref<2x16x16x9xf32, #tpu.memory_space<vmem>>, vector<2x16x15x1xf32>
    tpu.vector_store %arg9[%c0_49, %c0_50, %c0_51, %c5], %15 {strides = array<i32>} : memref<2x16x16x9xf32, #tpu.memory_space<vmem>>, vector<2x16x15x1xf32>,
    %c0_52 = arith.constant 0 : index
    %c1_53 = arith.constant 1 : index
    %c0_54 = arith.constant 0 : index
    %c0_55 = arith.constant 0 : index
    %17 = vector.load %arg1[%c0_52, %c1_53, %c0_54, %c0_55] : memref<2x16x16x1xf32, #tpu.memory_space<vmem>>, vector<2x15x15x1xf32>
    %c0_56 = arith.constant 0 : index
    %c0_57 = arith.constant 0 : index
    %c1_58 = arith.constant 1 : index
    %c6 = arith.constant 6 : index
    %18 = vector.load %arg9[%c0_56, %c0_57, %c1_58, %c6] : memref<2x16x16x9xf32, #tpu.memory_space<vmem>>, vector<2x15x15x1xf32>
    tpu.vector_store %arg9[%c0_56, %c0_57, %c1_58, %c6], %17 {strides = array<i32>} : memref<2x16x16x9xf32, #tpu.memory_space<vmem>>, vector<2x15x15x1xf32>,
    %c0_59 = arith.constant 0 : index
    %c1_60 = arith.constant 1 : index
    %c0_61 = arith.constant 0 : index
    %c0_62 = arith.constant 0 : index
    %19 = vector.load %arg1[%c0_59, %c1_60, %c0_61, %c0_62] : memref<2x16x16x1xf32, #tpu.memory_space<vmem>>, vector<2x15x16x1xf32>
    %c0_63 = arith.constant 0 : index
    %c0_64 = arith.constant 0 : index
    %c0_65 = arith.constant 0 : index
    %c7 = arith.constant 7 : index
    %20 = vector.load %arg9[%c0_63, %c0_64, %c0_65, %c7] : memref<2x16x16x9xf32, #tpu.memory_space<vmem>>, vector<2x15x16x1xf32>
    tpu.vector_store %arg9[%c0_63, %c0_64, %c0_65, %c7], %19 {strides = array<i32>} : memref<2x16x16x9xf32, #tpu.memory_space<vmem>>, vector<2x15x16x1xf32>,
    %c0_66 = arith.constant 0 : index
    %c1_67 = arith.constant 1 : index
    %c1_68 = arith.constant 1 : index
    %c0_69 = arith.constant 0 : index
    %21 = vector.load %arg1[%c0_66, %c1_67, %c1_68, %c0_69] : memref<2x16x16x1xf32, #tpu.memory_space<vmem>>, vector<2x15x15x1xf32>
    %c0_70 = arith.constant 0 : index
    %c0_71 = arith.constant 0 : index
    %c0_72 = arith.constant 0 : index
    %c8 = arith.constant 8 : index
    %22 = vector.load %arg9[%c0_70, %c0_71, %c0_72, %c8] : memref<2x16x16x9xf32, #tpu.memory_space<vmem>>, vector<2x15x15x1xf32>
    tpu.vector_store %arg9[%c0_70, %c0_71, %c0_72, %c8], %21 {strides = array<i32>} : memref<2x16x16x9xf32, #tpu.memory_space<vmem>>, vector<2x15x15x1xf32>,
    %c0_73 = arith.constant 0 : index
    %c0_74 = arith.constant 0 : index
    %c0_75 = arith.constant 0 : index
    %c0_76 = arith.constant 0 : index
    %23 = vector.load %arg9[%c0_73, %c0_74, %c0_75, %c0_76] : memref<2x16x16x9xf32, #tpu.memory_space<vmem>>, vector<2x16x16x9xf32>
    %24 = vector.shape_cast %23 : vector<2x16x16x9xf32> to vector<512x9xf32>
    %c0_77 = arith.constant 0 : index
    %c0_78 = arith.constant 0 : index
    %25 = vector.load %arg2[%c0_77, %c0_78] : memref<9x8xf32, #tpu.memory_space<vmem>>, vector<9x8xf32>
    %cst_79 = arith.constant dense<0.000000e+00> : vector<512x8xf32>
    %26 = tpu.matmul %24, %25, %cst_79 {dimension_numbers = #tpu.dot_dimension_numbers<[1], [0], [0], [1], [0, 0, 1, 1], [], []>} : vector<512x9xf32>, vector<9x8xf32>, vector<512x8xf32> -> vector<512x8xf32>
    %c0_80 = arith.constant 0 : index
    %c0_81 = arith.constant 0 : index
    %27 = vector.load %arg3[%c0_80, %c0_81] : memref<1x8xf32, #tpu.memory_space<vmem>>, vector<1x8xf32>
    %28 = vector.broadcast %27 : vector<1x8xf32> to vector<512x8xf32>
    %29 = arith.addf %26, %28 : vector<512x8xf32>
    %cst_82 = arith.constant 0.000000e+00 : f32
    %30 = vector.broadcast %cst_82 : f32 to vector<512x8xf32>
    %31 = arith.cmpf ogt, %29, %30 : vector<512x8xf32>
    %32 = vector.broadcast %4 : f32 to vector<512x8xf32>
    %33 = arith.mulf %32, %29 : vector<512x8xf32>
    %34 = arith.select %31, %29, %33 : vector<512x8xi1>, vector<512x8xf32>
    %35 = vector.shape_cast %34 : vector<512x8xf32> to vector<2x16x16x8xf32>
    %c0_83 = arith.constant 0 : index
    %c0_84 = arith.constant 0 : index
    %c0_85 = arith.constant 0 : index
    %c0_86 = arith.constant 0 : index
    %36 = vector.load %arg11[%c0_83, %c0_84, %c0_85, %c0_86] : memref<2x16x16x8xf32, #tpu.memory_space<vmem>>, vector<2x16x16x8xf32>
    tpu.vector_store %arg11[%c0_83, %c0_84, %c0_85, %c0_86], %35 {strides = array<i32>} : memref<2x16x16x8xf32, #tpu.memory_space<vmem>>, vector<2x16x16x8xf32>,
    %c1_87 = arith.constant 1 : index
    %37 = memref.load %arg0[%c1_87] : memref<3xf32, #tpu.memory_space<smem>>
    %c0_88 = arith.constant 0 : index
    %c0_89 = arith.constant 0 : index
    %c0_90 = arith.constant 0 : index
    %c0_91 = arith.constant 0 : index
    %38 = vector.load %arg11[%c0_88, %c0_89, %c0_90, %c0_91] : memref<2x16x16x8xf32, #tpu.memory_space<vmem>>, vector<2x15x15x8xf32>
    %c0_92 = arith.constant 0 : index
    %c1_93 = arith.constant 1 : index
    %c1_94 = arith.constant 1 : index
    %c0_95 = arith.constant 0 : index
    %39 = vector.load %arg10[%c0_92, %c1_93, %c1_94, %c0_95] : memref<2x16x16x72xf32, #tpu.memory_space<vmem>>, vector<2x15x15x8xf32>
    tpu.vector_store %arg10[%c0_92, %c1_93, %c1_94, %c0_95], %38 {strides = array<i32>} : memref<2x16x16x72xf32, #tpu.memory_space<vmem>>, vector<2x15x15x8xf32>,
    %c0_96 = arith.constant 0 : index
    %c0_97 = arith.constant 0 : index
    %c0_98 = arith.constant 0 : index
    %c0_99 = arith.constant 0 : index
    %40 = vector.load %arg11[%c0_96, %c0_97, %c0_98, %c0_99] : memref<2x16x16x8xf32, #tpu.memory_space<vmem>>, vector<2x15x16x8xf32>
    %c0_100 = arith.constant 0 : index
    %c1_101 = arith.constant 1 : index
    %c0_102 = arith.constant 0 : index
    %c8_103 = arith.constant 8 : index
    %41 = vector.load %arg10[%c0_100, %c1_101, %c0_102, %c8_103] : memref<2x16x16x72xf32, #tpu.memory_space<vmem>>, vector<2x15x16x8xf32>
    tpu.vector_store %arg10[%c0_100, %c1_101, %c0_102, %c8_103], %40 {strides = array<i32>} : memref<2x16x16x72xf32, #tpu.memory_space<vmem>>, vector<2x15x16x8xf32>,
    %c0_104 = arith.constant 0 : index
    %c0_105 = arith.constant 0 : index
    %c1_106 = arith.constant 1 : index
    %c0_107 = arith.constant 0 : index
    %42 = vector.load %arg11[%c0_104, %c0_105, %c1_106, %c0_107] : memref<2x16x16x8xf32, #tpu.memory_space<vmem>>, vector<2x15x15x8xf32>
    %c0_108 = arith.constant 0 : index
    %c1_109 = arith.constant 1 : index
    %c0_110 = arith.constant 0 : index
    %c16 = arith.constant 16 : index
    %43 = vector.load %arg10[%c0_108, %c1_109, %c0_110, %c16] : memref<2x16x16x72xf32, #tpu.memory_space<vmem>>, vector<2x15x15x8xf32>
    tpu.vector_store %arg10[%c0_108, %c1_109, %c0_110, %c16], %42 {strides = array<i32>} : memref<2x16x16x72xf32, #tpu.memory_space<vmem>>, vector<2x15x15x8xf32>,
    %c0_111 = arith.constant 0 : index
    %c0_112 = arith.constant 0 : index
    %c0_113 = arith.constant 0 : index
    %c0_114 = arith.constant 0 : index
    %44 = vector.load %arg11[%c0_111, %c0_112, %c0_113, %c0_114] : memref<2x16x16x8xf32, #tpu.memory_space<vmem>>, vector<2x16x15x8xf32>
    %c0_115 = arith.constant 0 : index
    %c0_116 = arith.constant 0 : index
    %c1_117 = arith.constant 1 : index
    %c24 = arith.constant 24 : index
    %45 = vector.load %arg10[%c0_115, %c0_116, %c1_117, %c24] : memref<2x16x16x72xf32, #tpu.memory_space<vmem>>, vector<2x16x15x8xf32>
    tpu.vector_store %arg10[%c0_115, %c0_116, %c1_117, %c24], %44 {strides = array<i32>} : memref<2x16x16x72xf32, #tpu.memory_space<vmem>>, vector<2x16x15x8xf32>,
    %c0_118 = arith.constant 0 : index
    %c0_119 = arith.constant 0 : index
    %c0_120 = arith.constant 0 : index
    %c0_121 = arith.constant 0 : index
    %46 = vector.load %arg11[%c0_118, %c0_119, %c0_120, %c0_121] : memref<2x16x16x8xf32, #tpu.memory_space<vmem>>, vector<2x16x16x8xf32>
    %c0_122 = arith.constant 0 : index
    %c0_123 = arith.constant 0 : index
    %c0_124 = arith.constant 0 : index
    %c32 = arith.constant 32 : index
    %47 = vector.load %arg10[%c0_122, %c0_123, %c0_124, %c32] : memref<2x16x16x72xf32, #tpu.memory_space<vmem>>, vector<2x16x16x8xf32>
    tpu.vector_store %arg10[%c0_122, %c0_123, %c0_124, %c32], %46 {strides = array<i32>} : memref<2x16x16x72xf32, #tpu.memory_space<vmem>>, vector<2x16x16x8xf32>,
    %c0_125 = arith.constant 0 : index
    %c0_126 = arith.constant 0 : index
    %c1_127 = arith.constant 1 : index
    %c0_128 = arith.constant 0 : index
    %48 = vector.load %arg11[%c0_125, %c0_126, %c1_127, %c0_128] : memref<2x16x16x8xf32, #tpu.memory_space<vmem>>, vector<2x16x15x8xf32>
    %c0_129 = arith.constant 0 : index
    %c0_130 = arith.constant 0 : index
    %c0_131 = arith.constant 0 : index
    %c40 = arith.constant 40 : index
    %49 = vector.load %arg10[%c0_129, %c0_130, %c0_131, %c40] : memref<2x16x16x72xf32, #tpu.memory_space<vmem>>, vector<2x16x15x8xf32>
    tpu.vector_store %arg10[%c0_129, %c0_130, %c0_131, %c40], %48 {strides = array<i32>} : memref<2x16x16x72xf32, #tpu.memory_space<vmem>>, vector<2x16x15x8xf32>,
    %c0_132 = arith.constant 0 : index
    %c1_133 = arith.constant 1 : index
    %c0_134 = arith.constant 0 : index
    %c0_135 = arith.constant 0 : index
    %50 = vector.load %arg11[%c0_132, %c1_133, %c0_134, %c0_135] : memref<2x16x16x8xf32, #tpu.memory_space<vmem>>, vector<2x15x15x8xf32>
    %c0_136 = arith.constant 0 : index
    %c0_137 = arith.constant 0 : index
    %c1_138 = arith.constant 1 : index
    %c48 = arith.constant 48 : index
    %51 = vector.load %arg10[%c0_136, %c0_137, %c1_138, %c48] : memref<2x16x16x72xf32, #tpu.memory_space<vmem>>, vector<2x15x15x8xf32>
    tpu.vector_store %arg10[%c0_136, %c0_137, %c1_138, %c48], %50 {strides = array<i32>} : memref<2x16x16x72xf32, #tpu.memory_space<vmem>>, vector<2x15x15x8xf32>,
    %c0_139 = arith.constant 0 : index
    %c1_140 = arith.constant 1 : index
    %c0_141 = arith.constant 0 : index
    %c0_142 = arith.constant 0 : index
    %52 = vector.load %arg11[%c0_139, %c1_140, %c0_141, %c0_142] : memref<2x16x16x8xf32, #tpu.memory_space<vmem>>, vector<2x15x16x8xf32>
    %c0_143 = arith.constant 0 : index
    %c0_144 = arith.constant 0 : index
    %c0_145 = arith.constant 0 : index
    %c56 = arith.constant 56 : index
    %53 = vector.load %arg10[%c0_143, %c0_144, %c0_145, %c56] : memref<2x16x16x72xf32, #tpu.memory_space<vmem>>, vector<2x15x16x8xf32>
    tpu.vector_store %arg10[%c0_143, %c0_144, %c0_145, %c56], %52 {strides = array<i32>} : memref<2x16x16x72xf32, #tpu.memory_space<vmem>>, vector<2x15x16x8xf32>,
    %c0_146 = arith.constant 0 : index
    %c1_147 = arith.constant 1 : index
    %c1_148 = arith.constant 1 : index
    %c0_149 = arith.constant 0 : index
    %54 = vector.load %arg11[%c0_146, %c1_147, %c1_148, %c0_149] : memref<2x16x16x8xf32, #tpu.memory_space<vmem>>, vector<2x15x15x8xf32>
    %c0_150 = arith.constant 0 : index
    %c0_151 = arith.constant 0 : index
    %c0_152 = arith.constant 0 : index
    %c64 = arith.constant 64 : index
    %55 = vector.load %arg10[%c0_150, %c0_151, %c0_152, %c64] : memref<2x16x16x72xf32, #tpu.memory_space<vmem>>, vector<2x15x15x8xf32>
    tpu.vector_store %arg10[%c0_150, %c0_151, %c0_152, %c64], %54 {strides = array<i32>} : memref<2x16x16x72xf32, #tpu.memory_space<vmem>>, vector<2x15x15x8xf32>,
    %c0_153 = arith.constant 0 : index
    %c0_154 = arith.constant 0 : index
    %c0_155 = arith.constant 0 : index
    %c0_156 = arith.constant 0 : index
    %56 = vector.load %arg10[%c0_153, %c0_154, %c0_155, %c0_156] : memref<2x16x16x72xf32, #tpu.memory_space<vmem>>, vector<2x16x16x72xf32>
    %57 = vector.shape_cast %56 : vector<2x16x16x72xf32> to vector<512x72xf32>
    %c0_157 = arith.constant 0 : index
    %c0_158 = arith.constant 0 : index
    %58 = vector.load %arg4[%c0_157, %c0_158] : memref<72x8xf32, #tpu.memory_space<vmem>>, vector<72x8xf32>
    %cst_159 = arith.constant dense<0.000000e+00> : vector<512x8xf32>
    %59 = tpu.matmul %57, %58, %cst_159 {dimension_numbers = #tpu.dot_dimension_numbers<[1], [0], [0], [1], [0, 0, 1, 1], [], []>} : vector<512x72xf32>, vector<72x8xf32>, vector<512x8xf32> -> vector<512x8xf32>
    %c0_160 = arith.constant 0 : index
    %c0_161 = arith.constant 0 : index
    %60 = vector.load %arg5[%c0_160, %c0_161] : memref<1x8xf32, #tpu.memory_space<vmem>>, vector<1x8xf32>
    %61 = vector.broadcast %60 : vector<1x8xf32> to vector<512x8xf32>
    %62 = arith.addf %59, %61 : vector<512x8xf32>
    %cst_162 = arith.constant 0.000000e+00 : f32
    %63 = vector.broadcast %cst_162 : f32 to vector<512x8xf32>
    %64 = arith.cmpf ogt, %62, %63 : vector<512x8xf32>
    %65 = vector.broadcast %37 : f32 to vector<512x8xf32>
    %66 = arith.mulf %65, %62 : vector<512x8xf32>
    %67 = arith.select %64, %62, %66 : vector<512x8xi1>, vector<512x8xf32>
    %68 = vector.shape_cast %67 : vector<512x8xf32> to vector<2x16x16x8xf32>
    %c0_163 = arith.constant 0 : index
    %c0_164 = arith.constant 0 : index
    %c0_165 = arith.constant 0 : index
    %c0_166 = arith.constant 0 : index
    %69 = vector.load %arg11[%c0_163, %c0_164, %c0_165, %c0_166] : memref<2x16x16x8xf32, #tpu.memory_space<vmem>>, vector<2x16x16x8xf32>
    tpu.vector_store %arg11[%c0_163, %c0_164, %c0_165, %c0_166], %68 {strides = array<i32>} : memref<2x16x16x8xf32, #tpu.memory_space<vmem>>, vector<2x16x16x8xf32>,
    %c2_167 = arith.constant 2 : index
    %70 = memref.load %arg0[%c2_167] : memref<3xf32, #tpu.memory_space<smem>>
    %c0_168 = arith.constant 0 : index
    %c0_169 = arith.constant 0 : index
    %c0_170 = arith.constant 0 : index
    %c0_171 = arith.constant 0 : index
    %71 = vector.load %arg11[%c0_168, %c0_169, %c0_170, %c0_171] : memref<2x16x16x8xf32, #tpu.memory_space<vmem>>, vector<2x15x15x8xf32>
    %c0_172 = arith.constant 0 : index
    %c1_173 = arith.constant 1 : index
    %c1_174 = arith.constant 1 : index
    %c0_175 = arith.constant 0 : index
    %72 = vector.load %arg10[%c0_172, %c1_173, %c1_174, %c0_175] : memref<2x16x16x72xf32, #tpu.memory_space<vmem>>, vector<2x15x15x8xf32>
    tpu.vector_store %arg10[%c0_172, %c1_173, %c1_174, %c0_175], %71 {strides = array<i32>} : memref<2x16x16x72xf32, #tpu.memory_space<vmem>>, vector<2x15x15x8xf32>,
    %c0_176 = arith.constant 0 : index
    %c0_177 = arith.constant 0 : index
    %c0_178 = arith.constant 0 : index
    %c0_179 = arith.constant 0 : index
    %73 = vector.load %arg11[%c0_176, %c0_177, %c0_178, %c0_179] : memref<2x16x16x8xf32, #tpu.memory_space<vmem>>, vector<2x15x16x8xf32>
    %c0_180 = arith.constant 0 : index
    %c1_181 = arith.constant 1 : index
    %c0_182 = arith.constant 0 : index
    %c8_183 = arith.constant 8 : index
    %74 = vector.load %arg10[%c0_180, %c1_181, %c0_182, %c8_183] : memref<2x16x16x72xf32, #tpu.memory_space<vmem>>, vector<2x15x16x8xf32>
    tpu.vector_store %arg10[%c0_180, %c1_181, %c0_182, %c8_183], %73 {strides = array<i32>} : memref<2x16x16x72xf32, #tpu.memory_space<vmem>>, vector<2x15x16x8xf32>,
    %c0_184 = arith.constant 0 : index
    %c0_185 = arith.constant 0 : index
    %c1_186 = arith.constant 1 : index
    %c0_187 = arith.constant 0 : index
    %75 = vector.load %arg11[%c0_184, %c0_185, %c1_186, %c0_187] : memref<2x16x16x8xf32, #tpu.memory_space<vmem>>, vector<2x15x15x8xf32>
    %c0_188 = arith.constant 0 : index
    %c1_189 = arith.constant 1 : index
    %c0_190 = arith.constant 0 : index
    %c16_191 = arith.constant 16 : index
    %76 = vector.load %arg10[%c0_188, %c1_189, %c0_190, %c16_191] : memref<2x16x16x72xf32, #tpu.memory_space<vmem>>, vector<2x15x15x8xf32>
    tpu.vector_store %arg10[%c0_188, %c1_189, %c0_190, %c16_191], %75 {strides = array<i32>} : memref<2x16x16x72xf32, #tpu.memory_space<vmem>>, vector<2x15x15x8xf32>,
    %c0_192 = arith.constant 0 : index
    %c0_193 = arith.constant 0 : index
    %c0_194 = arith.constant 0 : index
    %c0_195 = arith.constant 0 : index
    %77 = vector.load %arg11[%c0_192, %c0_193, %c0_194, %c0_195] : memref<2x16x16x8xf32, #tpu.memory_space<vmem>>, vector<2x16x15x8xf32>
    %c0_196 = arith.constant 0 : index
    %c0_197 = arith.constant 0 : index
    %c1_198 = arith.constant 1 : index
    %c24_199 = arith.constant 24 : index
    %78 = vector.load %arg10[%c0_196, %c0_197, %c1_198, %c24_199] : memref<2x16x16x72xf32, #tpu.memory_space<vmem>>, vector<2x16x15x8xf32>
    tpu.vector_store %arg10[%c0_196, %c0_197, %c1_198, %c24_199], %77 {strides = array<i32>} : memref<2x16x16x72xf32, #tpu.memory_space<vmem>>, vector<2x16x15x8xf32>,
    %c0_200 = arith.constant 0 : index
    %c0_201 = arith.constant 0 : index
    %c0_202 = arith.constant 0 : index
    %c0_203 = arith.constant 0 : index
    %79 = vector.load %arg11[%c0_200, %c0_201, %c0_202, %c0_203] : memref<2x16x16x8xf32, #tpu.memory_space<vmem>>, vector<2x16x16x8xf32>
    %c0_204 = arith.constant 0 : index
    %c0_205 = arith.constant 0 : index
    %c0_206 = arith.constant 0 : index
    %c32_207 = arith.constant 32 : index
    %80 = vector.load %arg10[%c0_204, %c0_205, %c0_206, %c32_207] : memref<2x16x16x72xf32, #tpu.memory_space<vmem>>, vector<2x16x16x8xf32>
    tpu.vector_store %arg10[%c0_204, %c0_205, %c0_206, %c32_207], %79 {strides = array<i32>} : memref<2x16x16x72xf32, #tpu.memory_space<vmem>>, vector<2x16x16x8xf32>,
    %c0_208 = arith.constant 0 : index
    %c0_209 = arith.constant 0 : index
    %c1_210 = arith.constant 1 : index
    %c0_211 = arith.constant 0 : index
    %81 = vector.load %arg11[%c0_208, %c0_209, %c1_210, %c0_211] : memref<2x16x16x8xf32, #tpu.memory_space<vmem>>, vector<2x16x15x8xf32>
    %c0_212 = arith.constant 0 : index
    %c0_213 = arith.constant 0 : index
    %c0_214 = arith.constant 0 : index
    %c40_215 = arith.constant 40 : index
    %82 = vector.load %arg10[%c0_212, %c0_213, %c0_214, %c40_215] : memref<2x16x16x72xf32, #tpu.memory_space<vmem>>, vector<2x16x15x8xf32>
    tpu.vector_store %arg10[%c0_212, %c0_213, %c0_214, %c40_215], %81 {strides = array<i32>} : memref<2x16x16x72xf32, #tpu.memory_space<vmem>>, vector<2x16x15x8xf32>,
    %c0_216 = arith.constant 0 : index
    %c1_217 = arith.constant 1 : index
    %c0_218 = arith.constant 0 : index
    %c0_219 = arith.constant 0 : index
    %83 = vector.load %arg11[%c0_216, %c1_217, %c0_218, %c0_219] : memref<2x16x16x8xf32, #tpu.memory_space<vmem>>, vector<2x15x15x8xf32>
    %c0_220 = arith.constant 0 : index
    %c0_221 = arith.constant 0 : index
    %c1_222 = arith.constant 1 : index
    %c48_223 = arith.constant 48 : index
    %84 = vector.load %arg10[%c0_220, %c0_221, %c1_222, %c48_223] : memref<2x16x16x72xf32, #tpu.memory_space<vmem>>, vector<2x15x15x8xf32>
    tpu.vector_store %arg10[%c0_220, %c0_221, %c1_222, %c48_223], %83 {strides = array<i32>} : memref<2x16x16x72xf32, #tpu.memory_space<vmem>>, vector<2x15x15x8xf32>,
    %c0_224 = arith.constant 0 : index
    %c1_225 = arith.constant 1 : index
    %c0_226 = arith.constant 0 : index
    %c0_227 = arith.constant 0 : index
    %85 = vector.load %arg11[%c0_224, %c1_225, %c0_226, %c0_227] : memref<2x16x16x8xf32, #tpu.memory_space<vmem>>, vector<2x15x16x8xf32>
    %c0_228 = arith.constant 0 : index
    %c0_229 = arith.constant 0 : index
    %c0_230 = arith.constant 0 : index
    %c56_231 = arith.constant 56 : index
    %86 = vector.load %arg10[%c0_228, %c0_229, %c0_230, %c56_231] : memref<2x16x16x72xf32, #tpu.memory_space<vmem>>, vector<2x15x16x8xf32>
    tpu.vector_store %arg10[%c0_228, %c0_229, %c0_230, %c56_231], %85 {strides = array<i32>} : memref<2x16x16x72xf32, #tpu.memory_space<vmem>>, vector<2x15x16x8xf32>,
    %c0_232 = arith.constant 0 : index
    %c1_233 = arith.constant 1 : index
    %c1_234 = arith.constant 1 : index
    %c0_235 = arith.constant 0 : index
    %87 = vector.load %arg11[%c0_232, %c1_233, %c1_234, %c0_235] : memref<2x16x16x8xf32, #tpu.memory_space<vmem>>, vector<2x15x15x8xf32>
    %c0_236 = arith.constant 0 : index
    %c0_237 = arith.constant 0 : index
    %c0_238 = arith.constant 0 : index
    %c64_239 = arith.constant 64 : index
    %88 = vector.load %arg10[%c0_236, %c0_237, %c0_238, %c64_239] : memref<2x16x16x72xf32, #tpu.memory_space<vmem>>, vector<2x15x15x8xf32>
    tpu.vector_store %arg10[%c0_236, %c0_237, %c0_238, %c64_239], %87 {strides = array<i32>} : memref<2x16x16x72xf32, #tpu.memory_space<vmem>>, vector<2x15x15x8xf32>,
    %c0_240 = arith.constant 0 : index
    %c0_241 = arith.constant 0 : index
    %c0_242 = arith.constant 0 : index
    %c0_243 = arith.constant 0 : index
    %89 = vector.load %arg10[%c0_240, %c0_241, %c0_242, %c0_243] : memref<2x16x16x72xf32, #tpu.memory_space<vmem>>, vector<2x16x16x72xf32>
    %90 = vector.shape_cast %89 : vector<2x16x16x72xf32> to vector<512x72xf32>
    %c0_244 = arith.constant 0 : index
    %c0_245 = arith.constant 0 : index
    %91 = vector.load %arg6[%c0_244, %c0_245] : memref<72x1xf32, #tpu.memory_space<vmem>>, vector<72x1xf32>
    %cst_246 = arith.constant dense<0.000000e+00> : vector<512x1xf32>
    %92 = tpu.matmul %90, %91, %cst_246 {dimension_numbers = #tpu.dot_dimension_numbers<[1], [0], [0], [1], [0, 0, 1, 1], [], []>} : vector<512x72xf32>, vector<72x1xf32>, vector<512x1xf32> -> vector<512x1xf32>
    %c0_247 = arith.constant 0 : index
    %c0_248 = arith.constant 0 : index
    %93 = vector.load %arg7[%c0_247, %c0_248] : memref<1x1xf32, #tpu.memory_space<vmem>>, vector<1x1xf32>
    %94 = vector.broadcast %93 : vector<1x1xf32> to vector<512x1xf32>
    %95 = arith.addf %92, %94 : vector<512x1xf32>
    %cst_249 = arith.constant 0.000000e+00 : f32
    %96 = vector.broadcast %cst_249 : f32 to vector<512x1xf32>
    %97 = arith.cmpf ogt, %95, %96 : vector<512x1xf32>
    %98 = vector.broadcast %70 : f32 to vector<512x1xf32>
    %99 = arith.mulf %98, %95 : vector<512x1xf32>
    %100 = arith.select %97, %95, %99 : vector<512x1xi1>, vector<512x1xf32>
    %c0_250 = arith.constant 0 : index
    %c0_251 = arith.constant 0 : index
    %101 = vector.load %arg8[%c0_250, %c0_251] : memref<512x1xf32, #tpu.memory_space<vmem>>, vector<512x1xf32>
    tpu.vector_store %arg8[%c0_250, %c0_251], %100 {strides = array<i32>} : memref<512x1xf32, #tpu.memory_space<vmem>>, vector<512x1xf32>,
    return
  }
}

</mosaic_0001>

<llo_original>
// kernel: convolution_4_forward.1
$region0: #{convolution_4_forward.1}
  #allocation0 [shape = 'u32[]', space=smem, size = 0x4, offset = 0x4, fixed_abs, tag = 'smem constant byte address 0x4 - core index']
  #allocation1 [shape = 'u32[144,128]{1,0:T(1,128)}', space=vmem, size = 0x12000, scoped, tag = 'internal scratch']
  #allocation2 [shape = 'f32[2,16,16,9]{3,2,1,0:T(8,128)}', space=vmem, size = 0x40000, scoped, tag = 'scratch operand']
  #allocation3 [shape = 'f32[2,16,16,72]{3,2,1,0:T(8,128)}', space=vmem, size = 0x40000, scoped, tag = 'scratch operand']
  #allocation4 [shape = 'f32[2,16,16,8]{3,2,1,0:T(8,128)}', space=vmem, size = 0x40000, scoped, tag = 'scratch operand']
  #allocation5 [shape = 'f32[1,1]{1,0:T(1,128)S(1)}', space=vmem, size = 0x200, scoped, tag = 'scoped memory for convolution_4_forward.1']
  %s0 = inlined_call_operand.vmem [shape: f32[3], index: 0, kind: input, shape index: {}]
  %s1 = inlined_call_operand.vmem [shape: f32[2,16,16,1], index: 1, kind: input, shape index: {}]
  %s2 = inlined_call_operand.vmem [shape: f32[9,8], index: 2, kind: input, shape index: {}]
  %s3 = inlined_call_operand.vmem [shape: f32[1,8], index: 3, kind: input, shape index: {}]
  %s4 = inlined_call_operand.vmem [shape: f32[72,8], index: 4, kind: input, shape index: {}]
  %s5 = inlined_call_operand.vmem [shape: f32[1,8], index: 5, kind: input, shape index: {}]
  %s6 = inlined_call_operand.vmem [shape: f32[72,1], index: 6, kind: input, shape index: {}]
  %s7 = inlined_call_operand.<no memory space> [shape: f32[1,1], index: 7, kind: input, shape index: {}]
  %s8 = inlined_call_operand.vmem [shape: f32[512,1], index: 8, kind: output, shape index: {}]
  %s9 = sld [smem:[#allocation0]]
  $region46: #{convolution_4_forward.1} parent=0
    _
  %s11 = ssub.s32 1, %s9
  %s12 = scalar_select 0, %s11, %s9
  %v13 = vstv %s7
  %14 = vst [vmem:[#allocation5] sm:$0x1] %v13
  $region1: #{convolution_4_forward.1} parent=0
    #allocation6 [shape = 'u8[512]{0}', space=smem, size = 0x200, scoped, tag = 'input window, operand 0, single buffered']
    #allocation7 [shape = 's32[1]{0}', space=sflag, size = 0x4, scoped, tag = 'scoped memory for convolution_4_forward.1']
    %15 = vsyncpa [#allocation7], 0
    // Predicated region
    $region2: #{convolution_4_forward.1} parent=1 // pred_check
      _
    $region3: #{convolution_4_forward.1} parent=1 // pred_check_branch
      %17 = sbr.rel (0) target = $region5
    $region4: #{convolution_4_forward.1} parent=1 // pred_region
      %s19 = ssub.s32 16, 16
      %20 = vsyncadd [#allocation7], %s19
      %s22 = sshll.u32 %s0, 4
      %s23 = int_to_ptr.vmem [resolvable:$true] %s22
      %25 = dma.vmem_to_smem %s23, 16, [#allocation6], [#allocation7]
    $region5: #{convolution_4_forward.1} parent=1 // pred_fallthru
      _
    // Predicated region
    $region6: #{convolution_4_forward.1} parent=1 // pred_check
      _
    $region7: #{convolution_4_forward.1} parent=1 // pred_check_branch
      %27 = sbr.rel (0) target = $region9
    $region8: #{convolution_4_forward.1} parent=1 // pred_region
      _
    $region9: #{convolution_4_forward.1} parent=1 // pred_fallthru
      _
    // Predicated region
    $region10: #{convolution_4_forward.1} parent=1 // pred_check
      _
    $region11: #{convolution_4_forward.1} parent=1 // pred_check_branch
      %29 = sbr.rel (0) target = $region13
    $region12: #{convolution_4_forward.1} parent=1 // pred_region
      _
    $region13: #{convolution_4_forward.1} parent=1 // pred_fallthru
      _
    // Predicated region
    $region14: #{convolution_4_forward.1} parent=1 // pred_check
      _
    $region15: #{convolution_4_forward.1} parent=1 // pred_check_branch
      %31 = sbr.rel (0) target = $region17
    $region16: #{convolution_4_forward.1} parent=1 // pred_region
      _
    $region17: #{convolution_4_forward.1} parent=1 // pred_fallthru
      _
    // Predicated region
    $region18: #{convolution_4_forward.1} parent=1 // pred_check
      _
    $region19: #{convolution_4_forward.1} parent=1 // pred_check_branch
      %33 = sbr.rel (0) target = $region21
    $region20: #{convolution_4_forward.1} parent=1 // pred_region
      _
    $region21: #{convolution_4_forward.1} parent=1 // pred_fallthru
      _
    // Predicated region
    $region22: #{convolution_4_forward.1} parent=1 // pred_check
      _
    $region23: #{convolution_4_forward.1} parent=1 // pred_check_branch
      %35 = sbr.rel (0) target = $region25
    $region24: #{convolution_4_forward.1} parent=1 // pred_region
      _
    $region25: #{convolution_4_forward.1} parent=1 // pred_fallthru
      _
    // Predicated region
    $region26: #{convolution_4_forward.1} parent=1 // pred_check
      _
    $region27: #{convolution_4_forward.1} parent=1 // pred_check_branch
      %37 = sbr.rel (0) target = $region29
    $region28: #{convolution_4_forward.1} parent=1 // pred_region
      _
    $region29: #{convolution_4_forward.1} parent=1 // pred_fallthru
      _
    // Predicated region
    $region30: #{convolution_4_forward.1} parent=1 // pred_check
      _
    $region31: #{convolution_4_forward.1} parent=1 // pred_check_branch
      %39 = sbr.rel (0) target = $region33
    $region32: #{convolution_4_forward.1} parent=1 // pred_region
      _
    $region33: #{convolution_4_forward.1} parent=1 // pred_fallthru
      _
    // Predicated region
    $region34: #{convolution_4_forward.1} parent=1 // pred_check
      _
    $region35: #{convolution_4_forward.1} parent=1 // pred_check_branch
      %41 = sbr.rel (0) target = $region37
    $region36: #{convolution_4_forward.1} parent=1 // pred_region
      %42 = dma.done [#allocation7], 16
    $region37: #{convolution_4_forward.1} parent=1 // pred_fallthru
      _
    %43 = sfence
    %vm44 = vcmask 72704
    %45 = vst.msk [vmem:[#allocation2] sm:$0xff] %vm44, 0.0
    %46 = vst.msk [vmem:[#allocation2 + $0x8] sm:$0xff] %vm44, 0.0
    %47 = vst.msk [vmem:[#allocation2 + $0x10] sm:$0xff] %vm44, 0.0
    %48 = vst.msk [vmem:[#allocation2 + $0x18] sm:$0xff] %vm44, 0.0
    %49 = vst.msk [vmem:[#allocation2 + $0x20] sm:$0xff] %vm44, 0.0
    %50 = vst.msk [vmem:[#allocation2 + $0x28] sm:$0xff] %vm44, 0.0
    %51 = vst.msk [vmem:[#allocation2 + $0x30] sm:$0xff] %vm44, 0.0
    %52 = vst.msk [vmem:[#allocation2 + $0x38] sm:$0xff] %vm44, 0.0
    %53 = vst.msk [vmem:[#allocation2 + $0x40] sm:$0xff] %vm44, 0.0
    %54 = vst.msk [vmem:[#allocation2 + $0x48] sm:$0xff] %vm44, 0.0
    %55 = vst.msk [vmem:[#allocation2 + $0x50] sm:$0xff] %vm44, 0.0
    %56 = vst.msk [vmem:[#allocation2 + $0x58] sm:$0xff] %vm44, 0.0
    %57 = vst.msk [vmem:[#allocation2 + $0x60] sm:$0xff] %vm44, 0.0
    %58 = vst.msk [vmem:[#allocation2 + $0x68] sm:$0xff] %vm44, 0.0
    %59 = vst.msk [vmem:[#allocation2 + $0x70] sm:$0xff] %vm44, 0.0
    %60 = vst.msk [vmem:[#allocation2 + $0x78] sm:$0xff] %vm44, 0.0
    %61 = vst.msk [vmem:[#allocation2 + $0x80] sm:$0xff] %vm44, 0.0
    %62 = vst.msk [vmem:[#allocation2 + $0x88] sm:$0xff] %vm44, 0.0
    %63 = vst.msk [vmem:[#allocation2 + $0x90] sm:$0xff] %vm44, 0.0
    %64 = vst.msk [vmem:[#allocation2 + $0x98] sm:$0xff] %vm44, 0.0
    %65 = vst.msk [vmem:[#allocation2 + $0xa0] sm:$0xff] %vm44, 0.0
    %66 = vst.msk [vmem:[#allocation2 + $0xa8] sm:$0xff] %vm44, 0.0
    %67 = vst.msk [vmem:[#allocation2 + $0xb0] sm:$0xff] %vm44, 0.0
    %68 = vst.msk [vmem:[#allocation2 + $0xb8] sm:$0xff] %vm44, 0.0
    %69 = vst.msk [vmem:[#allocation2 + $0xc0] sm:$0xff] %vm44, 0.0
    %70 = vst.msk [vmem:[#allocation2 + $0xc8] sm:$0xff] %vm44, 0.0
    %71 = vst.msk [vmem:[#allocation2 + $0xd0] sm:$0xff] %vm44, 0.0
    %72 = vst.msk [vmem:[#allocation2 + $0xd8] sm:$0xff] %vm44, 0.0
    %73 = vst.msk [vmem:[#allocation2 + $0xe0] sm:$0xff] %vm44, 0.0
    %74 = vst.msk [vmem:[#allocation2 + $0xe8] sm:$0xff] %vm44, 0.0
    %75 = vst.msk [vmem:[#allocation2 + $0xf0] sm:$0xff] %vm44, 0.0
    %76 = vst.msk [vmem:[#allocation2 + $0xf8] sm:$0xff] %vm44, 0.0
    %77 = vst.msk [vmem:[#allocation2 + $0x100] sm:$0xff] %vm44, 0.0
    %78 = vst.msk [vmem:[#allocation2 + $0x108] sm:$0xff] %vm44, 0.0
    %79 = vst.msk [vmem:[#allocation2 + $0x110] sm:$0xff] %vm44, 0.0
    %80 = vst.msk [vmem:[#allocation2 + $0x118] sm:$0xff] %vm44, 0.0
    %81 = vst.msk [vmem:[#allocation2 + $0x120] sm:$0xff] %vm44, 0.0
    %82 = vst.msk [vmem:[#allocation2 + $0x128] sm:$0xff] %vm44, 0.0
    %83 = vst.msk [vmem:[#allocation2 + $0x130] sm:$0xff] %vm44, 0.0
    %84 = vst.msk [vmem:[#allocation2 + $0x138] sm:$0xff] %vm44, 0.0
    %85 = vst.msk [vmem:[#allocation2 + $0x140] sm:$0xff] %vm44, 0.0
    %86 = vst.msk [vmem:[#allocation2 + $0x148] sm:$0xff] %vm44, 0.0
    %87 = vst.msk [vmem:[#allocation2 + $0x150] sm:$0xff] %vm44, 0.0
    %88 = vst.msk [vmem:[#allocation2 + $0x158] sm:$0xff] %vm44, 0.0
    %89 = vst.msk [vmem:[#allocation2 + $0x160] sm:$0xff] %vm44, 0.0
    %90 = vst.msk [vmem:[#allocation2 + $0x168] sm:$0xff] %vm44, 0.0
    %91 = vst.msk [vmem:[#allocation2 + $0x170] sm:$0xff] %vm44, 0.0
    %92 = vst.msk [vmem:[#allocation2 + $0x178] sm:$0xff] %vm44, 0.0
    %93 = vst.msk [vmem:[#allocation2 + $0x180] sm:$0xff] %vm44, 0.0
    %94 = vst.msk [vmem:[#allocation2 + $0x188] sm:$0xff] %vm44, 0.0
    %95 = vst.msk [vmem:[#allocation2 + $0x190] sm:$0xff] %vm44, 0.0
    %96 = vst.msk [vmem:[#allocation2 + $0x198] sm:$0xff] %vm44, 0.0
    %97 = vst.msk [vmem:[#allocation2 + $0x1a0] sm:$0xff] %vm44, 0.0
    %98 = vst.msk [vmem:[#allocation2 + $0x1a8] sm:$0xff] %vm44, 0.0
    %99 = vst.msk [vmem:[#allocation2 + $0x1b0] sm:$0xff] %vm44, 0.0
    %100 = vst.msk [vmem:[#allocation2 + $0x1b8] sm:$0xff] %vm44, 0.0
    %101 = vst.msk [vmem:[#allocation2 + $0x1c0] sm:$0xff] %vm44, 0.0
    %102 = vst.msk [vmem:[#allocation2 + $0x1c8] sm:$0xff] %vm44, 0.0
    %103 = vst.msk [vmem:[#allocation2 + $0x1d0] sm:$0xff] %vm44, 0.0
    %104 = vst.msk [vmem:[#allocation2 + $0x1d8] sm:$0xff] %vm44, 0.0
    %105 = vst.msk [vmem:[#allocation2 + $0x1e0] sm:$0xff] %vm44, 0.0
    %106 = vst.msk [vmem:[#allocation2 + $0x1e8] sm:$0xff] %vm44, 0.0
    %107 = vst.msk [vmem:[#allocation2 + $0x1f0] sm:$0xff] %vm44, 0.0
    %108 = vst.msk [vmem:[#allocation2 + $0x1f8] sm:$0xff] %vm44, 0.0
    %vm109 = vcmask 588800
    %110 = vst.msk [vmem:[#allocation3] sm:$0xff] %vm109, 0.0
    %111 = vst.msk [vmem:[#allocation3 + $0x8] sm:$0xff] %vm109, 0.0
    %112 = vst.msk [vmem:[#allocation3 + $0x10] sm:$0xff] %vm109, 0.0
    %113 = vst.msk [vmem:[#allocation3 + $0x18] sm:$0xff] %vm109, 0.0
    %114 = vst.msk [vmem:[#allocation3 + $0x20] sm:$0xff] %vm109, 0.0
    %115 = vst.msk [vmem:[#allocation3 + $0x28] sm:$0xff] %vm109, 0.0
    %116 = vst.msk [vmem:[#allocation3 + $0x30] sm:$0xff] %vm109, 0.0
    %117 = vst.msk [vmem:[#allocation3 + $0x38] sm:$0xff] %vm109, 0.0
    %118 = vst.msk [vmem:[#allocation3 + $0x40] sm:$0xff] %vm109, 0.0
    %119 = vst.msk [vmem:[#allocation3 + $0x48] sm:$0xff] %vm109, 0.0
    %120 = vst.msk [vmem:[#allocation3 + $0x50] sm:$0xff] %vm109, 0.0
    %121 = vst.msk [vmem:[#allocation3 + $0x58] sm:$0xff] %vm109, 0.0
    %122 = vst.msk [vmem:[#allocation3 + $0x60] sm:$0xff] %vm109, 0.0
    %123 = vst.msk [vmem:[#allocation3 + $0x68] sm:$0xff] %vm109, 0.0
    %124 = vst.msk [vmem:[#allocation3 + $0x70] sm:$0xff] %vm109, 0.0
    %125 = vst.msk [vmem:[#allocation3 + $0x78] sm:$0xff] %vm109, 0.0
    %126 = vst.msk [vmem:[#allocation3 + $0x80] sm:$0xff] %vm109, 0.0
    %127 = vst.msk [vmem:[#allocation3 + $0x88] sm:$0xff] %vm109, 0.0
    %128 = vst.msk [vmem:[#allocation3 + $0x90] sm:$0xff] %vm109, 0.0
    %129 = vst.msk [vmem:[#allocation3 + $0x98] sm:$0xff] %vm109, 0.0
    %130 = vst.msk [vmem:[#allocation3 + $0xa0] sm:$0xff] %vm109, 0.0
    %131 = vst.msk [vmem:[#allocation3 + $0xa8] sm:$0xff] %vm109, 0.0
    %132 = vst.msk [vmem:[#allocation3 + $0xb0] sm:$0xff] %vm109, 0.0
    %133 = vst.msk [vmem:[#allocation3 + $0xb8] sm:$0xff] %vm109, 0.0
    %134 = vst.msk [vmem:[#allocation3 + $0xc0] sm:$0xff] %vm109, 0.0
    %135 = vst.msk [vmem:[#allocation3 + $0xc8] sm:$0xff] %vm109, 0.0
    %136 = vst.msk [vmem:[#allocation3 + $0xd0] sm:$0xff] %vm109, 0.0
    %137 = vst.msk [vmem:[#allocation3 + $0xd8] sm:$0xff] %vm109, 0.0
    %138 = vst.msk [vmem:[#allocation3 + $0xe0] sm:$0xff] %vm109, 0.0
    %139 = vst.msk [vmem:[#allocation3 + $0xe8] sm:$0xff] %vm109, 0.0
    %140 = vst.msk [vmem:[#allocation3 + $0xf0] sm:$0xff] %vm109, 0.0
    %141 = vst.msk [vmem:[#allocation3 + $0xf8] sm:$0xff] %vm109, 0.0
    %142 = vst.msk [vmem:[#allocation3 + $0x100] sm:$0xff] %vm109, 0.0
    %143 = vst.msk [vmem:[#allocation3 + $0x108] sm:$0xff] %vm109, 0.0
    %144 = vst.msk [vmem:[#allocation3 + $0x110] sm:$0xff] %vm109, 0.0
    %145 = vst.msk [vmem:[#allocation3 + $0x118] sm:$0xff] %vm109, 0.0
    %146 = vst.msk [vmem:[#allocation3 + $0x120] sm:$0xff] %vm109, 0.0
    %147 = vst.msk [vmem:[#allocation3 + $0x128] sm:$0xff] %vm109, 0.0
    %148 = vst.msk [vmem:[#allocation3 + $0x130] sm:$0xff] %vm109, 0.0
    %149 = vst.msk [vmem:[#allocation3 + $0x138] sm:$0xff] %vm109, 0.0
    %150 = vst.msk [vmem:[#allocation3 + $0x140] sm:$0xff] %vm109, 0.0
    %151 = vst.msk [vmem:[#allocation3 + $0x148] sm:$0xff] %vm109, 0.0
    %152 = vst.msk [vmem:[#allocation3 + $0x150] sm:$0xff] %vm109, 0.0
    %153 = vst.msk [vmem:[#allocation3 + $0x158] sm:$0xff] %vm109, 0.0
    %154 = vst.msk [vmem:[#allocation3 + $0x160] sm:$0xff] %vm109, 0.0
    %155 = vst.msk [vmem:[#allocation3 + $0x168] sm:$0xff] %vm109, 0.0
    %156 = vst.msk [vmem:[#allocation3 + $0x170] sm:$0xff] %vm109, 0.0
    %157 = vst.msk [vmem:[#allocation3 + $0x178] sm:$0xff] %vm109, 0.0
    %158 = vst.msk [vmem:[#allocation3 + $0x180] sm:$0xff] %vm109, 0.0
    %159 = vst.msk [vmem:[#allocation3 + $0x188] sm:$0xff] %vm109, 0.0
    %160 = vst.msk [vmem:[#allocation3 + $0x190] sm:$0xff] %vm109, 0.0
    %161 = vst.msk [vmem:[#allocation3 + $0x198] sm:$0xff] %vm109, 0.0
    %162 = vst.msk [vmem:[#allocation3 + $0x1a0] sm:$0xff] %vm109, 0.0
    %163 = vst.msk [vmem:[#allocation3 + $0x1a8] sm:$0xff] %vm109, 0.0
    %164 = vst.msk [vmem:[#allocation3 + $0x1b0] sm:$0xff] %vm109, 0.0
    %165 = vst.msk [vmem:[#allocation3 + $0x1b8] sm:$0xff] %vm109, 0.0
    %166 = vst.msk [vmem:[#allocation3 + $0x1c0] sm:$0xff] %vm109, 0.0
    %167 = vst.msk [vmem:[#allocation3 + $0x1c8] sm:$0xff] %vm109, 0.0
    %168 = vst.msk [vmem:[#allocation3 + $0x1d0] sm:$0xff] %vm109, 0.0
    %169 = vst.msk [vmem:[#allocation3 + $0x1d8] sm:$0xff] %vm109, 0.0
    %170 = vst.msk [vmem:[#allocation3 + $0x1e0] sm:$0xff] %vm109, 0.0
    %171 = vst.msk [vmem:[#allocation3 + $0x1e8] sm:$0xff] %vm109, 0.0
    %172 = vst.msk [vmem:[#allocation3 + $0x1f0] sm:$0xff] %vm109, 0.0
    %173 = vst.msk [vmem:[#allocation3 + $0x1f8] sm:$0xff] %vm109, 0.0
    %s174 = sld [smem:[#allocation6]]
    %v175 = vld [vmem:[%s1] sm:$0xff]
    %v176 = vld [vmem:[%s1 + $0x8] sm:$0x7f]
    %v177 = vld [vmem:[%s1 + $0x10] sm:$0xff]
    %v178 = vld [vmem:[%s1 + $0x18] sm:$0x7f]
    %v179 = vld [vmem:[%s1 + $0x20] sm:$0xff]
    %v180 = vld [vmem:[%s1 + $0x28] sm:$0x7f]
    %v181 = vld [vmem:[%s1 + $0x30] sm:$0xff]
    %v182 = vld [vmem:[%s1 + $0x38] sm:$0x7f]
    %v183 = vld [vmem:[%s1 + $0x40] sm:$0xff]
    %v184 = vld [vmem:[%s1 + $0x48] sm:$0x7f]
    %v185 = vld [vmem:[%s1 + $0x50] sm:$0xff]
    %v186 = vld [vmem:[%s1 + $0x58] sm:$0x7f]
    %v187 = vld [vmem:[%s1 + $0x60] sm:$0xff]
    %v188 = vld [vmem:[%s1 + $0x68] sm:$0x7f]
    %v189 = vld [vmem:[%s1 + $0x70] sm:$0xff]
    %v190 = vld [vmem:[%s1 + $0x78] sm:$0x7f]
    %v191 = vld [vmem:[%s1 + $0x80] sm:$0xff]
    %v192 = vld [vmem:[%s1 + $0x88] sm:$0x7f]
    %v193 = vld [vmem:[%s1 + $0x90] sm:$0xff]
    %v194 = vld [vmem:[%s1 + $0x98] sm:$0x7f]
    %v195 = vld [vmem:[%s1 + $0xa0] sm:$0xff]
    %v196 = vld [vmem:[%s1 + $0xa8] sm:$0x7f]
    %v197 = vld [vmem:[%s1 + $0xb0] sm:$0xff]
    %v198 = vld [vmem:[%s1 + $0xb8] sm:$0x7f]
    %v199 = vld [vmem:[%s1 + $0xc0] sm:$0xff]
    %v200 = vld [vmem:[%s1 + $0xc8] sm:$0x7f]
    %v201 = vld [vmem:[%s1 + $0xd0] sm:$0xff]
    %v202 = vld [vmem:[%s1 + $0xd8] sm:$0x7f]
    %v203 = vld [vmem:[%s1 + $0xe0] sm:$0xff]
    %v204 = vld [vmem:[%s1 + $0xe8] sm:$0x7f]
    %v205 = vld [vmem:[%s1 + $0x100] sm:$0xff]
    %v206 = vld [vmem:[%s1 + $0x108] sm:$0x7f]
    %v207 = vld [vmem:[%s1 + $0x110] sm:$0xff]
    %v208 = vld [vmem:[%s1 + $0x118] sm:$0x7f]
    %v209 = vld [vmem:[%s1 + $0x120] sm:$0xff]
    %v210 = vld [vmem:[%s1 + $0x128] sm:$0x7f]
    %v211 = vld [vmem:[%s1 + $0x130] sm:$0xff]
    %v212 = vld [vmem:[%s1 + $0x138] sm:$0x7f]
    %v213 = vld [vmem:[%s1 + $0x140] sm:$0xff]
    %v214 = vld [vmem:[%s1 + $0x148] sm:$0x7f]
    %v215 = vld [vmem:[%s1 + $0x150] sm:$0xff]
    %v216 = vld [vmem:[%s1 + $0x158] sm:$0x7f]
    %v217 = vld [vmem:[%s1 + $0x160] sm:$0xff]
    %v218 = vld [vmem:[%s1 + $0x168] sm:$0x7f]
    %v219 = vld [vmem:[%s1 + $0x170] sm:$0xff]
    %v220 = vld [vmem:[%s1 + $0x178] sm:$0x7f]
    %v221 = vld [vmem:[%s1 + $0x180] sm:$0xff]
    %v222 = vld [vmem:[%s1 + $0x188] sm:$0x7f]
    %v223 = vld [vmem:[%s1 + $0x190] sm:$0xff]
    %v224 = vld [vmem:[%s1 + $0x198] sm:$0x7f]
    %v225 = vld [vmem:[%s1 + $0x1a0] sm:$0xff]
    %v226 = vld [vmem:[%s1 + $0x1a8] sm:$0x7f]
    %v227 = vld [vmem:[%s1 + $0x1b0] sm:$0xff]
    %v228 = vld [vmem:[%s1 + $0x1b8] sm:$0x7f]
    %v229 = vld [vmem:[%s1 + $0x1c0] sm:$0xff]
    %v230 = vld [vmem:[%s1 + $0x1c8] sm:$0x7f]
    %v231 = vld [vmem:[%s1 + $0x1d0] sm:$0xff]
    %v232 = vld [vmem:[%s1 + $0x1d8] sm:$0x7f]
    %v233 = vld [vmem:[%s1 + $0x1e0] sm:$0xff]
    %v234 = vld [vmem:[%s1 + $0x1e8] sm:$0x7f]
    %s235 = scalar_lea.vmem [#allocation2], 16
    %vm236 = vcmask 7168
    %237 = vst.msk [vmem:[%s235 + $0x1] sm:$0xff] %vm236, %v175
    %vm238 = vcmask 6144
    %239 = vst.msk [vmem:[%s235 + $0x9] sm:$0x7f] %vm238, %v176
    %240 = vst.msk [vmem:[%s235 + $0x11] sm:$0xff] %vm236, %v177
    %241 = vst.msk [vmem:[%s235 + $0x19] sm:$0x7f] %vm238, %v178
    %242 = vst.msk [vmem:[%s235 + $0x21] sm:$0xff] %vm236, %v179
    %243 = vst.msk [vmem:[%s235 + $0x29] sm:$0x7f] %vm238, %v180
    %244 = vst.msk [vmem:[%s235 + $0x31] sm:$0xff] %vm236, %v181
    %245 = vst.msk [vmem:[%s235 + $0x39] sm:$0x7f] %vm238, %v182
    %246 = vst.msk [vmem:[%s235 + $0x41] sm:$0xff] %vm236, %v183
    %247 = vst.msk [vmem:[%s235 + $0x49] sm:$0x7f] %vm238, %v184
    %248 = vst.msk [vmem:[%s235 + $0x51] sm:$0xff] %vm236, %v185
    %249 = vst.msk [vmem:[%s235 + $0x59] sm:$0x7f] %vm238, %v186
    %250 = vst.msk [vmem:[%s235 + $0x61] sm:$0xff] %vm236, %v187
    %251 = vst.msk [vmem:[%s235 + $0x69] sm:$0x7f] %vm238, %v188
    %252 = vst.msk [vmem:[%s235 + $0x71] sm:$0xff] %vm236, %v189
    %253 = vst.msk [vmem:[%s235 + $0x79] sm:$0x7f] %vm238, %v190
    %254 = vst.msk [vmem:[%s235 + $0x81] sm:$0xff] %vm236, %v191
    %255 = vst.msk [vmem:[%s235 + $0x89] sm:$0x7f] %vm238, %v192
    %256 = vst.msk [vmem:[%s235 + $0x91] sm:$0xff] %vm236, %v193
    %257 = vst.msk [vmem:[%s235 + $0x99] sm:$0x7f] %vm238, %v194
    %258 = vst.msk [vmem:[%s235 + $0xa1] sm:$0xff] %vm236, %v195
    %259 = vst.msk [vmem:[%s235 + $0xa9] sm:$0x7f] %vm238, %v196
    %260 = vst.msk [vmem:[%s235 + $0xb1] sm:$0xff] %vm236, %v197
    %261 = vst.msk [vmem:[%s235 + $0xb9] sm:$0x7f] %vm238, %v198
    %262 = vst.msk [vmem:[%s235 + $0xc1] sm:$0xff] %vm236, %v199
    %263 = vst.msk [vmem:[%s235 + $0xc9] sm:$0x7f] %vm238, %v200
    %264 = vst.msk [vmem:[%s235 + $0xd1] sm:$0xff] %vm236, %v201
    %265 = vst.msk [vmem:[%s235 + $0xd9] sm:$0x7f] %vm238, %v202
    %266 = vst.msk [vmem:[%s235 + $0xe1] sm:$0xff] %vm236, %v203
    %267 = vst.msk [vmem:[%s235 + $0xe9] sm:$0x7f] %vm238, %v204
    %268 = vst.msk [vmem:[%s235 + $0x101] sm:$0xff] %vm236, %v205
    %269 = vst.msk [vmem:[%s235 + $0x109] sm:$0x7f] %vm238, %v206
    %270 = vst.msk [vmem:[%s235 + $0x111] sm:$0xff] %vm236, %v207
    %271 = vst.msk [vmem:[%s235 + $0x119] sm:$0x7f] %vm238, %v208
    %272 = vst.msk [vmem:[%s235 + $0x121] sm:$0xff] %vm236, %v209
    %273 = vst.msk [vmem:[%s235 + $0x129] sm:$0x7f] %vm238, %v210
    %274 = vst.msk [vmem:[%s235 + $0x131] sm:$0xff] %vm236, %v211
    %275 = vst.msk [vmem:[%s235 + $0x139] sm:$0x7f] %vm238, %v212
    %276 = vst.msk [vmem:[%s235 + $0x141] sm:$0xff] %vm236, %v213
    %277 = vst.msk [vmem:[%s235 + $0x149] sm:$0x7f] %vm238, %v214
    %278 = vst.msk [vmem:[%s235 + $0x151] sm:$0xff] %vm236, %v215
    %279 = vst.msk [vmem:[%s235 + $0x159] sm:$0x7f] %vm238, %v216
    %280 = vst.msk [vmem:[%s235 + $0x161] sm:$0xff] %vm236, %v217
    %281 = vst.msk [vmem:[%s235 + $0x169] sm:$0x7f] %vm238, %v218
    %282 = vst.msk [vmem:[%s235 + $0x171] sm:$0xff] %vm236, %v219
    %283 = vst.msk [vmem:[%s235 + $0x179] sm:$0x7f] %vm238, %v220
    %284 = vst.msk [vmem:[%s235 + $0x181] sm:$0xff] %vm236, %v221
    %285 = vst.msk [vmem:[%s235 + $0x189] sm:$0x7f] %vm238, %v222
    %286 = vst.msk [vmem:[%s235 + $0x191] sm:$0xff] %vm236, %v223
    %287 = vst.msk [vmem:[%s235 + $0x199] sm:$0x7f] %vm238, %v224
    %288 = vst.msk [vmem:[%s235 + $0x1a1] sm:$0xff] %vm236, %v225
    %289 = vst.msk [vmem:[%s235 + $0x1a9] sm:$0x7f] %vm238, %v226
    %290 = vst.msk [vmem:[%s235 + $0x1b1] sm:$0xff] %vm236, %v227
    %291 = vst.msk [vmem:[%s235 + $0x1b9] sm:$0x7f] %vm238, %v228
    %292 = vst.msk [vmem:[%s235 + $0x1c1] sm:$0xff] %vm236, %v229
    %293 = vst.msk [vmem:[%s235 + $0x1c9] sm:$0x7f] %vm238, %v230
    %294 = vst.msk [vmem:[%s235 + $0x1d1] sm:$0xff] %vm236, %v231
    %295 = vst.msk [vmem:[%s235 + $0x1d9] sm:$0x7f] %vm238, %v232
    %296 = vst.msk [vmem:[%s235 + $0x1e1] sm:$0xff] %vm236, %v233
    %297 = vst.msk [vmem:[%s235 + $0x1e9] sm:$0x7f] %vm238, %v234
    %v298 = vld [vmem:[%s1] sm:$0xff]
    %v299 = vld [vmem:[%s1 + $0x8] sm:$0xff]
    %v300 = vld [vmem:[%s1 + $0x10] sm:$0xff]
    %v301 = vld [vmem:[%s1 + $0x18] sm:$0xff]
    %v302 = vld [vmem:[%s1 + $0x20] sm:$0xff]
    %v303 = vld [vmem:[%s1 + $0x28] sm:$0xff]
    %v304 = vld [vmem:[%s1 + $0x30] sm:$0xff]
    %v305 = vld [vmem:[%s1 + $0x38] sm:$0xff]
    %v306 = vld [vmem:[%s1 + $0x40] sm:$0xff]
    %v307 = vld [vmem:[%s1 + $0x48] sm:$0xff]
    %v308 = vld [vmem:[%s1 + $0x50] sm:$0xff]
    %v309 = vld [vmem:[%s1 + $0x58] sm:$0xff]
    %v310 = vld [vmem:[%s1 + $0x60] sm:$0xff]
    %v311 = vld [vmem:[%s1 + $0x68] sm:$0xff]
    %v312 = vld [vmem:[%s1 + $0x70] sm:$0xff]
    %v313 = vld [vmem:[%s1 + $0x78] sm:$0xff]
    %v314 = vld [vmem:[%s1 + $0x80] sm:$0xff]
    %v315 = vld [vmem:[%s1 + $0x88] sm:$0xff]
    %v316 = vld [vmem:[%s1 + $0x90] sm:$0xff]
    %v317 = vld [vmem:[%s1 + $0x98] sm:$0xff]
    %v318 = vld [vmem:[%s1 + $0xa0] sm:$0xff]
    %v319 = vld [vmem:[%s1 + $0xa8] sm:$0xff]
    %v320 = vld [vmem:[%s1 + $0xb0] sm:$0xff]
    %v321 = vld [vmem:[%s1 + $0xb8] sm:$0xff]
    %v322 = vld [vmem:[%s1 + $0xc0] sm:$0xff]
    %v323 = vld [vmem:[%s1 + $0xc8] sm:$0xff]
    %v324 = vld [vmem:[%s1 + $0xd0] sm:$0xff]
    %v325 = vld [vmem:[%s1 + $0xd8] sm:$0xff]
    %v326 = vld [vmem:[%s1 + $0xe0] sm:$0xff]
    %v327 = vld [vmem:[%s1 + $0xe8] sm:$0xff]
    %v328 = vld [vmem:[%s1 + $0x100] sm:$0xff]
    %v329 = vld [vmem:[%s1 + $0x108] sm:$0xff]
    %v330 = vld [vmem:[%s1 + $0x110] sm:$0xff]
    %v331 = vld [vmem:[%s1 + $0x118] sm:$0xff]
    %v332 = vld [vmem:[%s1 + $0x120] sm:$0xff]
    %v333 = vld [vmem:[%s1 + $0x128] sm:$0xff]
    %v334 = vld [vmem:[%s1 + $0x130] sm:$0xff]
    %v335 = vld [vmem:[%s1 + $0x138] sm:$0xff]
    %v336 = vld [vmem:[%s1 + $0x140] sm:$0xff]
    %v337 = vld [vmem:[%s1 + $0x148] sm:$0xff]
    %v338 = vld [vmem:[%s1 + $0x150] sm:$0xff]
    %v339 = vld [vmem:[%s1 + $0x158] sm:$0xff]
    %v340 = vld [vmem:[%s1 + $0x160] sm:$0xff]
    %v341 = vld [vmem:[%s1 + $0x168] sm:$0xff]
    %v342 = vld [vmem:[%s1 + $0x170] sm:$0xff]
    %v343 = vld [vmem:[%s1 + $0x178] sm:$0xff]
    %v344 = vld [vmem:[%s1 + $0x180] sm:$0xff]
    %v345 = vld [vmem:[%s1 + $0x188] sm:$0xff]
    %v346 = vld [vmem:[%s1 + $0x190] sm:$0xff]
    %v347 = vld [vmem:[%s1 + $0x198] sm:$0xff]
    %v348 = vld [vmem:[%s1 + $0x1a0] sm:$0xff]
    %v349 = vld [vmem:[%s1 + $0x1a8] sm:$0xff]
    %v350 = vld [vmem:[%s1 + $0x1b0] sm:$0xff]
    %v351 = vld [vmem:[%s1 + $0x1b8] sm:$0xff]
    %v352 = vld [vmem:[%s1 + $0x1c0] sm:$0xff]
    %v353 = vld [vmem:[%s1 + $0x1c8] sm:$0xff]
    %v354 = vld [vmem:[%s1 + $0x1d0] sm:$0xff]
    %v355 = vld [vmem:[%s1 + $0x1d8] sm:$0xff]
    %v356 = vld [vmem:[%s1 + $0x1e0] sm:$0xff]
    %v357 = vld [vmem:[%s1 + $0x1e8] sm:$0xff]
    %418 = vrot.lane.b32.xlu0 %v298, 1
    %v419 = vpop.permute.xlu0 %418
    %420 = vrot.lane.b32.xlu0 %v299, 1
    %v421 = vpop.permute.xlu0 %420
    %422 = vrot.lane.b32.xlu0 %v300, 1
    %v423 = vpop.permute.xlu0 %422
    %424 = vrot.lane.b32.xlu0 %v301, 1
    %v425 = vpop.permute.xlu0 %424
    %426 = vrot.lane.b32.xlu0 %v302, 1
    %v427 = vpop.permute.xlu0 %426
    %428 = vrot.lane.b32.xlu0 %v303, 1
    %v429 = vpop.permute.xlu0 %428
    %430 = vrot.lane.b32.xlu0 %v304, 1
    %v431 = vpop.permute.xlu0 %430
    %432 = vrot.lane.b32.xlu0 %v305, 1
    %v433 = vpop.permute.xlu0 %432
    %434 = vrot.lane.b32.xlu0 %v306, 1
    %v435 = vpop.permute.xlu0 %434
    %436 = vrot.lane.b32.xlu0 %v307, 1
    %v437 = vpop.permute.xlu0 %436
    %438 = vrot.lane.b32.xlu0 %v308, 1
    %v439 = vpop.permute.xlu0 %438
    %440 = vrot.lane.b32.xlu0 %v309, 1
    %v441 = vpop.permute.xlu0 %440
    %442 = vrot.lane.b32.xlu0 %v310, 1
    %v443 = vpop.permute.xlu0 %442
    %444 = vrot.lane.b32.xlu0 %v311, 1
    %v445 = vpop.permute.xlu0 %444
    %446 = vrot.lane.b32.xlu0 %v312, 1
    %v447 = vpop.permute.xlu0 %446
    %448 = vrot.lane.b32.xlu0 %v313, 1
    %v449 = vpop.permute.xlu0 %448
    %450 = vrot.lane.b32.xlu0 %v314, 1
    %v451 = vpop.permute.xlu0 %450
    %452 = vrot.lane.b32.xlu0 %v315, 1
    %v453 = vpop.permute.xlu0 %452
    %454 = vrot.lane.b32.xlu0 %v316, 1
    %v455 = vpop.permute.xlu0 %454
    %456 = vrot.lane.b32.xlu0 %v317, 1
    %v457 = vpop.permute.xlu0 %456
    %458 = vrot.lane.b32.xlu0 %v318, 1
    %v459 = vpop.permute.xlu0 %458
    %460 = vrot.lane.b32.xlu0 %v319, 1
    %v461 = vpop.permute.xlu0 %460
    %462 = vrot.lane.b32.xlu0 %v320, 1
    %v463 = vpop.permute.xlu0 %462
    %464 = vrot.lane.b32.xlu0 %v321, 1
    %v465 = vpop.permute.xlu0 %464
    %466 = vrot.lane.b32.xlu0 %v322, 1
    %v467 = vpop.permute.xlu0 %466
    %468 = vrot.lane.b32.xlu0 %v323, 1
    %v469 = vpop.permute.xlu0 %468
    %470 = vrot.lane.b32.xlu0 %v324, 1
    %v471 = vpop.permute.xlu0 %470
    %472 = vrot.lane.b32.xlu0 %v325, 1
    %v473 = vpop.permute.xlu0 %472
    %474 = vrot.lane.b32.xlu0 %v326, 1
    %v475 = vpop.permute.xlu0 %474
    %476 = vrot.lane.b32.xlu0 %v327, 1
    %v477 = vpop.permute.xlu0 %476
    %478 = vrot.lane.b32.xlu0 %v328, 1
    %v479 = vpop.permute.xlu0 %478
    %480 = vrot.lane.b32.xlu0 %v329, 1
    %v481 = vpop.permute.xlu0 %480
    %482 = vrot.lane.b32.xlu0 %v330, 1
    %v483 = vpop.permute.xlu0 %482
    %484 = vrot.lane.b32.xlu0 %v331, 1
    %v485 = vpop.permute.xlu0 %484
    %486 = vrot.lane.b32.xlu0 %v332, 1
    %v487 = vpop.permute.xlu0 %486
    %488 = vrot.lane.b32.xlu0 %v333, 1
    %v489 = vpop.permute.xlu0 %488
    %490 = vrot.lane.b32.xlu0 %v334, 1
    %v491 = vpop.permute.xlu0 %490
    %492 = vrot.lane.b32.xlu0 %v335, 1
    %v493 = vpop.permute.xlu0 %492
    %494 = vrot.lane.b32.xlu0 %v336, 1
    %v495 = vpop.permute.xlu0 %494
    %496 = vrot.lane.b32.xlu0 %v337, 1
    %v497 = vpop.permute.xlu0 %496
    %498 = vrot.lane.b32.xlu0 %v338, 1
    %v499 = vpop.permute.xlu0 %498
    %500 = vrot.lane.b32.xlu0 %v339, 1
    %v501 = vpop.permute.xlu0 %500
    %502 = vrot.lane.b32.xlu0 %v340, 1
    %v503 = vpop.permute.xlu0 %502
    %504 = vrot.lane.b32.xlu0 %v341, 1
    %v505 = vpop.permute.xlu0 %504
    %506 = vrot.lane.b32.xlu0 %v342, 1
    %v507 = vpop.permute.xlu0 %506
    %508 = vrot.lane.b32.xlu0 %v343, 1
    %v509 = vpop.permute.xlu0 %508
    %510 = vrot.lane.b32.xlu0 %v344, 1
    %v511 = vpop.permute.xlu0 %510
    %512 = vrot.lane.b32.xlu0 %v345, 1
    %v513 = vpop.permute.xlu0 %512
    %514 = vrot.lane.b32.xlu0 %v346, 1
    %v515 = vpop.permute.xlu0 %514
    %516 = vrot.lane.b32.xlu0 %v347, 1
    %v517 = vpop.permute.xlu0 %516
    %518 = vrot.lane.b32.xlu0 %v348, 1
    %v519 = vpop.permute.xlu0 %518
    %520 = vrot.lane.b32.xlu0 %v349, 1
    %v521 = vpop.permute.xlu0 %520
    %522 = vrot.lane.b32.xlu0 %v350, 1
    %v523 = vpop.permute.xlu0 %522
    %524 = vrot.lane.b32.xlu0 %v351, 1
    %v525 = vpop.permute.xlu0 %524
    %526 = vrot.lane.b32.xlu0 %v352, 1
    %v527 = vpop.permute.xlu0 %526
    %528 = vrot.lane.b32.xlu0 %v353, 1
    %v529 = vpop.permute.xlu0 %528
    %530 = vrot.lane.b32.xlu0 %v354, 1
    %v531 = vpop.permute.xlu0 %530
    %532 = vrot.lane.b32.xlu0 %v355, 1
    %v533 = vpop.permute.xlu0 %532
    %534 = vrot.lane.b32.xlu0 %v356, 1
    %v535 = vpop.permute.xlu0 %534
    %536 = vrot.lane.b32.xlu0 %v357, 1
    %v537 = vpop.permute.xlu0 %536
    %vm598 = vcmask 15368
    %599 = vst.msk [vmem:[%s235] sm:$0xff] %vm598, %v419
    %600 = vst.msk [vmem:[%s235 + $0x8] sm:$0xff] %vm598, %v421
    %601 = vst.msk [vmem:[%s235 + $0x10] sm:$0xff] %vm598, %v423
    %602 = vst.msk [vmem:[%s235 + $0x18] sm:$0xff] %vm598, %v425
    %603 = vst.msk [vmem:[%s235 + $0x20] sm:$0xff] %vm598, %v427
    %604 = vst.msk [vmem:[%s235 + $0x28] sm:$0xff] %vm598, %v429
    %605 = vst.msk [vmem:[%s235 + $0x30] sm:$0xff] %vm598, %v431
    %606 = vst.msk [vmem:[%s235 + $0x38] sm:$0xff] %vm598, %v433
    %607 = vst.msk [vmem:[%s235 + $0x40] sm:$0xff] %vm598, %v435
    %608 = vst.msk [vmem:[%s235 + $0x48] sm:$0xff] %vm598, %v437
    %609 = vst.msk [vmem:[%s235 + $0x50] sm:$0xff] %vm598, %v439
    %610 = vst.msk [vmem:[%s235 + $0x58] sm:$0xff] %vm598, %v441
    %611 = vst.msk [vmem:[%s235 + $0x60] sm:$0xff] %vm598, %v443
    %612 = vst.msk [vmem:[%s235 + $0x68] sm:$0xff] %vm598, %v445
    %613 = vst.msk [vmem:[%s235 + $0x70] sm:$0xff] %vm598, %v447
    %614 = vst.msk [vmem:[%s235 + $0x78] sm:$0xff] %vm598, %v449
    %615 = vst.msk [vmem:[%s235 + $0x80] sm:$0xff] %vm598, %v451
    %616 = vst.msk [vmem:[%s235 + $0x88] sm:$0xff] %vm598, %v453
    %617 = vst.msk [vmem:[%s235 + $0x90] sm:$0xff] %vm598, %v455
    %618 = vst.msk [vmem:[%s235 + $0x98] sm:$0xff] %vm598, %v457
    %619 = vst.msk [vmem:[%s235 + $0xa0] sm:$0xff] %vm598, %v459
    %620 = vst.msk [vmem:[%s235 + $0xa8] sm:$0xff] %vm598, %v461
    %621 = vst.msk [vmem:[%s235 + $0xb0] sm:$0xff] %vm598, %v463
    %622 = vst.msk [vmem:[%s235 + $0xb8] sm:$0xff] %vm598, %v465
    %623 = vst.msk [vmem:[%s235 + $0xc0] sm:$0xff] %vm598, %v467
    %624 = vst.msk [vmem:[%s235 + $0xc8] sm:$0xff] %vm598, %v469
    %625 = vst.msk [vmem:[%s235 + $0xd0] sm:$0xff] %vm598, %v471
    %626 = vst.msk [vmem:[%s235 + $0xd8] sm:$0xff] %vm598, %v473
    %627 = vst.msk [vmem:[%s235 + $0xe0] sm:$0xff] %vm598, %v475
    %628 = vst.msk [vmem:[%s235 + $0xe8] sm:$0xff] %vm598, %v477
    %629 = vst.msk [vmem:[%s235 + $0x100] sm:$0xff] %vm598, %v479
    %630 = vst.msk [vmem:[%s235 + $0x108] sm:$0xff] %vm598, %v481
    %631 = vst.msk [vmem:[%s235 + $0x110] sm:$0xff] %vm598, %v483
    %632 = vst.msk [vmem:[%s235 + $0x118] sm:$0xff] %vm598, %v485
    %633 = vst.msk [vmem:[%s235 + $0x120] sm:$0xff] %vm598, %v487
    %634 = vst.msk [vmem:[%s235 + $0x128] sm:$0xff] %vm598, %v489
    %635 = vst.msk [vmem:[%s235 + $0x130] sm:$0xff] %vm598, %v491
    %636 = vst.msk [vmem:[%s235 + $0x138] sm:$0xff] %vm598, %v493
    %637 = vst.msk [vmem:[%s235 + $0x140] sm:$0xff] %vm598, %v495
    %638 = vst.msk [vmem:[%s235 + $0x148] sm:$0xff] %vm598, %v497
    %639 = vst.msk [vmem:[%s235 + $0x150] sm:$0xff] %vm598, %v499
    %640 = vst.msk [vmem:[%s235 + $0x158] sm:$0xff] %vm598, %v501
    %641 = vst.msk [vmem:[%s235 + $0x160] sm:$0xff] %vm598, %v503
    %642 = vst.msk [vmem:[%s235 + $0x168] sm:$0xff] %vm598, %v505
    %643 = vst.msk [vmem:[%s235 + $0x170] sm:$0xff] %vm598, %v507
    %644 = vst.msk [vmem:[%s235 + $0x178] sm:$0xff] %vm598, %v509
    %645 = vst.msk [vmem:[%s235 + $0x180] sm:$0xff] %vm598, %v511
    %646 = vst.msk [vmem:[%s235 + $0x188] sm:$0xff] %vm598, %v513
    %647 = vst.msk [vmem:[%s235 + $0x190] sm:$0xff] %vm598, %v515
    %648 = vst.msk [vmem:[%s235 + $0x198] sm:$0xff] %vm598, %v517
    %649 = vst.msk [vmem:[%s235 + $0x1a0] sm:$0xff] %vm598, %v519
    %650 = vst.msk [vmem:[%s235 + $0x1a8] sm:$0xff] %vm598, %v521
    %651 = vst.msk [vmem:[%s235 + $0x1b0] sm:$0xff] %vm598, %v523
    %652 = vst.msk [vmem:[%s235 + $0x1b8] sm:$0xff] %vm598, %v525
    %653 = vst.msk [vmem:[%s235 + $0x1c0] sm:$0xff] %vm598, %v527
    %654 = vst.msk [vmem:[%s235 + $0x1c8] sm:$0xff] %vm598, %v529
    %655 = vst.msk [vmem:[%s235 + $0x1d0] sm:$0xff] %vm598, %v531
    %656 = vst.msk [vmem:[%s235 + $0x1d8] sm:$0xff] %vm598, %v533
    %657 = vst.msk [vmem:[%s235 + $0x1e0] sm:$0xff] %vm598, %v535
    %658 = vst.msk [vmem:[%s235 + $0x1e8] sm:$0xff] %vm598, %v537
    %v659 = vld [vmem:[%s1 + $0x1] sm:$0xff]
    %v660 = vld [vmem:[%s1 + $0x9] sm:$0x7f]
    %v661 = vld [vmem:[%s1 + $0x11] sm:$0xff]
    %v662 = vld [vmem:[%s1 + $0x19] sm:$0x7f]
    %v663 = vld [vmem:[%s1 + $0x21] sm:$0xff]
    %v664 = vld [vmem:[%s1 + $0x29] sm:$0x7f]
    %v665 = vld [vmem:[%s1 + $0x31] sm:$0xff]
    %v666 = vld [vmem:[%s1 + $0x39] sm:$0x7f]
    %v667 = vld [vmem:[%s1 + $0x41] sm:$0xff]
    %v668 = vld [vmem:[%s1 + $0x49] sm:$0x7f]
    %v669 = vld [vmem:[%s1 + $0x51] sm:$0xff]
    %v670 = vld [vmem:[%s1 + $0x59] sm:$0x7f]
    %v671 = vld [vmem:[%s1 + $0x61] sm:$0xff]
    %v672 = vld [vmem:[%s1 + $0x69] sm:$0x7f]
    %v673 = vld [vmem:[%s1 + $0x71] sm:$0xff]
    %v674 = vld [vmem:[%s1 + $0x79] sm:$0x7f]
    %v675 = vld [vmem:[%s1 + $0x81] sm:$0xff]
    %v676 = vld [vmem:[%s1 + $0x89] sm:$0x7f]
    %v677 = vld [vmem:[%s1 + $0x91] sm:$0xff]
    %v678 = vld [vmem:[%s1 + $0x99] sm:$0x7f]
    %v679 = vld [vmem:[%s1 + $0xa1] sm:$0xff]
    %v680 = vld [vmem:[%s1 + $0xa9] sm:$0x7f]
    %v681 = vld [vmem:[%s1 + $0xb1] sm:$0xff]
    %v682 = vld [vmem:[%s1 + $0xb9] sm:$0x7f]
    %v683 = vld [vmem:[%s1 + $0xc1] sm:$0xff]
    %v684 = vld [vmem:[%s1 + $0xc9] sm:$0x7f]
    %v685 = vld [vmem:[%s1 + $0xd1] sm:$0xff]
    %v686 = vld [vmem:[%s1 + $0xd9] sm:$0x7f]
    %v687 = vld [vmem:[%s1 + $0xe1] sm:$0xff]
    %v688 = vld [vmem:[%s1 + $0xe9] sm:$0x7f]
    %v689 = vld [vmem:[%s1 + $0x101] sm:$0xff]
    %v690 = vld [vmem:[%s1 + $0x109] sm:$0x7f]
    %v691 = vld [vmem:[%s1 + $0x111] sm:$0xff]
    %v692 = vld [vmem:[%s1 + $0x119] sm:$0x7f]
    %v693 = vld [vmem:[%s1 + $0x121] sm:$0xff]
    %v694 = vld [vmem:[%s1 + $0x129] sm:$0x7f]
    %v695 = vld [vmem:[%s1 + $0x131] sm:$0xff]
    %v696 = vld [vmem:[%s1 + $0x139] sm:$0x7f]
    %v697 = vld [vmem:[%s1 + $0x141] sm:$0xff]
    %v698 = vld [vmem:[%s1 + $0x149] sm:$0x7f]
    %v699 = vld [vmem:[%s1 + $0x151] sm:$0xff]
    %v700 = vld [vmem:[%s1 + $0x159] sm:$0x7f]
    %v701 = vld [vmem:[%s1 + $0x161] sm:$0xff]
    %v702 = vld [vmem:[%s1 + $0x169] sm:$0x7f]
    %v703 = vld [vmem:[%s1 + $0x171] sm:$0xff]
    %v704 = vld [vmem:[%s1 + $0x179] sm:$0x7f]
    %v705 = vld [vmem:[%s1 + $0x181] sm:$0xff]
    %v706 = vld [vmem:[%s1 + $0x189] sm:$0x7f]
    %v707 = vld [vmem:[%s1 + $0x191] sm:$0xff]
    %v708 = vld [vmem:[%s1 + $0x199] sm:$0x7f]
    %v709 = vld [vmem:[%s1 + $0x1a1] sm:$0xff]
    %v710 = vld [vmem:[%s1 + $0x1a9] sm:$0x7f]
    %v711 = vld [vmem:[%s1 + $0x1b1] sm:$0xff]
    %v712 = vld [vmem:[%s1 + $0x1b9] sm:$0x7f]
    %v713 = vld [vmem:[%s1 + $0x1c1] sm:$0xff]
    %v714 = vld [vmem:[%s1 + $0x1c9] sm:$0x7f]
    %v715 = vld [vmem:[%s1 + $0x1d1] sm:$0xff]
    %v716 = vld [vmem:[%s1 + $0x1d9] sm:$0x7f]
    %v717 = vld [vmem:[%s1 + $0x1e1] sm:$0xff]
    %v718 = vld [vmem:[%s1 + $0x1e9] sm:$0x7f]
    %779 = vrot.lane.b32.xlu0 %v659, 2
    %v780 = vpop.permute.xlu0 %779
    %781 = vrot.lane.b32.xlu0 %v660, 2
    %v782 = vpop.permute.xlu0 %781
    %783 = vrot.lane.b32.xlu0 %v661, 2
    %v784 = vpop.permute.xlu0 %783
    %785 = vrot.lane.b32.xlu0 %v662, 2
    %v786 = vpop.permute.xlu0 %785
    %787 = vrot.lane.b32.xlu0 %v663, 2
    %v788 = vpop.permute.xlu0 %787
    %789 = vrot.lane.b32.xlu0 %v664, 2
    %v790 = vpop.permute.xlu0 %789
    %791 = vrot.lane.b32.xlu0 %v665, 2
    %v792 = vpop.permute.xlu0 %791
    %793 = vrot.lane.b32.xlu0 %v666, 2
    %v794 = vpop.permute.xlu0 %793
    %795 = vrot.lane.b32.xlu0 %v667, 2
    %v796 = vpop.permute.xlu0 %795
    %797 = vrot.lane.b32.xlu0 %v668, 2
    %v798 = vpop.permute.xlu0 %797
    %799 = vrot.lane.b32.xlu0 %v669, 2
    %v800 = vpop.permute.xlu0 %799
    %801 = vrot.lane.b32.xlu0 %v670, 2
    %v802 = vpop.permute.xlu0 %801
    %803 = vrot.lane.b32.xlu0 %v671, 2
    %v804 = vpop.permute.xlu0 %803
    %805 = vrot.lane.b32.xlu0 %v672, 2
    %v806 = vpop.permute.xlu0 %805
    %807 = vrot.lane.b32.xlu0 %v673, 2
    %v808 = vpop.permute.xlu0 %807
    %809 = vrot.lane.b32.xlu0 %v674, 2
    %v810 = vpop.permute.xlu0 %809
    %811 = vrot.lane.b32.xlu0 %v675, 2
    %v812 = vpop.permute.xlu0 %811
    %813 = vrot.lane.b32.xlu0 %v676, 2
    %v814 = vpop.permute.xlu0 %813
    %815 = vrot.lane.b32.xlu0 %v677, 2
    %v816 = vpop.permute.xlu0 %815
    %817 = vrot.lane.b32.xlu0 %v678, 2
    %v818 = vpop.permute.xlu0 %817
    %819 = vrot.lane.b32.xlu0 %v679, 2
    %v820 = vpop.permute.xlu0 %819
    %821 = vrot.lane.b32.xlu0 %v680, 2
    %v822 = vpop.permute.xlu0 %821
    %823 = vrot.lane.b32.xlu0 %v681, 2
    %v824 = vpop.permute.xlu0 %823
    %825 = vrot.lane.b32.xlu0 %v682, 2
    %v826 = vpop.permute.xlu0 %825
    %827 = vrot.lane.b32.xlu0 %v683, 2
    %v828 = vpop.permute.xlu0 %827
    %829 = vrot.lane.b32.xlu0 %v684, 2
    %v830 = vpop.permute.xlu0 %829
    %831 = vrot.lane.b32.xlu0 %v685, 2
    %v832 = vpop.permute.xlu0 %831
    %833 = vrot.lane.b32.xlu0 %v686, 2
    %v834 = vpop.permute.xlu0 %833
    %835 = vrot.lane.b32.xlu0 %v687, 2
    %v836 = vpop.permute.xlu0 %835
    %837 = vrot.lane.b32.xlu0 %v688, 2
    %v838 = vpop.permute.xlu0 %837
    %839 = vrot.lane.b32.xlu0 %v689, 2
    %v840 = vpop.permute.xlu0 %839
    %841 = vrot.lane.b32.xlu0 %v690, 2
    %v842 = vpop.permute.xlu0 %841
    %843 = vrot.lane.b32.xlu0 %v691, 2
    %v844 = vpop.permute.xlu0 %843
    %845 = vrot.lane.b32.xlu0 %v692, 2
    %v846 = vpop.permute.xlu0 %845
    %847 = vrot.lane.b32.xlu0 %v693, 2
    %v848 = vpop.permute.xlu0 %847
    %849 = vrot.lane.b32.xlu0 %v694, 2
    %v850 = vpop.permute.xlu0 %849
    %851 = vrot.lane.b32.xlu0 %v695, 2
    %v852 = vpop.permute.xlu0 %851
    %853 = vrot.lane.b32.xlu0 %v696, 2
    %v854 = vpop.permute.xlu0 %853
    %855 = vrot.lane.b32.xlu0 %v697, 2
    %v856 = vpop.permute.xlu0 %855
    %857 = vrot.lane.b32.xlu0 %v698, 2
    %v858 = vpop.permute.xlu0 %857
    %859 = vrot.lane.b32.xlu0 %v699, 2
    %v860 = vpop.permute.xlu0 %859
    %861 = vrot.lane.b32.xlu0 %v700, 2
    %v862 = vpop.permute.xlu0 %861
    %863 = vrot.lane.b32.xlu0 %v701, 2
    %v864 = vpop.permute.xlu0 %863
    %865 = vrot.lane.b32.xlu0 %v702, 2
    %v866 = vpop.permute.xlu0 %865
    %867 = vrot.lane.b32.xlu0 %v703, 2
    %v868 = vpop.permute.xlu0 %867
    %869 = vrot.lane.b32.xlu0 %v704, 2
    %v870 = vpop.permute.xlu0 %869
    %871 = vrot.lane.b32.xlu0 %v705, 2
    %v872 = vpop.permute.xlu0 %871
    %873 = vrot.lane.b32.xlu0 %v706, 2
    %v874 = vpop.permute.xlu0 %873
    %875 = vrot.lane.b32.xlu0 %v707, 2
    %v876 = vpop.permute.xlu0 %875
    %877 = vrot.lane.b32.xlu0 %v708, 2
    %v878 = vpop.permute.xlu0 %877
    %879 = vrot.lane.b32.xlu0 %v709, 2
    %v880 = vpop.permute.xlu0 %879
    %881 = vrot.lane.b32.xlu0 %v710, 2
    %v882 = vpop.permute.xlu0 %881
    %883 = vrot.lane.b32.xlu0 %v711, 2
    %v884 = vpop.permute.xlu0 %883
    %885 = vrot.lane.b32.xlu0 %v712, 2
    %v886 = vpop.permute.xlu0 %885
    %887 = vrot.lane.b32.xlu0 %v713, 2
    %v888 = vpop.permute.xlu0 %887
    %889 = vrot.lane.b32.xlu0 %v714, 2
    %v890 = vpop.permute.xlu0 %889
    %891 = vrot.lane.b32.xlu0 %v715, 2
    %v892 = vpop.permute.xlu0 %891
    %893 = vrot.lane.b32.xlu0 %v716, 2
    %v894 = vpop.permute.xlu0 %893
    %895 = vrot.lane.b32.xlu0 %v717, 2
    %v896 = vpop.permute.xlu0 %895
    %897 = vrot.lane.b32.xlu0 %v718, 2
    %v898 = vpop.permute.xlu0 %897
    %vm959 = vcmask 23568
    %960 = vst.msk [vmem:[%s235] sm:$0xff] %vm959, %v780
    %vm961 = vcmask 22544
    %962 = vst.msk [vmem:[%s235 + $0x8] sm:$0x7f] %vm961, %v782
    %963 = vst.msk [vmem:[%s235 + $0x10] sm:$0xff] %vm959, %v784
    %964 = vst.msk [vmem:[%s235 + $0x18] sm:$0x7f] %vm961, %v786
    %965 = vst.msk [vmem:[%s235 + $0x20] sm:$0xff] %vm959, %v788
    %966 = vst.msk [vmem:[%s235 + $0x28] sm:$0x7f] %vm961, %v790
    %967 = vst.msk [vmem:[%s235 + $0x30] sm:$0xff] %vm959, %v792
    %968 = vst.msk [vmem:[%s235 + $0x38] sm:$0x7f] %vm961, %v794
    %969 = vst.msk [vmem:[%s235 + $0x40] sm:$0xff] %vm959, %v796
    %970 = vst.msk [vmem:[%s235 + $0x48] sm:$0x7f] %vm961, %v798
    %971 = vst.msk [vmem:[%s235 + $0x50] sm:$0xff] %vm959, %v800
    %972 = vst.msk [vmem:[%s235 + $0x58] sm:$0x7f] %vm961, %v802
    %973 = vst.msk [vmem:[%s235 + $0x60] sm:$0xff] %vm959, %v804
    %974 = vst.msk [vmem:[%s235 + $0x68] sm:$0x7f] %vm961, %v806
    %975 = vst.msk [vmem:[%s235 + $0x70] sm:$0xff] %vm959, %v808
    %976 = vst.msk [vmem:[%s235 + $0x78] sm:$0x7f] %vm961, %v810
    %977 = vst.msk [vmem:[%s235 + $0x80] sm:$0xff] %vm959, %v812
    %978 = vst.msk [vmem:[%s235 + $0x88] sm:$0x7f] %vm961, %v814
    %979 = vst.msk [vmem:[%s235 + $0x90] sm:$0xff] %vm959, %v816
    %980 = vst.msk [vmem:[%s235 + $0x98] sm:$0x7f] %vm961, %v818
    %981 = vst.msk [vmem:[%s235 + $0xa0] sm:$0xff] %vm959, %v820
    %982 = vst.msk [vmem:[%s235 + $0xa8] sm:$0x7f] %vm961, %v822
    %983 = vst.msk [vmem:[%s235 + $0xb0] sm:$0xff] %vm959, %v824
    %984 = vst.msk [vmem:[%s235 + $0xb8] sm:$0x7f] %vm961, %v826
    %985 = vst.msk [vmem:[%s235 + $0xc0] sm:$0xff] %vm959, %v828
    %986 = vst.msk [vmem:[%s235 + $0xc8] sm:$0x7f] %vm961, %v830
    %987 = vst.msk [vmem:[%s235 + $0xd0] sm:$0xff] %vm959, %v832
    %988 = vst.msk [vmem:[%s235 + $0xd8] sm:$0x7f] %vm961, %v834
    %989 = vst.msk [vmem:[%s235 + $0xe0] sm:$0xff] %vm959, %v836
    %990 = vst.msk [vmem:[%s235 + $0xe8] sm:$0x7f] %vm961, %v838
    %991 = vst.msk [vmem:[%s235 + $0x100] sm:$0xff] %vm959, %v840
    %992 = vst.msk [vmem:[%s235 + $0x108] sm:$0x7f] %vm961, %v842
    %993 = vst.msk [vmem:[%s235 + $0x110] sm:$0xff] %vm959, %v844
    %994 = vst.msk [vmem:[%s235 + $0x118] sm:$0x7f] %vm961, %v846
    %995 = vst.msk [vmem:[%s235 + $0x120] sm:$0xff] %vm959, %v848
    %996 = vst.msk [vmem:[%s235 + $0x128] sm:$0x7f] %vm961, %v850
    %997 = vst.msk [vmem:[%s235 + $0x130] sm:$0xff] %vm959, %v852
    %998 = vst.msk [vmem:[%s235 + $0x138] sm:$0x7f] %vm961, %v854
    %999 = vst.msk [vmem:[%s235 + $0x140] sm:$0xff] %vm959, %v856
    %1000 = vst.msk [vmem:[%s235 + $0x148] sm:$0x7f] %vm961, %v858
    %1001 = vst.msk [vmem:[%s235 + $0x150] sm:$0xff] %vm959, %v860
    %1002 = vst.msk [vmem:[%s235 + $0x158] sm:$0x7f] %vm961, %v862
    %1003 = vst.msk [vmem:[%s235 + $0x160] sm:$0xff] %vm959, %v864
    %1004 = vst.msk [vmem:[%s235 + $0x168] sm:$0x7f] %vm961, %v866
    %1005 = vst.msk [vmem:[%s235 + $0x170] sm:$0xff] %vm959, %v868
    %1006 = vst.msk [vmem:[%s235 + $0x178] sm:$0x7f] %vm961, %v870
    %1007 = vst.msk [vmem:[%s235 + $0x180] sm:$0xff] %vm959, %v872
    %1008 = vst.msk [vmem:[%s235 + $0x188] sm:$0x7f] %vm961, %v874
    %1009 = vst.msk [vmem:[%s235 + $0x190] sm:$0xff] %vm959, %v876
    %1010 = vst.msk [vmem:[%s235 + $0x198] sm:$0x7f] %vm961, %v878
    %1011 = vst.msk [vmem:[%s235 + $0x1a0] sm:$0xff] %vm959, %v880
    %1012 = vst.msk [vmem:[%s235 + $0x1a8] sm:$0x7f] %vm961, %v882
    %1013 = vst.msk [vmem:[%s235 + $0x1b0] sm:$0xff] %vm959, %v884
    %1014 = vst.msk [vmem:[%s235 + $0x1b8] sm:$0x7f] %vm961, %v886
    %1015 = vst.msk [vmem:[%s235 + $0x1c0] sm:$0xff] %vm959, %v888
    %1016 = vst.msk [vmem:[%s235 + $0x1c8] sm:$0x7f] %vm961, %v890
    %1017 = vst.msk [vmem:[%s235 + $0x1d0] sm:$0xff] %vm959, %v892
    %1018 = vst.msk [vmem:[%s235 + $0x1d8] sm:$0x7f] %vm961, %v894
    %1019 = vst.msk [vmem:[%s235 + $0x1e0] sm:$0xff] %vm959, %v896
    %1020 = vst.msk [vmem:[%s235 + $0x1e8] sm:$0x7f] %vm961, %v898
    %v1021 = vld [vmem:[%s1] sm:$0xff]
    %v1022 = vld [vmem:[%s1 + $0x8] sm:$0x7f]
    %v1023 = vld [vmem:[%s1 + $0x10] sm:$0xff]
    %v1024 = vld [vmem:[%s1 + $0x18] sm:$0x7f]
    %v1025 = vld [vmem:[%s1 + $0x20] sm:$0xff]
    %v1026 = vld [vmem:[%s1 + $0x28] sm:$0x7f]
    %v1027 = vld [vmem:[%s1 + $0x30] sm:$0xff]
    %v1028 = vld [vmem:[%s1 + $0x38] sm:$0x7f]
    %v1029 = vld [vmem:[%s1 + $0x40] sm:$0xff]
    %v1030 = vld [vmem:[%s1 + $0x48] sm:$0x7f]
    %v1031 = vld [vmem:[%s1 + $0x50] sm:$0xff]
    %v1032 = vld [vmem:[%s1 + $0x58] sm:$0x7f]
    %v1033 = vld [vmem:[%s1 + $0x60] sm:$0xff]
    %v1034 = vld [vmem:[%s1 + $0x68] sm:$0x7f]
    %v1035 = vld [vmem:[%s1 + $0x70] sm:$0xff]
    %v1036 = vld [vmem:[%s1 + $0x78] sm:$0x7f]
    %v1037 = vld [vmem:[%s1 + $0x80] sm:$0xff]
    %v1038 = vld [vmem:[%s1 + $0x88] sm:$0x7f]
    %v1039 = vld [vmem:[%s1 + $0x90] sm:$0xff]
    %v1040 = vld [vmem:[%s1 + $0x98] sm:$0x7f]
    %v1041 = vld [vmem:[%s1 + $0xa0] sm:$0xff]
    %v1042 = vld [vmem:[%s1 + $0xa8] sm:$0x7f]
    %v1043 = vld [vmem:[%s1 + $0xb0] sm:$0xff]
    %v1044 = vld [vmem:[%s1 + $0xb8] sm:$0x7f]
    %v1045 = vld [vmem:[%s1 + $0xc0] sm:$0xff]
    %v1046 = vld [vmem:[%s1 + $0xc8] sm:$0x7f]
    %v1047 = vld [vmem:[%s1 + $0xd0] sm:$0xff]
    %v1048 = vld [vmem:[%s1 + $0xd8] sm:$0x7f]
    %v1049 = vld [vmem:[%s1 + $0xe0] sm:$0xff]
    %v1050 = vld [vmem:[%s1 + $0xe8] sm:$0x7f]
    %v1051 = vld [vmem:[%s1 + $0xf0] sm:$0xff]
    %v1052 = vld [vmem:[%s1 + $0xf8] sm:$0x7f]
    %v1053 = vld [vmem:[%s1 + $0x100] sm:$0xff]
    %v1054 = vld [vmem:[%s1 + $0x108] sm:$0x7f]
    %v1055 = vld [vmem:[%s1 + $0x110] sm:$0xff]
    %v1056 = vld [vmem:[%s1 + $0x118] sm:$0x7f]
    %v1057 = vld [vmem:[%s1 + $0x120] sm:$0xff]
    %v1058 = vld [vmem:[%s1 + $0x128] sm:$0x7f]
    %v1059 = vld [vmem:[%s1 + $0x130] sm:$0xff]
    %v1060 = vld [vmem:[%s1 + $0x138] sm:$0x7f]
    %v1061 = vld [vmem:[%s1 + $0x140] sm:$0xff]
    %v1062 = vld [vmem:[%s1 + $0x148] sm:$0x7f]
    %v1063 = vld [vmem:[%s1 + $0x150] sm:$0xff]
    %v1064 = vld [vmem:[%s1 + $0x158] sm:$0x7f]
    %v1065 = vld [vmem:[%s1 + $0x160] sm:$0xff]
    %v1066 = vld [vmem:[%s1 + $0x168] sm:$0x7f]
    %v1067 = vld [vmem:[%s1 + $0x170] sm:$0xff]
    %v1068 = vld [vmem:[%s1 + $0x178] sm:$0x7f]
    %v1069 = vld [vmem:[%s1 + $0x180] sm:$0xff]
    %v1070 = vld [vmem:[%s1 + $0x188] sm:$0x7f]
    %v1071 = vld [vmem:[%s1 + $0x190] sm:$0xff]
    %v1072 = vld [vmem:[%s1 + $0x198] sm:$0x7f]
    %v1073 = vld [vmem:[%s1 + $0x1a0] sm:$0xff]
    %v1074 = vld [vmem:[%s1 + $0x1a8] sm:$0x7f]
    %v1075 = vld [vmem:[%s1 + $0x1b0] sm:$0xff]
    %v1076 = vld [vmem:[%s1 + $0x1b8] sm:$0x7f]
    %v1077 = vld [vmem:[%s1 + $0x1c0] sm:$0xff]
    %v1078 = vld [vmem:[%s1 + $0x1c8] sm:$0x7f]
    %v1079 = vld [vmem:[%s1 + $0x1d0] sm:$0xff]
    %v1080 = vld [vmem:[%s1 + $0x1d8] sm:$0x7f]
    %v1081 = vld [vmem:[%s1 + $0x1e0] sm:$0xff]
    %v1082 = vld [vmem:[%s1 + $0x1e8] sm:$0x7f]
    %v1083 = vld [vmem:[%s1 + $0x1f0] sm:$0xff]
    %v1084 = vld [vmem:[%s1 + $0x1f8] sm:$0x7f]
    %1149 = vrot.lane.b32.xlu0 %v1021, 3
    %v1150 = vpop.permute.xlu0 %1149
    %1151 = vrot.lane.b32.xlu0 %v1022, 3
    %v1152 = vpop.permute.xlu0 %1151
    %1153 = vrot.lane.b32.xlu0 %v1023, 3
    %v1154 = vpop.permute.xlu0 %1153
    %1155 = vrot.lane.b32.xlu0 %v1024, 3
    %v1156 = vpop.permute.xlu0 %1155
    %1157 = vrot.lane.b32.xlu0 %v1025, 3
    %v1158 = vpop.permute.xlu0 %1157
    %1159 = vrot.lane.b32.xlu0 %v1026, 3
    %v1160 = vpop.permute.xlu0 %1159
    %1161 = vrot.lane.b32.xlu0 %v1027, 3
    %v1162 = vpop.permute.xlu0 %1161
    %1163 = vrot.lane.b32.xlu0 %v1028, 3
    %v1164 = vpop.permute.xlu0 %1163
    %1165 = vrot.lane.b32.xlu0 %v1029, 3
    %v1166 = vpop.permute.xlu0 %1165
    %1167 = vrot.lane.b32.xlu0 %v1030, 3
    %v1168 = vpop.permute.xlu0 %1167
    %1169 = vrot.lane.b32.xlu0 %v1031, 3
    %v1170 = vpop.permute.xlu0 %1169
    %1171 = vrot.lane.b32.xlu0 %v1032, 3
    %v1172 = vpop.permute.xlu0 %1171
    %1173 = vrot.lane.b32.xlu0 %v1033, 3
    %v1174 = vpop.permute.xlu0 %1173
    %1175 = vrot.lane.b32.xlu0 %v1034, 3
    %v1176 = vpop.permute.xlu0 %1175
    %1177 = vrot.lane.b32.xlu0 %v1035, 3
    %v1178 = vpop.permute.xlu0 %1177
    %1179 = vrot.lane.b32.xlu0 %v1036, 3
    %v1180 = vpop.permute.xlu0 %1179
    %1181 = vrot.lane.b32.xlu0 %v1037, 3
    %v1182 = vpop.permute.xlu0 %1181
    %1183 = vrot.lane.b32.xlu0 %v1038, 3
    %v1184 = vpop.permute.xlu0 %1183
    %1185 = vrot.lane.b32.xlu0 %v1039, 3
    %v1186 = vpop.permute.xlu0 %1185
    %1187 = vrot.lane.b32.xlu0 %v1040, 3
    %v1188 = vpop.permute.xlu0 %1187
    %1189 = vrot.lane.b32.xlu0 %v1041, 3
    %v1190 = vpop.permute.xlu0 %1189
    %1191 = vrot.lane.b32.xlu0 %v1042, 3
    %v1192 = vpop.permute.xlu0 %1191
    %1193 = vrot.lane.b32.xlu0 %v1043, 3
    %v1194 = vpop.permute.xlu0 %1193
    %1195 = vrot.lane.b32.xlu0 %v1044, 3
    %v1196 = vpop.permute.xlu0 %1195
    %1197 = vrot.lane.b32.xlu0 %v1045, 3
    %v1198 = vpop.permute.xlu0 %1197
    %1199 = vrot.lane.b32.xlu0 %v1046, 3
    %v1200 = vpop.permute.xlu0 %1199
    %1201 = vrot.lane.b32.xlu0 %v1047, 3
    %v1202 = vpop.permute.xlu0 %1201
    %1203 = vrot.lane.b32.xlu0 %v1048, 3
    %v1204 = vpop.permute.xlu0 %1203
    %1205 = vrot.lane.b32.xlu0 %v1049, 3
    %v1206 = vpop.permute.xlu0 %1205
    %1207 = vrot.lane.b32.xlu0 %v1050, 3
    %v1208 = vpop.permute.xlu0 %1207
    %1209 = vrot.lane.b32.xlu0 %v1051, 3
    %v1210 = vpop.permute.xlu0 %1209
    %1211 = vrot.lane.b32.xlu0 %v1052, 3
    %v1212 = vpop.permute.xlu0 %1211
    %1213 = vrot.lane.b32.xlu0 %v1053, 3
    %v1214 = vpop.permute.xlu0 %1213
    %1215 = vrot.lane.b32.xlu0 %v1054, 3
    %v1216 = vpop.permute.xlu0 %1215
    %1217 = vrot.lane.b32.xlu0 %v1055, 3
    %v1218 = vpop.permute.xlu0 %1217
    %1219 = vrot.lane.b32.xlu0 %v1056, 3
    %v1220 = vpop.permute.xlu0 %1219
    %1221 = vrot.lane.b32.xlu0 %v1057, 3
    %v1222 = vpop.permute.xlu0 %1221
    %1223 = vrot.lane.b32.xlu0 %v1058, 3
    %v1224 = vpop.permute.xlu0 %1223
    %1225 = vrot.lane.b32.xlu0 %v1059, 3
    %v1226 = vpop.permute.xlu0 %1225
    %1227 = vrot.lane.b32.xlu0 %v1060, 3
    %v1228 = vpop.permute.xlu0 %1227
    %1229 = vrot.lane.b32.xlu0 %v1061, 3
    %v1230 = vpop.permute.xlu0 %1229
    %1231 = vrot.lane.b32.xlu0 %v1062, 3
    %v1232 = vpop.permute.xlu0 %1231
    %1233 = vrot.lane.b32.xlu0 %v1063, 3
    %v1234 = vpop.permute.xlu0 %1233
    %1235 = vrot.lane.b32.xlu0 %v1064, 3
    %v1236 = vpop.permute.xlu0 %1235
    %1237 = vrot.lane.b32.xlu0 %v1065, 3
    %v1238 = vpop.permute.xlu0 %1237
    %1239 = vrot.lane.b32.xlu0 %v1066, 3
    %v1240 = vpop.permute.xlu0 %1239
    %1241 = vrot.lane.b32.xlu0 %v1067, 3
    %v1242 = vpop.permute.xlu0 %1241
    %1243 = vrot.lane.b32.xlu0 %v1068, 3
    %v1244 = vpop.permute.xlu0 %1243
    %1245 = vrot.lane.b32.xlu0 %v1069, 3
    %v1246 = vpop.permute.xlu0 %1245
    %1247 = vrot.lane.b32.xlu0 %v1070, 3
    %v1248 = vpop.permute.xlu0 %1247
    %1249 = vrot.lane.b32.xlu0 %v1071, 3
    %v1250 = vpop.permute.xlu0 %1249
    %1251 = vrot.lane.b32.xlu0 %v1072, 3
    %v1252 = vpop.permute.xlu0 %1251
    %1253 = vrot.lane.b32.xlu0 %v1073, 3
    %v1254 = vpop.permute.xlu0 %1253
    %1255 = vrot.lane.b32.xlu0 %v1074, 3
    %v1256 = vpop.permute.xlu0 %1255
    %1257 = vrot.lane.b32.xlu0 %v1075, 3
    %v1258 = vpop.permute.xlu0 %1257
    %1259 = vrot.lane.b32.xlu0 %v1076, 3
    %v1260 = vpop.permute.xlu0 %1259
    %1261 = vrot.lane.b32.xlu0 %v1077, 3
    %v1262 = vpop.permute.xlu0 %1261
    %1263 = vrot.lane.b32.xlu0 %v1078, 3
    %v1264 = vpop.permute.xlu0 %1263
    %1265 = vrot.lane.b32.xlu0 %v1079, 3
    %v1266 = vpop.permute.xlu0 %1265
    %1267 = vrot.lane.b32.xlu0 %v1080, 3
    %v1268 = vpop.permute.xlu0 %1267
    %1269 = vrot.lane.b32.xlu0 %v1081, 3
    %v1270 = vpop.permute.xlu0 %1269
    %1271 = vrot.lane.b32.xlu0 %v1082, 3
    %v1272 = vpop.permute.xlu0 %1271
    %1273 = vrot.lane.b32.xlu0 %v1083, 3
    %v1274 = vpop.permute.xlu0 %1273
    %1275 = vrot.lane.b32.xlu0 %v1084, 3
    %v1276 = vpop.permute.xlu0 %1275
    %vm1341 = vcmask 31768
    %1342 = vst.msk [vmem:[#allocation2 + $0x1] sm:$0xff] %vm1341, %v1150
    %vm1343 = vcmask 30744
    %1344 = vst.msk [vmem:[#allocation2 + $0x9] sm:$0x7f] %vm1343, %v1152
    %1345 = vst.msk [vmem:[#allocation2 + $0x11] sm:$0xff] %vm1341, %v1154
    %1346 = vst.msk [vmem:[#allocation2 + $0x19] sm:$0x7f] %vm1343, %v1156
    %1347 = vst.msk [vmem:[#allocation2 + $0x21] sm:$0xff] %vm1341, %v1158
    %1348 = vst.msk [vmem:[#allocation2 + $0x29] sm:$0x7f] %vm1343, %v1160
    %1349 = vst.msk [vmem:[#allocation2 + $0x31] sm:$0xff] %vm1341, %v1162
    %1350 = vst.msk [vmem:[#allocation2 + $0x39] sm:$0x7f] %vm1343, %v1164
    %1351 = vst.msk [vmem:[#allocation2 + $0x41] sm:$0xff] %vm1341, %v1166
    %1352 = vst.msk [vmem:[#allocation2 + $0x49] sm:$0x7f] %vm1343, %v1168
    %1353 = vst.msk [vmem:[#allocation2 + $0x51] sm:$0xff] %vm1341, %v1170
    %1354 = vst.msk [vmem:[#allocation2 + $0x59] sm:$0x7f] %vm1343, %v1172
    %1355 = vst.msk [vmem:[#allocation2 + $0x61] sm:$0xff] %vm1341, %v1174
    %1356 = vst.msk [vmem:[#allocation2 + $0x69] sm:$0x7f] %vm1343, %v1176
    %1357 = vst.msk [vmem:[#allocation2 + $0x71] sm:$0xff] %vm1341, %v1178
    %1358 = vst.msk [vmem:[#allocation2 + $0x79] sm:$0x7f] %vm1343, %v1180
    %1359 = vst.msk [vmem:[#allocation2 + $0x81] sm:$0xff] %vm1341, %v1182
    %1360 = vst.msk [vmem:[#allocation2 + $0x89] sm:$0x7f] %vm1343, %v1184
    %1361 = vst.msk [vmem:[#allocation2 + $0x91] sm:$0xff] %vm1341, %v1186
    %1362 = vst.msk [vmem:[#allocation2 + $0x99] sm:$0x7f] %vm1343, %v1188
    %1363 = vst.msk [vmem:[#allocation2 + $0xa1] sm:$0xff] %vm1341, %v1190
    %1364 = vst.msk [vmem:[#allocation2 + $0xa9] sm:$0x7f] %vm1343, %v1192
    %1365 = vst.msk [vmem:[#allocation2 + $0xb1] sm:$0xff] %vm1341, %v1194
    %1366 = vst.msk [vmem:[#allocation2 + $0xb9] sm:$0x7f] %vm1343, %v1196
    %1367 = vst.msk [vmem:[#allocation2 + $0xc1] sm:$0xff] %vm1341, %v1198
    %1368 = vst.msk [vmem:[#allocation2 + $0xc9] sm:$0x7f] %vm1343, %v1200
    %1369 = vst.msk [vmem:[#allocation2 + $0xd1] sm:$0xff] %vm1341, %v1202
    %1370 = vst.msk [vmem:[#allocation2 + $0xd9] sm:$0x7f] %vm1343, %v1204
    %1371 = vst.msk [vmem:[#allocation2 + $0xe1] sm:$0xff] %vm1341, %v1206
    %1372 = vst.msk [vmem:[#allocation2 + $0xe9] sm:$0x7f] %vm1343, %v1208
    %1373 = vst.msk [vmem:[#allocation2 + $0xf1] sm:$0xff] %vm1341, %v1210
    %1374 = vst.msk [vmem:[#allocation2 + $0xf9] sm:$0x7f] %vm1343, %v1212
    %1375 = vst.msk [vmem:[#allocation2 + $0x101] sm:$0xff] %vm1341, %v1214
    %1376 = vst.msk [vmem:[#allocation2 + $0x109] sm:$0x7f] %vm1343, %v1216
    %1377 = vst.msk [vmem:[#allocation2 + $0x111] sm:$0xff] %vm1341, %v1218
    %1378 = vst.msk [vmem:[#allocation2 + $0x119] sm:$0x7f] %vm1343, %v1220
    %1379 = vst.msk [vmem:[#allocation2 + $0x121] sm:$0xff] %vm1341, %v1222
    %1380 = vst.msk [vmem:[#allocation2 + $0x129] sm:$0x7f] %vm1343, %v1224
    %1381 = vst.msk [vmem:[#allocation2 + $0x131] sm:$0xff] %vm1341, %v1226
    %1382 = vst.msk [vmem:[#allocation2 + $0x139] sm:$0x7f] %vm1343, %v1228
    %1383 = vst.msk [vmem:[#allocation2 + $0x141] sm:$0xff] %vm1341, %v1230
    %1384 = vst.msk [vmem:[#allocation2 + $0x149] sm:$0x7f] %vm1343, %v1232
    %1385 = vst.msk [vmem:[#allocation2 + $0x151] sm:$0xff] %vm1341, %v1234
    %1386 = vst.msk [vmem:[#allocation2 + $0x159] sm:$0x7f] %vm1343, %v1236
    %1387 = vst.msk [vmem:[#allocation2 + $0x161] sm:$0xff] %vm1341, %v1238
    %1388 = vst.msk [vmem:[#allocation2 + $0x169] sm:$0x7f] %vm1343, %v1240
    %1389 = vst.msk [vmem:[#allocation2 + $0x171] sm:$0xff] %vm1341, %v1242
    %1390 = vst.msk [vmem:[#allocation2 + $0x179] sm:$0x7f] %vm1343, %v1244
    %1391 = vst.msk [vmem:[#allocation2 + $0x181] sm:$0xff] %vm1341, %v1246
    %1392 = vst.msk [vmem:[#allocation2 + $0x189] sm:$0x7f] %vm1343, %v1248
    %1393 = vst.msk [vmem:[#allocation2 + $0x191] sm:$0xff] %vm1341, %v1250
    %1394 = vst.msk [vmem:[#allocation2 + $0x199] sm:$0x7f] %vm1343, %v1252
    %1395 = vst.msk [vmem:[#allocation2 + $0x1a1] sm:$0xff] %vm1341, %v1254
    %1396 = vst.msk [vmem:[#allocation2 + $0x1a9] sm:$0x7f] %vm1343, %v1256
    %1397 = vst.msk [vmem:[#allocation2 + $0x1b1] sm:$0xff] %vm1341, %v1258
    %1398 = vst.msk [vmem:[#allocation2 + $0x1b9] sm:$0x7f] %vm1343, %v1260
    %1399 = vst.msk [vmem:[#allocation2 + $0x1c1] sm:$0xff] %vm1341, %v1262
    %1400 = vst.msk [vmem:[#allocation2 + $0x1c9] sm:$0x7f] %vm1343, %v1264
    %1401 = vst.msk [vmem:[#allocation2 + $0x1d1] sm:$0xff] %vm1341, %v1266
    %1402 = vst.msk [vmem:[#allocation2 + $0x1d9] sm:$0x7f] %vm1343, %v1268
    %1403 = vst.msk [vmem:[#allocation2 + $0x1e1] sm:$0xff] %vm1341, %v1270
    %1404 = vst.msk [vmem:[#allocation2 + $0x1e9] sm:$0x7f] %vm1343, %v1272
    %1405 = vst.msk [vmem:[#allocation2 + $0x1f1] sm:$0xff] %vm1341, %v1274
    %1406 = vst.msk [vmem:[#allocation2 + $0x1f9] sm:$0x7f] %vm1343, %v1276
    %v1407 = vld [vmem:[%s1] sm:$0xff]
    %v1408 = vld [vmem:[%s1 + $0x8] sm:$0xff]
    %v1409 = vld [vmem:[%s1 + $0x10] sm:$0xff]
    %v1410 = vld [vmem:[%s1 + $0x18] sm:$0xff]
    %v1411 = vld [vmem:[%s1 + $0x20] sm:$0xff]
    %v1412 = vld [vmem:[%s1 + $0x28] sm:$0xff]
    %v1413 = vld [vmem:[%s1 + $0x30] sm:$0xff]
    %v1414 = vld [vmem:[%s1 + $0x38] sm:$0xff]
    %v1415 = vld [vmem:[%s1 + $0x40] sm:$0xff]
    %v1416 = vld [vmem:[%s1 + $0x48] sm:$0xff]
    %v1417 = vld [vmem:[%s1 + $0x50] sm:$0xff]
    %v1418 = vld [vmem:[%s1 + $0x58] sm:$0xff]
    %v1419 = vld [vmem:[%s1 + $0x60] sm:$0xff]
    %v1420 = vld [vmem:[%s1 + $0x68] sm:$0xff]
    %v1421 = vld [vmem:[%s1 + $0x70] sm:$0xff]
    %v1422 = vld [vmem:[%s1 + $0x78] sm:$0xff]
    %v1423 = vld [vmem:[%s1 + $0x80] sm:$0xff]
    %v1424 = vld [vmem:[%s1 + $0x88] sm:$0xff]
    %v1425 = vld [vmem:[%s1 + $0x90] sm:$0xff]
    %v1426 = vld [vmem:[%s1 + $0x98] sm:$0xff]
    %v1427 = vld [vmem:[%s1 + $0xa0] sm:$0xff]
    %v1428 = vld [vmem:[%s1 + $0xa8] sm:$0xff]
    %v1429 = vld [vmem:[%s1 + $0xb0] sm:$0xff]
    %v1430 = vld [vmem:[%s1 + $0xb8] sm:$0xff]
    %v1431 = vld [vmem:[%s1 + $0xc0] sm:$0xff]
    %v1432 = vld [vmem:[%s1 + $0xc8] sm:$0xff]
    %v1433 = vld [vmem:[%s1 + $0xd0] sm:$0xff]
    %v1434 = vld [vmem:[%s1 + $0xd8] sm:$0xff]
    %v1435 = vld [vmem:[%s1 + $0xe0] sm:$0xff]
    %v1436 = vld [vmem:[%s1 + $0xe8] sm:$0xff]
    %v1437 = vld [vmem:[%s1 + $0xf0] sm:$0xff]
    %v1438 = vld [vmem:[%s1 + $0xf8] sm:$0xff]
    %v1439 = vld [vmem:[%s1 + $0x100] sm:$0xff]
    %v1440 = vld [vmem:[%s1 + $0x108] sm:$0xff]
    %v1441 = vld [vmem:[%s1 + $0x110] sm:$0xff]
    %v1442 = vld [vmem:[%s1 + $0x118] sm:$0xff]
    %v1443 = vld [vmem:[%s1 + $0x120] sm:$0xff]
    %v1444 = vld [vmem:[%s1 + $0x128] sm:$0xff]
    %v1445 = vld [vmem:[%s1 + $0x130] sm:$0xff]
    %v1446 = vld [vmem:[%s1 + $0x138] sm:$0xff]
    %v1447 = vld [vmem:[%s1 + $0x140] sm:$0xff]
    %v1448 = vld [vmem:[%s1 + $0x148] sm:$0xff]
    %v1449 = vld [vmem:[%s1 + $0x150] sm:$0xff]
    %v1450 = vld [vmem:[%s1 + $0x158] sm:$0xff]
    %v1451 = vld [vmem:[%s1 + $0x160] sm:$0xff]
    %v1452 = vld [vmem:[%s1 + $0x168] sm:$0xff]
    %v1453 = vld [vmem:[%s1 + $0x170] sm:$0xff]
    %v1454 = vld [vmem:[%s1 + $0x178] sm:$0xff]
    %v1455 = vld [vmem:[%s1 + $0x180] sm:$0xff]
    %v1456 = vld [vmem:[%s1 + $0x188] sm:$0xff]
    %v1457 = vld [vmem:[%s1 + $0x190] sm:$0xff]
    %v1458 = vld [vmem:[%s1 + $0x198] sm:$0xff]
    %v1459 = vld [vmem:[%s1 + $0x1a0] sm:$0xff]
    %v1460 = vld [vmem:[%s1 + $0x1a8] sm:$0xff]
    %v1461 = vld [vmem:[%s1 + $0x1b0] sm:$0xff]
    %v1462 = vld [vmem:[%s1 + $0x1b8] sm:$0xff]
    %v1463 = vld [vmem:[%s1 + $0x1c0] sm:$0xff]
    %v1464 = vld [vmem:[%s1 + $0x1c8] sm:$0xff]
    %v1465 = vld [vmem:[%s1 + $0x1d0] sm:$0xff]
    %v1466 = vld [vmem:[%s1 + $0x1d8] sm:$0xff]
    %v1467 = vld [vmem:[%s1 + $0x1e0] sm:$0xff]
    %v1468 = vld [vmem:[%s1 + $0x1e8] sm:$0xff]
    %v1469 = vld [vmem:[%s1 + $0x1f0] sm:$0xff]
    %v1470 = vld [vmem:[%s1 + $0x1f8] sm:$0xff]
    %1535 = vrot.lane.b32.xlu0 %v1407, 4
    %v1536 = vpop.permute.xlu0 %1535
    %1537 = vrot.lane.b32.xlu0 %v1408, 4
    %v1538 = vpop.permute.xlu0 %1537
    %1539 = vrot.lane.b32.xlu0 %v1409, 4
    %v1540 = vpop.permute.xlu0 %1539
    %1541 = vrot.lane.b32.xlu0 %v1410, 4
    %v1542 = vpop.permute.xlu0 %1541
    %1543 = vrot.lane.b32.xlu0 %v1411, 4
    %v1544 = vpop.permute.xlu0 %1543
    %1545 = vrot.lane.b32.xlu0 %v1412, 4
    %v1546 = vpop.permute.xlu0 %1545
    %1547 = vrot.lane.b32.xlu0 %v1413, 4
    %v1548 = vpop.permute.xlu0 %1547
    %1549 = vrot.lane.b32.xlu0 %v1414, 4
    %v1550 = vpop.permute.xlu0 %1549
    %1551 = vrot.lane.b32.xlu0 %v1415, 4
    %v1552 = vpop.permute.xlu0 %1551
    %1553 = vrot.lane.b32.xlu0 %v1416, 4
    %v1554 = vpop.permute.xlu0 %1553
    %1555 = vrot.lane.b32.xlu0 %v1417, 4
    %v1556 = vpop.permute.xlu0 %1555
    %1557 = vrot.lane.b32.xlu0 %v1418, 4
    %v1558 = vpop.permute.xlu0 %1557
    %1559 = vrot.lane.b32.xlu0 %v1419, 4
    %v1560 = vpop.permute.xlu0 %1559
    %1561 = vrot.lane.b32.xlu0 %v1420, 4
    %v1562 = vpop.permute.xlu0 %1561
    %1563 = vrot.lane.b32.xlu0 %v1421, 4
    %v1564 = vpop.permute.xlu0 %1563
    %1565 = vrot.lane.b32.xlu0 %v1422, 4
    %v1566 = vpop.permute.xlu0 %1565
    %1567 = vrot.lane.b32.xlu0 %v1423, 4
    %v1568 = vpop.permute.xlu0 %1567
    %1569 = vrot.lane.b32.xlu0 %v1424, 4
    %v1570 = vpop.permute.xlu0 %1569
    %1571 = vrot.lane.b32.xlu0 %v1425, 4
    %v1572 = vpop.permute.xlu0 %1571
    %1573 = vrot.lane.b32.xlu0 %v1426, 4
    %v1574 = vpop.permute.xlu0 %1573
    %1575 = vrot.lane.b32.xlu0 %v1427, 4
    %v1576 = vpop.permute.xlu0 %1575
    %1577 = vrot.lane.b32.xlu0 %v1428, 4
    %v1578 = vpop.permute.xlu0 %1577
    %1579 = vrot.lane.b32.xlu0 %v1429, 4
    %v1580 = vpop.permute.xlu0 %1579
    %1581 = vrot.lane.b32.xlu0 %v1430, 4
    %v1582 = vpop.permute.xlu0 %1581
    %1583 = vrot.lane.b32.xlu0 %v1431, 4
    %v1584 = vpop.permute.xlu0 %1583
    %1585 = vrot.lane.b32.xlu0 %v1432, 4
    %v1586 = vpop.permute.xlu0 %1585
    %1587 = vrot.lane.b32.xlu0 %v1433, 4
    %v1588 = vpop.permute.xlu0 %1587
    %1589 = vrot.lane.b32.xlu0 %v1434, 4
    %v1590 = vpop.permute.xlu0 %1589
    %1591 = vrot.lane.b32.xlu0 %v1435, 4
    %v1592 = vpop.permute.xlu0 %1591
    %1593 = vrot.lane.b32.xlu0 %v1436, 4
    %v1594 = vpop.permute.xlu0 %1593
    %1595 = vrot.lane.b32.xlu0 %v1437, 4
    %v1596 = vpop.permute.xlu0 %1595
    %1597 = vrot.lane.b32.xlu0 %v1438, 4
    %v1598 = vpop.permute.xlu0 %1597
    %1599 = vrot.lane.b32.xlu0 %v1439, 4
    %v1600 = vpop.permute.xlu0 %1599
    %1601 = vrot.lane.b32.xlu0 %v1440, 4
    %v1602 = vpop.permute.xlu0 %1601
    %1603 = vrot.lane.b32.xlu0 %v1441, 4
    %v1604 = vpop.permute.xlu0 %1603
    %1605 = vrot.lane.b32.xlu0 %v1442, 4
    %v1606 = vpop.permute.xlu0 %1605
    %1607 = vrot.lane.b32.xlu0 %v1443, 4
    %v1608 = vpop.permute.xlu0 %1607
    %1609 = vrot.lane.b32.xlu0 %v1444, 4
    %v1610 = vpop.permute.xlu0 %1609
    %1611 = vrot.lane.b32.xlu0 %v1445, 4
    %v1612 = vpop.permute.xlu0 %1611
    %1613 = vrot.lane.b32.xlu0 %v1446, 4
    %v1614 = vpop.permute.xlu0 %1613
    %1615 = vrot.lane.b32.xlu0 %v1447, 4
    %v1616 = vpop.permute.xlu0 %1615
    %1617 = vrot.lane.b32.xlu0 %v1448, 4
    %v1618 = vpop.permute.xlu0 %1617
    %1619 = vrot.lane.b32.xlu0 %v1449, 4
    %v1620 = vpop.permute.xlu0 %1619
    %1621 = vrot.lane.b32.xlu0 %v1450, 4
    %v1622 = vpop.permute.xlu0 %1621
    %1623 = vrot.lane.b32.xlu0 %v1451, 4
    %v1624 = vpop.permute.xlu0 %1623
    %1625 = vrot.lane.b32.xlu0 %v1452, 4
    %v1626 = vpop.permute.xlu0 %1625
    %1627 = vrot.lane.b32.xlu0 %v1453, 4
    %v1628 = vpop.permute.xlu0 %1627
    %1629 = vrot.lane.b32.xlu0 %v1454, 4
    %v1630 = vpop.permute.xlu0 %1629
    %1631 = vrot.lane.b32.xlu0 %v1455, 4
    %v1632 = vpop.permute.xlu0 %1631
    %1633 = vrot.lane.b32.xlu0 %v1456, 4
    %v1634 = vpop.permute.xlu0 %1633
    %1635 = vrot.lane.b32.xlu0 %v1457, 4
    %v1636 = vpop.permute.xlu0 %1635
    %1637 = vrot.lane.b32.xlu0 %v1458, 4
    %v1638 = vpop.permute.xlu0 %1637
    %1639 = vrot.lane.b32.xlu0 %v1459, 4
    %v1640 = vpop.permute.xlu0 %1639
    %1641 = vrot.lane.b32.xlu0 %v1460, 4
    %v1642 = vpop.permute.xlu0 %1641
    %1643 = vrot.lane.b32.xlu0 %v1461, 4
    %v1644 = vpop.permute.xlu0 %1643
    %1645 = vrot.lane.b32.xlu0 %v1462, 4
    %v1646 = vpop.permute.xlu0 %1645
    %1647 = vrot.lane.b32.xlu0 %v1463, 4
    %v1648 = vpop.permute.xlu0 %1647
    %1649 = vrot.lane.b32.xlu0 %v1464, 4
    %v1650 = vpop.permute.xlu0 %1649
    %1651 = vrot.lane.b32.xlu0 %v1465, 4
    %v1652 = vpop.permute.xlu0 %1651
    %1653 = vrot.lane.b32.xlu0 %v1466, 4
    %v1654 = vpop.permute.xlu0 %1653
    %1655 = vrot.lane.b32.xlu0 %v1467, 4
    %v1656 = vpop.permute.xlu0 %1655
    %1657 = vrot.lane.b32.xlu0 %v1468, 4
    %v1658 = vpop.permute.xlu0 %1657
    %1659 = vrot.lane.b32.xlu0 %v1469, 4
    %v1660 = vpop.permute.xlu0 %1659
    %1661 = vrot.lane.b32.xlu0 %v1470, 4
    %v1662 = vpop.permute.xlu0 %1661
    %vm1727 = vcmask 39968
    %1728 = vst.msk [vmem:[#allocation2] sm:$0xff] %vm1727, %v1536
    %1729 = vst.msk [vmem:[#allocation2 + $0x8] sm:$0xff] %vm1727, %v1538
    %1730 = vst.msk [vmem:[#allocation2 + $0x10] sm:$0xff] %vm1727, %v1540
    %1731 = vst.msk [vmem:[#allocation2 + $0x18] sm:$0xff] %vm1727, %v1542
    %1732 = vst.msk [vmem:[#allocation2 + $0x20] sm:$0xff] %vm1727, %v1544
    %1733 = vst.msk [vmem:[#allocation2 + $0x28] sm:$0xff] %vm1727, %v1546
    %1734 = vst.msk [vmem:[#allocation2 + $0x30] sm:$0xff] %vm1727, %v1548
    %1735 = vst.msk [vmem:[#allocation2 + $0x38] sm:$0xff] %vm1727, %v1550
    %1736 = vst.msk [vmem:[#allocation2 + $0x40] sm:$0xff] %vm1727, %v1552
    %1737 = vst.msk [vmem:[#allocation2 + $0x48] sm:$0xff] %vm1727, %v1554
    %1738 = vst.msk [vmem:[#allocation2 + $0x50] sm:$0xff] %vm1727, %v1556
    %1739 = vst.msk [vmem:[#allocation2 + $0x58] sm:$0xff] %vm1727, %v1558
    %1740 = vst.msk [vmem:[#allocation2 + $0x60] sm:$0xff] %vm1727, %v1560
    %1741 = vst.msk [vmem:[#allocation2 + $0x68] sm:$0xff] %vm1727, %v1562
    %1742 = vst.msk [vmem:[#allocation2 + $0x70] sm:$0xff] %vm1727, %v1564
    %1743 = vst.msk [vmem:[#allocation2 + $0x78] sm:$0xff] %vm1727, %v1566
    %1744 = vst.msk [vmem:[#allocation2 + $0x80] sm:$0xff] %vm1727, %v1568
    %1745 = vst.msk [vmem:[#allocation2 + $0x88] sm:$0xff] %vm1727, %v1570
    %1746 = vst.msk [vmem:[#allocation2 + $0x90] sm:$0xff] %vm1727, %v1572
    %1747 = vst.msk [vmem:[#allocation2 + $0x98] sm:$0xff] %vm1727, %v1574
    %1748 = vst.msk [vmem:[#allocation2 + $0xa0] sm:$0xff] %vm1727, %v1576
    %1749 = vst.msk [vmem:[#allocation2 + $0xa8] sm:$0xff] %vm1727, %v1578
    %1750 = vst.msk [vmem:[#allocation2 + $0xb0] sm:$0xff] %vm1727, %v1580
    %1751 = vst.msk [vmem:[#allocation2 + $0xb8] sm:$0xff] %vm1727, %v1582
    %1752 = vst.msk [vmem:[#allocation2 + $0xc0] sm:$0xff] %vm1727, %v1584
    %1753 = vst.msk [vmem:[#allocation2 + $0xc8] sm:$0xff] %vm1727, %v1586
    %1754 = vst.msk [vmem:[#allocation2 + $0xd0] sm:$0xff] %vm1727, %v1588
    %1755 = vst.msk [vmem:[#allocation2 + $0xd8] sm:$0xff] %vm1727, %v1590
    %1756 = vst.msk [vmem:[#allocation2 + $0xe0] sm:$0xff] %vm1727, %v1592
    %1757 = vst.msk [vmem:[#allocation2 + $0xe8] sm:$0xff] %vm1727, %v1594
    %1758 = vst.msk [vmem:[#allocation2 + $0xf0] sm:$0xff] %vm1727, %v1596
    %1759 = vst.msk [vmem:[#allocation2 + $0xf8] sm:$0xff] %vm1727, %v1598
    %1760 = vst.msk [vmem:[#allocation2 + $0x100] sm:$0xff] %vm1727, %v1600
    %1761 = vst.msk [vmem:[#allocation2 + $0x108] sm:$0xff] %vm1727, %v1602
    %1762 = vst.msk [vmem:[#allocation2 + $0x110] sm:$0xff] %vm1727, %v1604
    %1763 = vst.msk [vmem:[#allocation2 + $0x118] sm:$0xff] %vm1727, %v1606
    %1764 = vst.msk [vmem:[#allocation2 + $0x120] sm:$0xff] %vm1727, %v1608
    %1765 = vst.msk [vmem:[#allocation2 + $0x128] sm:$0xff] %vm1727, %v1610
    %1766 = vst.msk [vmem:[#allocation2 + $0x130] sm:$0xff] %vm1727, %v1612
    %1767 = vst.msk [vmem:[#allocation2 + $0x138] sm:$0xff] %vm1727, %v1614
    %1768 = vst.msk [vmem:[#allocation2 + $0x140] sm:$0xff] %vm1727, %v1616
    %1769 = vst.msk [vmem:[#allocation2 + $0x148] sm:$0xff] %vm1727, %v1618
    %1770 = vst.msk [vmem:[#allocation2 + $0x150] sm:$0xff] %vm1727, %v1620
    %1771 = vst.msk [vmem:[#allocation2 + $0x158] sm:$0xff] %vm1727, %v1622
    %1772 = vst.msk [vmem:[#allocation2 + $0x160] sm:$0xff] %vm1727, %v1624
    %1773 = vst.msk [vmem:[#allocation2 + $0x168] sm:$0xff] %vm1727, %v1626
    %1774 = vst.msk [vmem:[#allocation2 + $0x170] sm:$0xff] %vm1727, %v1628
    %1775 = vst.msk [vmem:[#allocation2 + $0x178] sm:$0xff] %vm1727, %v1630
    %1776 = vst.msk [vmem:[#allocation2 + $0x180] sm:$0xff] %vm1727, %v1632
    %1777 = vst.msk [vmem:[#allocation2 + $0x188] sm:$0xff] %vm1727, %v1634
    %1778 = vst.msk [vmem:[#allocation2 + $0x190] sm:$0xff] %vm1727, %v1636
    %1779 = vst.msk [vmem:[#allocation2 + $0x198] sm:$0xff] %vm1727, %v1638
    %1780 = vst.msk [vmem:[#allocation2 + $0x1a0] sm:$0xff] %vm1727, %v1640
    %1781 = vst.msk [vmem:[#allocation2 + $0x1a8] sm:$0xff] %vm1727, %v1642
    %1782 = vst.msk [vmem:[#allocation2 + $0x1b0] sm:$0xff] %vm1727, %v1644
    %1783 = vst.msk [vmem:[#allocation2 + $0x1b8] sm:$0xff] %vm1727, %v1646
    %1784 = vst.msk [vmem:[#allocation2 + $0x1c0] sm:$0xff] %vm1727, %v1648
    %1785 = vst.msk [vmem:[#allocation2 + $0x1c8] sm:$0xff] %vm1727, %v1650
    %1786 = vst.msk [vmem:[#allocation2 + $0x1d0] sm:$0xff] %vm1727, %v1652
    %1787 = vst.msk [vmem:[#allocation2 + $0x1d8] sm:$0xff] %vm1727, %v1654
    %1788 = vst.msk [vmem:[#allocation2 + $0x1e0] sm:$0xff] %vm1727, %v1656
    %1789 = vst.msk [vmem:[#allocation2 + $0x1e8] sm:$0xff] %vm1727, %v1658
    %1790 = vst.msk [vmem:[#allocation2 + $0x1f0] sm:$0xff] %vm1727, %v1660
    %1791 = vst.msk [vmem:[#allocation2 + $0x1f8] sm:$0xff] %vm1727, %v1662
    %v1792 = vld [vmem:[%s1 + $0x1] sm:$0xff]
    %v1793 = vld [vmem:[%s1 + $0x9] sm:$0x7f]
    %v1794 = vld [vmem:[%s1 + $0x11] sm:$0xff]
    %v1795 = vld [vmem:[%s1 + $0x19] sm:$0x7f]
    %v1796 = vld [vmem:[%s1 + $0x21] sm:$0xff]
    %v1797 = vld [vmem:[%s1 + $0x29] sm:$0x7f]
    %v1798 = vld [vmem:[%s1 + $0x31] sm:$0xff]
    %v1799 = vld [vmem:[%s1 + $0x39] sm:$0x7f]
    %v1800 = vld [vmem:[%s1 + $0x41] sm:$0xff]
    %v1801 = vld [vmem:[%s1 + $0x49] sm:$0x7f]
    %v1802 = vld [vmem:[%s1 + $0x51] sm:$0xff]
    %v1803 = vld [vmem:[%s1 + $0x59] sm:$0x7f]
    %v1804 = vld [vmem:[%s1 + $0x61] sm:$0xff]
    %v1805 = vld [vmem:[%s1 + $0x69] sm:$0x7f]
    %v1806 = vld [vmem:[%s1 + $0x71] sm:$0xff]
    %v1807 = vld [vmem:[%s1 + $0x79] sm:$0x7f]
    %v1808 = vld [vmem:[%s1 + $0x81] sm:$0xff]
    %v1809 = vld [vmem:[%s1 + $0x89] sm:$0x7f]
    %v1810 = vld [vmem:[%s1 + $0x91] sm:$0xff]
    %v1811 = vld [vmem:[%s1 + $0x99] sm:$0x7f]
    %v1812 = vld [vmem:[%s1 + $0xa1] sm:$0xff]
    %v1813 = vld [vmem:[%s1 + $0xa9] sm:$0x7f]
    %v1814 = vld [vmem:[%s1 + $0xb1] sm:$0xff]
    %v1815 = vld [vmem:[%s1 + $0xb9] sm:$0x7f]
    %v1816 = vld [vmem:[%s1 + $0xc1] sm:$0xff]
    %v1817 = vld [vmem:[%s1 + $0xc9] sm:$0x7f]
    %v1818 = vld [vmem:[%s1 + $0xd1] sm:$0xff]
    %v1819 = vld [vmem:[%s1 + $0xd9] sm:$0x7f]
    %v1820 = vld [vmem:[%s1 + $0xe1] sm:$0xff]
    %v1821 = vld [vmem:[%s1 + $0xe9] sm:$0x7f]
    %v1822 = vld [vmem:[%s1 + $0xf1] sm:$0xff]
    %v1823 = vld [vmem:[%s1 + $0xf9] sm:$0x7f]
    %v1824 = vld [vmem:[%s1 + $0x101] sm:$0xff]
    %v1825 = vld [vmem:[%s1 + $0x109] sm:$0x7f]
    %v1826 = vld [vmem:[%s1 + $0x111] sm:$0xff]
    %v1827 = vld [vmem:[%s1 + $0x119] sm:$0x7f]
    %v1828 = vld [vmem:[%s1 + $0x121] sm:$0xff]
    %v1829 = vld [vmem:[%s1 + $0x129] sm:$0x7f]
    %v1830 = vld [vmem:[%s1 + $0x131] sm:$0xff]
    %v1831 = vld [vmem:[%s1 + $0x139] sm:$0x7f]
    %v1832 = vld [vmem:[%s1 + $0x141] sm:$0xff]
    %v1833 = vld [vmem:[%s1 + $0x149] sm:$0x7f]
    %v1834 = vld [vmem:[%s1 + $0x151] sm:$0xff]
    %v1835 = vld [vmem:[%s1 + $0x159] sm:$0x7f]
    %v1836 = vld [vmem:[%s1 + $0x161] sm:$0xff]
    %v1837 = vld [vmem:[%s1 + $0x169] sm:$0x7f]
    %v1838 = vld [vmem:[%s1 + $0x171] sm:$0xff]
    %v1839 = vld [vmem:[%s1 + $0x179] sm:$0x7f]
    %v1840 = vld [vmem:[%s1 + $0x181] sm:$0xff]
    %v1841 = vld [vmem:[%s1 + $0x189] sm:$0x7f]
    %v1842 = vld [vmem:[%s1 + $0x191] sm:$0xff]
    %v1843 = vld [vmem:[%s1 + $0x199] sm:$0x7f]
    %v1844 = vld [vmem:[%s1 + $0x1a1] sm:$0xff]
    %v1845 = vld [vmem:[%s1 + $0x1a9] sm:$0x7f]
    %v1846 = vld [vmem:[%s1 + $0x1b1] sm:$0xff]
    %v1847 = vld [vmem:[%s1 + $0x1b9] sm:$0x7f]
    %v1848 = vld [vmem:[%s1 + $0x1c1] sm:$0xff]
    %v1849 = vld [vmem:[%s1 + $0x1c9] sm:$0x7f]
    %v1850 = vld [vmem:[%s1 + $0x1d1] sm:$0xff]
    %v1851 = vld [vmem:[%s1 + $0x1d9] sm:$0x7f]
    %v1852 = vld [vmem:[%s1 + $0x1e1] sm:$0xff]
    %v1853 = vld [vmem:[%s1 + $0x1e9] sm:$0x7f]
    %v1854 = vld [vmem:[%s1 + $0x1f1] sm:$0xff]
    %v1855 = vld [vmem:[%s1 + $0x1f9] sm:$0x7f]
    %1920 = vrot.lane.b32.xlu0 %v1792, 5
    %v1921 = vpop.permute.xlu0 %1920
    %1922 = vrot.lane.b32.xlu0 %v1793, 5
    %v1923 = vpop.permute.xlu0 %1922
    %1924 = vrot.lane.b32.xlu0 %v1794, 5
    %v1925 = vpop.permute.xlu0 %1924
    %1926 = vrot.lane.b32.xlu0 %v1795, 5
    %v1927 = vpop.permute.xlu0 %1926
    %1928 = vrot.lane.b32.xlu0 %v1796, 5
    %v1929 = vpop.permute.xlu0 %1928
    %1930 = vrot.lane.b32.xlu0 %v1797, 5
    %v1931 = vpop.permute.xlu0 %1930
    %1932 = vrot.lane.b32.xlu0 %v1798, 5
    %v1933 = vpop.permute.xlu0 %1932
    %1934 = vrot.lane.b32.xlu0 %v1799, 5
    %v1935 = vpop.permute.xlu0 %1934
    %1936 = vrot.lane.b32.xlu0 %v1800, 5
    %v1937 = vpop.permute.xlu0 %1936
    %1938 = vrot.lane.b32.xlu0 %v1801, 5
    %v1939 = vpop.permute.xlu0 %1938
    %1940 = vrot.lane.b32.xlu0 %v1802, 5
    %v1941 = vpop.permute.xlu0 %1940
    %1942 = vrot.lane.b32.xlu0 %v1803, 5
    %v1943 = vpop.permute.xlu0 %1942
    %1944 = vrot.lane.b32.xlu0 %v1804, 5
    %v1945 = vpop.permute.xlu0 %1944
    %1946 = vrot.lane.b32.xlu0 %v1805, 5
    %v1947 = vpop.permute.xlu0 %1946
    %1948 = vrot.lane.b32.xlu0 %v1806, 5
    %v1949 = vpop.permute.xlu0 %1948
    %1950 = vrot.lane.b32.xlu0 %v1807, 5
    %v1951 = vpop.permute.xlu0 %1950
    %1952 = vrot.lane.b32.xlu0 %v1808, 5
    %v1953 = vpop.permute.xlu0 %1952
    %1954 = vrot.lane.b32.xlu0 %v1809, 5
    %v1955 = vpop.permute.xlu0 %1954
    %1956 = vrot.lane.b32.xlu0 %v1810, 5
    %v1957 = vpop.permute.xlu0 %1956
    %1958 = vrot.lane.b32.xlu0 %v1811, 5
    %v1959 = vpop.permute.xlu0 %1958
    %1960 = vrot.lane.b32.xlu0 %v1812, 5
    %v1961 = vpop.permute.xlu0 %1960
    %1962 = vrot.lane.b32.xlu0 %v1813, 5
    %v1963 = vpop.permute.xlu0 %1962
    %1964 = vrot.lane.b32.xlu0 %v1814, 5
    %v1965 = vpop.permute.xlu0 %1964
    %1966 = vrot.lane.b32.xlu0 %v1815, 5
    %v1967 = vpop.permute.xlu0 %1966
    %1968 = vrot.lane.b32.xlu0 %v1816, 5
    %v1969 = vpop.permute.xlu0 %1968
    %1970 = vrot.lane.b32.xlu0 %v1817, 5
    %v1971 = vpop.permute.xlu0 %1970
    %1972 = vrot.lane.b32.xlu0 %v1818, 5
    %v1973 = vpop.permute.xlu0 %1972
    %1974 = vrot.lane.b32.xlu0 %v1819, 5
    %v1975 = vpop.permute.xlu0 %1974
    %1976 = vrot.lane.b32.xlu0 %v1820, 5
    %v1977 = vpop.permute.xlu0 %1976
    %1978 = vrot.lane.b32.xlu0 %v1821, 5
    %v1979 = vpop.permute.xlu0 %1978
    %1980 = vrot.lane.b32.xlu0 %v1822, 5
    %v1981 = vpop.permute.xlu0 %1980
    %1982 = vrot.lane.b32.xlu0 %v1823, 5
    %v1983 = vpop.permute.xlu0 %1982
    %1984 = vrot.lane.b32.xlu0 %v1824, 5
    %v1985 = vpop.permute.xlu0 %1984
    %1986 = vrot.lane.b32.xlu0 %v1825, 5
    %v1987 = vpop.permute.xlu0 %1986
    %1988 = vrot.lane.b32.xlu0 %v1826, 5
    %v1989 = vpop.permute.xlu0 %1988
    %1990 = vrot.lane.b32.xlu0 %v1827, 5
    %v1991 = vpop.permute.xlu0 %1990
    %1992 = vrot.lane.b32.xlu0 %v1828, 5
    %v1993 = vpop.permute.xlu0 %1992
    %1994 = vrot.lane.b32.xlu0 %v1829, 5
    %v1995 = vpop.permute.xlu0 %1994
    %1996 = vrot.lane.b32.xlu0 %v1830, 5
    %v1997 = vpop.permute.xlu0 %1996
    %1998 = vrot.lane.b32.xlu0 %v1831, 5
    %v1999 = vpop.permute.xlu0 %1998
    %2000 = vrot.lane.b32.xlu0 %v1832, 5
    %v2001 = vpop.permute.xlu0 %2000
    %2002 = vrot.lane.b32.xlu0 %v1833, 5
    %v2003 = vpop.permute.xlu0 %2002
    %2004 = vrot.lane.b32.xlu0 %v1834, 5
    %v2005 = vpop.permute.xlu0 %2004
    %2006 = vrot.lane.b32.xlu0 %v1835, 5
    %v2007 = vpop.permute.xlu0 %2006
    %2008 = vrot.lane.b32.xlu0 %v1836, 5
    %v2009 = vpop.permute.xlu0 %2008
    %2010 = vrot.lane.b32.xlu0 %v1837, 5
    %v2011 = vpop.permute.xlu0 %2010
    %2012 = vrot.lane.b32.xlu0 %v1838, 5
    %v2013 = vpop.permute.xlu0 %2012
    %2014 = vrot.lane.b32.xlu0 %v1839, 5
    %v2015 = vpop.permute.xlu0 %2014
    %2016 = vrot.lane.b32.xlu0 %v1840, 5
    %v2017 = vpop.permute.xlu0 %2016
    %2018 = vrot.lane.b32.xlu0 %v1841, 5
    %v2019 = vpop.permute.xlu0 %2018
    %2020 = vrot.lane.b32.xlu0 %v1842, 5
    %v2021 = vpop.permute.xlu0 %2020
    %2022 = vrot.lane.b32.xlu0 %v1843, 5
    %v2023 = vpop.permute.xlu0 %2022
    %2024 = vrot.lane.b32.xlu0 %v1844, 5
    %v2025 = vpop.permute.xlu0 %2024
    %2026 = vrot.lane.b32.xlu0 %v1845, 5
    %v2027 = vpop.permute.xlu0 %2026
    %2028 = vrot.lane.b32.xlu0 %v1846, 5
    %v2029 = vpop.permute.xlu0 %2028
    %2030 = vrot.lane.b32.xlu0 %v1847, 5
    %v2031 = vpop.permute.xlu0 %2030
    %2032 = vrot.lane.b32.xlu0 %v1848, 5
    %v2033 = vpop.permute.xlu0 %2032
    %2034 = vrot.lane.b32.xlu0 %v1849, 5
    %v2035 = vpop.permute.xlu0 %2034
    %2036 = vrot.lane.b32.xlu0 %v1850, 5
    %v2037 = vpop.permute.xlu0 %2036
    %2038 = vrot.lane.b32.xlu0 %v1851, 5
    %v2039 = vpop.permute.xlu0 %2038
    %2040 = vrot.lane.b32.xlu0 %v1852, 5
    %v2041 = vpop.permute.xlu0 %2040
    %2042 = vrot.lane.b32.xlu0 %v1853, 5
    %v2043 = vpop.permute.xlu0 %2042
    %2044 = vrot.lane.b32.xlu0 %v1854, 5
    %v2045 = vpop.permute.xlu0 %2044
    %2046 = vrot.lane.b32.xlu0 %v1855, 5
    %v2047 = vpop.permute.xlu0 %2046
    %vm2112 = vcmask 48168
    %2113 = vst.msk [vmem:[#allocation2] sm:$0xff] %vm2112, %v1921
    %vm2114 = vcmask 47144
    %2115 = vst.msk [vmem:[#allocation2 + $0x8] sm:$0x7f] %vm2114, %v1923
    %2116 = vst.msk [vmem:[#allocation2 + $0x10] sm:$0xff] %vm2112, %v1925
    %2117 = vst.msk [vmem:[#allocation2 + $0x18] sm:$0x7f] %vm2114, %v1927
    %2118 = vst.msk [vmem:[#allocation2 + $0x20] sm:$0xff] %vm2112, %v1929
    %2119 = vst.msk [vmem:[#allocation2 + $0x28] sm:$0x7f] %vm2114, %v1931
    %2120 = vst.msk [vmem:[#allocation2 + $0x30] sm:$0xff] %vm2112, %v1933
    %2121 = vst.msk [vmem:[#allocation2 + $0x38] sm:$0x7f] %vm2114, %v1935
    %2122 = vst.msk [vmem:[#allocation2 + $0x40] sm:$0xff] %vm2112, %v1937
    %2123 = vst.msk [vmem:[#allocation2 + $0x48] sm:$0x7f] %vm2114, %v1939
    %2124 = vst.msk [vmem:[#allocation2 + $0x50] sm:$0xff] %vm2112, %v1941
    %2125 = vst.msk [vmem:[#allocation2 + $0x58] sm:$0x7f] %vm2114, %v1943
    %2126 = vst.msk [vmem:[#allocation2 + $0x60] sm:$0xff] %vm2112, %v1945
    %2127 = vst.msk [vmem:[#allocation2 + $0x68] sm:$0x7f] %vm2114, %v1947
    %2128 = vst.msk [vmem:[#allocation2 + $0x70] sm:$0xff] %vm2112, %v1949
    %2129 = vst.msk [vmem:[#allocation2 + $0x78] sm:$0x7f] %vm2114, %v1951
    %2130 = vst.msk [vmem:[#allocation2 + $0x80] sm:$0xff] %vm2112, %v1953
    %2131 = vst.msk [vmem:[#allocation2 + $0x88] sm:$0x7f] %vm2114, %v1955
    %2132 = vst.msk [vmem:[#allocation2 + $0x90] sm:$0xff] %vm2112, %v1957
    %2133 = vst.msk [vmem:[#allocation2 + $0x98] sm:$0x7f] %vm2114, %v1959
    %2134 = vst.msk [vmem:[#allocation2 + $0xa0] sm:$0xff] %vm2112, %v1961
    %2135 = vst.msk [vmem:[#allocation2 + $0xa8] sm:$0x7f] %vm2114, %v1963
    %2136 = vst.msk [vmem:[#allocation2 + $0xb0] sm:$0xff] %vm2112, %v1965
    %2137 = vst.msk [vmem:[#allocation2 + $0xb8] sm:$0x7f] %vm2114, %v1967
    %2138 = vst.msk [vmem:[#allocation2 + $0xc0] sm:$0xff] %vm2112, %v1969
    %2139 = vst.msk [vmem:[#allocation2 + $0xc8] sm:$0x7f] %vm2114, %v1971
    %2140 = vst.msk [vmem:[#allocation2 + $0xd0] sm:$0xff] %vm2112, %v1973
    %2141 = vst.msk [vmem:[#allocation2 + $0xd8] sm:$0x7f] %vm2114, %v1975
    %2142 = vst.msk [vmem:[#allocation2 + $0xe0] sm:$0xff] %vm2112, %v1977
    %2143 = vst.msk [vmem:[#allocation2 + $0xe8] sm:$0x7f] %vm2114, %v1979
    %2144 = vst.msk [vmem:[#allocation2 + $0xf0] sm:$0xff] %vm2112, %v1981
    %2145 = vst.msk [vmem:[#allocation2 + $0xf8] sm:$0x7f] %vm2114, %v1983
    %2146 = vst.msk [vmem:[#allocation2 + $0x100] sm:$0xff] %vm2112, %v1985
    %2147 = vst.msk [vmem:[#allocation2 + $0x108] sm:$0x7f] %vm2114, %v1987
    %2148 = vst.msk [vmem:[#allocation2 + $0x110] sm:$0xff] %vm2112, %v1989
    %2149 = vst.msk [vmem:[#allocation2 + $0x118] sm:$0x7f] %vm2114, %v1991
    %2150 = vst.msk [vmem:[#allocation2 + $0x120] sm:$0xff] %vm2112, %v1993
    %2151 = vst.msk [vmem:[#allocation2 + $0x128] sm:$0x7f] %vm2114, %v1995
    %2152 = vst.msk [vmem:[#allocation2 + $0x130] sm:$0xff] %vm2112, %v1997
    %2153 = vst.msk [vmem:[#allocation2 + $0x138] sm:$0x7f] %vm2114, %v1999
    %2154 = vst.msk [vmem:[#allocation2 + $0x140] sm:$0xff] %vm2112, %v2001
    %2155 = vst.msk [vmem:[#allocation2 + $0x148] sm:$0x7f] %vm2114, %v2003
    %2156 = vst.msk [vmem:[#allocation2 + $0x150] sm:$0xff] %vm2112, %v2005
    %2157 = vst.msk [vmem:[#allocation2 + $0x158] sm:$0x7f] %vm2114, %v2007
    %2158 = vst.msk [vmem:[#allocation2 + $0x160] sm:$0xff] %vm2112, %v2009
    %2159 = vst.msk [vmem:[#allocation2 + $0x168] sm:$0x7f] %vm2114, %v2011
    %2160 = vst.msk [vmem:[#allocation2 + $0x170] sm:$0xff] %vm2112, %v2013
    %2161 = vst.msk [vmem:[#allocation2 + $0x178] sm:$0x7f] %vm2114, %v2015
    %2162 = vst.msk [vmem:[#allocation2 + $0x180] sm:$0xff] %vm2112, %v2017
    %2163 = vst.msk [vmem:[#allocation2 + $0x188] sm:$0x7f] %vm2114, %v2019
    %2164 = vst.msk [vmem:[#allocation2 + $0x190] sm:$0xff] %vm2112, %v2021
    %2165 = vst.msk [vmem:[#allocation2 + $0x198] sm:$0x7f] %vm2114, %v2023
    %2166 = vst.msk [vmem:[#allocation2 + $0x1a0] sm:$0xff] %vm2112, %v2025
    %2167 = vst.msk [vmem:[#allocation2 + $0x1a8] sm:$0x7f] %vm2114, %v2027
    %2168 = vst.msk [vmem:[#allocation2 + $0x1b0] sm:$0xff] %vm2112, %v2029
    %2169 = vst.msk [vmem:[#allocation2 + $0x1b8] sm:$0x7f] %vm2114, %v2031
    %2170 = vst.msk [vmem:[#allocation2 + $0x1c0] sm:$0xff] %vm2112, %v2033
    %2171 = vst.msk [vmem:[#allocation2 + $0x1c8] sm:$0x7f] %vm2114, %v2035
    %2172 = vst.msk [vmem:[#allocation2 + $0x1d0] sm:$0xff] %vm2112, %v2037
    %2173 = vst.msk [vmem:[#allocation2 + $0x1d8] sm:$0x7f] %vm2114, %v2039
    %2174 = vst.msk [vmem:[#allocation2 + $0x1e0] sm:$0xff] %vm2112, %v2041
    %2175 = vst.msk [vmem:[#allocation2 + $0x1e8] sm:$0x7f] %vm2114, %v2043
    %2176 = vst.msk [vmem:[#allocation2 + $0x1f0] sm:$0xff] %vm2112, %v2045
    %2177 = vst.msk [vmem:[#allocation2 + $0x1f8] sm:$0x7f] %vm2114, %v2047
    %s2178 = scalar_lea.vmem %s1, 16
    %v2179 = vld [vmem:[%s2178] sm:$0xff]
    %v2180 = vld [vmem:[%s2178 + $0x8] sm:$0x7f]
    %v2181 = vld [vmem:[%s2178 + $0x10] sm:$0xff]
    %v2182 = vld [vmem:[%s2178 + $0x18] sm:$0x7f]
    %v2183 = vld [vmem:[%s2178 + $0x20] sm:$0xff]
    %v2184 = vld [vmem:[%s2178 + $0x28] sm:$0x7f]
    %v2185 = vld [vmem:[%s2178 + $0x30] sm:$0xff]
    %v2186 = vld [vmem:[%s2178 + $0x38] sm:$0x7f]
    %v2187 = vld [vmem:[%s2178 + $0x40] sm:$0xff]
    %v2188 = vld [vmem:[%s2178 + $0x48] sm:$0x7f]
    %v2189 = vld [vmem:[%s2178 + $0x50] sm:$0xff]
    %v2190 = vld [vmem:[%s2178 + $0x58] sm:$0x7f]
    %v2191 = vld [vmem:[%s2178 + $0x60] sm:$0xff]
    %v2192 = vld [vmem:[%s2178 + $0x68] sm:$0x7f]
    %v2193 = vld [vmem:[%s2178 + $0x70] sm:$0xff]
    %v2194 = vld [vmem:[%s2178 + $0x78] sm:$0x7f]
    %v2195 = vld [vmem:[%s2178 + $0x80] sm:$0xff]
    %v2196 = vld [vmem:[%s2178 + $0x88] sm:$0x7f]
    %v2197 = vld [vmem:[%s2178 + $0x90] sm:$0xff]
    %v2198 = vld [vmem:[%s2178 + $0x98] sm:$0x7f]
    %v2199 = vld [vmem:[%s2178 + $0xa0] sm:$0xff]
    %v2200 = vld [vmem:[%s2178 + $0xa8] sm:$0x7f]
    %v2201 = vld [vmem:[%s2178 + $0xb0] sm:$0xff]
    %v2202 = vld [vmem:[%s2178 + $0xb8] sm:$0x7f]
    %v2203 = vld [vmem:[%s2178 + $0xc0] sm:$0xff]
    %v2204 = vld [vmem:[%s2178 + $0xc8] sm:$0x7f]
    %v2205 = vld [vmem:[%s2178 + $0xd0] sm:$0xff]
    %v2206 = vld [vmem:[%s2178 + $0xd8] sm:$0x7f]
    %v2207 = vld [vmem:[%s2178 + $0xe0] sm:$0xff]
    %v2208 = vld [vmem:[%s2178 + $0xe8] sm:$0x7f]
    %v2209 = vld [vmem:[%s2178 + $0x100] sm:$0xff]
    %v2210 = vld [vmem:[%s2178 + $0x108] sm:$0x7f]
    %v2211 = vld [vmem:[%s2178 + $0x110] sm:$0xff]
    %v2212 = vld [vmem:[%s2178 + $0x118] sm:$0x7f]
    %v2213 = vld [vmem:[%s2178 + $0x120] sm:$0xff]
    %v2214 = vld [vmem:[%s2178 + $0x128] sm:$0x7f]
    %v2215 = vld [vmem:[%s2178 + $0x130] sm:$0xff]
    %v2216 = vld [vmem:[%s2178 + $0x138] sm:$0x7f]
    %v2217 = vld [vmem:[%s2178 + $0x140] sm:$0xff]
    %v2218 = vld [vmem:[%s2178 + $0x148] sm:$0x7f]
    %v2219 = vld [vmem:[%s2178 + $0x150] sm:$0xff]
    %v2220 = vld [vmem:[%s2178 + $0x158] sm:$0x7f]
    %v2221 = vld [vmem:[%s2178 + $0x160] sm:$0xff]
    %v2222 = vld [vmem:[%s2178 + $0x168] sm:$0x7f]
    %v2223 = vld [vmem:[%s2178 + $0x170] sm:$0xff]
    %v2224 = vld [vmem:[%s2178 + $0x178] sm:$0x7f]
    %v2225 = vld [vmem:[%s2178 + $0x180] sm:$0xff]
    %v2226 = vld [vmem:[%s2178 + $0x188] sm:$0x7f]
    %v2227 = vld [vmem:[%s2178 + $0x190] sm:$0xff]
    %v2228 = vld [vmem:[%s2178 + $0x198] sm:$0x7f]
    %v2229 = vld [vmem:[%s2178 + $0x1a0] sm:$0xff]
    %v2230 = vld [vmem:[%s2178 + $0x1a8] sm:$0x7f]
    %v2231 = vld [vmem:[%s2178 + $0x1b0] sm:$0xff]
    %v2232 = vld [vmem:[%s2178 + $0x1b8] sm:$0x7f]
    %v2233 = vld [vmem:[%s2178 + $0x1c0] sm:$0xff]
    %v2234 = vld [vmem:[%s2178 + $0x1c8] sm:$0x7f]
    %v2235 = vld [vmem:[%s2178 + $0x1d0] sm:$0xff]
    %v2236 = vld [vmem:[%s2178 + $0x1d8] sm:$0x7f]
    %v2237 = vld [vmem:[%s2178 + $0x1e0] sm:$0xff]
    %v2238 = vld [vmem:[%s2178 + $0x1e8] sm:$0x7f]
    %2299 = vrot.lane.b32.xlu0 %v2179, 6
    %v2300 = vpop.permute.xlu0 %2299
    %2301 = vrot.lane.b32.xlu0 %v2180, 6
    %v2302 = vpop.permute.xlu0 %2301
    %2303 = vrot.lane.b32.xlu0 %v2181, 6
    %v2304 = vpop.permute.xlu0 %2303
    %2305 = vrot.lane.b32.xlu0 %v2182, 6
    %v2306 = vpop.permute.xlu0 %2305
    %2307 = vrot.lane.b32.xlu0 %v2183, 6
    %v2308 = vpop.permute.xlu0 %2307
    %2309 = vrot.lane.b32.xlu0 %v2184, 6
    %v2310 = vpop.permute.xlu0 %2309
    %2311 = vrot.lane.b32.xlu0 %v2185, 6
    %v2312 = vpop.permute.xlu0 %2311
    %2313 = vrot.lane.b32.xlu0 %v2186, 6
    %v2314 = vpop.permute.xlu0 %2313
    %2315 = vrot.lane.b32.xlu0 %v2187, 6
    %v2316 = vpop.permute.xlu0 %2315
    %2317 = vrot.lane.b32.xlu0 %v2188, 6
    %v2318 = vpop.permute.xlu0 %2317
    %2319 = vrot.lane.b32.xlu0 %v2189, 6
    %v2320 = vpop.permute.xlu0 %2319
    %2321 = vrot.lane.b32.xlu0 %v2190, 6
    %v2322 = vpop.permute.xlu0 %2321
    %2323 = vrot.lane.b32.xlu0 %v2191, 6
    %v2324 = vpop.permute.xlu0 %2323
    %2325 = vrot.lane.b32.xlu0 %v2192, 6
    %v2326 = vpop.permute.xlu0 %2325
    %2327 = vrot.lane.b32.xlu0 %v2193, 6
    %v2328 = vpop.permute.xlu0 %2327
    %2329 = vrot.lane.b32.xlu0 %v2194, 6
    %v2330 = vpop.permute.xlu0 %2329
    %2331 = vrot.lane.b32.xlu0 %v2195, 6
    %v2332 = vpop.permute.xlu0 %2331
    %2333 = vrot.lane.b32.xlu0 %v2196, 6
    %v2334 = vpop.permute.xlu0 %2333
    %2335 = vrot.lane.b32.xlu0 %v2197, 6
    %v2336 = vpop.permute.xlu0 %2335
    %2337 = vrot.lane.b32.xlu0 %v2198, 6
    %v2338 = vpop.permute.xlu0 %2337
    %2339 = vrot.lane.b32.xlu0 %v2199, 6
    %v2340 = vpop.permute.xlu0 %2339
    %2341 = vrot.lane.b32.xlu0 %v2200, 6
    %v2342 = vpop.permute.xlu0 %2341
    %2343 = vrot.lane.b32.xlu0 %v2201, 6
    %v2344 = vpop.permute.xlu0 %2343
    %2345 = vrot.lane.b32.xlu0 %v2202, 6
    %v2346 = vpop.permute.xlu0 %2345
    %2347 = vrot.lane.b32.xlu0 %v2203, 6
    %v2348 = vpop.permute.xlu0 %2347
    %2349 = vrot.lane.b32.xlu0 %v2204, 6
    %v2350 = vpop.permute.xlu0 %2349
    %2351 = vrot.lane.b32.xlu0 %v2205, 6
    %v2352 = vpop.permute.xlu0 %2351
    %2353 = vrot.lane.b32.xlu0 %v2206, 6
    %v2354 = vpop.permute.xlu0 %2353
    %2355 = vrot.lane.b32.xlu0 %v2207, 6
    %v2356 = vpop.permute.xlu0 %2355
    %2357 = vrot.lane.b32.xlu0 %v2208, 6
    %v2358 = vpop.permute.xlu0 %2357
    %2359 = vrot.lane.b32.xlu0 %v2209, 6
    %v2360 = vpop.permute.xlu0 %2359
    %2361 = vrot.lane.b32.xlu0 %v2210, 6
    %v2362 = vpop.permute.xlu0 %2361
    %2363 = vrot.lane.b32.xlu0 %v2211, 6
    %v2364 = vpop.permute.xlu0 %2363
    %2365 = vrot.lane.b32.xlu0 %v2212, 6
    %v2366 = vpop.permute.xlu0 %2365
    %2367 = vrot.lane.b32.xlu0 %v2213, 6
    %v2368 = vpop.permute.xlu0 %2367
    %2369 = vrot.lane.b32.xlu0 %v2214, 6
    %v2370 = vpop.permute.xlu0 %2369
    %2371 = vrot.lane.b32.xlu0 %v2215, 6
    %v2372 = vpop.permute.xlu0 %2371
    %2373 = vrot.lane.b32.xlu0 %v2216, 6
    %v2374 = vpop.permute.xlu0 %2373
    %2375 = vrot.lane.b32.xlu0 %v2217, 6
    %v2376 = vpop.permute.xlu0 %2375
    %2377 = vrot.lane.b32.xlu0 %v2218, 6
    %v2378 = vpop.permute.xlu0 %2377
    %2379 = vrot.lane.b32.xlu0 %v2219, 6
    %v2380 = vpop.permute.xlu0 %2379
    %2381 = vrot.lane.b32.xlu0 %v2220, 6
    %v2382 = vpop.permute.xlu0 %2381
    %2383 = vrot.lane.b32.xlu0 %v2221, 6
    %v2384 = vpop.permute.xlu0 %2383
    %2385 = vrot.lane.b32.xlu0 %v2222, 6
    %v2386 = vpop.permute.xlu0 %2385
    %2387 = vrot.lane.b32.xlu0 %v2223, 6
    %v2388 = vpop.permute.xlu0 %2387
    %2389 = vrot.lane.b32.xlu0 %v2224, 6
    %v2390 = vpop.permute.xlu0 %2389
    %2391 = vrot.lane.b32.xlu0 %v2225, 6
    %v2392 = vpop.permute.xlu0 %2391
    %2393 = vrot.lane.b32.xlu0 %v2226, 6
    %v2394 = vpop.permute.xlu0 %2393
    %2395 = vrot.lane.b32.xlu0 %v2227, 6
    %v2396 = vpop.permute.xlu0 %2395
    %2397 = vrot.lane.b32.xlu0 %v2228, 6
    %v2398 = vpop.permute.xlu0 %2397
    %2399 = vrot.lane.b32.xlu0 %v2229, 6
    %v2400 = vpop.permute.xlu0 %2399
    %2401 = vrot.lane.b32.xlu0 %v2230, 6
    %v2402 = vpop.permute.xlu0 %2401
    %2403 = vrot.lane.b32.xlu0 %v2231, 6
    %v2404 = vpop.permute.xlu0 %2403
    %2405 = vrot.lane.b32.xlu0 %v2232, 6
    %v2406 = vpop.permute.xlu0 %2405
    %2407 = vrot.lane.b32.xlu0 %v2233, 6
    %v2408 = vpop.permute.xlu0 %2407
    %2409 = vrot.lane.b32.xlu0 %v2234, 6
    %v2410 = vpop.permute.xlu0 %2409
    %2411 = vrot.lane.b32.xlu0 %v2235, 6
    %v2412 = vpop.permute.xlu0 %2411
    %2413 = vrot.lane.b32.xlu0 %v2236, 6
    %v2414 = vpop.permute.xlu0 %2413
    %2415 = vrot.lane.b32.xlu0 %v2237, 6
    %v2416 = vpop.permute.xlu0 %2415
    %2417 = vrot.lane.b32.xlu0 %v2238, 6
    %v2418 = vpop.permute.xlu0 %2417
    %vm2479 = vcmask 56368
    %2480 = vst.msk [vmem:[#allocation2 + $0x1] sm:$0xff] %vm2479, %v2300
    %vm2481 = vcmask 55344
    %2482 = vst.msk [vmem:[#allocation2 + $0x9] sm:$0x7f] %vm2481, %v2302
    %2483 = vst.msk [vmem:[#allocation2 + $0x11] sm:$0xff] %vm2479, %v2304
    %2484 = vst.msk [vmem:[#allocation2 + $0x19] sm:$0x7f] %vm2481, %v2306
    %2485 = vst.msk [vmem:[#allocation2 + $0x21] sm:$0xff] %vm2479, %v2308
    %2486 = vst.msk [vmem:[#allocation2 + $0x29] sm:$0x7f] %vm2481, %v2310
    %2487 = vst.msk [vmem:[#allocation2 + $0x31] sm:$0xff] %vm2479, %v2312
    %2488 = vst.msk [vmem:[#allocation2 + $0x39] sm:$0x7f] %vm2481, %v2314
    %2489 = vst.msk [vmem:[#allocation2 + $0x41] sm:$0xff] %vm2479, %v2316
    %2490 = vst.msk [vmem:[#allocation2 + $0x49] sm:$0x7f] %vm2481, %v2318
    %2491 = vst.msk [vmem:[#allocation2 + $0x51] sm:$0xff] %vm2479, %v2320
    %2492 = vst.msk [vmem:[#allocation2 + $0x59] sm:$0x7f] %vm2481, %v2322
    %2493 = vst.msk [vmem:[#allocation2 + $0x61] sm:$0xff] %vm2479, %v2324
    %2494 = vst.msk [vmem:[#allocation2 + $0x69] sm:$0x7f] %vm2481, %v2326
    %2495 = vst.msk [vmem:[#allocation2 + $0x71] sm:$0xff] %vm2479, %v2328
    %2496 = vst.msk [vmem:[#allocation2 + $0x79] sm:$0x7f] %vm2481, %v2330
    %2497 = vst.msk [vmem:[#allocation2 + $0x81] sm:$0xff] %vm2479, %v2332
    %2498 = vst.msk [vmem:[#allocation2 + $0x89] sm:$0x7f] %vm2481, %v2334
    %2499 = vst.msk [vmem:[#allocation2 + $0x91] sm:$0xff] %vm2479, %v2336
    %2500 = vst.msk [vmem:[#allocation2 + $0x99] sm:$0x7f] %vm2481, %v2338
    %2501 = vst.msk [vmem:[#allocation2 + $0xa1] sm:$0xff] %vm2479, %v2340
    %2502 = vst.msk [vmem:[#allocation2 + $0xa9] sm:$0x7f] %vm2481, %v2342
    %2503 = vst.msk [vmem:[#allocation2 + $0xb1] sm:$0xff] %vm2479, %v2344
    %2504 = vst.msk [vmem:[#allocation2 + $0xb9] sm:$0x7f] %vm2481, %v2346
    %2505 = vst.msk [vmem:[#allocation2 + $0xc1] sm:$0xff] %vm2479, %v2348
    %2506 = vst.msk [vmem:[#allocation2 + $0xc9] sm:$0x7f] %vm2481, %v2350
    %2507 = vst.msk [vmem:[#allocation2 + $0xd1] sm:$0xff] %vm2479, %v2352
    %2508 = vst.msk [vmem:[#allocation2 + $0xd9] sm:$0x7f] %vm2481, %v2354
    %2509 = vst.msk [vmem:[#allocation2 + $0xe1] sm:$0xff] %vm2479, %v2356
    %2510 = vst.msk [vmem:[#allocation2 + $0xe9] sm:$0x7f] %vm2481, %v2358
    %2511 = vst.msk [vmem:[#allocation2 + $0x101] sm:$0xff] %vm2479, %v2360
    %2512 = vst.msk [vmem:[#allocation2 + $0x109] sm:$0x7f] %vm2481, %v2362
    %2513 = vst.msk [vmem:[#allocation2 + $0x111] sm:$0xff] %vm2479, %v2364
    %2514 = vst.msk [vmem:[#allocation2 + $0x119] sm:$0x7f] %vm2481, %v2366
    %2515 = vst.msk [vmem:[#allocation2 + $0x121] sm:$0xff] %vm2479, %v2368
    %2516 = vst.msk [vmem:[#allocation2 + $0x129] sm:$0x7f] %vm2481, %v2370
    %2517 = vst.msk [vmem:[#allocation2 + $0x131] sm:$0xff] %vm2479, %v2372
    %2518 = vst.msk [vmem:[#allocation2 + $0x139] sm:$0x7f] %vm2481, %v2374
    %2519 = vst.msk [vmem:[#allocation2 + $0x141] sm:$0xff] %vm2479, %v2376
    %2520 = vst.msk [vmem:[#allocation2 + $0x149] sm:$0x7f] %vm2481, %v2378
    %2521 = vst.msk [vmem:[#allocation2 + $0x151] sm:$0xff] %vm2479, %v2380
    %2522 = vst.msk [vmem:[#allocation2 + $0x159] sm:$0x7f] %vm2481, %v2382
    %2523 = vst.msk [vmem:[#allocation2 + $0x161] sm:$0xff] %vm2479, %v2384
    %2524 = vst.msk [vmem:[#allocation2 + $0x169] sm:$0x7f] %vm2481, %v2386
    %2525 = vst.msk [vmem:[#allocation2 + $0x171] sm:$0xff] %vm2479, %v2388
    %2526 = vst.msk [vmem:[#allocation2 + $0x179] sm:$0x7f] %vm2481, %v2390
    %2527 = vst.msk [vmem:[#allocation2 + $0x181] sm:$0xff] %vm2479, %v2392
    %2528 = vst.msk [vmem:[#allocation2 + $0x189] sm:$0x7f] %vm2481, %v2394
    %2529 = vst.msk [vmem:[#allocation2 + $0x191] sm:$0xff] %vm2479, %v2396
    %2530 = vst.msk [vmem:[#allocation2 + $0x199] sm:$0x7f] %vm2481, %v2398
    %2531 = vst.msk [vmem:[#allocation2 + $0x1a1] sm:$0xff] %vm2479, %v2400
    %2532 = vst.msk [vmem:[#allocation2 + $0x1a9] sm:$0x7f] %vm2481, %v2402
    %2533 = vst.msk [vmem:[#allocation2 + $0x1b1] sm:$0xff] %vm2479, %v2404
    %2534 = vst.msk [vmem:[#allocation2 + $0x1b9] sm:$0x7f] %vm2481, %v2406
    %2535 = vst.msk [vmem:[#allocation2 + $0x1c1] sm:$0xff] %vm2479, %v2408
    %2536 = vst.msk [vmem:[#allocation2 + $0x1c9] sm:$0x7f] %vm2481, %v2410
    %2537 = vst.msk [vmem:[#allocation2 + $0x1d1] sm:$0xff] %vm2479, %v2412
    %2538 = vst.msk [vmem:[#allocation2 + $0x1d9] sm:$0x7f] %vm2481, %v2414
    %2539 = vst.msk [vmem:[#allocation2 + $0x1e1] sm:$0xff] %vm2479, %v2416
    %2540 = vst.msk [vmem:[#allocation2 + $0x1e9] sm:$0x7f] %vm2481, %v2418
    %v2541 = vld [vmem:[%s2178] sm:$0xff]
    %v2542 = vld [vmem:[%s2178 + $0x8] sm:$0xff]
    %v2543 = vld [vmem:[%s2178 + $0x10] sm:$0xff]
    %v2544 = vld [vmem:[%s2178 + $0x18] sm:$0xff]
    %v2545 = vld [vmem:[%s2178 + $0x20] sm:$0xff]
    %v2546 = vld [vmem:[%s2178 + $0x28] sm:$0xff]
    %v2547 = vld [vmem:[%s2178 + $0x30] sm:$0xff]
    %v2548 = vld [vmem:[%s2178 + $0x38] sm:$0xff]
    %v2549 = vld [vmem:[%s2178 + $0x40] sm:$0xff]
    %v2550 = vld [vmem:[%s2178 + $0x48] sm:$0xff]
    %v2551 = vld [vmem:[%s2178 + $0x50] sm:$0xff]
    %v2552 = vld [vmem:[%s2178 + $0x58] sm:$0xff]
    %v2553 = vld [vmem:[%s2178 + $0x60] sm:$0xff]
    %v2554 = vld [vmem:[%s2178 + $0x68] sm:$0xff]
    %v2555 = vld [vmem:[%s2178 + $0x70] sm:$0xff]
    %v2556 = vld [vmem:[%s2178 + $0x78] sm:$0xff]
    %v2557 = vld [vmem:[%s2178 + $0x80] sm:$0xff]
    %v2558 = vld [vmem:[%s2178 + $0x88] sm:$0xff]
    %v2559 = vld [vmem:[%s2178 + $0x90] sm:$0xff]
    %v2560 = vld [vmem:[%s2178 + $0x98] sm:$0xff]
    %v2561 = vld [vmem:[%s2178 + $0xa0] sm:$0xff]
    %v2562 = vld [vmem:[%s2178 + $0xa8] sm:$0xff]
    %v2563 = vld [vmem:[%s2178 + $0xb0] sm:$0xff]
    %v2564 = vld [vmem:[%s2178 + $0xb8] sm:$0xff]
    %v2565 = vld [vmem:[%s2178 + $0xc0] sm:$0xff]
    %v2566 = vld [vmem:[%s2178 + $0xc8] sm:$0xff]
    %v2567 = vld [vmem:[%s2178 + $0xd0] sm:$0xff]
    %v2568 = vld [vmem:[%s2178 + $0xd8] sm:$0xff]
    %v2569 = vld [vmem:[%s2178 + $0xe0] sm:$0xff]
    %v2570 = vld [vmem:[%s2178 + $0xe8] sm:$0xff]
    %v2571 = vld [vmem:[%s2178 + $0x100] sm:$0xff]
    %v2572 = vld [vmem:[%s2178 + $0x108] sm:$0xff]
    %v2573 = vld [vmem:[%s2178 + $0x110] sm:$0xff]
    %v2574 = vld [vmem:[%s2178 + $0x118] sm:$0xff]
    %v2575 = vld [vmem:[%s2178 + $0x120] sm:$0xff]
    %v2576 = vld [vmem:[%s2178 + $0x128] sm:$0xff]
    %v2577 = vld [vmem:[%s2178 + $0x130] sm:$0xff]
    %v2578 = vld [vmem:[%s2178 + $0x138] sm:$0xff]
    %v2579 = vld [vmem:[%s2178 + $0x140] sm:$0xff]
    %v2580 = vld [vmem:[%s2178 + $0x148] sm:$0xff]
    %v2581 = vld [vmem:[%s2178 + $0x150] sm:$0xff]
    %v2582 = vld [vmem:[%s2178 + $0x158] sm:$0xff]
    %v2583 = vld [vmem:[%s2178 + $0x160] sm:$0xff]
    %v2584 = vld [vmem:[%s2178 + $0x168] sm:$0xff]
    %v2585 = vld [vmem:[%s2178 + $0x170] sm:$0xff]
    %v2586 = vld [vmem:[%s2178 + $0x178] sm:$0xff]
    %v2587 = vld [vmem:[%s2178 + $0x180] sm:$0xff]
    %v2588 = vld [vmem:[%s2178 + $0x188] sm:$0xff]
    %v2589 = vld [vmem:[%s2178 + $0x190] sm:$0xff]
    %v2590 = vld [vmem:[%s2178 + $0x198] sm:$0xff]
    %v2591 = vld [vmem:[%s2178 + $0x1a0] sm:$0xff]
    %v2592 = vld [vmem:[%s2178 + $0x1a8] sm:$0xff]
    %v2593 = vld [vmem:[%s2178 + $0x1b0] sm:$0xff]
    %v2594 = vld [vmem:[%s2178 + $0x1b8] sm:$0xff]
    %v2595 = vld [vmem:[%s2178 + $0x1c0] sm:$0xff]
    %v2596 = vld [vmem:[%s2178 + $0x1c8] sm:$0xff]
    %v2597 = vld [vmem:[%s2178 + $0x1d0] sm:$0xff]
    %v2598 = vld [vmem:[%s2178 + $0x1d8] sm:$0xff]
    %v2599 = vld [vmem:[%s2178 + $0x1e0] sm:$0xff]
    %v2600 = vld [vmem:[%s2178 + $0x1e8] sm:$0xff]
    %2661 = vrot.lane.b32.xlu0 %v2541, 7
    %v2662 = vpop.permute.xlu0 %2661
    %2663 = vrot.lane.b32.xlu0 %v2542, 7
    %v2664 = vpop.permute.xlu0 %2663
    %2665 = vrot.lane.b32.xlu0 %v2543, 7
    %v2666 = vpop.permute.xlu0 %2665
    %2667 = vrot.lane.b32.xlu0 %v2544, 7
    %v2668 = vpop.permute.xlu0 %2667
    %2669 = vrot.lane.b32.xlu0 %v2545, 7
    %v2670 = vpop.permute.xlu0 %2669
    %2671 = vrot.lane.b32.xlu0 %v2546, 7
    %v2672 = vpop.permute.xlu0 %2671
    %2673 = vrot.lane.b32.xlu0 %v2547, 7
    %v2674 = vpop.permute.xlu0 %2673
    %2675 = vrot.lane.b32.xlu0 %v2548, 7
    %v2676 = vpop.permute.xlu0 %2675
    %2677 = vrot.lane.b32.xlu0 %v2549, 7
    %v2678 = vpop.permute.xlu0 %2677
    %2679 = vrot.lane.b32.xlu0 %v2550, 7
    %v2680 = vpop.permute.xlu0 %2679
    %2681 = vrot.lane.b32.xlu0 %v2551, 7
    %v2682 = vpop.permute.xlu0 %2681
    %2683 = vrot.lane.b32.xlu0 %v2552, 7
    %v2684 = vpop.permute.xlu0 %2683
    %2685 = vrot.lane.b32.xlu0 %v2553, 7
    %v2686 = vpop.permute.xlu0 %2685
    %2687 = vrot.lane.b32.xlu0 %v2554, 7
    %v2688 = vpop.permute.xlu0 %2687
    %2689 = vrot.lane.b32.xlu0 %v2555, 7
    %v2690 = vpop.permute.xlu0 %2689
    %2691 = vrot.lane.b32.xlu0 %v2556, 7
    %v2692 = vpop.permute.xlu0 %2691
    %2693 = vrot.lane.b32.xlu0 %v2557, 7
    %v2694 = vpop.permute.xlu0 %2693
    %2695 = vrot.lane.b32.xlu0 %v2558, 7
    %v2696 = vpop.permute.xlu0 %2695
    %2697 = vrot.lane.b32.xlu0 %v2559, 7
    %v2698 = vpop.permute.xlu0 %2697
    %2699 = vrot.lane.b32.xlu0 %v2560, 7
    %v2700 = vpop.permute.xlu0 %2699
    %2701 = vrot.lane.b32.xlu0 %v2561, 7
    %v2702 = vpop.permute.xlu0 %2701
    %2703 = vrot.lane.b32.xlu0 %v2562, 7
    %v2704 = vpop.permute.xlu0 %2703
    %2705 = vrot.lane.b32.xlu0 %v2563, 7
    %v2706 = vpop.permute.xlu0 %2705
    %2707 = vrot.lane.b32.xlu0 %v2564, 7
    %v2708 = vpop.permute.xlu0 %2707
    %2709 = vrot.lane.b32.xlu0 %v2565, 7
    %v2710 = vpop.permute.xlu0 %2709
    %2711 = vrot.lane.b32.xlu0 %v2566, 7
    %v2712 = vpop.permute.xlu0 %2711
    %2713 = vrot.lane.b32.xlu0 %v2567, 7
    %v2714 = vpop.permute.xlu0 %2713
    %2715 = vrot.lane.b32.xlu0 %v2568, 7
    %v2716 = vpop.permute.xlu0 %2715
    %2717 = vrot.lane.b32.xlu0 %v2569, 7
    %v2718 = vpop.permute.xlu0 %2717
    %2719 = vrot.lane.b32.xlu0 %v2570, 7
    %v2720 = vpop.permute.xlu0 %2719
    %2721 = vrot.lane.b32.xlu0 %v2571, 7
    %v2722 = vpop.permute.xlu0 %2721
    %2723 = vrot.lane.b32.xlu0 %v2572, 7
    %v2724 = vpop.permute.xlu0 %2723
    %2725 = vrot.lane.b32.xlu0 %v2573, 7
    %v2726 = vpop.permute.xlu0 %2725
    %2727 = vrot.lane.b32.xlu0 %v2574, 7
    %v2728 = vpop.permute.xlu0 %2727
    %2729 = vrot.lane.b32.xlu0 %v2575, 7
    %v2730 = vpop.permute.xlu0 %2729
    %2731 = vrot.lane.b32.xlu0 %v2576, 7
    %v2732 = vpop.permute.xlu0 %2731
    %2733 = vrot.lane.b32.xlu0 %v2577, 7
    %v2734 = vpop.permute.xlu0 %2733
    %2735 = vrot.lane.b32.xlu0 %v2578, 7
    %v2736 = vpop.permute.xlu0 %2735
    %2737 = vrot.lane.b32.xlu0 %v2579, 7
    %v2738 = vpop.permute.xlu0 %2737
    %2739 = vrot.lane.b32.xlu0 %v2580, 7
    %v2740 = vpop.permute.xlu0 %2739
    %2741 = vrot.lane.b32.xlu0 %v2581, 7
    %v2742 = vpop.permute.xlu0 %2741
    %2743 = vrot.lane.b32.xlu0 %v2582, 7
    %v2744 = vpop.permute.xlu0 %2743
    %2745 = vrot.lane.b32.xlu0 %v2583, 7
    %v2746 = vpop.permute.xlu0 %2745
    %2747 = vrot.lane.b32.xlu0 %v2584, 7
    %v2748 = vpop.permute.xlu0 %2747
    %2749 = vrot.lane.b32.xlu0 %v2585, 7
    %v2750 = vpop.permute.xlu0 %2749
    %2751 = vrot.lane.b32.xlu0 %v2586, 7
    %v2752 = vpop.permute.xlu0 %2751
    %2753 = vrot.lane.b32.xlu0 %v2587, 7
    %v2754 = vpop.permute.xlu0 %2753
    %2755 = vrot.lane.b32.xlu0 %v2588, 7
    %v2756 = vpop.permute.xlu0 %2755
    %2757 = vrot.lane.b32.xlu0 %v2589, 7
    %v2758 = vpop.permute.xlu0 %2757
    %2759 = vrot.lane.b32.xlu0 %v2590, 7
    %v2760 = vpop.permute.xlu0 %2759
    %2761 = vrot.lane.b32.xlu0 %v2591, 7
    %v2762 = vpop.permute.xlu0 %2761
    %2763 = vrot.lane.b32.xlu0 %v2592, 7
    %v2764 = vpop.permute.xlu0 %2763
    %2765 = vrot.lane.b32.xlu0 %v2593, 7
    %v2766 = vpop.permute.xlu0 %2765
    %2767 = vrot.lane.b32.xlu0 %v2594, 7
    %v2768 = vpop.permute.xlu0 %2767
    %2769 = vrot.lane.b32.xlu0 %v2595, 7
    %v2770 = vpop.permute.xlu0 %2769
    %2771 = vrot.lane.b32.xlu0 %v2596, 7
    %v2772 = vpop.permute.xlu0 %2771
    %2773 = vrot.lane.b32.xlu0 %v2597, 7
    %v2774 = vpop.permute.xlu0 %2773
    %2775 = vrot.lane.b32.xlu0 %v2598, 7
    %v2776 = vpop.permute.xlu0 %2775
    %2777 = vrot.lane.b32.xlu0 %v2599, 7
    %v2778 = vpop.permute.xlu0 %2777
    %2779 = vrot.lane.b32.xlu0 %v2600, 7
    %v2780 = vpop.permute.xlu0 %2779
    %vm2841 = vcmask 64568
    %2842 = vst.msk [vmem:[#allocation2] sm:$0xff] %vm2841, %v2662
    %2843 = vst.msk [vmem:[#allocation2 + $0x8] sm:$0xff] %vm2841, %v2664
    %2844 = vst.msk [vmem:[#allocation2 + $0x10] sm:$0xff] %vm2841, %v2666
    %2845 = vst.msk [vmem:[#allocation2 + $0x18] sm:$0xff] %vm2841, %v2668
    %2846 = vst.msk [vmem:[#allocation2 + $0x20] sm:$0xff] %vm2841, %v2670
    %2847 = vst.msk [vmem:[#allocation2 + $0x28] sm:$0xff] %vm2841, %v2672
    %2848 = vst.msk [vmem:[#allocation2 + $0x30] sm:$0xff] %vm2841, %v2674
    %2849 = vst.msk [vmem:[#allocation2 + $0x38] sm:$0xff] %vm2841, %v2676
    %2850 = vst.msk [vmem:[#allocation2 + $0x40] sm:$0xff] %vm2841, %v2678
    %2851 = vst.msk [vmem:[#allocation2 + $0x48] sm:$0xff] %vm2841, %v2680
    %2852 = vst.msk [vmem:[#allocation2 + $0x50] sm:$0xff] %vm2841, %v2682
    %2853 = vst.msk [vmem:[#allocation2 + $0x58] sm:$0xff] %vm2841, %v2684
    %2854 = vst.msk [vmem:[#allocation2 + $0x60] sm:$0xff] %vm2841, %v2686
    %2855 = vst.msk [vmem:[#allocation2 + $0x68] sm:$0xff] %vm2841, %v2688
    %2856 = vst.msk [vmem:[#allocation2 + $0x70] sm:$0xff] %vm2841, %v2690
    %2857 = vst.msk [vmem:[#allocation2 + $0x78] sm:$0xff] %vm2841, %v2692
    %2858 = vst.msk [vmem:[#allocation2 + $0x80] sm:$0xff] %vm2841, %v2694
    %2859 = vst.msk [vmem:[#allocation2 + $0x88] sm:$0xff] %vm2841, %v2696
    %2860 = vst.msk [vmem:[#allocation2 + $0x90] sm:$0xff] %vm2841, %v2698
    %2861 = vst.msk [vmem:[#allocation2 + $0x98] sm:$0xff] %vm2841, %v2700
    %2862 = vst.msk [vmem:[#allocation2 + $0xa0] sm:$0xff] %vm2841, %v2702
    %2863 = vst.msk [vmem:[#allocation2 + $0xa8] sm:$0xff] %vm2841, %v2704
    %2864 = vst.msk [vmem:[#allocation2 + $0xb0] sm:$0xff] %vm2841, %v2706
    %2865 = vst.msk [vmem:[#allocation2 + $0xb8] sm:$0xff] %vm2841, %v2708
    %2866 = vst.msk [vmem:[#allocation2 + $0xc0] sm:$0xff] %vm2841, %v2710
    %2867 = vst.msk [vmem:[#allocation2 + $0xc8] sm:$0xff] %vm2841, %v2712
    %2868 = vst.msk [vmem:[#allocation2 + $0xd0] sm:$0xff] %vm2841, %v2714
    %2869 = vst.msk [vmem:[#allocation2 + $0xd8] sm:$0xff] %vm2841, %v2716
    %2870 = vst.msk [vmem:[#allocation2 + $0xe0] sm:$0xff] %vm2841, %v2718
    %2871 = vst.msk [vmem:[#allocation2 + $0xe8] sm:$0xff] %vm2841, %v2720
    %2872 = vst.msk [vmem:[#allocation2 + $0x100] sm:$0xff] %vm2841, %v2722
    %2873 = vst.msk [vmem:[#allocation2 + $0x108] sm:$0xff] %vm2841, %v2724
    %2874 = vst.msk [vmem:[#allocation2 + $0x110] sm:$0xff] %vm2841, %v2726
    %2875 = vst.msk [vmem:[#allocation2 + $0x118] sm:$0xff] %vm2841, %v2728
    %2876 = vst.msk [vmem:[#allocation2 + $0x120] sm:$0xff] %vm2841, %v2730
    %2877 = vst.msk [vmem:[#allocation2 + $0x128] sm:$0xff] %vm2841, %v2732
    %2878 = vst.msk [vmem:[#allocation2 + $0x130] sm:$0xff] %vm2841, %v2734
    %2879 = vst.msk [vmem:[#allocation2 + $0x138] sm:$0xff] %vm2841, %v2736
    %2880 = vst.msk [vmem:[#allocation2 + $0x140] sm:$0xff] %vm2841, %v2738
    %2881 = vst.msk [vmem:[#allocation2 + $0x148] sm:$0xff] %vm2841, %v2740
    %2882 = vst.msk [vmem:[#allocation2 + $0x150] sm:$0xff] %vm2841, %v2742
    %2883 = vst.msk [vmem:[#allocation2 + $0x158] sm:$0xff] %vm2841, %v2744
    %2884 = vst.msk [vmem:[#allocation2 + $0x160] sm:$0xff] %vm2841, %v2746
    %2885 = vst.msk [vmem:[#allocation2 + $0x168] sm:$0xff] %vm2841, %v2748
    %2886 = vst.msk [vmem:[#allocation2 + $0x170] sm:$0xff] %vm2841, %v2750
    %2887 = vst.msk [vmem:[#allocation2 + $0x178] sm:$0xff] %vm2841, %v2752
    %2888 = vst.msk [vmem:[#allocation2 + $0x180] sm:$0xff] %vm2841, %v2754
    %2889 = vst.msk [vmem:[#allocation2 + $0x188] sm:$0xff] %vm2841, %v2756
    %2890 = vst.msk [vmem:[#allocation2 + $0x190] sm:$0xff] %vm2841, %v2758
    %2891 = vst.msk [vmem:[#allocation2 + $0x198] sm:$0xff] %vm2841, %v2760
    %2892 = vst.msk [vmem:[#allocation2 + $0x1a0] sm:$0xff] %vm2841, %v2762
    %2893 = vst.msk [vmem:[#allocation2 + $0x1a8] sm:$0xff] %vm2841, %v2764
    %2894 = vst.msk [vmem:[#allocation2 + $0x1b0] sm:$0xff] %vm2841, %v2766
    %2895 = vst.msk [vmem:[#allocation2 + $0x1b8] sm:$0xff] %vm2841, %v2768
    %2896 = vst.msk [vmem:[#allocation2 + $0x1c0] sm:$0xff] %vm2841, %v2770
    %2897 = vst.msk [vmem:[#allocation2 + $0x1c8] sm:$0xff] %vm2841, %v2772
    %2898 = vst.msk [vmem:[#allocation2 + $0x1d0] sm:$0xff] %vm2841, %v2774
    %2899 = vst.msk [vmem:[#allocation2 + $0x1d8] sm:$0xff] %vm2841, %v2776
    %2900 = vst.msk [vmem:[#allocation2 + $0x1e0] sm:$0xff] %vm2841, %v2778
    %2901 = vst.msk [vmem:[#allocation2 + $0x1e8] sm:$0xff] %vm2841, %v2780
    %v2902 = vld [vmem:[%s2178 + $0x1] sm:$0xff]
    %v2903 = vld [vmem:[%s2178 + $0x9] sm:$0x7f]
    %v2904 = vld [vmem:[%s2178 + $0x11] sm:$0xff]
    %v2905 = vld [vmem:[%s2178 + $0x19] sm:$0x7f]
    %v2906 = vld [vmem:[%s2178 + $0x21] sm:$0xff]
    %v2907 = vld [vmem:[%s2178 + $0x29] sm:$0x7f]
    %v2908 = vld [vmem:[%s2178 + $0x31] sm:$0xff]
    %v2909 = vld [vmem:[%s2178 + $0x39] sm:$0x7f]
    %v2910 = vld [vmem:[%s2178 + $0x41] sm:$0xff]
    %v2911 = vld [vmem:[%s2178 + $0x49] sm:$0x7f]
    %v2912 = vld [vmem:[%s2178 + $0x51] sm:$0xff]
    %v2913 = vld [vmem:[%s2178 + $0x59] sm:$0x7f]
    %v2914 = vld [vmem:[%s2178 + $0x61] sm:$0xff]
    %v2915 = vld [vmem:[%s2178 + $0x69] sm:$0x7f]
    %v2916 = vld [vmem:[%s2178 + $0x71] sm:$0xff]
    %v2917 = vld [vmem:[%s2178 + $0x79] sm:$0x7f]
    %v2918 = vld [vmem:[%s2178 + $0x81] sm:$0xff]
    %v2919 = vld [vmem:[%s2178 + $0x89] sm:$0x7f]
    %v2920 = vld [vmem:[%s2178 + $0x91] sm:$0xff]
    %v2921 = vld [vmem:[%s2178 + $0x99] sm:$0x7f]
    %v2922 = vld [vmem:[%s2178 + $0xa1] sm:$0xff]
    %v2923 = vld [vmem:[%s2178 + $0xa9] sm:$0x7f]
    %v2924 = vld [vmem:[%s2178 + $0xb1] sm:$0xff]
    %v2925 = vld [vmem:[%s2178 + $0xb9] sm:$0x7f]
    %v2926 = vld [vmem:[%s2178 + $0xc1] sm:$0xff]
    %v2927 = vld [vmem:[%s2178 + $0xc9] sm:$0x7f]
    %v2928 = vld [vmem:[%s2178 + $0xd1] sm:$0xff]
    %v2929 = vld [vmem:[%s2178 + $0xd9] sm:$0x7f]
    %v2930 = vld [vmem:[%s2178 + $0xe1] sm:$0xff]
    %v2931 = vld [vmem:[%s2178 + $0xe9] sm:$0x7f]
    %v2932 = vld [vmem:[%s2178 + $0x101] sm:$0xff]
    %v2933 = vld [vmem:[%s2178 + $0x109] sm:$0x7f]
    %v2934 = vld [vmem:[%s2178 + $0x111] sm:$0xff]
    %v2935 = vld [vmem:[%s2178 + $0x119] sm:$0x7f]
    %v2936 = vld [vmem:[%s2178 + $0x121] sm:$0xff]
    %v2937 = vld [vmem:[%s2178 + $0x129] sm:$0x7f]
    %v2938 = vld [vmem:[%s2178 + $0x131] sm:$0xff]
    %v2939 = vld [vmem:[%s2178 + $0x139] sm:$0x7f]
    %v2940 = vld [vmem:[%s2178 + $0x141] sm:$0xff]
    %v2941 = vld [vmem:[%s2178 + $0x149] sm:$0x7f]
    %v2942 = vld [vmem:[%s2178 + $0x151] sm:$0xff]
    %v2943 = vld [vmem:[%s2178 + $0x159] sm:$0x7f]
    %v2944 = vld [vmem:[%s2178 + $0x161] sm:$0xff]
    %v2945 = vld [vmem:[%s2178 + $0x169] sm:$0x7f]
    %v2946 = vld [vmem:[%s2178 + $0x171] sm:$0xff]
    %v2947 = vld [vmem:[%s2178 + $0x179] sm:$0x7f]
    %v2948 = vld [vmem:[%s2178 + $0x181] sm:$0xff]
    %v2949 = vld [vmem:[%s2178 + $0x189] sm:$0x7f]
    %v2950 = vld [vmem:[%s2178 + $0x191] sm:$0xff]
    %v2951 = vld [vmem:[%s2178 + $0x199] sm:$0x7f]
    %v2952 = vld [vmem:[%s2178 + $0x1a1] sm:$0xff]
    %v2953 = vld [vmem:[%s2178 + $0x1a9] sm:$0x7f]
    %v2954 = vld [vmem:[%s2178 + $0x1b1] sm:$0xff]
    %v2955 = vld [vmem:[%s2178 + $0x1b9] sm:$0x7f]
    %v2956 = vld [vmem:[%s2178 + $0x1c1] sm:$0xff]
    %v2957 = vld [vmem:[%s2178 + $0x1c9] sm:$0x7f]
    %v2958 = vld [vmem:[%s2178 + $0x1d1] sm:$0xff]
    %v2959 = vld [vmem:[%s2178 + $0x1d9] sm:$0x7f]
    %v2960 = vld [vmem:[%s2178 + $0x1e1] sm:$0xff]
    %v2961 = vld [vmem:[%s2178 + $0x1e9] sm:$0x7f]
    %3022 = vrot.lane.b32.xlu0 %v2902, 8
    %v3023 = vpop.permute.xlu0 %3022
    %3024 = vrot.lane.b32.xlu0 %v2903, 8
    %v3025 = vpop.permute.xlu0 %3024
    %3026 = vrot.lane.b32.xlu0 %v2904, 8
    %v3027 = vpop.permute.xlu0 %3026
    %3028 = vrot.lane.b32.xlu0 %v2905, 8
    %v3029 = vpop.permute.xlu0 %3028
    %3030 = vrot.lane.b32.xlu0 %v2906, 8
    %v3031 = vpop.permute.xlu0 %3030
    %3032 = vrot.lane.b32.xlu0 %v2907, 8
    %v3033 = vpop.permute.xlu0 %3032
    %3034 = vrot.lane.b32.xlu0 %v2908, 8
    %v3035 = vpop.permute.xlu0 %3034
    %3036 = vrot.lane.b32.xlu0 %v2909, 8
    %v3037 = vpop.permute.xlu0 %3036
    %3038 = vrot.lane.b32.xlu0 %v2910, 8
    %v3039 = vpop.permute.xlu0 %3038
    %3040 = vrot.lane.b32.xlu0 %v2911, 8
    %v3041 = vpop.permute.xlu0 %3040
    %3042 = vrot.lane.b32.xlu0 %v2912, 8
    %v3043 = vpop.permute.xlu0 %3042
    %3044 = vrot.lane.b32.xlu0 %v2913, 8
    %v3045 = vpop.permute.xlu0 %3044
    %3046 = vrot.lane.b32.xlu0 %v2914, 8
    %v3047 = vpop.permute.xlu0 %3046
    %3048 = vrot.lane.b32.xlu0 %v2915, 8
    %v3049 = vpop.permute.xlu0 %3048
    %3050 = vrot.lane.b32.xlu0 %v2916, 8
    %v3051 = vpop.permute.xlu0 %3050
    %3052 = vrot.lane.b32.xlu0 %v2917, 8
    %v3053 = vpop.permute.xlu0 %3052
    %3054 = vrot.lane.b32.xlu0 %v2918, 8
    %v3055 = vpop.permute.xlu0 %3054
    %3056 = vrot.lane.b32.xlu0 %v2919, 8
    %v3057 = vpop.permute.xlu0 %3056
    %3058 = vrot.lane.b32.xlu0 %v2920, 8
    %v3059 = vpop.permute.xlu0 %3058
    %3060 = vrot.lane.b32.xlu0 %v2921, 8
    %v3061 = vpop.permute.xlu0 %3060
    %3062 = vrot.lane.b32.xlu0 %v2922, 8
    %v3063 = vpop.permute.xlu0 %3062
    %3064 = vrot.lane.b32.xlu0 %v2923, 8
    %v3065 = vpop.permute.xlu0 %3064
    %3066 = vrot.lane.b32.xlu0 %v2924, 8
    %v3067 = vpop.permute.xlu0 %3066
    %3068 = vrot.lane.b32.xlu0 %v2925, 8
    %v3069 = vpop.permute.xlu0 %3068
    %3070 = vrot.lane.b32.xlu0 %v2926, 8
    %v3071 = vpop.permute.xlu0 %3070
    %3072 = vrot.lane.b32.xlu0 %v2927, 8
    %v3073 = vpop.permute.xlu0 %3072
    %3074 = vrot.lane.b32.xlu0 %v2928, 8
    %v3075 = vpop.permute.xlu0 %3074
    %3076 = vrot.lane.b32.xlu0 %v2929, 8
    %v3077 = vpop.permute.xlu0 %3076
    %3078 = vrot.lane.b32.xlu0 %v2930, 8
    %v3079 = vpop.permute.xlu0 %3078
    %3080 = vrot.lane.b32.xlu0 %v2931, 8
    %v3081 = vpop.permute.xlu0 %3080
    %3082 = vrot.lane.b32.xlu0 %v2932, 8
    %v3083 = vpop.permute.xlu0 %3082
    %3084 = vrot.lane.b32.xlu0 %v2933, 8
    %v3085 = vpop.permute.xlu0 %3084
    %3086 = vrot.lane.b32.xlu0 %v2934, 8
    %v3087 = vpop.permute.xlu0 %3086
    %3088 = vrot.lane.b32.xlu0 %v2935, 8
    %v3089 = vpop.permute.xlu0 %3088
    %3090 = vrot.lane.b32.xlu0 %v2936, 8
    %v3091 = vpop.permute.xlu0 %3090
    %3092 = vrot.lane.b32.xlu0 %v2937, 8
    %v3093 = vpop.permute.xlu0 %3092
    %3094 = vrot.lane.b32.xlu0 %v2938, 8
    %v3095 = vpop.permute.xlu0 %3094
    %3096 = vrot.lane.b32.xlu0 %v2939, 8
    %v3097 = vpop.permute.xlu0 %3096
    %3098 = vrot.lane.b32.xlu0 %v2940, 8
    %v3099 = vpop.permute.xlu0 %3098
    %3100 = vrot.lane.b32.xlu0 %v2941, 8
    %v3101 = vpop.permute.xlu0 %3100
    %3102 = vrot.lane.b32.xlu0 %v2942, 8
    %v3103 = vpop.permute.xlu0 %3102
    %3104 = vrot.lane.b32.xlu0 %v2943, 8
    %v3105 = vpop.permute.xlu0 %3104
    %3106 = vrot.lane.b32.xlu0 %v2944, 8
    %v3107 = vpop.permute.xlu0 %3106
    %3108 = vrot.lane.b32.xlu0 %v2945, 8
    %v3109 = vpop.permute.xlu0 %3108
    %3110 = vrot.lane.b32.xlu0 %v2946, 8
    %v3111 = vpop.permute.xlu0 %3110
    %3112 = vrot.lane.b32.xlu0 %v2947, 8
    %v3113 = vpop.permute.xlu0 %3112
    %3114 = vrot.lane.b32.xlu0 %v2948, 8
    %v3115 = vpop.permute.xlu0 %3114
    %3116 = vrot.lane.b32.xlu0 %v2949, 8
    %v3117 = vpop.permute.xlu0 %3116
    %3118 = vrot.lane.b32.xlu0 %v2950, 8
    %v3119 = vpop.permute.xlu0 %3118
    %3120 = vrot.lane.b32.xlu0 %v2951, 8
    %v3121 = vpop.permute.xlu0 %3120
    %3122 = vrot.lane.b32.xlu0 %v2952, 8
    %v3123 = vpop.permute.xlu0 %3122
    %3124 = vrot.lane.b32.xlu0 %v2953, 8
    %v3125 = vpop.permute.xlu0 %3124
    %3126 = vrot.lane.b32.xlu0 %v2954, 8
    %v3127 = vpop.permute.xlu0 %3126
    %3128 = vrot.lane.b32.xlu0 %v2955, 8
    %v3129 = vpop.permute.xlu0 %3128
    %3130 = vrot.lane.b32.xlu0 %v2956, 8
    %v3131 = vpop.permute.xlu0 %3130
    %3132 = vrot.lane.b32.xlu0 %v2957, 8
    %v3133 = vpop.permute.xlu0 %3132
    %3134 = vrot.lane.b32.xlu0 %v2958, 8
    %v3135 = vpop.permute.xlu0 %3134
    %3136 = vrot.lane.b32.xlu0 %v2959, 8
    %v3137 = vpop.permute.xlu0 %3136
    %3138 = vrot.lane.b32.xlu0 %v2960, 8
    %v3139 = vpop.permute.xlu0 %3138
    %3140 = vrot.lane.b32.xlu0 %v2961, 8
    %v3141 = vpop.permute.xlu0 %3140
    %vm3202 = vcmask 72768
    %3203 = vst.msk [vmem:[#allocation2] sm:$0xff] %vm3202, %v3023
    %vm3204 = vcmask 71744
    %3205 = vst.msk [vmem:[#allocation2 + $0x8] sm:$0x7f] %vm3204, %v3025
    %3206 = vst.msk [vmem:[#allocation2 + $0x10] sm:$0xff] %vm3202, %v3027
    %3207 = vst.msk [vmem:[#allocation2 + $0x18] sm:$0x7f] %vm3204, %v3029
    %3208 = vst.msk [vmem:[#allocation2 + $0x20] sm:$0xff] %vm3202, %v3031
    %3209 = vst.msk [vmem:[#allocation2 + $0x28] sm:$0x7f] %vm3204, %v3033
    %3210 = vst.msk [vmem:[#allocation2 + $0x30] sm:$0xff] %vm3202, %v3035
    %3211 = vst.msk [vmem:[#allocation2 + $0x38] sm:$0x7f] %vm3204, %v3037
    %3212 = vst.msk [vmem:[#allocation2 + $0x40] sm:$0xff] %vm3202, %v3039
    %3213 = vst.msk [vmem:[#allocation2 + $0x48] sm:$0x7f] %vm3204, %v3041
    %3214 = vst.msk [vmem:[#allocation2 + $0x50] sm:$0xff] %vm3202, %v3043
    %3215 = vst.msk [vmem:[#allocation2 + $0x58] sm:$0x7f] %vm3204, %v3045
    %3216 = vst.msk [vmem:[#allocation2 + $0x60] sm:$0xff] %vm3202, %v3047
    %3217 = vst.msk [vmem:[#allocation2 + $0x68] sm:$0x7f] %vm3204, %v3049
    %3218 = vst.msk [vmem:[#allocation2 + $0x70] sm:$0xff] %vm3202, %v3051
    %3219 = vst.msk [vmem:[#allocation2 + $0x78] sm:$0x7f] %vm3204, %v3053
    %3220 = vst.msk [vmem:[#allocation2 + $0x80] sm:$0xff] %vm3202, %v3055
    %3221 = vst.msk [vmem:[#allocation2 + $0x88] sm:$0x7f] %vm3204, %v3057
    %3222 = vst.msk [vmem:[#allocation2 + $0x90] sm:$0xff] %vm3202, %v3059
    %3223 = vst.msk [vmem:[#allocation2 + $0x98] sm:$0x7f] %vm3204, %v3061
    %3224 = vst.msk [vmem:[#allocation2 + $0xa0] sm:$0xff] %vm3202, %v3063
    %3225 = vst.msk [vmem:[#allocation2 + $0xa8] sm:$0x7f] %vm3204, %v3065
    %3226 = vst.msk [vmem:[#allocation2 + $0xb0] sm:$0xff] %vm3202, %v3067
    %3227 = vst.msk [vmem:[#allocation2 + $0xb8] sm:$0x7f] %vm3204, %v3069
    %3228 = vst.msk [vmem:[#allocation2 + $0xc0] sm:$0xff] %vm3202, %v3071
    %3229 = vst.msk [vmem:[#allocation2 + $0xc8] sm:$0x7f] %vm3204, %v3073
    %3230 = vst.msk [vmem:[#allocation2 + $0xd0] sm:$0xff] %vm3202, %v3075
    %3231 = vst.msk [vmem:[#allocation2 + $0xd8] sm:$0x7f] %vm3204, %v3077
    %3232 = vst.msk [vmem:[#allocation2 + $0xe0] sm:$0xff] %vm3202, %v3079
    %3233 = vst.msk [vmem:[#allocation2 + $0xe8] sm:$0x7f] %vm3204, %v3081
    %3234 = vst.msk [vmem:[#allocation2 + $0x100] sm:$0xff] %vm3202, %v3083
    %3235 = vst.msk [vmem:[#allocation2 + $0x108] sm:$0x7f] %vm3204, %v3085
    %3236 = vst.msk [vmem:[#allocation2 + $0x110] sm:$0xff] %vm3202, %v3087
    %3237 = vst.msk [vmem:[#allocation2 + $0x118] sm:$0x7f] %vm3204, %v3089
    %3238 = vst.msk [vmem:[#allocation2 + $0x120] sm:$0xff] %vm3202, %v3091
    %3239 = vst.msk [vmem:[#allocation2 + $0x128] sm:$0x7f] %vm3204, %v3093
    %3240 = vst.msk [vmem:[#allocation2 + $0x130] sm:$0xff] %vm3202, %v3095
    %3241 = vst.msk [vmem:[#allocation2 + $0x138] sm:$0x7f] %vm3204, %v3097
    %3242 = vst.msk [vmem:[#allocation2 + $0x140] sm:$0xff] %vm3202, %v3099
    %3243 = vst.msk [vmem:[#allocation2 + $0x148] sm:$0x7f] %vm3204, %v3101
    %3244 = vst.msk [vmem:[#allocation2 + $0x150] sm:$0xff] %vm3202, %v3103
    %3245 = vst.msk [vmem:[#allocation2 + $0x158] sm:$0x7f] %vm3204, %v3105
    %3246 = vst.msk [vmem:[#allocation2 + $0x160] sm:$0xff] %vm3202, %v3107
    %3247 = vst.msk [vmem:[#allocation2 + $0x168] sm:$0x7f] %vm3204, %v3109
    %3248 = vst.msk [vmem:[#allocation2 + $0x170] sm:$0xff] %vm3202, %v3111
    %3249 = vst.msk [vmem:[#allocation2 + $0x178] sm:$0x7f] %vm3204, %v3113
    %3250 = vst.msk [vmem:[#allocation2 + $0x180] sm:$0xff] %vm3202, %v3115
    %3251 = vst.msk [vmem:[#allocation2 + $0x188] sm:$0x7f] %vm3204, %v3117
    %3252 = vst.msk [vmem:[#allocation2 + $0x190] sm:$0xff] %vm3202, %v3119
    %3253 = vst.msk [vmem:[#allocation2 + $0x198] sm:$0x7f] %vm3204, %v3121
    %3254 = vst.msk [vmem:[#allocation2 + $0x1a0] sm:$0xff] %vm3202, %v3123
    %3255 = vst.msk [vmem:[#allocation2 + $0x1a8] sm:$0x7f] %vm3204, %v3125
    %3256 = vst.msk [vmem:[#allocation2 + $0x1b0] sm:$0xff] %vm3202, %v3127
    %3257 = vst.msk [vmem:[#allocation2 + $0x1b8] sm:$0x7f] %vm3204, %v3129
    %3258 = vst.msk [vmem:[#allocation2 + $0x1c0] sm:$0xff] %vm3202, %v3131
    %3259 = vst.msk [vmem:[#allocation2 + $0x1c8] sm:$0x7f] %vm3204, %v3133
    %3260 = vst.msk [vmem:[#allocation2 + $0x1d0] sm:$0xff] %vm3202, %v3135
    %3261 = vst.msk [vmem:[#allocation2 + $0x1d8] sm:$0x7f] %vm3204, %v3137
    %3262 = vst.msk [vmem:[#allocation2 + $0x1e0] sm:$0xff] %vm3202, %v3139
    %3263 = vst.msk [vmem:[#allocation2 + $0x1e8] sm:$0x7f] %vm3204, %v3141
    %v3264 = vld [vmem:[#allocation2] sm:$0xff]
    %v3265 = vld [vmem:[#allocation2 + $0x8] sm:$0xff]
    %v3266 = vld [vmem:[#allocation2 + $0x10] sm:$0xff]
    %v3267 = vld [vmem:[#allocation2 + $0x18] sm:$0xff]
    %v3268 = vld [vmem:[#allocation2 + $0x20] sm:$0xff]
    %v3269 = vld [vmem:[#allocation2 + $0x28] sm:$0xff]
    %v3270 = vld [vmem:[#allocation2 + $0x30] sm:$0xff]
    %v3271 = vld [vmem:[#allocation2 + $0x38] sm:$0xff]
    %v3272 = vld [vmem:[#allocation2 + $0x40] sm:$0xff]
    %v3273 = vld [vmem:[#allocation2 + $0x48] sm:$0xff]
    %v3274 = vld [vmem:[#allocation2 + $0x50] sm:$0xff]
    %v3275 = vld [vmem:[#allocation2 + $0x58] sm:$0xff]
    %v3276 = vld [vmem:[#allocation2 + $0x60] sm:$0xff]
    %v3277 = vld [vmem:[#allocation2 + $0x68] sm:$0xff]
    %v3278 = vld [vmem:[#allocation2 + $0x70] sm:$0xff]
    %v3279 = vld [vmem:[#allocation2 + $0x78] sm:$0xff]
    %v3280 = vld [vmem:[#allocation2 + $0x80] sm:$0xff]
    %v3281 = vld [vmem:[#allocation2 + $0x88] sm:$0xff]
    %v3282 = vld [vmem:[#allocation2 + $0x90] sm:$0xff]
    %v3283 = vld [vmem:[#allocation2 + $0x98] sm:$0xff]
    %v3284 = vld [vmem:[#allocation2 + $0xa0] sm:$0xff]
    %v3285 = vld [vmem:[#allocation2 + $0xa8] sm:$0xff]
    %v3286 = vld [vmem:[#allocation2 + $0xb0] sm:$0xff]
    %v3287 = vld [vmem:[#allocation2 + $0xb8] sm:$0xff]
    %v3288 = vld [vmem:[#allocation2 + $0xc0] sm:$0xff]
    %v3289 = vld [vmem:[#allocation2 + $0xc8] sm:$0xff]
    %v3290 = vld [vmem:[#allocation2 + $0xd0] sm:$0xff]
    %v3291 = vld [vmem:[#allocation2 + $0xd8] sm:$0xff]
    %v3292 = vld [vmem:[#allocation2 + $0xe0] sm:$0xff]
    %v3293 = vld [vmem:[#allocation2 + $0xe8] sm:$0xff]
    %v3294 = vld [vmem:[#allocation2 + $0xf0] sm:$0xff]
    %v3295 = vld [vmem:[#allocation2 + $0xf8] sm:$0xff]
    %v3296 = vld [vmem:[#allocation2 + $0x100] sm:$0xff]
    %v3297 = vld [vmem:[#allocation2 + $0x108] sm:$0xff]
    %v3298 = vld [vmem:[#allocation2 + $0x110] sm:$0xff]
    %v3299 = vld [vmem:[#allocation2 + $0x118] sm:$0xff]
    %v3300 = vld [vmem:[#allocation2 + $0x120] sm:$0xff]
    %v3301 = vld [vmem:[#allocation2 + $0x128] sm:$0xff]
    %v3302 = vld [vmem:[#allocation2 + $0x130] sm:$0xff]
    %v3303 = vld [vmem:[#allocation2 + $0x138] sm:$0xff]
    %v3304 = vld [vmem:[#allocation2 + $0x140] sm:$0xff]
    %v3305 = vld [vmem:[#allocation2 + $0x148] sm:$0xff]
    %v3306 = vld [vmem:[#allocation2 + $0x150] sm:$0xff]
    %v3307 = vld [vmem:[#allocation2 + $0x158] sm:$0xff]
    %v3308 = vld [vmem:[#allocation2 + $0x160] sm:$0xff]
    %v3309 = vld [vmem:[#allocation2 + $0x168] sm:$0xff]
    %v3310 = vld [vmem:[#allocation2 + $0x170] sm:$0xff]
    %v3311 = vld [vmem:[#allocation2 + $0x178] sm:$0xff]
    %v3312 = vld [vmem:[#allocation2 + $0x180] sm:$0xff]
    %v3313 = vld [vmem:[#allocation2 + $0x188] sm:$0xff]
    %v3314 = vld [vmem:[#allocation2 + $0x190] sm:$0xff]
    %v3315 = vld [vmem:[#allocation2 + $0x198] sm:$0xff]
    %v3316 = vld [vmem:[#allocation2 + $0x1a0] sm:$0xff]
    %v3317 = vld [vmem:[#allocation2 + $0x1a8] sm:$0xff]
    %v3318 = vld [vmem:[#allocation2 + $0x1b0] sm:$0xff]
    %v3319 = vld [vmem:[#allocation2 + $0x1b8] sm:$0xff]
    %v3320 = vld [vmem:[#allocation2 + $0x1c0] sm:$0xff]
    %v3321 = vld [vmem:[#allocation2 + $0x1c8] sm:$0xff]
    %v3322 = vld [vmem:[#allocation2 + $0x1d0] sm:$0xff]
    %v3323 = vld [vmem:[#allocation2 + $0x1d8] sm:$0xff]
    %v3324 = vld [vmem:[#allocation2 + $0x1e0] sm:$0xff]
    %v3325 = vld [vmem:[#allocation2 + $0x1e8] sm:$0xff]
    %v3326 = vld [vmem:[#allocation2 + $0x1f0] sm:$0xff]
    %v3327 = vld [vmem:[#allocation2 + $0x1f8] sm:$0xff]
    %v3328 = vld [vmem:[%s2] sm:$0xff]
    %v3329 = vld [vmem:[%s2 + $0x8] sm:$0x1]
    %v3330 = vld [vmem:[%s3] sm:$0x1]
    %v3332 = vlaneseq
    %v3333 = vshrl.u32 %v3332, 7
    %v3334 = vsub.s32 0, %v3333
    %v3335 = vrot.slane %v3330, %v3334
    %v3338 = vsel %vm44, %v3264, 0
    %v3341 = vsel %vm44, %v3265, 0
    %v3344 = vsel %vm44, %v3266, 0
    %v3347 = vsel %vm44, %v3267, 0
    %v3350 = vsel %vm44, %v3268, 0
    %v3353 = vsel %vm44, %v3269, 0
    %v3356 = vsel %vm44, %v3270, 0
    %v3359 = vsel %vm44, %v3271, 0
    %v3362 = vsel %vm44, %v3272, 0
    %v3365 = vsel %vm44, %v3273, 0
    %v3368 = vsel %vm44, %v3274, 0
    %v3371 = vsel %vm44, %v3275, 0
    %v3374 = vsel %vm44, %v3276, 0
    %v3377 = vsel %vm44, %v3277, 0
    %v3380 = vsel %vm44, %v3278, 0
    %v3383 = vsel %vm44, %v3279, 0
    %v3386 = vsel %vm44, %v3280, 0
    %v3389 = vsel %vm44, %v3281, 0
    %v3392 = vsel %vm44, %v3282, 0
    %v3395 = vsel %vm44, %v3283, 0
    %v3398 = vsel %vm44, %v3284, 0
    %v3401 = vsel %vm44, %v3285, 0
    %v3404 = vsel %vm44, %v3286, 0
    %v3407 = vsel %vm44, %v3287, 0
    %v3410 = vsel %vm44, %v3288, 0
    %v3413 = vsel %vm44, %v3289, 0
    %v3416 = vsel %vm44, %v3290, 0
    %v3419 = vsel %vm44, %v3291, 0
    %v3422 = vsel %vm44, %v3292, 0
    %v3425 = vsel %vm44, %v3293, 0
    %v3428 = vsel %vm44, %v3294, 0
    %v3431 = vsel %vm44, %v3295, 0
    %v3434 = vsel %vm44, %v3296, 0
    %v3437 = vsel %vm44, %v3297, 0
    %v3440 = vsel %vm44, %v3298, 0
    %v3443 = vsel %vm44, %v3299, 0
    %v3446 = vsel %vm44, %v3300, 0
    %v3449 = vsel %vm44, %v3301, 0
    %v3452 = vsel %vm44, %v3302, 0
    %v3455 = vsel %vm44, %v3303, 0
    %v3458 = vsel %vm44, %v3304, 0
    %v3461 = vsel %vm44, %v3305, 0
    %v3464 = vsel %vm44, %v3306, 0
    %v3467 = vsel %vm44, %v3307, 0
    %v3470 = vsel %vm44, %v3308, 0
    %v3473 = vsel %vm44, %v3309, 0
    %v3476 = vsel %vm44, %v3310, 0
    %v3479 = vsel %vm44, %v3311, 0
    %v3482 = vsel %vm44, %v3312, 0
    %v3485 = vsel %vm44, %v3313, 0
    %v3488 = vsel %vm44, %v3314, 0
    %v3491 = vsel %vm44, %v3315, 0
    %v3494 = vsel %vm44, %v3316, 0
    %v3497 = vsel %vm44, %v3317, 0
    %v3500 = vsel %vm44, %v3318, 0
    %v3503 = vsel %vm44, %v3319, 0
    %v3506 = vsel %vm44, %v3320, 0
    %v3509 = vsel %vm44, %v3321, 0
    %v3512 = vsel %vm44, %v3322, 0
    %v3515 = vsel %vm44, %v3323, 0
    %v3518 = vsel %vm44, %v3324, 0
    %v3521 = vsel %vm44, %v3325, 0
    %v3524 = vsel %vm44, %v3326, 0
    %v3527 = vsel %vm44, %v3327, 0
    %vm3529 = vcmask 1040384
    %v3531 = vsel %vm3529, %v3329, 0
    %3533 = vmatprep.subr.mxu0 0.0
    %3534 = vmatpush1.msra.mxu0 0.0
    %3535 = vmatprep.subr.mxu0 0.0
    %3536 = vmatpush1.msra.mxu0 0.0
    %3537 = vmatprep.subr.mxu0 0.0
    %3538 = vmatpush1.msra.mxu0 0.0
    %3539 = vmatprep.subr.mxu0 0.0
    %3540 = vmatpush1.msra.mxu0 0.0
    %3541 = vmatprep.subr.mxu0 0.0
    %3542 = vmatpush1.msra.mxu0 0.0
    %3543 = vmatprep.subr.mxu0 0.0
    %3544 = vmatpush1.msra.mxu0 0.0
    %3545 = vmatprep.subr.mxu0 0.0
    %3546 = vmatpush1.msra.mxu0 0.0
    %3547 = vmatprep.subr.mxu0 0.0
    %3548 = vmatpush1.msra.mxu0 0.0
    %3549 = vmatprep.subr.mxu0 0.0
    %3550 = vmatpush1.msra.mxu0 0.0
    %3551 = vmatprep.subr.mxu0 0.0
    %3552 = vmatpush1.msra.mxu0 0.0
    %3553 = vmatprep.subr.mxu0 0.0
    %3554 = vmatpush1.msra.mxu0 0.0
    %3555 = vmatprep.subr.mxu0 0.0
    %3556 = vmatpush1.msra.mxu0 0.0
    %3557 = vmatprep.subr.mxu0 0.0
    %3558 = vmatpush1.msra.mxu0 0.0
    %3559 = vmatprep.subr.mxu0 0.0
    %3560 = vmatpush1.msra.mxu0 0.0
    %3561 = vmatprep.subr.mxu0 0.0
    %3562 = vmatpush1.msra.mxu0 %v3531
    %3563 = vmatprep.subr.mxu0 0.0
    %3564 = vmatpush1.msra.mxu0 %v3328
    %3565 = vmatprep.subr.mxu0 0.0
    %3566 = vmatpush2.msra.mxu0 0.0
    %3567 = vmatprep.subr.mxu0 0.0
    %3568 = vmatpush2.msra.mxu0 0.0
    %3569 = vmatprep.subr.mxu0 0.0
    %3570 = vmatpush2.msra.mxu0 0.0
    %3571 = vmatprep.subr.mxu0 0.0
    %3572 = vmatpush2.msra.mxu0 0.0
    %3573 = vmatprep.subr.mxu0 0.0
    %3574 = vmatpush2.msra.mxu0 0.0
    %3575 = vmatprep.subr.mxu0 0.0
    %3576 = vmatpush2.msra.mxu0 0.0
    %3577 = vmatprep.subr.mxu0 0.0
    %3578 = vmatpush2.msra.mxu0 0.0
    %3579 = vmatprep.subr.mxu0 0.0
    %3580 = vmatpush2.msra.mxu0 0.0
    %3581 = vmatprep.subr.mxu0 0.0
    %3582 = vmatpush2.msra.mxu0 0.0
    %3583 = vmatprep.subr.mxu0 0.0
    %3584 = vmatpush2.msra.mxu0 0.0
    %3585 = vmatprep.subr.mxu0 0.0
    %3586 = vmatpush2.msra.mxu0 0.0
    %3587 = vmatprep.subr.mxu0 0.0
    %3588 = vmatpush2.msra.mxu0 0.0
    %3589 = vmatprep.subr.mxu0 0.0
    %3590 = vmatpush2.msra.mxu0 0.0
    %3591 = vmatprep.subr.mxu0 0.0
    %3592 = vmatpush2.msra.mxu0 0.0
    %3593 = vmatprep.subr.mxu0 0.0
    %3594 = vmatpush2.msra.mxu0 0.0
    %3595 = vmatprep.subr.mxu0 0.0
    %3596 = vmatpush2.msra.mxu0 0.0
    %3597 = vmatprep.mubr.f32.mxu0 0.0
    %3598 = vmatmul.mubr.f32.gmra.mxu0 %v3338
    %v3599 = vpop.f32.mrf.mxu0
    %v3600 = vadd.f32 %v3335, %v3599
    %v3601 = vpop.f32.mrf.mxu0
    %3602 = vmatprep.mubr.f32.mxu0 0.0
    %3603 = vmatmul.mubr.f32.gmra.mxu0 %v3341
    %v3604 = vpop.f32.mrf.mxu0
    %v3605 = vadd.f32 %v3335, %v3604
    %v3606 = vpop.f32.mrf.mxu0
    %3607 = vmatprep.mubr.f32.mxu0 0.0
    %3608 = vmatmul.mubr.f32.gmra.mxu0 %v3344
    %v3609 = vpop.f32.mrf.mxu0
    %v3610 = vadd.f32 %v3335, %v3609
    %v3611 = vpop.f32.mrf.mxu0
    %3612 = vmatprep.mubr.f32.mxu0 0.0
    %3613 = vmatmul.mubr.f32.gmra.mxu0 %v3347
    %v3614 = vpop.f32.mrf.mxu0
    %v3615 = vadd.f32 %v3335, %v3614
    %v3616 = vpop.f32.mrf.mxu0
    %3617 = vmatprep.mubr.f32.mxu0 0.0
    %3618 = vmatmul.mubr.f32.gmra.mxu0 %v3350
    %v3619 = vpop.f32.mrf.mxu0
    %v3620 = vadd.f32 %v3335, %v3619
    %v3621 = vpop.f32.mrf.mxu0
    %3622 = vmatprep.mubr.f32.mxu0 0.0
    %3623 = vmatmul.mubr.f32.gmra.mxu0 %v3353
    %v3624 = vpop.f32.mrf.mxu0
    %v3625 = vadd.f32 %v3335, %v3624
    %v3626 = vpop.f32.mrf.mxu0
    %3627 = vmatprep.mubr.f32.mxu0 0.0
    %3628 = vmatmul.mubr.f32.gmra.mxu0 %v3356
    %v3629 = vpop.f32.mrf.mxu0
    %v3630 = vadd.f32 %v3335, %v3629
    %v3631 = vpop.f32.mrf.mxu0
    %3632 = vmatprep.mubr.f32.mxu0 0.0
    %3633 = vmatmul.mubr.f32.gmra.mxu0 %v3359
    %v3634 = vpop.f32.mrf.mxu0
    %v3635 = vadd.f32 %v3335, %v3634
    %v3636 = vpop.f32.mrf.mxu0
    %3637 = vmatprep.mubr.f32.mxu0 0.0
    %3638 = vmatmul.mubr.f32.gmra.mxu0 %v3362
    %v3639 = vpop.f32.mrf.mxu0
    %v3640 = vadd.f32 %v3335, %v3639
    %v3641 = vpop.f32.mrf.mxu0
    %3642 = vmatprep.mubr.f32.mxu0 0.0
    %3643 = vmatmul.mubr.f32.gmra.mxu0 %v3365
    %v3644 = vpop.f32.mrf.mxu0
    %v3645 = vadd.f32 %v3335, %v3644
    %v3646 = vpop.f32.mrf.mxu0
    %3647 = vmatprep.mubr.f32.mxu0 0.0
    %3648 = vmatmul.mubr.f32.gmra.mxu0 %v3368
    %v3649 = vpop.f32.mrf.mxu0
    %v3650 = vadd.f32 %v3335, %v3649
    %v3651 = vpop.f32.mrf.mxu0
    %3652 = vmatprep.mubr.f32.mxu0 0.0
    %3653 = vmatmul.mubr.f32.gmra.mxu0 %v3371
    %v3654 = vpop.f32.mrf.mxu0
    %v3655 = vadd.f32 %v3335, %v3654
    %v3656 = vpop.f32.mrf.mxu0
    %3657 = vmatprep.mubr.f32.mxu0 0.0
    %3658 = vmatmul.mubr.f32.gmra.mxu0 %v3374
    %v3659 = vpop.f32.mrf.mxu0
    %v3660 = vadd.f32 %v3335, %v3659
    %v3661 = vpop.f32.mrf.mxu0
    %3662 = vmatprep.mubr.f32.mxu0 0.0
    %3663 = vmatmul.mubr.f32.gmra.mxu0 %v3377
    %v3664 = vpop.f32.mrf.mxu0
    %v3665 = vadd.f32 %v3335, %v3664
    %v3666 = vpop.f32.mrf.mxu0
    %3667 = vmatprep.mubr.f32.mxu0 0.0
    %3668 = vmatmul.mubr.f32.gmra.mxu0 %v3380
    %v3669 = vpop.f32.mrf.mxu0
    %v3670 = vadd.f32 %v3335, %v3669
    %v3671 = vpop.f32.mrf.mxu0
    %3672 = vmatprep.mubr.f32.mxu0 0.0
    %3673 = vmatmul.mubr.f32.gmra.mxu0 %v3383
    %v3674 = vpop.f32.mrf.mxu0
    %v3675 = vadd.f32 %v3335, %v3674
    %v3676 = vpop.f32.mrf.mxu0
    %3677 = vmatprep.mubr.f32.mxu0 0.0
    %3678 = vmatmul.mubr.f32.gmra.mxu0 %v3386
    %v3679 = vpop.f32.mrf.mxu0
    %v3680 = vadd.f32 %v3335, %v3679
    %v3681 = vpop.f32.mrf.mxu0
    %3682 = vmatprep.mubr.f32.mxu0 0.0
    %3683 = vmatmul.mubr.f32.gmra.mxu0 %v3389
    %v3684 = vpop.f32.mrf.mxu0
    %v3685 = vadd.f32 %v3335, %v3684
    %v3686 = vpop.f32.mrf.mxu0
    %3687 = vmatprep.mubr.f32.mxu0 0.0
    %3688 = vmatmul.mubr.f32.gmra.mxu0 %v3392
    %v3689 = vpop.f32.mrf.mxu0
    %v3690 = vadd.f32 %v3335, %v3689
    %v3691 = vpop.f32.mrf.mxu0
    %3692 = vmatprep.mubr.f32.mxu0 0.0
    %3693 = vmatmul.mubr.f32.gmra.mxu0 %v3395
    %v3694 = vpop.f32.mrf.mxu0
    %v3695 = vadd.f32 %v3335, %v3694
    %v3696 = vpop.f32.mrf.mxu0
    %3697 = vmatprep.mubr.f32.mxu0 0.0
    %3698 = vmatmul.mubr.f32.gmra.mxu0 %v3398
    %v3699 = vpop.f32.mrf.mxu0
    %v3700 = vadd.f32 %v3335, %v3699
    %v3701 = vpop.f32.mrf.mxu0
    %3702 = vmatprep.mubr.f32.mxu0 0.0
    %3703 = vmatmul.mubr.f32.gmra.mxu0 %v3401
    %v3704 = vpop.f32.mrf.mxu0
    %v3705 = vadd.f32 %v3335, %v3704
    %v3706 = vpop.f32.mrf.mxu0
    %3707 = vmatprep.mubr.f32.mxu0 0.0
    %3708 = vmatmul.mubr.f32.gmra.mxu0 %v3404
    %v3709 = vpop.f32.mrf.mxu0
    %v3710 = vadd.f32 %v3335, %v3709
    %v3711 = vpop.f32.mrf.mxu0
    %3712 = vmatprep.mubr.f32.mxu0 0.0
    %3713 = vmatmul.mubr.f32.gmra.mxu0 %v3407
    %v3714 = vpop.f32.mrf.mxu0
    %v3715 = vadd.f32 %v3335, %v3714
    %v3716 = vpop.f32.mrf.mxu0
    %3717 = vmatprep.mubr.f32.mxu0 0.0
    %3718 = vmatmul.mubr.f32.gmra.mxu0 %v3410
    %v3719 = vpop.f32.mrf.mxu0
    %v3720 = vadd.f32 %v3335, %v3719
    %v3721 = vpop.f32.mrf.mxu0
    %3722 = vmatprep.mubr.f32.mxu0 0.0
    %3723 = vmatmul.mubr.f32.gmra.mxu0 %v3413
    %v3724 = vpop.f32.mrf.mxu0
    %v3725 = vadd.f32 %v3335, %v3724
    %v3726 = vpop.f32.mrf.mxu0
    %3727 = vmatprep.mubr.f32.mxu0 0.0
    %3728 = vmatmul.mubr.f32.gmra.mxu0 %v3416
    %v3729 = vpop.f32.mrf.mxu0
    %v3730 = vadd.f32 %v3335, %v3729
    %v3731 = vpop.f32.mrf.mxu0
    %3732 = vmatprep.mubr.f32.mxu0 0.0
    %3733 = vmatmul.mubr.f32.gmra.mxu0 %v3419
    %v3734 = vpop.f32.mrf.mxu0
    %v3735 = vadd.f32 %v3335, %v3734
    %v3736 = vpop.f32.mrf.mxu0
    %3737 = vmatprep.mubr.f32.mxu0 0.0
    %3738 = vmatmul.mubr.f32.gmra.mxu0 %v3422
    %v3739 = vpop.f32.mrf.mxu0
    %v3740 = vadd.f32 %v3335, %v3739
    %v3741 = vpop.f32.mrf.mxu0
    %3742 = vmatprep.mubr.f32.mxu0 0.0
    %3743 = vmatmul.mubr.f32.gmra.mxu0 %v3425
    %v3744 = vpop.f32.mrf.mxu0
    %v3745 = vadd.f32 %v3335, %v3744
    %v3746 = vpop.f32.mrf.mxu0
    %3747 = vmatprep.mubr.f32.mxu0 0.0
    %3748 = vmatmul.mubr.f32.gmra.mxu0 %v3428
    %v3749 = vpop.f32.mrf.mxu0
    %v3750 = vadd.f32 %v3335, %v3749
    %v3751 = vpop.f32.mrf.mxu0
    %3752 = vmatprep.mubr.f32.mxu0 0.0
    %3753 = vmatmul.mubr.f32.gmra.mxu0 %v3431
    %v3754 = vpop.f32.mrf.mxu0
    %v3755 = vadd.f32 %v3335, %v3754
    %v3756 = vpop.f32.mrf.mxu0
    %3757 = vmatprep.mubr.f32.mxu0 0.0
    %3758 = vmatmul.mubr.f32.gmra.mxu0 %v3434
    %v3759 = vpop.f32.mrf.mxu0
    %v3760 = vadd.f32 %v3335, %v3759
    %v3761 = vpop.f32.mrf.mxu0
    %3762 = vmatprep.mubr.f32.mxu0 0.0
    %3763 = vmatmul.mubr.f32.gmra.mxu0 %v3437
    %v3764 = vpop.f32.mrf.mxu0
    %v3765 = vadd.f32 %v3335, %v3764
    %v3766 = vpop.f32.mrf.mxu0
    %3767 = vmatprep.mubr.f32.mxu0 0.0
    %3768 = vmatmul.mubr.f32.gmra.mxu0 %v3440
    %v3769 = vpop.f32.mrf.mxu0
    %v3770 = vadd.f32 %v3335, %v3769
    %v3771 = vpop.f32.mrf.mxu0
    %3772 = vmatprep.mubr.f32.mxu0 0.0
    %3773 = vmatmul.mubr.f32.gmra.mxu0 %v3443
    %v3774 = vpop.f32.mrf.mxu0
    %v3775 = vadd.f32 %v3335, %v3774
    %v3776 = vpop.f32.mrf.mxu0
    %3777 = vmatprep.mubr.f32.mxu0 0.0
    %3778 = vmatmul.mubr.f32.gmra.mxu0 %v3446
    %v3779 = vpop.f32.mrf.mxu0
    %v3780 = vadd.f32 %v3335, %v3779
    %v3781 = vpop.f32.mrf.mxu0
    %3782 = vmatprep.mubr.f32.mxu0 0.0
    %3783 = vmatmul.mubr.f32.gmra.mxu0 %v3449
    %v3784 = vpop.f32.mrf.mxu0
    %v3785 = vadd.f32 %v3335, %v3784
    %v3786 = vpop.f32.mrf.mxu0
    %3787 = vmatprep.mubr.f32.mxu0 0.0
    %3788 = vmatmul.mubr.f32.gmra.mxu0 %v3452
    %v3789 = vpop.f32.mrf.mxu0
    %v3790 = vadd.f32 %v3335, %v3789
    %v3791 = vpop.f32.mrf.mxu0
    %3792 = vmatprep.mubr.f32.mxu0 0.0
    %3793 = vmatmul.mubr.f32.gmra.mxu0 %v3455
    %v3794 = vpop.f32.mrf.mxu0
    %v3795 = vadd.f32 %v3335, %v3794
    %v3796 = vpop.f32.mrf.mxu0
    %3797 = vmatprep.mubr.f32.mxu0 0.0
    %3798 = vmatmul.mubr.f32.gmra.mxu0 %v3458
    %v3799 = vpop.f32.mrf.mxu0
    %v3800 = vadd.f32 %v3335, %v3799
    %v3801 = vpop.f32.mrf.mxu0
    %3802 = vmatprep.mubr.f32.mxu0 0.0
    %3803 = vmatmul.mubr.f32.gmra.mxu0 %v3461
    %v3804 = vpop.f32.mrf.mxu0
    %v3805 = vadd.f32 %v3335, %v3804
    %v3806 = vpop.f32.mrf.mxu0
    %3807 = vmatprep.mubr.f32.mxu0 0.0
    %3808 = vmatmul.mubr.f32.gmra.mxu0 %v3464
    %v3809 = vpop.f32.mrf.mxu0
    %v3810 = vadd.f32 %v3335, %v3809
    %v3811 = vpop.f32.mrf.mxu0
    %3812 = vmatprep.mubr.f32.mxu0 0.0
    %3813 = vmatmul.mubr.f32.gmra.mxu0 %v3467
    %v3814 = vpop.f32.mrf.mxu0
    %v3815 = vadd.f32 %v3335, %v3814
    %v3816 = vpop.f32.mrf.mxu0
    %3817 = vmatprep.mubr.f32.mxu0 0.0
    %3818 = vmatmul.mubr.f32.gmra.mxu0 %v3470
    %v3819 = vpop.f32.mrf.mxu0
    %v3820 = vadd.f32 %v3335, %v3819
    %v3821 = vpop.f32.mrf.mxu0
    %3822 = vmatprep.mubr.f32.mxu0 0.0
    %3823 = vmatmul.mubr.f32.gmra.mxu0 %v3473
    %v3824 = vpop.f32.mrf.mxu0
    %v3825 = vadd.f32 %v3335, %v3824
    %v3826 = vpop.f32.mrf.mxu0
    %3827 = vmatprep.mubr.f32.mxu0 0.0
    %3828 = vmatmul.mubr.f32.gmra.mxu0 %v3476
    %v3829 = vpop.f32.mrf.mxu0
    %v3830 = vadd.f32 %v3335, %v3829
    %v3831 = vpop.f32.mrf.mxu0
    %3832 = vmatprep.mubr.f32.mxu0 0.0
    %3833 = vmatmul.mubr.f32.gmra.mxu0 %v3479
    %v3834 = vpop.f32.mrf.mxu0
    %v3835 = vadd.f32 %v3335, %v3834
    %v3836 = vpop.f32.mrf.mxu0
    %3837 = vmatprep.mubr.f32.mxu0 0.0
    %3838 = vmatmul.mubr.f32.gmra.mxu0 %v3482
    %v3839 = vpop.f32.mrf.mxu0
    %v3840 = vadd.f32 %v3335, %v3839
    %v3841 = vpop.f32.mrf.mxu0
    %3842 = vmatprep.mubr.f32.mxu0 0.0
    %3843 = vmatmul.mubr.f32.gmra.mxu0 %v3485
    %v3844 = vpop.f32.mrf.mxu0
    %v3845 = vadd.f32 %v3335, %v3844
    %v3846 = vpop.f32.mrf.mxu0
    %3847 = vmatprep.mubr.f32.mxu0 0.0
    %3848 = vmatmul.mubr.f32.gmra.mxu0 %v3488
    %v3849 = vpop.f32.mrf.mxu0
    %v3850 = vadd.f32 %v3335, %v3849
    %v3851 = vpop.f32.mrf.mxu0
    %3852 = vmatprep.mubr.f32.mxu0 0.0
    %3853 = vmatmul.mubr.f32.gmra.mxu0 %v3491
    %v3854 = vpop.f32.mrf.mxu0
    %v3855 = vadd.f32 %v3335, %v3854
    %v3856 = vpop.f32.mrf.mxu0
    %3857 = vmatprep.mubr.f32.mxu0 0.0
    %3858 = vmatmul.mubr.f32.gmra.mxu0 %v3494
    %v3859 = vpop.f32.mrf.mxu0
    %v3860 = vadd.f32 %v3335, %v3859
    %v3861 = vpop.f32.mrf.mxu0
    %3862 = vmatprep.mubr.f32.mxu0 0.0
    %3863 = vmatmul.mubr.f32.gmra.mxu0 %v3497
    %v3864 = vpop.f32.mrf.mxu0
    %v3865 = vadd.f32 %v3335, %v3864
    %v3866 = vpop.f32.mrf.mxu0
    %3867 = vmatprep.mubr.f32.mxu0 0.0
    %3868 = vmatmul.mubr.f32.gmra.mxu0 %v3500
    %v3869 = vpop.f32.mrf.mxu0
    %v3870 = vadd.f32 %v3335, %v3869
    %v3871 = vpop.f32.mrf.mxu0
    %3872 = vmatprep.mubr.f32.mxu0 0.0
    %3873 = vmatmul.mubr.f32.gmra.mxu0 %v3503
    %v3874 = vpop.f32.mrf.mxu0
    %v3875 = vadd.f32 %v3335, %v3874
    %v3876 = vpop.f32.mrf.mxu0
    %3877 = vmatprep.mubr.f32.mxu0 0.0
    %3878 = vmatmul.mubr.f32.gmra.mxu0 %v3506
    %v3879 = vpop.f32.mrf.mxu0
    %v3880 = vadd.f32 %v3335, %v3879
    %v3881 = vpop.f32.mrf.mxu0
    %3882 = vmatprep.mubr.f32.mxu0 0.0
    %3883 = vmatmul.mubr.f32.gmra.mxu0 %v3509
    %v3884 = vpop.f32.mrf.mxu0
    %v3885 = vadd.f32 %v3335, %v3884
    %v3886 = vpop.f32.mrf.mxu0
    %3887 = vmatprep.mubr.f32.mxu0 0.0
    %3888 = vmatmul.mubr.f32.gmra.mxu0 %v3512
    %v3889 = vpop.f32.mrf.mxu0
    %v3890 = vadd.f32 %v3335, %v3889
    %v3891 = vpop.f32.mrf.mxu0
    %3892 = vmatprep.mubr.f32.mxu0 0.0
    %3893 = vmatmul.mubr.f32.gmra.mxu0 %v3515
    %v3894 = vpop.f32.mrf.mxu0
    %v3895 = vadd.f32 %v3335, %v3894
    %v3896 = vpop.f32.mrf.mxu0
    %3897 = vmatprep.mubr.f32.mxu0 0.0
    %3898 = vmatmul.mubr.f32.gmra.mxu0 %v3518
    %v3899 = vpop.f32.mrf.mxu0
    %v3900 = vadd.f32 %v3335, %v3899
    %v3901 = vpop.f32.mrf.mxu0
    %3902 = vmatprep.mubr.f32.mxu0 0.0
    %3903 = vmatmul.mubr.f32.gmra.mxu0 %v3521
    %v3904 = vpop.f32.mrf.mxu0
    %v3905 = vadd.f32 %v3335, %v3904
    %v3906 = vpop.f32.mrf.mxu0
    %3907 = vmatprep.mubr.f32.mxu0 0.0
    %3908 = vmatmul.mubr.f32.gmra.mxu0 %v3524
    %v3909 = vpop.f32.mrf.mxu0
    %v3910 = vadd.f32 %v3335, %v3909
    %v3911 = vpop.f32.mrf.mxu0
    %3912 = vmatprep.mubr.f32.mxu0 0.0
    %3913 = vmatmul.mubr.f32.gmra.mxu0 %v3527
    %v3914 = vpop.f32.mrf.mxu0
    %v3915 = vadd.f32 %v3335, %v3914
    %v3916 = vpop.f32.mrf.mxu0
    %3917 = vdwg.mxu0
    %vm3918 = vcmp.gt.f32.partialorder %v3600, 0.0
    %vm3919 = vcmp.gt.f32.partialorder %v3605, 0.0
    %vm3920 = vcmp.gt.f32.partialorder %v3610, 0.0
    %vm3921 = vcmp.gt.f32.partialorder %v3615, 0.0
    %vm3922 = vcmp.gt.f32.partialorder %v3620, 0.0
    %vm3923 = vcmp.gt.f32.partialorder %v3625, 0.0
    %vm3924 = vcmp.gt.f32.partialorder %v3630, 0.0
    %vm3925 = vcmp.gt.f32.partialorder %v3635, 0.0
    %vm3926 = vcmp.gt.f32.partialorder %v3640, 0.0
    %vm3927 = vcmp.gt.f32.partialorder %v3645, 0.0
    %vm3928 = vcmp.gt.f32.partialorder %v3650, 0.0
    %vm3929 = vcmp.gt.f32.partialorder %v3655, 0.0
    %vm3930 = vcmp.gt.f32.partialorder %v3660, 0.0
    %vm3931 = vcmp.gt.f32.partialorder %v3665, 0.0
    %vm3932 = vcmp.gt.f32.partialorder %v3670, 0.0
    %vm3933 = vcmp.gt.f32.partialorder %v3675, 0.0
    %vm3934 = vcmp.gt.f32.partialorder %v3680, 0.0
    %vm3935 = vcmp.gt.f32.partialorder %v3685, 0.0
    %vm3936 = vcmp.gt.f32.partialorder %v3690, 0.0
    %vm3937 = vcmp.gt.f32.partialorder %v3695, 0.0
    %vm3938 = vcmp.gt.f32.partialorder %v3700, 0.0
    %vm3939 = vcmp.gt.f32.partialorder %v3705, 0.0
    %vm3940 = vcmp.gt.f32.partialorder %v3710, 0.0
    %vm3941 = vcmp.gt.f32.partialorder %v3715, 0.0
    %vm3942 = vcmp.gt.f32.partialorder %v3720, 0.0
    %vm3943 = vcmp.gt.f32.partialorder %v3725, 0.0
    %vm3944 = vcmp.gt.f32.partialorder %v3730, 0.0
    %vm3945 = vcmp.gt.f32.partialorder %v3735, 0.0
    %vm3946 = vcmp.gt.f32.partialorder %v3740, 0.0
    %vm3947 = vcmp.gt.f32.partialorder %v3745, 0.0
    %vm3948 = vcmp.gt.f32.partialorder %v3750, 0.0
    %vm3949 = vcmp.gt.f32.partialorder %v3755, 0.0
    %vm3950 = vcmp.gt.f32.partialorder %v3760, 0.0
    %vm3951 = vcmp.gt.f32.partialorder %v3765, 0.0
    %vm3952 = vcmp.gt.f32.partialorder %v3770, 0.0
    %vm3953 = vcmp.gt.f32.partialorder %v3775, 0.0
    %vm3954 = vcmp.gt.f32.partialorder %v3780, 0.0
    %vm3955 = vcmp.gt.f32.partialorder %v3785, 0.0
    %vm3956 = vcmp.gt.f32.partialorder %v3790, 0.0
    %vm3957 = vcmp.gt.f32.partialorder %v3795, 0.0
    %vm3958 = vcmp.gt.f32.partialorder %v3800, 0.0
    %vm3959 = vcmp.gt.f32.partialorder %v3805, 0.0
    %vm3960 = vcmp.gt.f32.partialorder %v3810, 0.0
    %vm3961 = vcmp.gt.f32.partialorder %v3815, 0.0
    %vm3962 = vcmp.gt.f32.partialorder %v3820, 0.0
    %vm3963 = vcmp.gt.f32.partialorder %v3825, 0.0
    %vm3964 = vcmp.gt.f32.partialorder %v3830, 0.0
    %vm3965 = vcmp.gt.f32.partialorder %v3835, 0.0
    %vm3966 = vcmp.gt.f32.partialorder %v3840, 0.0
    %vm3967 = vcmp.gt.f32.partialorder %v3845, 0.0
    %vm3968 = vcmp.gt.f32.partialorder %v3850, 0.0
    %vm3969 = vcmp.gt.f32.partialorder %v3855, 0.0
    %vm3970 = vcmp.gt.f32.partialorder %v3860, 0.0
    %vm3971 = vcmp.gt.f32.partialorder %v3865, 0.0
    %vm3972 = vcmp.gt.f32.partialorder %v3870, 0.0
    %vm3973 = vcmp.gt.f32.partialorder %v3875, 0.0
    %vm3974 = vcmp.gt.f32.partialorder %v3880, 0.0
    %vm3975 = vcmp.gt.f32.partialorder %v3885, 0.0
    %vm3976 = vcmp.gt.f32.partialorder %v3890, 0.0
    %vm3977 = vcmp.gt.f32.partialorder %v3895, 0.0
    %vm3978 = vcmp.gt.f32.partialorder %v3900, 0.0
    %vm3979 = vcmp.gt.f32.partialorder %v3905, 0.0
    %vm3980 = vcmp.gt.f32.partialorder %v3910, 0.0
    %vm3981 = vcmp.gt.f32.partialorder %v3915, 0.0
    %v3982 = vstv %s174
    %v3983 = vmul.f32 %v3982, %v3600
    %v3984 = vmul.f32 %v3982, %v3605
    %v3985 = vmul.f32 %v3982, %v3610
    %v3986 = vmul.f32 %v3982, %v3615
    %v3987 = vmul.f32 %v3982, %v3620
    %v3988 = vmul.f32 %v3982, %v3625
    %v3989 = vmul.f32 %v3982, %v3630
    %v3990 = vmul.f32 %v3982, %v3635
    %v3991 = vmul.f32 %v3982, %v3640
    %v3992 = vmul.f32 %v3982, %v3645
    %v3993 = vmul.f32 %v3982, %v3650
    %v3994 = vmul.f32 %v3982, %v3655
    %v3995 = vmul.f32 %v3982, %v3660
    %v3996 = vmul.f32 %v3982, %v3665
    %v3997 = vmul.f32 %v3982, %v3670
    %v3998 = vmul.f32 %v3982, %v3675
    %v3999 = vmul.f32 %v3982, %v3680
    %v4000 = vmul.f32 %v3982, %v3685
    %v4001 = vmul.f32 %v3982, %v3690
    %v4002 = vmul.f32 %v3982, %v3695
    %v4003 = vmul.f32 %v3982, %v3700
    %v4004 = vmul.f32 %v3982, %v3705
    %v4005 = vmul.f32 %v3982, %v3710
    %v4006 = vmul.f32 %v3982, %v3715
    %v4007 = vmul.f32 %v3982, %v3720
    %v4008 = vmul.f32 %v3982, %v3725
    %v4009 = vmul.f32 %v3982, %v3730
    %v4010 = vmul.f32 %v3982, %v3735
    %v4011 = vmul.f32 %v3982, %v3740
    %v4012 = vmul.f32 %v3982, %v3745
    %v4013 = vmul.f32 %v3982, %v3750
    %v4014 = vmul.f32 %v3982, %v3755
    %v4015 = vmul.f32 %v3982, %v3760
    %v4016 = vmul.f32 %v3982, %v3765
    %v4017 = vmul.f32 %v3982, %v3770
    %v4018 = vmul.f32 %v3982, %v3775
    %v4019 = vmul.f32 %v3982, %v3780
    %v4020 = vmul.f32 %v3982, %v3785
    %v4021 = vmul.f32 %v3982, %v3790
    %v4022 = vmul.f32 %v3982, %v3795
    %v4023 = vmul.f32 %v3982, %v3800
    %v4024 = vmul.f32 %v3982, %v3805
    %v4025 = vmul.f32 %v3982, %v3810
    %v4026 = vmul.f32 %v3982, %v3815
    %v4027 = vmul.f32 %v3982, %v3820
    %v4028 = vmul.f32 %v3982, %v3825
    %v4029 = vmul.f32 %v3982, %v3830
    %v4030 = vmul.f32 %v3982, %v3835
    %v4031 = vmul.f32 %v3982, %v3840
    %v4032 = vmul.f32 %v3982, %v3845
    %v4033 = vmul.f32 %v3982, %v3850
    %v4034 = vmul.f32 %v3982, %v3855
    %v4035 = vmul.f32 %v3982, %v3860
    %v4036 = vmul.f32 %v3982, %v3865
    %v4037 = vmul.f32 %v3982, %v3870
    %v4038 = vmul.f32 %v3982, %v3875
    %v4039 = vmul.f32 %v3982, %v3880
    %v4040 = vmul.f32 %v3982, %v3885
    %v4041 = vmul.f32 %v3982, %v3890
    %v4042 = vmul.f32 %v3982, %v3895
    %v4043 = vmul.f32 %v3982, %v3900
    %v4044 = vmul.f32 %v3982, %v3905
    %v4045 = vmul.f32 %v3982, %v3910
    %v4046 = vmul.f32 %v3982, %v3915
    %v4047 = vsel %vm3918, %v3600, %v3983
    %v4048 = vsel %vm3919, %v3605, %v3984
    %v4049 = vsel %vm3920, %v3610, %v3985
    %v4050 = vsel %vm3921, %v3615, %v3986
    %v4051 = vsel %vm3922, %v3620, %v3987
    %v4052 = vsel %vm3923, %v3625, %v3988
    %v4053 = vsel %vm3924, %v3630, %v3989
    %v4054 = vsel %vm3925, %v3635, %v3990
    %v4055 = vsel %vm3926, %v3640, %v3991
    %v4056 = vsel %vm3927, %v3645, %v3992
    %v4057 = vsel %vm3928, %v3650, %v3993
    %v4058 = vsel %vm3929, %v3655, %v3994
    %v4059 = vsel %vm3930, %v3660, %v3995
    %v4060 = vsel %vm3931, %v3665, %v3996
    %v4061 = vsel %vm3932, %v3670, %v3997
    %v4062 = vsel %vm3933, %v3675, %v3998
    %v4063 = vsel %vm3934, %v3680, %v3999
    %v4064 = vsel %vm3935, %v3685, %v4000
    %v4065 = vsel %vm3936, %v3690, %v4001
    %v4066 = vsel %vm3937, %v3695, %v4002
    %v4067 = vsel %vm3938, %v3700, %v4003
    %v4068 = vsel %vm3939, %v3705, %v4004
    %v4069 = vsel %vm3940, %v3710, %v4005
    %v4070 = vsel %vm3941, %v3715, %v4006
    %v4071 = vsel %vm3942, %v3720, %v4007
    %v4072 = vsel %vm3943, %v3725, %v4008
    %v4073 = vsel %vm3944, %v3730, %v4009
    %v4074 = vsel %vm3945, %v3735, %v4010
    %v4075 = vsel %vm3946, %v3740, %v4011
    %v4076 = vsel %vm3947, %v3745, %v4012
    %v4077 = vsel %vm3948, %v3750, %v4013
    %v4078 = vsel %vm3949, %v3755, %v4014
    %v4079 = vsel %vm3950, %v3760, %v4015
    %v4080 = vsel %vm3951, %v3765, %v4016
    %v4081 = vsel %vm3952, %v3770, %v4017
    %v4082 = vsel %vm3953, %v3775, %v4018
    %v4083 = vsel %vm3954, %v3780, %v4019
    %v4084 = vsel %vm3955, %v3785, %v4020
    %v4085 = vsel %vm3956, %v3790, %v4021
    %v4086 = vsel %vm3957, %v3795, %v4022
    %v4087 = vsel %vm3958, %v3800, %v4023
    %v4088 = vsel %vm3959, %v3805, %v4024
    %v4089 = vsel %vm3960, %v3810, %v4025
    %v4090 = vsel %vm3961, %v3815, %v4026
    %v4091 = vsel %vm3962, %v3820, %v4027
    %v4092 = vsel %vm3963, %v3825, %v4028
    %v4093 = vsel %vm3964, %v3830, %v4029
    %v4094 = vsel %vm3965, %v3835, %v4030
    %v4095 = vsel %vm3966, %v3840, %v4031
    %v4096 = vsel %vm3967, %v3845, %v4032
    %v4097 = vsel %vm3968, %v3850, %v4033
    %v4098 = vsel %vm3969, %v3855, %v4034
    %v4099 = vsel %vm3970, %v3860, %v4035
    %v4100 = vsel %vm3971, %v3865, %v4036
    %v4101 = vsel %vm3972, %v3870, %v4037
    %v4102 = vsel %vm3973, %v3875, %v4038
    %v4103 = vsel %vm3974, %v3880, %v4039
    %v4104 = vsel %vm3975, %v3885, %v4040
    %v4105 = vsel %vm3976, %v3890, %v4041
    %v4106 = vsel %vm3977, %v3895, %v4042
    %v4107 = vsel %vm3978, %v3900, %v4043
    %v4108 = vsel %vm3979, %v3905, %v4044
    %v4109 = vsel %vm3980, %v3910, %v4045
    %v4110 = vsel %vm3981, %v3915, %v4046
    %vm4111 = vcmask 64512
    %4112 = vst.msk [vmem:[#allocation4] sm:$0xff] %vm4111, %v4047
    %4113 = vst.msk [vmem:[#allocation4 + $0x8] sm:$0xff] %vm4111, %v4048
    %4114 = vst.msk [vmem:[#allocation4 + $0x10] sm:$0xff] %vm4111, %v4049
    %4115 = vst.msk [vmem:[#allocation4 + $0x18] sm:$0xff] %vm4111, %v4050
    %4116 = vst.msk [vmem:[#allocation4 + $0x20] sm:$0xff] %vm4111, %v4051
    %4117 = vst.msk [vmem:[#allocation4 + $0x28] sm:$0xff] %vm4111, %v4052
    %4118 = vst.msk [vmem:[#allocation4 + $0x30] sm:$0xff] %vm4111, %v4053
    %4119 = vst.msk [vmem:[#allocation4 + $0x38] sm:$0xff] %vm4111, %v4054
    %4120 = vst.msk [vmem:[#allocation4 + $0x40] sm:$0xff] %vm4111, %v4055
    %4121 = vst.msk [vmem:[#allocation4 + $0x48] sm:$0xff] %vm4111, %v4056
    %4122 = vst.msk [vmem:[#allocation4 + $0x50] sm:$0xff] %vm4111, %v4057
    %4123 = vst.msk [vmem:[#allocation4 + $0x58] sm:$0xff] %vm4111, %v4058
    %4124 = vst.msk [vmem:[#allocation4 + $0x60] sm:$0xff] %vm4111, %v4059
    %4125 = vst.msk [vmem:[#allocation4 + $0x68] sm:$0xff] %vm4111, %v4060
    %4126 = vst.msk [vmem:[#allocation4 + $0x70] sm:$0xff] %vm4111, %v4061
    %4127 = vst.msk [vmem:[#allocation4 + $0x78] sm:$0xff] %vm4111, %v4062
    %4128 = vst.msk [vmem:[#allocation4 + $0x80] sm:$0xff] %vm4111, %v4063
    %4129 = vst.msk [vmem:[#allocation4 + $0x88] sm:$0xff] %vm4111, %v4064
    %4130 = vst.msk [vmem:[#allocation4 + $0x90] sm:$0xff] %vm4111, %v4065
    %4131 = vst.msk [vmem:[#allocation4 + $0x98] sm:$0xff] %vm4111, %v4066
    %4132 = vst.msk [vmem:[#allocation4 + $0xa0] sm:$0xff] %vm4111, %v4067
    %4133 = vst.msk [vmem:[#allocation4 + $0xa8] sm:$0xff] %vm4111, %v4068
    %4134 = vst.msk [vmem:[#allocation4 + $0xb0] sm:$0xff] %vm4111, %v4069
    %4135 = vst.msk [vmem:[#allocation4 + $0xb8] sm:$0xff] %vm4111, %v4070
    %4136 = vst.msk [vmem:[#allocation4 + $0xc0] sm:$0xff] %vm4111, %v4071
    %4137 = vst.msk [vmem:[#allocation4 + $0xc8] sm:$0xff] %vm4111, %v4072
    %4138 = vst.msk [vmem:[#allocation4 + $0xd0] sm:$0xff] %vm4111, %v4073
    %4139 = vst.msk [vmem:[#allocation4 + $0xd8] sm:$0xff] %vm4111, %v4074
    %4140 = vst.msk [vmem:[#allocation4 + $0xe0] sm:$0xff] %vm4111, %v4075
    %4141 = vst.msk [vmem:[#allocation4 + $0xe8] sm:$0xff] %vm4111, %v4076
    %4142 = vst.msk [vmem:[#allocation4 + $0xf0] sm:$0xff] %vm4111, %v4077
    %4143 = vst.msk [vmem:[#allocation4 + $0xf8] sm:$0xff] %vm4111, %v4078
    %4144 = vst.msk [vmem:[#allocation4 + $0x100] sm:$0xff] %vm4111, %v4079
    %4145 = vst.msk [vmem:[#allocation4 + $0x108] sm:$0xff] %vm4111, %v4080
    %4146 = vst.msk [vmem:[#allocation4 + $0x110] sm:$0xff] %vm4111, %v4081
    %4147 = vst.msk [vmem:[#allocation4 + $0x118] sm:$0xff] %vm4111, %v4082
    %4148 = vst.msk [vmem:[#allocation4 + $0x120] sm:$0xff] %vm4111, %v4083
    %4149 = vst.msk [vmem:[#allocation4 + $0x128] sm:$0xff] %vm4111, %v4084
    %4150 = vst.msk [vmem:[#allocation4 + $0x130] sm:$0xff] %vm4111, %v4085
    %4151 = vst.msk [vmem:[#allocation4 + $0x138] sm:$0xff] %vm4111, %v4086
    %4152 = vst.msk [vmem:[#allocation4 + $0x140] sm:$0xff] %vm4111, %v4087
    %4153 = vst.msk [vmem:[#allocation4 + $0x148] sm:$0xff] %vm4111, %v4088
    %4154 = vst.msk [vmem:[#allocation4 + $0x150] sm:$0xff] %vm4111, %v4089
    %4155 = vst.msk [vmem:[#allocation4 + $0x158] sm:$0xff] %vm4111, %v4090
    %4156 = vst.msk [vmem:[#allocation4 + $0x160] sm:$0xff] %vm4111, %v4091
    %4157 = vst.msk [vmem:[#allocation4 + $0x168] sm:$0xff] %vm4111, %v4092
    %4158 = vst.msk [vmem:[#allocation4 + $0x170] sm:$0xff] %vm4111, %v4093
    %4159 = vst.msk [vmem:[#allocation4 + $0x178] sm:$0xff] %vm4111, %v4094
    %4160 = vst.msk [vmem:[#allocation4 + $0x180] sm:$0xff] %vm4111, %v4095
    %4161 = vst.msk [vmem:[#allocation4 + $0x188] sm:$0xff] %vm4111, %v4096
    %4162 = vst.msk [vmem:[#allocation4 + $0x190] sm:$0xff] %vm4111, %v4097
    %4163 = vst.msk [vmem:[#allocation4 + $0x198] sm:$0xff] %vm4111, %v4098
    %4164 = vst.msk [vmem:[#allocation4 + $0x1a0] sm:$0xff] %vm4111, %v4099
    %4165 = vst.msk [vmem:[#allocation4 + $0x1a8] sm:$0xff] %vm4111, %v4100
    %4166 = vst.msk [vmem:[#allocation4 + $0x1b0] sm:$0xff] %vm4111, %v4101
    %4167 = vst.msk [vmem:[#allocation4 + $0x1b8] sm:$0xff] %vm4111, %v4102
    %4168 = vst.msk [vmem:[#allocation4 + $0x1c0] sm:$0xff] %vm4111, %v4103
    %4169 = vst.msk [vmem:[#allocation4 + $0x1c8] sm:$0xff] %vm4111, %v4104
    %4170 = vst.msk [vmem:[#allocation4 + $0x1d0] sm:$0xff] %vm4111, %v4105
    %4171 = vst.msk [vmem:[#allocation4 + $0x1d8] sm:$0xff] %vm4111, %v4106
    %4172 = vst.msk [vmem:[#allocation4 + $0x1e0] sm:$0xff] %vm4111, %v4107
    %4173 = vst.msk [vmem:[#allocation4 + $0x1e8] sm:$0xff] %vm4111, %v4108
    %4174 = vst.msk [vmem:[#allocation4 + $0x1f0] sm:$0xff] %vm4111, %v4109
    %4175 = vst.msk [vmem:[#allocation4 + $0x1f8] sm:$0xff] %vm4111, %v4110
    %s4176 = sld [smem:[#allocation6 + $0x1]]
    %v4177 = vld [vmem:[#allocation4] sm:$0xff]
    %v4178 = vld [vmem:[#allocation4 + $0x8] sm:$0x7f]
    %v4179 = vld [vmem:[#allocation4 + $0x10] sm:$0xff]
    %v4180 = vld [vmem:[#allocation4 + $0x18] sm:$0x7f]
    %v4181 = vld [vmem:[#allocation4 + $0x20] sm:$0xff]
    %v4182 = vld [vmem:[#allocation4 + $0x28] sm:$0x7f]
    %v4183 = vld [vmem:[#allocation4 + $0x30] sm:$0xff]
    %v4184 = vld [vmem:[#allocation4 + $0x38] sm:$0x7f]
    %v4185 = vld [vmem:[#allocation4 + $0x40] sm:$0xff]
    %v4186 = vld [vmem:[#allocation4 + $0x48] sm:$0x7f]
    %v4187 = vld [vmem:[#allocation4 + $0x50] sm:$0xff]
    %v4188 = vld [vmem:[#allocation4 + $0x58] sm:$0x7f]
    %v4189 = vld [vmem:[#allocation4 + $0x60] sm:$0xff]
    %v4190 = vld [vmem:[#allocation4 + $0x68] sm:$0x7f]
    %v4191 = vld [vmem:[#allocation4 + $0x70] sm:$0xff]
    %v4192 = vld [vmem:[#allocation4 + $0x78] sm:$0x7f]
    %v4193 = vld [vmem:[#allocation4 + $0x80] sm:$0xff]
    %v4194 = vld [vmem:[#allocation4 + $0x88] sm:$0x7f]
    %v4195 = vld [vmem:[#allocation4 + $0x90] sm:$0xff]
    %v4196 = vld [vmem:[#allocation4 + $0x98] sm:$0x7f]
    %v4197 = vld [vmem:[#allocation4 + $0xa0] sm:$0xff]
    %v4198 = vld [vmem:[#allocation4 + $0xa8] sm:$0x7f]
    %v4199 = vld [vmem:[#allocation4 + $0xb0] sm:$0xff]
    %v4200 = vld [vmem:[#allocation4 + $0xb8] sm:$0x7f]
    %v4201 = vld [vmem:[#allocation4 + $0xc0] sm:$0xff]
    %v4202 = vld [vmem:[#allocation4 + $0xc8] sm:$0x7f]
    %v4203 = vld [vmem:[#allocation4 + $0xd0] sm:$0xff]
    %v4204 = vld [vmem:[#allocation4 + $0xd8] sm:$0x7f]
    %v4205 = vld [vmem:[#allocation4 + $0xe0] sm:$0xff]
    %v4206 = vld [vmem:[#allocation4 + $0xe8] sm:$0x7f]
    %v4207 = vld [vmem:[#allocation4 + $0x100] sm:$0xff]
    %v4208 = vld [vmem:[#allocation4 + $0x108] sm:$0x7f]
    %v4209 = vld [vmem:[#allocation4 + $0x110] sm:$0xff]
    %v4210 = vld [vmem:[#allocation4 + $0x118] sm:$0x7f]
    %v4211 = vld [vmem:[#allocation4 + $0x120] sm:$0xff]
    %v4212 = vld [vmem:[#allocation4 + $0x128] sm:$0x7f]
    %v4213 = vld [vmem:[#allocation4 + $0x130] sm:$0xff]
    %v4214 = vld [vmem:[#allocation4 + $0x138] sm:$0x7f]
    %v4215 = vld [vmem:[#allocation4 + $0x140] sm:$0xff]
    %v4216 = vld [vmem:[#allocation4 + $0x148] sm:$0x7f]
    %v4217 = vld [vmem:[#allocation4 + $0x150] sm:$0xff]
    %v4218 = vld [vmem:[#allocation4 + $0x158] sm:$0x7f]
    %v4219 = vld [vmem:[#allocation4 + $0x160] sm:$0xff]
    %v4220 = vld [vmem:[#allocation4 + $0x168] sm:$0x7f]
    %v4221 = vld [vmem:[#allocation4 + $0x170] sm:$0xff]
    %v4222 = vld [vmem:[#allocation4 + $0x178] sm:$0x7f]
    %v4223 = vld [vmem:[#allocation4 + $0x180] sm:$0xff]
    %v4224 = vld [vmem:[#allocation4 + $0x188] sm:$0x7f]
    %v4225 = vld [vmem:[#allocation4 + $0x190] sm:$0xff]
    %v4226 = vld [vmem:[#allocation4 + $0x198] sm:$0x7f]
    %v4227 = vld [vmem:[#allocation4 + $0x1a0] sm:$0xff]
    %v4228 = vld [vmem:[#allocation4 + $0x1a8] sm:$0x7f]
    %v4229 = vld [vmem:[#allocation4 + $0x1b0] sm:$0xff]
    %v4230 = vld [vmem:[#allocation4 + $0x1b8] sm:$0x7f]
    %v4231 = vld [vmem:[#allocation4 + $0x1c0] sm:$0xff]
    %v4232 = vld [vmem:[#allocation4 + $0x1c8] sm:$0x7f]
    %v4233 = vld [vmem:[#allocation4 + $0x1d0] sm:$0xff]
    %v4234 = vld [vmem:[#allocation4 + $0x1d8] sm:$0x7f]
    %v4235 = vld [vmem:[#allocation4 + $0x1e0] sm:$0xff]
    %v4236 = vld [vmem:[#allocation4 + $0x1e8] sm:$0x7f]
    %s4237 = scalar_lea.vmem [#allocation3], 16
    %4238 = vst.msk [vmem:[%s4237 + $0x1] sm:$0xff] %vm4111, %v4177
    %vm4239 = vcmask 63488
    %4240 = vst.msk [vmem:[%s4237 + $0x9] sm:$0x7f] %vm4239, %v4178
    %4241 = vst.msk [vmem:[%s4237 + $0x11] sm:$0xff] %vm4111, %v4179
    %4242 = vst.msk [vmem:[%s4237 + $0x19] sm:$0x7f] %vm4239, %v4180
    %4243 = vst.msk [vmem:[%s4237 + $0x21] sm:$0xff] %vm4111, %v4181
    %4244 = vst.msk [vmem:[%s4237 + $0x29] sm:$0x7f] %vm4239, %v4182
    %4245 = vst.msk [vmem:[%s4237 + $0x31] sm:$0xff] %vm4111, %v4183
    %4246 = vst.msk [vmem:[%s4237 + $0x39] sm:$0x7f] %vm4239, %v4184
    %4247 = vst.msk [vmem:[%s4237 + $0x41] sm:$0xff] %vm4111, %v4185
    %4248 = vst.msk [vmem:[%s4237 + $0x49] sm:$0x7f] %vm4239, %v4186
    %4249 = vst.msk [vmem:[%s4237 + $0x51] sm:$0xff] %vm4111, %v4187
    %4250 = vst.msk [vmem:[%s4237 + $0x59] sm:$0x7f] %vm4239, %v4188
    %4251 = vst.msk [vmem:[%s4237 + $0x61] sm:$0xff] %vm4111, %v4189
    %4252 = vst.msk [vmem:[%s4237 + $0x69] sm:$0x7f] %vm4239, %v4190
    %4253 = vst.msk [vmem:[%s4237 + $0x71] sm:$0xff] %vm4111, %v4191
    %4254 = vst.msk [vmem:[%s4237 + $0x79] sm:$0x7f] %vm4239, %v4192
    %4255 = vst.msk [vmem:[%s4237 + $0x81] sm:$0xff] %vm4111, %v4193
    %4256 = vst.msk [vmem:[%s4237 + $0x89] sm:$0x7f] %vm4239, %v4194
    %4257 = vst.msk [vmem:[%s4237 + $0x91] sm:$0xff] %vm4111, %v4195
    %4258 = vst.msk [vmem:[%s4237 + $0x99] sm:$0x7f] %vm4239, %v4196
    %4259 = vst.msk [vmem:[%s4237 + $0xa1] sm:$0xff] %vm4111, %v4197
    %4260 = vst.msk [vmem:[%s4237 + $0xa9] sm:$0x7f] %vm4239, %v4198
    %4261 = vst.msk [vmem:[%s4237 + $0xb1] sm:$0xff] %vm4111, %v4199
    %4262 = vst.msk [vmem:[%s4237 + $0xb9] sm:$0x7f] %vm4239, %v4200
    %4263 = vst.msk [vmem:[%s4237 + $0xc1] sm:$0xff] %vm4111, %v4201
    %4264 = vst.msk [vmem:[%s4237 + $0xc9] sm:$0x7f] %vm4239, %v4202
    %4265 = vst.msk [vmem:[%s4237 + $0xd1] sm:$0xff] %vm4111, %v4203
    %4266 = vst.msk [vmem:[%s4237 + $0xd9] sm:$0x7f] %vm4239, %v4204
    %4267 = vst.msk [vmem:[%s4237 + $0xe1] sm:$0xff] %vm4111, %v4205
    %4268 = vst.msk [vmem:[%s4237 + $0xe9] sm:$0x7f] %vm4239, %v4206
    %4269 = vst.msk [vmem:[%s4237 + $0x101] sm:$0xff] %vm4111, %v4207
    %4270 = vst.msk [vmem:[%s4237 + $0x109] sm:$0x7f] %vm4239, %v4208
    %4271 = vst.msk [vmem:[%s4237 + $0x111] sm:$0xff] %vm4111, %v4209
    %4272 = vst.msk [vmem:[%s4237 + $0x119] sm:$0x7f] %vm4239, %v4210
    %4273 = vst.msk [vmem:[%s4237 + $0x121] sm:$0xff] %vm4111, %v4211
    %4274 = vst.msk [vmem:[%s4237 + $0x129] sm:$0x7f] %vm4239, %v4212
    %4275 = vst.msk [vmem:[%s4237 + $0x131] sm:$0xff] %vm4111, %v4213
    %4276 = vst.msk [vmem:[%s4237 + $0x139] sm:$0x7f] %vm4239, %v4214
    %4277 = vst.msk [vmem:[%s4237 + $0x141] sm:$0xff] %vm4111, %v4215
    %4278 = vst.msk [vmem:[%s4237 + $0x149] sm:$0x7f] %vm4239, %v4216
    %4279 = vst.msk [vmem:[%s4237 + $0x151] sm:$0xff] %vm4111, %v4217
    %4280 = vst.msk [vmem:[%s4237 + $0x159] sm:$0x7f] %vm4239, %v4218
    %4281 = vst.msk [vmem:[%s4237 + $0x161] sm:$0xff] %vm4111, %v4219
    %4282 = vst.msk [vmem:[%s4237 + $0x169] sm:$0x7f] %vm4239, %v4220
    %4283 = vst.msk [vmem:[%s4237 + $0x171] sm:$0xff] %vm4111, %v4221
    %4284 = vst.msk [vmem:[%s4237 + $0x179] sm:$0x7f] %vm4239, %v4222
    %4285 = vst.msk [vmem:[%s4237 + $0x181] sm:$0xff] %vm4111, %v4223
    %4286 = vst.msk [vmem:[%s4237 + $0x189] sm:$0x7f] %vm4239, %v4224
    %4287 = vst.msk [vmem:[%s4237 + $0x191] sm:$0xff] %vm4111, %v4225
    %4288 = vst.msk [vmem:[%s4237 + $0x199] sm:$0x7f] %vm4239, %v4226
    %4289 = vst.msk [vmem:[%s4237 + $0x1a1] sm:$0xff] %vm4111, %v4227
    %4290 = vst.msk [vmem:[%s4237 + $0x1a9] sm:$0x7f] %vm4239, %v4228
    %4291 = vst.msk [vmem:[%s4237 + $0x1b1] sm:$0xff] %vm4111, %v4229
    %4292 = vst.msk [vmem:[%s4237 + $0x1b9] sm:$0x7f] %vm4239, %v4230
    %4293 = vst.msk [vmem:[%s4237 + $0x1c1] sm:$0xff] %vm4111, %v4231
    %4294 = vst.msk [vmem:[%s4237 + $0x1c9] sm:$0x7f] %vm4239, %v4232
    %4295 = vst.msk [vmem:[%s4237 + $0x1d1] sm:$0xff] %vm4111, %v4233
    %4296 = vst.msk [vmem:[%s4237 + $0x1d9] sm:$0x7f] %vm4239, %v4234
    %4297 = vst.msk [vmem:[%s4237 + $0x1e1] sm:$0xff] %vm4111, %v4235
    %4298 = vst.msk [vmem:[%s4237 + $0x1e9] sm:$0x7f] %vm4239, %v4236
    %v4299 = vld [vmem:[#allocation4] sm:$0xff]
    %v4300 = vld [vmem:[#allocation4 + $0x8] sm:$0xff]
    %v4301 = vld [vmem:[#allocation4 + $0x10] sm:$0xff]
    %v4302 = vld [vmem:[#allocation4 + $0x18] sm:$0xff]
    %v4303 = vld [vmem:[#allocation4 + $0x20] sm:$0xff]
    %v4304 = vld [vmem:[#allocation4 + $0x28] sm:$0xff]
    %v4305 = vld [vmem:[#allocation4 + $0x30] sm:$0xff]
    %v4306 = vld [vmem:[#allocation4 + $0x38] sm:$0xff]
    %v4307 = vld [vmem:[#allocation4 + $0x40] sm:$0xff]
    %v4308 = vld [vmem:[#allocation4 + $0x48] sm:$0xff]
    %v4309 = vld [vmem:[#allocation4 + $0x50] sm:$0xff]
    %v4310 = vld [vmem:[#allocation4 + $0x58] sm:$0xff]
    %v4311 = vld [vmem:[#allocation4 + $0x60] sm:$0xff]
    %v4312 = vld [vmem:[#allocation4 + $0x68] sm:$0xff]
    %v4313 = vld [vmem:[#allocation4 + $0x70] sm:$0xff]
    %v4314 = vld [vmem:[#allocation4 + $0x78] sm:$0xff]
    %v4315 = vld [vmem:[#allocation4 + $0x80] sm:$0xff]
    %v4316 = vld [vmem:[#allocation4 + $0x88] sm:$0xff]
    %v4317 = vld [vmem:[#allocation4 + $0x90] sm:$0xff]
    %v4318 = vld [vmem:[#allocation4 + $0x98] sm:$0xff]
    %v4319 = vld [vmem:[#allocation4 + $0xa0] sm:$0xff]
    %v4320 = vld [vmem:[#allocation4 + $0xa8] sm:$0xff]
    %v4321 = vld [vmem:[#allocation4 + $0xb0] sm:$0xff]
    %v4322 = vld [vmem:[#allocation4 + $0xb8] sm:$0xff]
    %v4323 = vld [vmem:[#allocation4 + $0xc0] sm:$0xff]
    %v4324 = vld [vmem:[#allocation4 + $0xc8] sm:$0xff]
    %v4325 = vld [vmem:[#allocation4 + $0xd0] sm:$0xff]
    %v4326 = vld [vmem:[#allocation4 + $0xd8] sm:$0xff]
    %v4327 = vld [vmem:[#allocation4 + $0xe0] sm:$0xff]
    %v4328 = vld [vmem:[#allocation4 + $0xe8] sm:$0xff]
    %v4329 = vld [vmem:[#allocation4 + $0x100] sm:$0xff]
    %v4330 = vld [vmem:[#allocation4 + $0x108] sm:$0xff]
    %v4331 = vld [vmem:[#allocation4 + $0x110] sm:$0xff]
    %v4332 = vld [vmem:[#allocation4 + $0x118] sm:$0xff]
    %v4333 = vld [vmem:[#allocation4 + $0x120] sm:$0xff]
    %v4334 = vld [vmem:[#allocation4 + $0x128] sm:$0xff]
    %v4335 = vld [vmem:[#allocation4 + $0x130] sm:$0xff]
    %v4336 = vld [vmem:[#allocation4 + $0x138] sm:$0xff]
    %v4337 = vld [vmem:[#allocation4 + $0x140] sm:$0xff]
    %v4338 = vld [vmem:[#allocation4 + $0x148] sm:$0xff]
    %v4339 = vld [vmem:[#allocation4 + $0x150] sm:$0xff]
    %v4340 = vld [vmem:[#allocation4 + $0x158] sm:$0xff]
    %v4341 = vld [vmem:[#allocation4 + $0x160] sm:$0xff]
    %v4342 = vld [vmem:[#allocation4 + $0x168] sm:$0xff]
    %v4343 = vld [vmem:[#allocation4 + $0x170] sm:$0xff]
    %v4344 = vld [vmem:[#allocation4 + $0x178] sm:$0xff]
    %v4345 = vld [vmem:[#allocation4 + $0x180] sm:$0xff]
    %v4346 = vld [vmem:[#allocation4 + $0x188] sm:$0xff]
    %v4347 = vld [vmem:[#allocation4 + $0x190] sm:$0xff]
    %v4348 = vld [vmem:[#allocation4 + $0x198] sm:$0xff]
    %v4349 = vld [vmem:[#allocation4 + $0x1a0] sm:$0xff]
    %v4350 = vld [vmem:[#allocation4 + $0x1a8] sm:$0xff]
    %v4351 = vld [vmem:[#allocation4 + $0x1b0] sm:$0xff]
    %v4352 = vld [vmem:[#allocation4 + $0x1b8] sm:$0xff]
    %v4353 = vld [vmem:[#allocation4 + $0x1c0] sm:$0xff]
    %v4354 = vld [vmem:[#allocation4 + $0x1c8] sm:$0xff]
    %v4355 = vld [vmem:[#allocation4 + $0x1d0] sm:$0xff]
    %v4356 = vld [vmem:[#allocation4 + $0x1d8] sm:$0xff]
    %v4357 = vld [vmem:[#allocation4 + $0x1e0] sm:$0xff]
    %v4358 = vld [vmem:[#allocation4 + $0x1e8] sm:$0xff]
    %4419 = vrot.lane.b32.xlu0 %v4299, 8
    %v4420 = vpop.permute.xlu0 %4419
    %4421 = vrot.lane.b32.xlu0 %v4300, 8
    %v4422 = vpop.permute.xlu0 %4421
    %4423 = vrot.lane.b32.xlu0 %v4301, 8
    %v4424 = vpop.permute.xlu0 %4423
    %4425 = vrot.lane.b32.xlu0 %v4302, 8
    %v4426 = vpop.permute.xlu0 %4425
    %4427 = vrot.lane.b32.xlu0 %v4303, 8
    %v4428 = vpop.permute.xlu0 %4427
    %4429 = vrot.lane.b32.xlu0 %v4304, 8
    %v4430 = vpop.permute.xlu0 %4429
    %4431 = vrot.lane.b32.xlu0 %v4305, 8
    %v4432 = vpop.permute.xlu0 %4431
    %4433 = vrot.lane.b32.xlu0 %v4306, 8
    %v4434 = vpop.permute.xlu0 %4433
    %4435 = vrot.lane.b32.xlu0 %v4307, 8
    %v4436 = vpop.permute.xlu0 %4435
    %4437 = vrot.lane.b32.xlu0 %v4308, 8
    %v4438 = vpop.permute.xlu0 %4437
    %4439 = vrot.lane.b32.xlu0 %v4309, 8
    %v4440 = vpop.permute.xlu0 %4439
    %4441 = vrot.lane.b32.xlu0 %v4310, 8
    %v4442 = vpop.permute.xlu0 %4441
    %4443 = vrot.lane.b32.xlu0 %v4311, 8
    %v4444 = vpop.permute.xlu0 %4443
    %4445 = vrot.lane.b32.xlu0 %v4312, 8
    %v4446 = vpop.permute.xlu0 %4445
    %4447 = vrot.lane.b32.xlu0 %v4313, 8
    %v4448 = vpop.permute.xlu0 %4447
    %4449 = vrot.lane.b32.xlu0 %v4314, 8
    %v4450 = vpop.permute.xlu0 %4449
    %4451 = vrot.lane.b32.xlu0 %v4315, 8
    %v4452 = vpop.permute.xlu0 %4451
    %4453 = vrot.lane.b32.xlu0 %v4316, 8
    %v4454 = vpop.permute.xlu0 %4453
    %4455 = vrot.lane.b32.xlu0 %v4317, 8
    %v4456 = vpop.permute.xlu0 %4455
    %4457 = vrot.lane.b32.xlu0 %v4318, 8
    %v4458 = vpop.permute.xlu0 %4457
    %4459 = vrot.lane.b32.xlu0 %v4319, 8
    %v4460 = vpop.permute.xlu0 %4459
    %4461 = vrot.lane.b32.xlu0 %v4320, 8
    %v4462 = vpop.permute.xlu0 %4461
    %4463 = vrot.lane.b32.xlu0 %v4321, 8
    %v4464 = vpop.permute.xlu0 %4463
    %4465 = vrot.lane.b32.xlu0 %v4322, 8
    %v4466 = vpop.permute.xlu0 %4465
    %4467 = vrot.lane.b32.xlu0 %v4323, 8
    %v4468 = vpop.permute.xlu0 %4467
    %4469 = vrot.lane.b32.xlu0 %v4324, 8
    %v4470 = vpop.permute.xlu0 %4469
    %4471 = vrot.lane.b32.xlu0 %v4325, 8
    %v4472 = vpop.permute.xlu0 %4471
    %4473 = vrot.lane.b32.xlu0 %v4326, 8
    %v4474 = vpop.permute.xlu0 %4473
    %4475 = vrot.lane.b32.xlu0 %v4327, 8
    %v4476 = vpop.permute.xlu0 %4475
    %4477 = vrot.lane.b32.xlu0 %v4328, 8
    %v4478 = vpop.permute.xlu0 %4477
    %4479 = vrot.lane.b32.xlu0 %v4329, 8
    %v4480 = vpop.permute.xlu0 %4479
    %4481 = vrot.lane.b32.xlu0 %v4330, 8
    %v4482 = vpop.permute.xlu0 %4481
    %4483 = vrot.lane.b32.xlu0 %v4331, 8
    %v4484 = vpop.permute.xlu0 %4483
    %4485 = vrot.lane.b32.xlu0 %v4332, 8
    %v4486 = vpop.permute.xlu0 %4485
    %4487 = vrot.lane.b32.xlu0 %v4333, 8
    %v4488 = vpop.permute.xlu0 %4487
    %4489 = vrot.lane.b32.xlu0 %v4334, 8
    %v4490 = vpop.permute.xlu0 %4489
    %4491 = vrot.lane.b32.xlu0 %v4335, 8
    %v4492 = vpop.permute.xlu0 %4491
    %4493 = vrot.lane.b32.xlu0 %v4336, 8
    %v4494 = vpop.permute.xlu0 %4493
    %4495 = vrot.lane.b32.xlu0 %v4337, 8
    %v4496 = vpop.permute.xlu0 %4495
    %4497 = vrot.lane.b32.xlu0 %v4338, 8
    %v4498 = vpop.permute.xlu0 %4497
    %4499 = vrot.lane.b32.xlu0 %v4339, 8
    %v4500 = vpop.permute.xlu0 %4499
    %4501 = vrot.lane.b32.xlu0 %v4340, 8
    %v4502 = vpop.permute.xlu0 %4501
    %4503 = vrot.lane.b32.xlu0 %v4341, 8
    %v4504 = vpop.permute.xlu0 %4503
    %4505 = vrot.lane.b32.xlu0 %v4342, 8
    %v4506 = vpop.permute.xlu0 %4505
    %4507 = vrot.lane.b32.xlu0 %v4343, 8
    %v4508 = vpop.permute.xlu0 %4507
    %4509 = vrot.lane.b32.xlu0 %v4344, 8
    %v4510 = vpop.permute.xlu0 %4509
    %4511 = vrot.lane.b32.xlu0 %v4345, 8
    %v4512 = vpop.permute.xlu0 %4511
    %4513 = vrot.lane.b32.xlu0 %v4346, 8
    %v4514 = vpop.permute.xlu0 %4513
    %4515 = vrot.lane.b32.xlu0 %v4347, 8
    %v4516 = vpop.permute.xlu0 %4515
    %4517 = vrot.lane.b32.xlu0 %v4348, 8
    %v4518 = vpop.permute.xlu0 %4517
    %4519 = vrot.lane.b32.xlu0 %v4349, 8
    %v4520 = vpop.permute.xlu0 %4519
    %4521 = vrot.lane.b32.xlu0 %v4350, 8
    %v4522 = vpop.permute.xlu0 %4521
    %4523 = vrot.lane.b32.xlu0 %v4351, 8
    %v4524 = vpop.permute.xlu0 %4523
    %4525 = vrot.lane.b32.xlu0 %v4352, 8
    %v4526 = vpop.permute.xlu0 %4525
    %4527 = vrot.lane.b32.xlu0 %v4353, 8
    %v4528 = vpop.permute.xlu0 %4527
    %4529 = vrot.lane.b32.xlu0 %v4354, 8
    %v4530 = vpop.permute.xlu0 %4529
    %4531 = vrot.lane.b32.xlu0 %v4355, 8
    %v4532 = vpop.permute.xlu0 %4531
    %4533 = vrot.lane.b32.xlu0 %v4356, 8
    %v4534 = vpop.permute.xlu0 %4533
    %4535 = vrot.lane.b32.xlu0 %v4357, 8
    %v4536 = vpop.permute.xlu0 %4535
    %4537 = vrot.lane.b32.xlu0 %v4358, 8
    %v4538 = vpop.permute.xlu0 %4537
    %vm4599 = vcmask 130112
    %4600 = vst.msk [vmem:[%s4237] sm:$0xff] %vm4599, %v4420
    %4601 = vst.msk [vmem:[%s4237 + $0x8] sm:$0xff] %vm4599, %v4422
    %4602 = vst.msk [vmem:[%s4237 + $0x10] sm:$0xff] %vm4599, %v4424
    %4603 = vst.msk [vmem:[%s4237 + $0x18] sm:$0xff] %vm4599, %v4426
    %4604 = vst.msk [vmem:[%s4237 + $0x20] sm:$0xff] %vm4599, %v4428
    %4605 = vst.msk [vmem:[%s4237 + $0x28] sm:$0xff] %vm4599, %v4430
    %4606 = vst.msk [vmem:[%s4237 + $0x30] sm:$0xff] %vm4599, %v4432
    %4607 = vst.msk [vmem:[%s4237 + $0x38] sm:$0xff] %vm4599, %v4434
    %4608 = vst.msk [vmem:[%s4237 + $0x40] sm:$0xff] %vm4599, %v4436
    %4609 = vst.msk [vmem:[%s4237 + $0x48] sm:$0xff] %vm4599, %v4438
    %4610 = vst.msk [vmem:[%s4237 + $0x50] sm:$0xff] %vm4599, %v4440
    %4611 = vst.msk [vmem:[%s4237 + $0x58] sm:$0xff] %vm4599, %v4442
    %4612 = vst.msk [vmem:[%s4237 + $0x60] sm:$0xff] %vm4599, %v4444
    %4613 = vst.msk [vmem:[%s4237 + $0x68] sm:$0xff] %vm4599, %v4446
    %4614 = vst.msk [vmem:[%s4237 + $0x70] sm:$0xff] %vm4599, %v4448
    %4615 = vst.msk [vmem:[%s4237 + $0x78] sm:$0xff] %vm4599, %v4450
    %4616 = vst.msk [vmem:[%s4237 + $0x80] sm:$0xff] %vm4599, %v4452
    %4617 = vst.msk [vmem:[%s4237 + $0x88] sm:$0xff] %vm4599, %v4454
    %4618 = vst.msk [vmem:[%s4237 + $0x90] sm:$0xff] %vm4599, %v4456
    %4619 = vst.msk [vmem:[%s4237 + $0x98] sm:$0xff] %vm4599, %v4458
    %4620 = vst.msk [vmem:[%s4237 + $0xa0] sm:$0xff] %vm4599, %v4460
    %4621 = vst.msk [vmem:[%s4237 + $0xa8] sm:$0xff] %vm4599, %v4462
    %4622 = vst.msk [vmem:[%s4237 + $0xb0] sm:$0xff] %vm4599, %v4464
    %4623 = vst.msk [vmem:[%s4237 + $0xb8] sm:$0xff] %vm4599, %v4466
    %4624 = vst.msk [vmem:[%s4237 + $0xc0] sm:$0xff] %vm4599, %v4468
    %4625 = vst.msk [vmem:[%s4237 + $0xc8] sm:$0xff] %vm4599, %v4470
    %4626 = vst.msk [vmem:[%s4237 + $0xd0] sm:$0xff] %vm4599, %v4472
    %4627 = vst.msk [vmem:[%s4237 + $0xd8] sm:$0xff] %vm4599, %v4474
    %4628 = vst.msk [vmem:[%s4237 + $0xe0] sm:$0xff] %vm4599, %v4476
    %4629 = vst.msk [vmem:[%s4237 + $0xe8] sm:$0xff] %vm4599, %v4478
    %4630 = vst.msk [vmem:[%s4237 + $0x100] sm:$0xff] %vm4599, %v4480
    %4631 = vst.msk [vmem:[%s4237 + $0x108] sm:$0xff] %vm4599, %v4482
    %4632 = vst.msk [vmem:[%s4237 + $0x110] sm:$0xff] %vm4599, %v4484
    %4633 = vst.msk [vmem:[%s4237 + $0x118] sm:$0xff] %vm4599, %v4486
    %4634 = vst.msk [vmem:[%s4237 + $0x120] sm:$0xff] %vm4599, %v4488
    %4635 = vst.msk [vmem:[%s4237 + $0x128] sm:$0xff] %vm4599, %v4490
    %4636 = vst.msk [vmem:[%s4237 + $0x130] sm:$0xff] %vm4599, %v4492
    %4637 = vst.msk [vmem:[%s4237 + $0x138] sm:$0xff] %vm4599, %v4494
    %4638 = vst.msk [vmem:[%s4237 + $0x140] sm:$0xff] %vm4599, %v4496
    %4639 = vst.msk [vmem:[%s4237 + $0x148] sm:$0xff] %vm4599, %v4498
    %4640 = vst.msk [vmem:[%s4237 + $0x150] sm:$0xff] %vm4599, %v4500
    %4641 = vst.msk [vmem:[%s4237 + $0x158] sm:$0xff] %vm4599, %v4502
    %4642 = vst.msk [vmem:[%s4237 + $0x160] sm:$0xff] %vm4599, %v4504
    %4643 = vst.msk [vmem:[%s4237 + $0x168] sm:$0xff] %vm4599, %v4506
    %4644 = vst.msk [vmem:[%s4237 + $0x170] sm:$0xff] %vm4599, %v4508
    %4645 = vst.msk [vmem:[%s4237 + $0x178] sm:$0xff] %vm4599, %v4510
    %4646 = vst.msk [vmem:[%s4237 + $0x180] sm:$0xff] %vm4599, %v4512
    %4647 = vst.msk [vmem:[%s4237 + $0x188] sm:$0xff] %vm4599, %v4514
    %4648 = vst.msk [vmem:[%s4237 + $0x190] sm:$0xff] %vm4599, %v4516
    %4649 = vst.msk [vmem:[%s4237 + $0x198] sm:$0xff] %vm4599, %v4518
    %4650 = vst.msk [vmem:[%s4237 + $0x1a0] sm:$0xff] %vm4599, %v4520
    %4651 = vst.msk [vmem:[%s4237 + $0x1a8] sm:$0xff] %vm4599, %v4522
    %4652 = vst.msk [vmem:[%s4237 + $0x1b0] sm:$0xff] %vm4599, %v4524
    %4653 = vst.msk [vmem:[%s4237 + $0x1b8] sm:$0xff] %vm4599, %v4526
    %4654 = vst.msk [vmem:[%s4237 + $0x1c0] sm:$0xff] %vm4599, %v4528
    %4655 = vst.msk [vmem:[%s4237 + $0x1c8] sm:$0xff] %vm4599, %v4530
    %4656 = vst.msk [vmem:[%s4237 + $0x1d0] sm:$0xff] %vm4599, %v4532
    %4657 = vst.msk [vmem:[%s4237 + $0x1d8] sm:$0xff] %vm4599, %v4534
    %4658 = vst.msk [vmem:[%s4237 + $0x1e0] sm:$0xff] %vm4599, %v4536
    %4659 = vst.msk [vmem:[%s4237 + $0x1e8] sm:$0xff] %vm4599, %v4538
    %v4660 = vld [vmem:[#allocation4 + $0x1] sm:$0xff]
    %v4661 = vld [vmem:[#allocation4 + $0x9] sm:$0x7f]
    %v4662 = vld [vmem:[#allocation4 + $0x11] sm:$0xff]
    %v4663 = vld [vmem:[#allocation4 + $0x19] sm:$0x7f]
    %v4664 = vld [vmem:[#allocation4 + $0x21] sm:$0xff]
    %v4665 = vld [vmem:[#allocation4 + $0x29] sm:$0x7f]
    %v4666 = vld [vmem:[#allocation4 + $0x31] sm:$0xff]
    %v4667 = vld [vmem:[#allocation4 + $0x39] sm:$0x7f]
    %v4668 = vld [vmem:[#allocation4 + $0x41] sm:$0xff]
    %v4669 = vld [vmem:[#allocation4 + $0x49] sm:$0x7f]
    %v4670 = vld [vmem:[#allocation4 + $0x51] sm:$0xff]
    %v4671 = vld [vmem:[#allocation4 + $0x59] sm:$0x7f]
    %v4672 = vld [vmem:[#allocation4 + $0x61] sm:$0xff]
    %v4673 = vld [vmem:[#allocation4 + $0x69] sm:$0x7f]
    %v4674 = vld [vmem:[#allocation4 + $0x71] sm:$0xff]
    %v4675 = vld [vmem:[#allocation4 + $0x79] sm:$0x7f]
    %v4676 = vld [vmem:[#allocation4 + $0x81] sm:$0xff]
    %v4677 = vld [vmem:[#allocation4 + $0x89] sm:$0x7f]
    %v4678 = vld [vmem:[#allocation4 + $0x91] sm:$0xff]
    %v4679 = vld [vmem:[#allocation4 + $0x99] sm:$0x7f]
    %v4680 = vld [vmem:[#allocation4 + $0xa1] sm:$0xff]
    %v4681 = vld [vmem:[#allocation4 + $0xa9] sm:$0x7f]
    %v4682 = vld [vmem:[#allocation4 + $0xb1] sm:$0xff]
    %v4683 = vld [vmem:[#allocation4 + $0xb9] sm:$0x7f]
    %v4684 = vld [vmem:[#allocation4 + $0xc1] sm:$0xff]
    %v4685 = vld [vmem:[#allocation4 + $0xc9] sm:$0x7f]
    %v4686 = vld [vmem:[#allocation4 + $0xd1] sm:$0xff]
    %v4687 = vld [vmem:[#allocation4 + $0xd9] sm:$0x7f]
    %v4688 = vld [vmem:[#allocation4 + $0xe1] sm:$0xff]
    %v4689 = vld [vmem:[#allocation4 + $0xe9] sm:$0x7f]
    %v4690 = vld [vmem:[#allocation4 + $0x101] sm:$0xff]
    %v4691 = vld [vmem:[#allocation4 + $0x109] sm:$0x7f]
    %v4692 = vld [vmem:[#allocation4 + $0x111] sm:$0xff]
    %v4693 = vld [vmem:[#allocation4 + $0x119] sm:$0x7f]
    %v4694 = vld [vmem:[#allocation4 + $0x121] sm:$0xff]
    %v4695 = vld [vmem:[#allocation4 + $0x129] sm:$0x7f]
    %v4696 = vld [vmem:[#allocation4 + $0x131] sm:$0xff]
    %v4697 = vld [vmem:[#allocation4 + $0x139] sm:$0x7f]
    %v4698 = vld [vmem:[#allocation4 + $0x141] sm:$0xff]
    %v4699 = vld [vmem:[#allocation4 + $0x149] sm:$0x7f]
    %v4700 = vld [vmem:[#allocation4 + $0x151] sm:$0xff]
    %v4701 = vld [vmem:[#allocation4 + $0x159] sm:$0x7f]
    %v4702 = vld [vmem:[#allocation4 + $0x161] sm:$0xff]
    %v4703 = vld [vmem:[#allocation4 + $0x169] sm:$0x7f]
    %v4704 = vld [vmem:[#allocation4 + $0x171] sm:$0xff]
    %v4705 = vld [vmem:[#allocation4 + $0x179] sm:$0x7f]
    %v4706 = vld [vmem:[#allocation4 + $0x181] sm:$0xff]
    %v4707 = vld [vmem:[#allocation4 + $0x189] sm:$0x7f]
    %v4708 = vld [vmem:[#allocation4 + $0x191] sm:$0xff]
    %v4709 = vld [vmem:[#allocation4 + $0x199] sm:$0x7f]
    %v4710 = vld [vmem:[#allocation4 + $0x1a1] sm:$0xff]
    %v4711 = vld [vmem:[#allocation4 + $0x1a9] sm:$0x7f]
    %v4712 = vld [vmem:[#allocation4 + $0x1b1] sm:$0xff]
    %v4713 = vld [vmem:[#allocation4 + $0x1b9] sm:$0x7f]
    %v4714 = vld [vmem:[#allocation4 + $0x1c1] sm:$0xff]
    %v4715 = vld [vmem:[#allocation4 + $0x1c9] sm:$0x7f]
    %v4716 = vld [vmem:[#allocation4 + $0x1d1] sm:$0xff]
    %v4717 = vld [vmem:[#allocation4 + $0x1d9] sm:$0x7f]
    %v4718 = vld [vmem:[#allocation4 + $0x1e1] sm:$0xff]
    %v4719 = vld [vmem:[#allocation4 + $0x1e9] sm:$0x7f]
    %4780 = vrot.lane.b32.xlu0 %v4660, 16
    %v4781 = vpop.permute.xlu0 %4780
    %4782 = vrot.lane.b32.xlu0 %v4661, 16
    %v4783 = vpop.permute.xlu0 %4782
    %4784 = vrot.lane.b32.xlu0 %v4662, 16
    %v4785 = vpop.permute.xlu0 %4784
    %4786 = vrot.lane.b32.xlu0 %v4663, 16
    %v4787 = vpop.permute.xlu0 %4786
    %4788 = vrot.lane.b32.xlu0 %v4664, 16
    %v4789 = vpop.permute.xlu0 %4788
    %4790 = vrot.lane.b32.xlu0 %v4665, 16
    %v4791 = vpop.permute.xlu0 %4790
    %4792 = vrot.lane.b32.xlu0 %v4666, 16
    %v4793 = vpop.permute.xlu0 %4792
    %4794 = vrot.lane.b32.xlu0 %v4667, 16
    %v4795 = vpop.permute.xlu0 %4794
    %4796 = vrot.lane.b32.xlu0 %v4668, 16
    %v4797 = vpop.permute.xlu0 %4796
    %4798 = vrot.lane.b32.xlu0 %v4669, 16
    %v4799 = vpop.permute.xlu0 %4798
    %4800 = vrot.lane.b32.xlu0 %v4670, 16
    %v4801 = vpop.permute.xlu0 %4800
    %4802 = vrot.lane.b32.xlu0 %v4671, 16
    %v4803 = vpop.permute.xlu0 %4802
    %4804 = vrot.lane.b32.xlu0 %v4672, 16
    %v4805 = vpop.permute.xlu0 %4804
    %4806 = vrot.lane.b32.xlu0 %v4673, 16
    %v4807 = vpop.permute.xlu0 %4806
    %4808 = vrot.lane.b32.xlu0 %v4674, 16
    %v4809 = vpop.permute.xlu0 %4808
    %4810 = vrot.lane.b32.xlu0 %v4675, 16
    %v4811 = vpop.permute.xlu0 %4810
    %4812 = vrot.lane.b32.xlu0 %v4676, 16
    %v4813 = vpop.permute.xlu0 %4812
    %4814 = vrot.lane.b32.xlu0 %v4677, 16
    %v4815 = vpop.permute.xlu0 %4814
    %4816 = vrot.lane.b32.xlu0 %v4678, 16
    %v4817 = vpop.permute.xlu0 %4816
    %4818 = vrot.lane.b32.xlu0 %v4679, 16
    %v4819 = vpop.permute.xlu0 %4818
    %4820 = vrot.lane.b32.xlu0 %v4680, 16
    %v4821 = vpop.permute.xlu0 %4820
    %4822 = vrot.lane.b32.xlu0 %v4681, 16
    %v4823 = vpop.permute.xlu0 %4822
    %4824 = vrot.lane.b32.xlu0 %v4682, 16
    %v4825 = vpop.permute.xlu0 %4824
    %4826 = vrot.lane.b32.xlu0 %v4683, 16
    %v4827 = vpop.permute.xlu0 %4826
    %4828 = vrot.lane.b32.xlu0 %v4684, 16
    %v4829 = vpop.permute.xlu0 %4828
    %4830 = vrot.lane.b32.xlu0 %v4685, 16
    %v4831 = vpop.permute.xlu0 %4830
    %4832 = vrot.lane.b32.xlu0 %v4686, 16
    %v4833 = vpop.permute.xlu0 %4832
    %4834 = vrot.lane.b32.xlu0 %v4687, 16
    %v4835 = vpop.permute.xlu0 %4834
    %4836 = vrot.lane.b32.xlu0 %v4688, 16
    %v4837 = vpop.permute.xlu0 %4836
    %4838 = vrot.lane.b32.xlu0 %v4689, 16
    %v4839 = vpop.permute.xlu0 %4838
    %4840 = vrot.lane.b32.xlu0 %v4690, 16
    %v4841 = vpop.permute.xlu0 %4840
    %4842 = vrot.lane.b32.xlu0 %v4691, 16
    %v4843 = vpop.permute.xlu0 %4842
    %4844 = vrot.lane.b32.xlu0 %v4692, 16
    %v4845 = vpop.permute.xlu0 %4844
    %4846 = vrot.lane.b32.xlu0 %v4693, 16
    %v4847 = vpop.permute.xlu0 %4846
    %4848 = vrot.lane.b32.xlu0 %v4694, 16
    %v4849 = vpop.permute.xlu0 %4848
    %4850 = vrot.lane.b32.xlu0 %v4695, 16
    %v4851 = vpop.permute.xlu0 %4850
    %4852 = vrot.lane.b32.xlu0 %v4696, 16
    %v4853 = vpop.permute.xlu0 %4852
    %4854 = vrot.lane.b32.xlu0 %v4697, 16
    %v4855 = vpop.permute.xlu0 %4854
    %4856 = vrot.lane.b32.xlu0 %v4698, 16
    %v4857 = vpop.permute.xlu0 %4856
    %4858 = vrot.lane.b32.xlu0 %v4699, 16
    %v4859 = vpop.permute.xlu0 %4858
    %4860 = vrot.lane.b32.xlu0 %v4700, 16
    %v4861 = vpop.permute.xlu0 %4860
    %4862 = vrot.lane.b32.xlu0 %v4701, 16
    %v4863 = vpop.permute.xlu0 %4862
    %4864 = vrot.lane.b32.xlu0 %v4702, 16
    %v4865 = vpop.permute.xlu0 %4864
    %4866 = vrot.lane.b32.xlu0 %v4703, 16
    %v4867 = vpop.permute.xlu0 %4866
    %4868 = vrot.lane.b32.xlu0 %v4704, 16
    %v4869 = vpop.permute.xlu0 %4868
    %4870 = vrot.lane.b32.xlu0 %v4705, 16
    %v4871 = vpop.permute.xlu0 %4870
    %4872 = vrot.lane.b32.xlu0 %v4706, 16
    %v4873 = vpop.permute.xlu0 %4872
    %4874 = vrot.lane.b32.xlu0 %v4707, 16
    %v4875 = vpop.permute.xlu0 %4874
    %4876 = vrot.lane.b32.xlu0 %v4708, 16
    %v4877 = vpop.permute.xlu0 %4876
    %4878 = vrot.lane.b32.xlu0 %v4709, 16
    %v4879 = vpop.permute.xlu0 %4878
    %4880 = vrot.lane.b32.xlu0 %v4710, 16
    %v4881 = vpop.permute.xlu0 %4880
    %4882 = vrot.lane.b32.xlu0 %v4711, 16
    %v4883 = vpop.permute.xlu0 %4882
    %4884 = vrot.lane.b32.xlu0 %v4712, 16
    %v4885 = vpop.permute.xlu0 %4884
    %4886 = vrot.lane.b32.xlu0 %v4713, 16
    %v4887 = vpop.permute.xlu0 %4886
    %4888 = vrot.lane.b32.xlu0 %v4714, 16
    %v4889 = vpop.permute.xlu0 %4888
    %4890 = vrot.lane.b32.xlu0 %v4715, 16
    %v4891 = vpop.permute.xlu0 %4890
    %4892 = vrot.lane.b32.xlu0 %v4716, 16
    %v4893 = vpop.permute.xlu0 %4892
    %4894 = vrot.lane.b32.xlu0 %v4717, 16
    %v4895 = vpop.permute.xlu0 %4894
    %4896 = vrot.lane.b32.xlu0 %v4718, 16
    %v4897 = vpop.permute.xlu0 %4896
    %4898 = vrot.lane.b32.xlu0 %v4719, 16
    %v4899 = vpop.permute.xlu0 %4898
    %vm4960 = vcmask 195712
    %4961 = vst.msk [vmem:[%s4237] sm:$0xff] %vm4960, %v4781
    %vm4962 = vcmask 194688
    %4963 = vst.msk [vmem:[%s4237 + $0x8] sm:$0x7f] %vm4962, %v4783
    %4964 = vst.msk [vmem:[%s4237 + $0x10] sm:$0xff] %vm4960, %v4785
    %4965 = vst.msk [vmem:[%s4237 + $0x18] sm:$0x7f] %vm4962, %v4787
    %4966 = vst.msk [vmem:[%s4237 + $0x20] sm:$0xff] %vm4960, %v4789
    %4967 = vst.msk [vmem:[%s4237 + $0x28] sm:$0x7f] %vm4962, %v4791
    %4968 = vst.msk [vmem:[%s4237 + $0x30] sm:$0xff] %vm4960, %v4793
    %4969 = vst.msk [vmem:[%s4237 + $0x38] sm:$0x7f] %vm4962, %v4795
    %4970 = vst.msk [vmem:[%s4237 + $0x40] sm:$0xff] %vm4960, %v4797
    %4971 = vst.msk [vmem:[%s4237 + $0x48] sm:$0x7f] %vm4962, %v4799
    %4972 = vst.msk [vmem:[%s4237 + $0x50] sm:$0xff] %vm4960, %v4801
    %4973 = vst.msk [vmem:[%s4237 + $0x58] sm:$0x7f] %vm4962, %v4803
    %4974 = vst.msk [vmem:[%s4237 + $0x60] sm:$0xff] %vm4960, %v4805
    %4975 = vst.msk [vmem:[%s4237 + $0x68] sm:$0x7f] %vm4962, %v4807
    %4976 = vst.msk [vmem:[%s4237 + $0x70] sm:$0xff] %vm4960, %v4809
    %4977 = vst.msk [vmem:[%s4237 + $0x78] sm:$0x7f] %vm4962, %v4811
    %4978 = vst.msk [vmem:[%s4237 + $0x80] sm:$0xff] %vm4960, %v4813
    %4979 = vst.msk [vmem:[%s4237 + $0x88] sm:$0x7f] %vm4962, %v4815
    %4980 = vst.msk [vmem:[%s4237 + $0x90] sm:$0xff] %vm4960, %v4817
    %4981 = vst.msk [vmem:[%s4237 + $0x98] sm:$0x7f] %vm4962, %v4819
    %4982 = vst.msk [vmem:[%s4237 + $0xa0] sm:$0xff] %vm4960, %v4821
    %4983 = vst.msk [vmem:[%s4237 + $0xa8] sm:$0x7f] %vm4962, %v4823
    %4984 = vst.msk [vmem:[%s4237 + $0xb0] sm:$0xff] %vm4960, %v4825
    %4985 = vst.msk [vmem:[%s4237 + $0xb8] sm:$0x7f] %vm4962, %v4827
    %4986 = vst.msk [vmem:[%s4237 + $0xc0] sm:$0xff] %vm4960, %v4829
    %4987 = vst.msk [vmem:[%s4237 + $0xc8] sm:$0x7f] %vm4962, %v4831
    %4988 = vst.msk [vmem:[%s4237 + $0xd0] sm:$0xff] %vm4960, %v4833
    %4989 = vst.msk [vmem:[%s4237 + $0xd8] sm:$0x7f] %vm4962, %v4835
    %4990 = vst.msk [vmem:[%s4237 + $0xe0] sm:$0xff] %vm4960, %v4837
    %4991 = vst.msk [vmem:[%s4237 + $0xe8] sm:$0x7f] %vm4962, %v4839
    %4992 = vst.msk [vmem:[%s4237 + $0x100] sm:$0xff] %vm4960, %v4841
    %4993 = vst.msk [vmem:[%s4237 + $0x108] sm:$0x7f] %vm4962, %v4843
    %4994 = vst.msk [vmem:[%s4237 + $0x110] sm:$0xff] %vm4960, %v4845
    %4995 = vst.msk [vmem:[%s4237 + $0x118] sm:$0x7f] %vm4962, %v4847
    %4996 = vst.msk [vmem:[%s4237 + $0x120] sm:$0xff] %vm4960, %v4849
    %4997 = vst.msk [vmem:[%s4237 + $0x128] sm:$0x7f] %vm4962, %v4851
    %4998 = vst.msk [vmem:[%s4237 + $0x130] sm:$0xff] %vm4960, %v4853
    %4999 = vst.msk [vmem:[%s4237 + $0x138] sm:$0x7f] %vm4962, %v4855
    %5000 = vst.msk [vmem:[%s4237 + $0x140] sm:$0xff] %vm4960, %v4857
    %5001 = vst.msk [vmem:[%s4237 + $0x148] sm:$0x7f] %vm4962, %v4859
    %5002 = vst.msk [vmem:[%s4237 + $0x150] sm:$0xff] %vm4960, %v4861
    %5003 = vst.msk [vmem:[%s4237 + $0x158] sm:$0x7f] %vm4962, %v4863
    %5004 = vst.msk [vmem:[%s4237 + $0x160] sm:$0xff] %vm4960, %v4865
    %5005 = vst.msk [vmem:[%s4237 + $0x168] sm:$0x7f] %vm4962, %v4867
    %5006 = vst.msk [vmem:[%s4237 + $0x170] sm:$0xff] %vm4960, %v4869
    %5007 = vst.msk [vmem:[%s4237 + $0x178] sm:$0x7f] %vm4962, %v4871
    %5008 = vst.msk [vmem:[%s4237 + $0x180] sm:$0xff] %vm4960, %v4873
    %5009 = vst.msk [vmem:[%s4237 + $0x188] sm:$0x7f] %vm4962, %v4875
    %5010 = vst.msk [vmem:[%s4237 + $0x190] sm:$0xff] %vm4960, %v4877
    %5011 = vst.msk [vmem:[%s4237 + $0x198] sm:$0x7f] %vm4962, %v4879
    %5012 = vst.msk [vmem:[%s4237 + $0x1a0] sm:$0xff] %vm4960, %v4881
    %5013 = vst.msk [vmem:[%s4237 + $0x1a8] sm:$0x7f] %vm4962, %v4883
    %5014 = vst.msk [vmem:[%s4237 + $0x1b0] sm:$0xff] %vm4960, %v4885
    %5015 = vst.msk [vmem:[%s4237 + $0x1b8] sm:$0x7f] %vm4962, %v4887
    %5016 = vst.msk [vmem:[%s4237 + $0x1c0] sm:$0xff] %vm4960, %v4889
    %5017 = vst.msk [vmem:[%s4237 + $0x1c8] sm:$0x7f] %vm4962, %v4891
    %5018 = vst.msk [vmem:[%s4237 + $0x1d0] sm:$0xff] %vm4960, %v4893
    %5019 = vst.msk [vmem:[%s4237 + $0x1d8] sm:$0x7f] %vm4962, %v4895
    %5020 = vst.msk [vmem:[%s4237 + $0x1e0] sm:$0xff] %vm4960, %v4897
    %5021 = vst.msk [vmem:[%s4237 + $0x1e8] sm:$0x7f] %vm4962, %v4899
    %v5022 = vld [vmem:[#allocation4] sm:$0xff]
    %v5023 = vld [vmem:[#allocation4 + $0x8] sm:$0x7f]
    %v5024 = vld [vmem:[#allocation4 + $0x10] sm:$0xff]
    %v5025 = vld [vmem:[#allocation4 + $0x18] sm:$0x7f]
    %v5026 = vld [vmem:[#allocation4 + $0x20] sm:$0xff]
    %v5027 = vld [vmem:[#allocation4 + $0x28] sm:$0x7f]
    %v5028 = vld [vmem:[#allocation4 + $0x30] sm:$0xff]
    %v5029 = vld [vmem:[#allocation4 + $0x38] sm:$0x7f]
    %v5030 = vld [vmem:[#allocation4 + $0x40] sm:$0xff]
    %v5031 = vld [vmem:[#allocation4 + $0x48] sm:$0x7f]
    %v5032 = vld [vmem:[#allocation4 + $0x50] sm:$0xff]
    %v5033 = vld [vmem:[#allocation4 + $0x58] sm:$0x7f]
    %v5034 = vld [vmem:[#allocation4 + $0x60] sm:$0xff]
    %v5035 = vld [vmem:[#allocation4 + $0x68] sm:$0x7f]
    %v5036 = vld [vmem:[#allocation4 + $0x70] sm:$0xff]
    %v5037 = vld [vmem:[#allocation4 + $0x78] sm:$0x7f]
    %v5038 = vld [vmem:[#allocation4 + $0x80] sm:$0xff]
    %v5039 = vld [vmem:[#allocation4 + $0x88] sm:$0x7f]
    %v5040 = vld [vmem:[#allocation4 + $0x90] sm:$0xff]
    %v5041 = vld [vmem:[#allocation4 + $0x98] sm:$0x7f]
    %v5042 = vld [vmem:[#allocation4 + $0xa0] sm:$0xff]
    %v5043 = vld [vmem:[#allocation4 + $0xa8] sm:$0x7f]
    %v5044 = vld [vmem:[#allocation4 + $0xb0] sm:$0xff]
    %v5045 = vld [vmem:[#allocation4 + $0xb8] sm:$0x7f]
    %v5046 = vld [vmem:[#allocation4 + $0xc0] sm:$0xff]
    %v5047 = vld [vmem:[#allocation4 + $0xc8] sm:$0x7f]
    %v5048 = vld [vmem:[#allocation4 + $0xd0] sm:$0xff]
    %v5049 = vld [vmem:[#allocation4 + $0xd8] sm:$0x7f]
    %v5050 = vld [vmem:[#allocation4 + $0xe0] sm:$0xff]
    %v5051 = vld [vmem:[#allocation4 + $0xe8] sm:$0x7f]
    %v5052 = vld [vmem:[#allocation4 + $0xf0] sm:$0xff]
    %v5053 = vld [vmem:[#allocation4 + $0xf8] sm:$0x7f]
    %v5054 = vld [vmem:[#allocation4 + $0x100] sm:$0xff]
    %v5055 = vld [vmem:[#allocation4 + $0x108] sm:$0x7f]
    %v5056 = vld [vmem:[#allocation4 + $0x110] sm:$0xff]
    %v5057 = vld [vmem:[#allocation4 + $0x118] sm:$0x7f]
    %v5058 = vld [vmem:[#allocation4 + $0x120] sm:$0xff]
    %v5059 = vld [vmem:[#allocation4 + $0x128] sm:$0x7f]
    %v5060 = vld [vmem:[#allocation4 + $0x130] sm:$0xff]
    %v5061 = vld [vmem:[#allocation4 + $0x138] sm:$0x7f]
    %v5062 = vld [vmem:[#allocation4 + $0x140] sm:$0xff]
    %v5063 = vld [vmem:[#allocation4 + $0x148] sm:$0x7f]
    %v5064 = vld [vmem:[#allocation4 + $0x150] sm:$0xff]
    %v5065 = vld [vmem:[#allocation4 + $0x158] sm:$0x7f]
    %v5066 = vld [vmem:[#allocation4 + $0x160] sm:$0xff]
    %v5067 = vld [vmem:[#allocation4 + $0x168] sm:$0x7f]
    %v5068 = vld [vmem:[#allocation4 + $0x170] sm:$0xff]
    %v5069 = vld [vmem:[#allocation4 + $0x178] sm:$0x7f]
    %v5070 = vld [vmem:[#allocation4 + $0x180] sm:$0xff]
    %v5071 = vld [vmem:[#allocation4 + $0x188] sm:$0x7f]
    %v5072 = vld [vmem:[#allocation4 + $0x190] sm:$0xff]
    %v5073 = vld [vmem:[#allocation4 + $0x198] sm:$0x7f]
    %v5074 = vld [vmem:[#allocation4 + $0x1a0] sm:$0xff]
    %v5075 = vld [vmem:[#allocation4 + $0x1a8] sm:$0x7f]
    %v5076 = vld [vmem:[#allocation4 + $0x1b0] sm:$0xff]
    %v5077 = vld [vmem:[#allocation4 + $0x1b8] sm:$0x7f]
    %v5078 = vld [vmem:[#allocation4 + $0x1c0] sm:$0xff]
    %v5079 = vld [vmem:[#allocation4 + $0x1c8] sm:$0x7f]
    %v5080 = vld [vmem:[#allocation4 + $0x1d0] sm:$0xff]
    %v5081 = vld [vmem:[#allocation4 + $0x1d8] sm:$0x7f]
    %v5082 = vld [vmem:[#allocation4 + $0x1e0] sm:$0xff]
    %v5083 = vld [vmem:[#allocation4 + $0x1e8] sm:$0x7f]
    %v5084 = vld [vmem:[#allocation4 + $0x1f0] sm:$0xff]
    %v5085 = vld [vmem:[#allocation4 + $0x1f8] sm:$0x7f]
    %5150 = vrot.lane.b32.xlu0 %v5022, 24
    %v5151 = vpop.permute.xlu0 %5150
    %5152 = vrot.lane.b32.xlu0 %v5023, 24
    %v5153 = vpop.permute.xlu0 %5152
    %5154 = vrot.lane.b32.xlu0 %v5024, 24
    %v5155 = vpop.permute.xlu0 %5154
    %5156 = vrot.lane.b32.xlu0 %v5025, 24
    %v5157 = vpop.permute.xlu0 %5156
    %5158 = vrot.lane.b32.xlu0 %v5026, 24
    %v5159 = vpop.permute.xlu0 %5158
    %5160 = vrot.lane.b32.xlu0 %v5027, 24
    %v5161 = vpop.permute.xlu0 %5160
    %5162 = vrot.lane.b32.xlu0 %v5028, 24
    %v5163 = vpop.permute.xlu0 %5162
    %5164 = vrot.lane.b32.xlu0 %v5029, 24
    %v5165 = vpop.permute.xlu0 %5164
    %5166 = vrot.lane.b32.xlu0 %v5030, 24
    %v5167 = vpop.permute.xlu0 %5166
    %5168 = vrot.lane.b32.xlu0 %v5031, 24
    %v5169 = vpop.permute.xlu0 %5168
    %5170 = vrot.lane.b32.xlu0 %v5032, 24
    %v5171 = vpop.permute.xlu0 %5170
    %5172 = vrot.lane.b32.xlu0 %v5033, 24
    %v5173 = vpop.permute.xlu0 %5172
    %5174 = vrot.lane.b32.xlu0 %v5034, 24
    %v5175 = vpop.permute.xlu0 %5174
    %5176 = vrot.lane.b32.xlu0 %v5035, 24
    %v5177 = vpop.permute.xlu0 %5176
    %5178 = vrot.lane.b32.xlu0 %v5036, 24
    %v5179 = vpop.permute.xlu0 %5178
    %5180 = vrot.lane.b32.xlu0 %v5037, 24
    %v5181 = vpop.permute.xlu0 %5180
    %5182 = vrot.lane.b32.xlu0 %v5038, 24
    %v5183 = vpop.permute.xlu0 %5182
    %5184 = vrot.lane.b32.xlu0 %v5039, 24
    %v5185 = vpop.permute.xlu0 %5184
    %5186 = vrot.lane.b32.xlu0 %v5040, 24
    %v5187 = vpop.permute.xlu0 %5186
    %5188 = vrot.lane.b32.xlu0 %v5041, 24
    %v5189 = vpop.permute.xlu0 %5188
    %5190 = vrot.lane.b32.xlu0 %v5042, 24
    %v5191 = vpop.permute.xlu0 %5190
    %5192 = vrot.lane.b32.xlu0 %v5043, 24
    %v5193 = vpop.permute.xlu0 %5192
    %5194 = vrot.lane.b32.xlu0 %v5044, 24
    %v5195 = vpop.permute.xlu0 %5194
    %5196 = vrot.lane.b32.xlu0 %v5045, 24
    %v5197 = vpop.permute.xlu0 %5196
    %5198 = vrot.lane.b32.xlu0 %v5046, 24
    %v5199 = vpop.permute.xlu0 %5198
    %5200 = vrot.lane.b32.xlu0 %v5047, 24
    %v5201 = vpop.permute.xlu0 %5200
    %5202 = vrot.lane.b32.xlu0 %v5048, 24
    %v5203 = vpop.permute.xlu0 %5202
    %5204 = vrot.lane.b32.xlu0 %v5049, 24
    %v5205 = vpop.permute.xlu0 %5204
    %5206 = vrot.lane.b32.xlu0 %v5050, 24
    %v5207 = vpop.permute.xlu0 %5206
    %5208 = vrot.lane.b32.xlu0 %v5051, 24
    %v5209 = vpop.permute.xlu0 %5208
    %5210 = vrot.lane.b32.xlu0 %v5052, 24
    %v5211 = vpop.permute.xlu0 %5210
    %5212 = vrot.lane.b32.xlu0 %v5053, 24
    %v5213 = vpop.permute.xlu0 %5212
    %5214 = vrot.lane.b32.xlu0 %v5054, 24
    %v5215 = vpop.permute.xlu0 %5214
    %5216 = vrot.lane.b32.xlu0 %v5055, 24
    %v5217 = vpop.permute.xlu0 %5216
    %5218 = vrot.lane.b32.xlu0 %v5056, 24
    %v5219 = vpop.permute.xlu0 %5218
    %5220 = vrot.lane.b32.xlu0 %v5057, 24
    %v5221 = vpop.permute.xlu0 %5220
    %5222 = vrot.lane.b32.xlu0 %v5058, 24
    %v5223 = vpop.permute.xlu0 %5222
    %5224 = vrot.lane.b32.xlu0 %v5059, 24
    %v5225 = vpop.permute.xlu0 %5224
    %5226 = vrot.lane.b32.xlu0 %v5060, 24
    %v5227 = vpop.permute.xlu0 %5226
    %5228 = vrot.lane.b32.xlu0 %v5061, 24
    %v5229 = vpop.permute.xlu0 %5228
    %5230 = vrot.lane.b32.xlu0 %v5062, 24
    %v5231 = vpop.permute.xlu0 %5230
    %5232 = vrot.lane.b32.xlu0 %v5063, 24
    %v5233 = vpop.permute.xlu0 %5232
    %5234 = vrot.lane.b32.xlu0 %v5064, 24
    %v5235 = vpop.permute.xlu0 %5234
    %5236 = vrot.lane.b32.xlu0 %v5065, 24
    %v5237 = vpop.permute.xlu0 %5236
    %5238 = vrot.lane.b32.xlu0 %v5066, 24
    %v5239 = vpop.permute.xlu0 %5238
    %5240 = vrot.lane.b32.xlu0 %v5067, 24
    %v5241 = vpop.permute.xlu0 %5240
    %5242 = vrot.lane.b32.xlu0 %v5068, 24
    %v5243 = vpop.permute.xlu0 %5242
    %5244 = vrot.lane.b32.xlu0 %v5069, 24
    %v5245 = vpop.permute.xlu0 %5244
    %5246 = vrot.lane.b32.xlu0 %v5070, 24
    %v5247 = vpop.permute.xlu0 %5246
    %5248 = vrot.lane.b32.xlu0 %v5071, 24
    %v5249 = vpop.permute.xlu0 %5248
    %5250 = vrot.lane.b32.xlu0 %v5072, 24
    %v5251 = vpop.permute.xlu0 %5250
    %5252 = vrot.lane.b32.xlu0 %v5073, 24
    %v5253 = vpop.permute.xlu0 %5252
    %5254 = vrot.lane.b32.xlu0 %v5074, 24
    %v5255 = vpop.permute.xlu0 %5254
    %5256 = vrot.lane.b32.xlu0 %v5075, 24
    %v5257 = vpop.permute.xlu0 %5256
    %5258 = vrot.lane.b32.xlu0 %v5076, 24
    %v5259 = vpop.permute.xlu0 %5258
    %5260 = vrot.lane.b32.xlu0 %v5077, 24
    %v5261 = vpop.permute.xlu0 %5260
    %5262 = vrot.lane.b32.xlu0 %v5078, 24
    %v5263 = vpop.permute.xlu0 %5262
    %5264 = vrot.lane.b32.xlu0 %v5079, 24
    %v5265 = vpop.permute.xlu0 %5264
    %5266 = vrot.lane.b32.xlu0 %v5080, 24
    %v5267 = vpop.permute.xlu0 %5266
    %5268 = vrot.lane.b32.xlu0 %v5081, 24
    %v5269 = vpop.permute.xlu0 %5268
    %5270 = vrot.lane.b32.xlu0 %v5082, 24
    %v5271 = vpop.permute.xlu0 %5270
    %5272 = vrot.lane.b32.xlu0 %v5083, 24
    %v5273 = vpop.permute.xlu0 %5272
    %5274 = vrot.lane.b32.xlu0 %v5084, 24
    %v5275 = vpop.permute.xlu0 %5274
    %5276 = vrot.lane.b32.xlu0 %v5085, 24
    %v5277 = vpop.permute.xlu0 %5276
    %vm5342 = vcmask 261312
    %5343 = vst.msk [vmem:[#allocation3 + $0x1] sm:$0xff] %vm5342, %v5151
    %vm5344 = vcmask 260288
    %5345 = vst.msk [vmem:[#allocation3 + $0x9] sm:$0x7f] %vm5344, %v5153
    %5346 = vst.msk [vmem:[#allocation3 + $0x11] sm:$0xff] %vm5342, %v5155
    %5347 = vst.msk [vmem:[#allocation3 + $0x19] sm:$0x7f] %vm5344, %v5157
    %5348 = vst.msk [vmem:[#allocation3 + $0x21] sm:$0xff] %vm5342, %v5159
    %5349 = vst.msk [vmem:[#allocation3 + $0x29] sm:$0x7f] %vm5344, %v5161
    %5350 = vst.msk [vmem:[#allocation3 + $0x31] sm:$0xff] %vm5342, %v5163
    %5351 = vst.msk [vmem:[#allocation3 + $0x39] sm:$0x7f] %vm5344, %v5165
    %5352 = vst.msk [vmem:[#allocation3 + $0x41] sm:$0xff] %vm5342, %v5167
    %5353 = vst.msk [vmem:[#allocation3 + $0x49] sm:$0x7f] %vm5344, %v5169
    %5354 = vst.msk [vmem:[#allocation3 + $0x51] sm:$0xff] %vm5342, %v5171
    %5355 = vst.msk [vmem:[#allocation3 + $0x59] sm:$0x7f] %vm5344, %v5173
    %5356 = vst.msk [vmem:[#allocation3 + $0x61] sm:$0xff] %vm5342, %v5175
    %5357 = vst.msk [vmem:[#allocation3 + $0x69] sm:$0x7f] %vm5344, %v5177
    %5358 = vst.msk [vmem:[#allocation3 + $0x71] sm:$0xff] %vm5342, %v5179
    %5359 = vst.msk [vmem:[#allocation3 + $0x79] sm:$0x7f] %vm5344, %v5181
    %5360 = vst.msk [vmem:[#allocation3 + $0x81] sm:$0xff] %vm5342, %v5183
    %5361 = vst.msk [vmem:[#allocation3 + $0x89] sm:$0x7f] %vm5344, %v5185
    %5362 = vst.msk [vmem:[#allocation3 + $0x91] sm:$0xff] %vm5342, %v5187
    %5363 = vst.msk [vmem:[#allocation3 + $0x99] sm:$0x7f] %vm5344, %v5189
    %5364 = vst.msk [vmem:[#allocation3 + $0xa1] sm:$0xff] %vm5342, %v5191
    %5365 = vst.msk [vmem:[#allocation3 + $0xa9] sm:$0x7f] %vm5344, %v5193
    %5366 = vst.msk [vmem:[#allocation3 + $0xb1] sm:$0xff] %vm5342, %v5195
    %5367 = vst.msk [vmem:[#allocation3 + $0xb9] sm:$0x7f] %vm5344, %v5197
    %5368 = vst.msk [vmem:[#allocation3 + $0xc1] sm:$0xff] %vm5342, %v5199
    %5369 = vst.msk [vmem:[#allocation3 + $0xc9] sm:$0x7f] %vm5344, %v5201
    %5370 = vst.msk [vmem:[#allocation3 + $0xd1] sm:$0xff] %vm5342, %v5203
    %5371 = vst.msk [vmem:[#allocation3 + $0xd9] sm:$0x7f] %vm5344, %v5205
    %5372 = vst.msk [vmem:[#allocation3 + $0xe1] sm:$0xff] %vm5342, %v5207
    %5373 = vst.msk [vmem:[#allocation3 + $0xe9] sm:$0x7f] %vm5344, %v5209
    %5374 = vst.msk [vmem:[#allocation3 + $0xf1] sm:$0xff] %vm5342, %v5211
    %5375 = vst.msk [vmem:[#allocation3 + $0xf9] sm:$0x7f] %vm5344, %v5213
    %5376 = vst.msk [vmem:[#allocation3 + $0x101] sm:$0xff] %vm5342, %v5215
    %5377 = vst.msk [vmem:[#allocation3 + $0x109] sm:$0x7f] %vm5344, %v5217
    %5378 = vst.msk [vmem:[#allocation3 + $0x111] sm:$0xff] %vm5342, %v5219
    %5379 = vst.msk [vmem:[#allocation3 + $0x119] sm:$0x7f] %vm5344, %v5221
    %5380 = vst.msk [vmem:[#allocation3 + $0x121] sm:$0xff] %vm5342, %v5223
    %5381 = vst.msk [vmem:[#allocation3 + $0x129] sm:$0x7f] %vm5344, %v5225
    %5382 = vst.msk [vmem:[#allocation3 + $0x131] sm:$0xff] %vm5342, %v5227
    %5383 = vst.msk [vmem:[#allocation3 + $0x139] sm:$0x7f] %vm5344, %v5229
    %5384 = vst.msk [vmem:[#allocation3 + $0x141] sm:$0xff] %vm5342, %v5231
    %5385 = vst.msk [vmem:[#allocation3 + $0x149] sm:$0x7f] %vm5344, %v5233
    %5386 = vst.msk [vmem:[#allocation3 + $0x151] sm:$0xff] %vm5342, %v5235
    %5387 = vst.msk [vmem:[#allocation3 + $0x159] sm:$0x7f] %vm5344, %v5237
    %5388 = vst.msk [vmem:[#allocation3 + $0x161] sm:$0xff] %vm5342, %v5239
    %5389 = vst.msk [vmem:[#allocation3 + $0x169] sm:$0x7f] %vm5344, %v5241
    %5390 = vst.msk [vmem:[#allocation3 + $0x171] sm:$0xff] %vm5342, %v5243
    %5391 = vst.msk [vmem:[#allocation3 + $0x179] sm:$0x7f] %vm5344, %v5245
    %5392 = vst.msk [vmem:[#allocation3 + $0x181] sm:$0xff] %vm5342, %v5247
    %5393 = vst.msk [vmem:[#allocation3 + $0x189] sm:$0x7f] %vm5344, %v5249
    %5394 = vst.msk [vmem:[#allocation3 + $0x191] sm:$0xff] %vm5342, %v5251
    %5395 = vst.msk [vmem:[#allocation3 + $0x199] sm:$0x7f] %vm5344, %v5253
    %5396 = vst.msk [vmem:[#allocation3 + $0x1a1] sm:$0xff] %vm5342, %v5255
    %5397 = vst.msk [vmem:[#allocation3 + $0x1a9] sm:$0x7f] %vm5344, %v5257
    %5398 = vst.msk [vmem:[#allocation3 + $0x1b1] sm:$0xff] %vm5342, %v5259
    %5399 = vst.msk [vmem:[#allocation3 + $0x1b9] sm:$0x7f] %vm5344, %v5261
    %5400 = vst.msk [vmem:[#allocation3 + $0x1c1] sm:$0xff] %vm5342, %v5263
    %5401 = vst.msk [vmem:[#allocation3 + $0x1c9] sm:$0x7f] %vm5344, %v5265
    %5402 = vst.msk [vmem:[#allocation3 + $0x1d1] sm:$0xff] %vm5342, %v5267
    %5403 = vst.msk [vmem:[#allocation3 + $0x1d9] sm:$0x7f] %vm5344, %v5269
    %5404 = vst.msk [vmem:[#allocation3 + $0x1e1] sm:$0xff] %vm5342, %v5271
    %5405 = vst.msk [vmem:[#allocation3 + $0x1e9] sm:$0x7f] %vm5344, %v5273
    %5406 = vst.msk [vmem:[#allocation3 + $0x1f1] sm:$0xff] %vm5342, %v5275
    %5407 = vst.msk [vmem:[#allocation3 + $0x1f9] sm:$0x7f] %vm5344, %v5277
    %v5408 = vld [vmem:[#allocation4] sm:$0xff]
    %v5409 = vld [vmem:[#allocation4 + $0x8] sm:$0xff]
    %v5410 = vld [vmem:[#allocation4 + $0x10] sm:$0xff]
    %v5411 = vld [vmem:[#allocation4 + $0x18] sm:$0xff]
    %v5412 = vld [vmem:[#allocation4 + $0x20] sm:$0xff]
    %v5413 = vld [vmem:[#allocation4 + $0x28] sm:$0xff]
    %v5414 = vld [vmem:[#allocation4 + $0x30] sm:$0xff]
    %v5415 = vld [vmem:[#allocation4 + $0x38] sm:$0xff]
    %v5416 = vld [vmem:[#allocation4 + $0x40] sm:$0xff]
    %v5417 = vld [vmem:[#allocation4 + $0x48] sm:$0xff]
    %v5418 = vld [vmem:[#allocation4 + $0x50] sm:$0xff]
    %v5419 = vld [vmem:[#allocation4 + $0x58] sm:$0xff]
    %v5420 = vld [vmem:[#allocation4 + $0x60] sm:$0xff]
    %v5421 = vld [vmem:[#allocation4 + $0x68] sm:$0xff]
    %v5422 = vld [vmem:[#allocation4 + $0x70] sm:$0xff]
    %v5423 = vld [vmem:[#allocation4 + $0x78] sm:$0xff]
    %v5424 = vld [vmem:[#allocation4 + $0x80] sm:$0xff]
    %v5425 = vld [vmem:[#allocation4 + $0x88] sm:$0xff]
    %v5426 = vld [vmem:[#allocation4 + $0x90] sm:$0xff]
    %v5427 = vld [vmem:[#allocation4 + $0x98] sm:$0xff]
    %v5428 = vld [vmem:[#allocation4 + $0xa0] sm:$0xff]
    %v5429 = vld [vmem:[#allocation4 + $0xa8] sm:$0xff]
    %v5430 = vld [vmem:[#allocation4 + $0xb0] sm:$0xff]
    %v5431 = vld [vmem:[#allocation4 + $0xb8] sm:$0xff]
    %v5432 = vld [vmem:[#allocation4 + $0xc0] sm:$0xff]
    %v5433 = vld [vmem:[#allocation4 + $0xc8] sm:$0xff]
    %v5434 = vld [vmem:[#allocation4 + $0xd0] sm:$0xff]
    %v5435 = vld [vmem:[#allocation4 + $0xd8] sm:$0xff]
    %v5436 = vld [vmem:[#allocation4 + $0xe0] sm:$0xff]
    %v5437 = vld [vmem:[#allocation4 + $0xe8] sm:$0xff]
    %v5438 = vld [vmem:[#allocation4 + $0xf0] sm:$0xff]
    %v5439 = vld [vmem:[#allocation4 + $0xf8] sm:$0xff]
    %v5440 = vld [vmem:[#allocation4 + $0x100] sm:$0xff]
    %v5441 = vld [vmem:[#allocation4 + $0x108] sm:$0xff]
    %v5442 = vld [vmem:[#allocation4 + $0x110] sm:$0xff]
    %v5443 = vld [vmem:[#allocation4 + $0x118] sm:$0xff]
    %v5444 = vld [vmem:[#allocation4 + $0x120] sm:$0xff]
    %v5445 = vld [vmem:[#allocation4 + $0x128] sm:$0xff]
    %v5446 = vld [vmem:[#allocation4 + $0x130] sm:$0xff]
    %v5447 = vld [vmem:[#allocation4 + $0x138] sm:$0xff]
    %v5448 = vld [vmem:[#allocation4 + $0x140] sm:$0xff]
    %v5449 = vld [vmem:[#allocation4 + $0x148] sm:$0xff]
    %v5450 = vld [vmem:[#allocation4 + $0x150] sm:$0xff]
    %v5451 = vld [vmem:[#allocation4 + $0x158] sm:$0xff]
    %v5452 = vld [vmem:[#allocation4 + $0x160] sm:$0xff]
    %v5453 = vld [vmem:[#allocation4 + $0x168] sm:$0xff]
    %v5454 = vld [vmem:[#allocation4 + $0x170] sm:$0xff]
    %v5455 = vld [vmem:[#allocation4 + $0x178] sm:$0xff]
    %v5456 = vld [vmem:[#allocation4 + $0x180] sm:$0xff]
    %v5457 = vld [vmem:[#allocation4 + $0x188] sm:$0xff]
    %v5458 = vld [vmem:[#allocation4 + $0x190] sm:$0xff]
    %v5459 = vld [vmem:[#allocation4 + $0x198] sm:$0xff]
    %v5460 = vld [vmem:[#allocation4 + $0x1a0] sm:$0xff]
    %v5461 = vld [vmem:[#allocation4 + $0x1a8] sm:$0xff]
    %v5462 = vld [vmem:[#allocation4 + $0x1b0] sm:$0xff]
    %v5463 = vld [vmem:[#allocation4 + $0x1b8] sm:$0xff]
    %v5464 = vld [vmem:[#allocation4 + $0x1c0] sm:$0xff]
    %v5465 = vld [vmem:[#allocation4 + $0x1c8] sm:$0xff]
    %v5466 = vld [vmem:[#allocation4 + $0x1d0] sm:$0xff]
    %v5467 = vld [vmem:[#allocation4 + $0x1d8] sm:$0xff]
    %v5468 = vld [vmem:[#allocation4 + $0x1e0] sm:$0xff]
    %v5469 = vld [vmem:[#allocation4 + $0x1e8] sm:$0xff]
    %v5470 = vld [vmem:[#allocation4 + $0x1f0] sm:$0xff]
    %v5471 = vld [vmem:[#allocation4 + $0x1f8] sm:$0xff]
    %5536 = vrot.lane.b32.xlu0 %v5408, 32
    %v5537 = vpop.permute.xlu0 %5536
    %5538 = vrot.lane.b32.xlu0 %v5409, 32
    %v5539 = vpop.permute.xlu0 %5538
    %5540 = vrot.lane.b32.xlu0 %v5410, 32
    %v5541 = vpop.permute.xlu0 %5540
    %5542 = vrot.lane.b32.xlu0 %v5411, 32
    %v5543 = vpop.permute.xlu0 %5542
    %5544 = vrot.lane.b32.xlu0 %v5412, 32
    %v5545 = vpop.permute.xlu0 %5544
    %5546 = vrot.lane.b32.xlu0 %v5413, 32
    %v5547 = vpop.permute.xlu0 %5546
    %5548 = vrot.lane.b32.xlu0 %v5414, 32
    %v5549 = vpop.permute.xlu0 %5548
    %5550 = vrot.lane.b32.xlu0 %v5415, 32
    %v5551 = vpop.permute.xlu0 %5550
    %5552 = vrot.lane.b32.xlu0 %v5416, 32
    %v5553 = vpop.permute.xlu0 %5552
    %5554 = vrot.lane.b32.xlu0 %v5417, 32
    %v5555 = vpop.permute.xlu0 %5554
    %5556 = vrot.lane.b32.xlu0 %v5418, 32
    %v5557 = vpop.permute.xlu0 %5556
    %5558 = vrot.lane.b32.xlu0 %v5419, 32
    %v5559 = vpop.permute.xlu0 %5558
    %5560 = vrot.lane.b32.xlu0 %v5420, 32
    %v5561 = vpop.permute.xlu0 %5560
    %5562 = vrot.lane.b32.xlu0 %v5421, 32
    %v5563 = vpop.permute.xlu0 %5562
    %5564 = vrot.lane.b32.xlu0 %v5422, 32
    %v5565 = vpop.permute.xlu0 %5564
    %5566 = vrot.lane.b32.xlu0 %v5423, 32
    %v5567 = vpop.permute.xlu0 %5566
    %5568 = vrot.lane.b32.xlu0 %v5424, 32
    %v5569 = vpop.permute.xlu0 %5568
    %5570 = vrot.lane.b32.xlu0 %v5425, 32
    %v5571 = vpop.permute.xlu0 %5570
    %5572 = vrot.lane.b32.xlu0 %v5426, 32
    %v5573 = vpop.permute.xlu0 %5572
    %5574 = vrot.lane.b32.xlu0 %v5427, 32
    %v5575 = vpop.permute.xlu0 %5574
    %5576 = vrot.lane.b32.xlu0 %v5428, 32
    %v5577 = vpop.permute.xlu0 %5576
    %5578 = vrot.lane.b32.xlu0 %v5429, 32
    %v5579 = vpop.permute.xlu0 %5578
    %5580 = vrot.lane.b32.xlu0 %v5430, 32
    %v5581 = vpop.permute.xlu0 %5580
    %5582 = vrot.lane.b32.xlu0 %v5431, 32
    %v5583 = vpop.permute.xlu0 %5582
    %5584 = vrot.lane.b32.xlu0 %v5432, 32
    %v5585 = vpop.permute.xlu0 %5584
    %5586 = vrot.lane.b32.xlu0 %v5433, 32
    %v5587 = vpop.permute.xlu0 %5586
    %5588 = vrot.lane.b32.xlu0 %v5434, 32
    %v5589 = vpop.permute.xlu0 %5588
    %5590 = vrot.lane.b32.xlu0 %v5435, 32
    %v5591 = vpop.permute.xlu0 %5590
    %5592 = vrot.lane.b32.xlu0 %v5436, 32
    %v5593 = vpop.permute.xlu0 %5592
    %5594 = vrot.lane.b32.xlu0 %v5437, 32
    %v5595 = vpop.permute.xlu0 %5594
    %5596 = vrot.lane.b32.xlu0 %v5438, 32
    %v5597 = vpop.permute.xlu0 %5596
    %5598 = vrot.lane.b32.xlu0 %v5439, 32
    %v5599 = vpop.permute.xlu0 %5598
    %5600 = vrot.lane.b32.xlu0 %v5440, 32
    %v5601 = vpop.permute.xlu0 %5600
    %5602 = vrot.lane.b32.xlu0 %v5441, 32
    %v5603 = vpop.permute.xlu0 %5602
    %5604 = vrot.lane.b32.xlu0 %v5442, 32
    %v5605 = vpop.permute.xlu0 %5604
    %5606 = vrot.lane.b32.xlu0 %v5443, 32
    %v5607 = vpop.permute.xlu0 %5606
    %5608 = vrot.lane.b32.xlu0 %v5444, 32
    %v5609 = vpop.permute.xlu0 %5608
    %5610 = vrot.lane.b32.xlu0 %v5445, 32
    %v5611 = vpop.permute.xlu0 %5610
    %5612 = vrot.lane.b32.xlu0 %v5446, 32
    %v5613 = vpop.permute.xlu0 %5612
    %5614 = vrot.lane.b32.xlu0 %v5447, 32
    %v5615 = vpop.permute.xlu0 %5614
    %5616 = vrot.lane.b32.xlu0 %v5448, 32
    %v5617 = vpop.permute.xlu0 %5616
    %5618 = vrot.lane.b32.xlu0 %v5449, 32
    %v5619 = vpop.permute.xlu0 %5618
    %5620 = vrot.lane.b32.xlu0 %v5450, 32
    %v5621 = vpop.permute.xlu0 %5620
    %5622 = vrot.lane.b32.xlu0 %v5451, 32
    %v5623 = vpop.permute.xlu0 %5622
    %5624 = vrot.lane.b32.xlu0 %v5452, 32
    %v5625 = vpop.permute.xlu0 %5624
    %5626 = vrot.lane.b32.xlu0 %v5453, 32
    %v5627 = vpop.permute.xlu0 %5626
    %5628 = vrot.lane.b32.xlu0 %v5454, 32
    %v5629 = vpop.permute.xlu0 %5628
    %5630 = vrot.lane.b32.xlu0 %v5455, 32
    %v5631 = vpop.permute.xlu0 %5630
    %5632 = vrot.lane.b32.xlu0 %v5456, 32
    %v5633 = vpop.permute.xlu0 %5632
    %5634 = vrot.lane.b32.xlu0 %v5457, 32
    %v5635 = vpop.permute.xlu0 %5634
    %5636 = vrot.lane.b32.xlu0 %v5458, 32
    %v5637 = vpop.permute.xlu0 %5636
    %5638 = vrot.lane.b32.xlu0 %v5459, 32
    %v5639 = vpop.permute.xlu0 %5638
    %5640 = vrot.lane.b32.xlu0 %v5460, 32
    %v5641 = vpop.permute.xlu0 %5640
    %5642 = vrot.lane.b32.xlu0 %v5461, 32
    %v5643 = vpop.permute.xlu0 %5642
    %5644 = vrot.lane.b32.xlu0 %v5462, 32
    %v5645 = vpop.permute.xlu0 %5644
    %5646 = vrot.lane.b32.xlu0 %v5463, 32
    %v5647 = vpop.permute.xlu0 %5646
    %5648 = vrot.lane.b32.xlu0 %v5464, 32
    %v5649 = vpop.permute.xlu0 %5648
    %5650 = vrot.lane.b32.xlu0 %v5465, 32
    %v5651 = vpop.permute.xlu0 %5650
    %5652 = vrot.lane.b32.xlu0 %v5466, 32
    %v5653 = vpop.permute.xlu0 %5652
    %5654 = vrot.lane.b32.xlu0 %v5467, 32
    %v5655 = vpop.permute.xlu0 %5654
    %5656 = vrot.lane.b32.xlu0 %v5468, 32
    %v5657 = vpop.permute.xlu0 %5656
    %5658 = vrot.lane.b32.xlu0 %v5469, 32
    %v5659 = vpop.permute.xlu0 %5658
    %5660 = vrot.lane.b32.xlu0 %v5470, 32
    %v5661 = vpop.permute.xlu0 %5660
    %5662 = vrot.lane.b32.xlu0 %v5471, 32
    %v5663 = vpop.permute.xlu0 %5662
    %vm5728 = vcmask 326912
    %5729 = vst.msk [vmem:[#allocation3] sm:$0xff] %vm5728, %v5537
    %5730 = vst.msk [vmem:[#allocation3 + $0x8] sm:$0xff] %vm5728, %v5539
    %5731 = vst.msk [vmem:[#allocation3 + $0x10] sm:$0xff] %vm5728, %v5541
    %5732 = vst.msk [vmem:[#allocation3 + $0x18] sm:$0xff] %vm5728, %v5543
    %5733 = vst.msk [vmem:[#allocation3 + $0x20] sm:$0xff] %vm5728, %v5545
    %5734 = vst.msk [vmem:[#allocation3 + $0x28] sm:$0xff] %vm5728, %v5547
    %5735 = vst.msk [vmem:[#allocation3 + $0x30] sm:$0xff] %vm5728, %v5549
    %5736 = vst.msk [vmem:[#allocation3 + $0x38] sm:$0xff] %vm5728, %v5551
    %5737 = vst.msk [vmem:[#allocation3 + $0x40] sm:$0xff] %vm5728, %v5553
    %5738 = vst.msk [vmem:[#allocation3 + $0x48] sm:$0xff] %vm5728, %v5555
    %5739 = vst.msk [vmem:[#allocation3 + $0x50] sm:$0xff] %vm5728, %v5557
    %5740 = vst.msk [vmem:[#allocation3 + $0x58] sm:$0xff] %vm5728, %v5559
    %5741 = vst.msk [vmem:[#allocation3 + $0x60] sm:$0xff] %vm5728, %v5561
    %5742 = vst.msk [vmem:[#allocation3 + $0x68] sm:$0xff] %vm5728, %v5563
    %5743 = vst.msk [vmem:[#allocation3 + $0x70] sm:$0xff] %vm5728, %v5565
    %5744 = vst.msk [vmem:[#allocation3 + $0x78] sm:$0xff] %vm5728, %v5567
    %5745 = vst.msk [vmem:[#allocation3 + $0x80] sm:$0xff] %vm5728, %v5569
    %5746 = vst.msk [vmem:[#allocation3 + $0x88] sm:$0xff] %vm5728, %v5571
    %5747 = vst.msk [vmem:[#allocation3 + $0x90] sm:$0xff] %vm5728, %v5573
    %5748 = vst.msk [vmem:[#allocation3 + $0x98] sm:$0xff] %vm5728, %v5575
    %5749 = vst.msk [vmem:[#allocation3 + $0xa0] sm:$0xff] %vm5728, %v5577
    %5750 = vst.msk [vmem:[#allocation3 + $0xa8] sm:$0xff] %vm5728, %v5579
    %5751 = vst.msk [vmem:[#allocation3 + $0xb0] sm:$0xff] %vm5728, %v5581
    %5752 = vst.msk [vmem:[#allocation3 + $0xb8] sm:$0xff] %vm5728, %v5583
    %5753 = vst.msk [vmem:[#allocation3 + $0xc0] sm:$0xff] %vm5728, %v5585
    %5754 = vst.msk [vmem:[#allocation3 + $0xc8] sm:$0xff] %vm5728, %v5587
    %5755 = vst.msk [vmem:[#allocation3 + $0xd0] sm:$0xff] %vm5728, %v5589
    %5756 = vst.msk [vmem:[#allocation3 + $0xd8] sm:$0xff] %vm5728, %v5591
    %5757 = vst.msk [vmem:[#allocation3 + $0xe0] sm:$0xff] %vm5728, %v5593
    %5758 = vst.msk [vmem:[#allocation3 + $0xe8] sm:$0xff] %vm5728, %v5595
    %5759 = vst.msk [vmem:[#allocation3 + $0xf0] sm:$0xff] %vm5728, %v5597
    %5760 = vst.msk [vmem:[#allocation3 + $0xf8] sm:$0xff] %vm5728, %v5599
    %5761 = vst.msk [vmem:[#allocation3 + $0x100] sm:$0xff] %vm5728, %v5601
    %5762 = vst.msk [vmem:[#allocation3 + $0x108] sm:$0xff] %vm5728, %v5603
    %5763 = vst.msk [vmem:[#allocation3 + $0x110] sm:$0xff] %vm5728, %v5605
    %5764 = vst.msk [vmem:[#allocation3 + $0x118] sm:$0xff] %vm5728, %v5607
    %5765 = vst.msk [vmem:[#allocation3 + $0x120] sm:$0xff] %vm5728, %v5609
    %5766 = vst.msk [vmem:[#allocation3 + $0x128] sm:$0xff] %vm5728, %v5611
    %5767 = vst.msk [vmem:[#allocation3 + $0x130] sm:$0xff] %vm5728, %v5613
    %5768 = vst.msk [vmem:[#allocation3 + $0x138] sm:$0xff] %vm5728, %v5615
    %5769 = vst.msk [vmem:[#allocation3 + $0x140] sm:$0xff] %vm5728, %v5617
    %5770 = vst.msk [vmem:[#allocation3 + $0x148] sm:$0xff] %vm5728, %v5619
    %5771 = vst.msk [vmem:[#allocation3 + $0x150] sm:$0xff] %vm5728, %v5621
    %5772 = vst.msk [vmem:[#allocation3 + $0x158] sm:$0xff] %vm5728, %v5623
    %5773 = vst.msk [vmem:[#allocation3 + $0x160] sm:$0xff] %vm5728, %v5625
    %5774 = vst.msk [vmem:[#allocation3 + $0x168] sm:$0xff] %vm5728, %v5627
    %5775 = vst.msk [vmem:[#allocation3 + $0x170] sm:$0xff] %vm5728, %v5629
    %5776 = vst.msk [vmem:[#allocation3 + $0x178] sm:$0xff] %vm5728, %v5631
    %5777 = vst.msk [vmem:[#allocation3 + $0x180] sm:$0xff] %vm5728, %v5633
    %5778 = vst.msk [vmem:[#allocation3 + $0x188] sm:$0xff] %vm5728, %v5635
    %5779 = vst.msk [vmem:[#allocation3 + $0x190] sm:$0xff] %vm5728, %v5637
    %5780 = vst.msk [vmem:[#allocation3 + $0x198] sm:$0xff] %vm5728, %v5639
    %5781 = vst.msk [vmem:[#allocation3 + $0x1a0] sm:$0xff] %vm5728, %v5641
    %5782 = vst.msk [vmem:[#allocation3 + $0x1a8] sm:$0xff] %vm5728, %v5643
    %5783 = vst.msk [vmem:[#allocation3 + $0x1b0] sm:$0xff] %vm5728, %v5645
    %5784 = vst.msk [vmem:[#allocation3 + $0x1b8] sm:$0xff] %vm5728, %v5647
    %5785 = vst.msk [vmem:[#allocation3 + $0x1c0] sm:$0xff] %vm5728, %v5649
    %5786 = vst.msk [vmem:[#allocation3 + $0x1c8] sm:$0xff] %vm5728, %v5651
    %5787 = vst.msk [vmem:[#allocation3 + $0x1d0] sm:$0xff] %vm5728, %v5653
    %5788 = vst.msk [vmem:[#allocation3 + $0x1d8] sm:$0xff] %vm5728, %v5655
    %5789 = vst.msk [vmem:[#allocation3 + $0x1e0] sm:$0xff] %vm5728, %v5657
    %5790 = vst.msk [vmem:[#allocation3 + $0x1e8] sm:$0xff] %vm5728, %v5659
    %5791 = vst.msk [vmem:[#allocation3 + $0x1f0] sm:$0xff] %vm5728, %v5661
    %5792 = vst.msk [vmem:[#allocation3 + $0x1f8] sm:$0xff] %vm5728, %v5663
    %v5793 = vld [vmem:[#allocation4 + $0x1] sm:$0xff]
    %v5794 = vld [vmem:[#allocation4 + $0x9] sm:$0x7f]
    %v5795 = vld [vmem:[#allocation4 + $0x11] sm:$0xff]
    %v5796 = vld [vmem:[#allocation4 + $0x19] sm:$0x7f]
    %v5797 = vld [vmem:[#allocation4 + $0x21] sm:$0xff]
    %v5798 = vld [vmem:[#allocation4 + $0x29] sm:$0x7f]
    %v5799 = vld [vmem:[#allocation4 + $0x31] sm:$0xff]
    %v5800 = vld [vmem:[#allocation4 + $0x39] sm:$0x7f]
    %v5801 = vld [vmem:[#allocation4 + $0x41] sm:$0xff]
    %v5802 = vld [vmem:[#allocation4 + $0x49] sm:$0x7f]
    %v5803 = vld [vmem:[#allocation4 + $0x51] sm:$0xff]
    %v5804 = vld [vmem:[#allocation4 + $0x59] sm:$0x7f]
    %v5805 = vld [vmem:[#allocation4 + $0x61] sm:$0xff]
    %v5806 = vld [vmem:[#allocation4 + $0x69] sm:$0x7f]
    %v5807 = vld [vmem:[#allocation4 + $0x71] sm:$0xff]
    %v5808 = vld [vmem:[#allocation4 + $0x79] sm:$0x7f]
    %v5809 = vld [vmem:[#allocation4 + $0x81] sm:$0xff]
    %v5810 = vld [vmem:[#allocation4 + $0x89] sm:$0x7f]
    %v5811 = vld [vmem:[#allocation4 + $0x91] sm:$0xff]
    %v5812 = vld [vmem:[#allocation4 + $0x99] sm:$0x7f]
    %v5813 = vld [vmem:[#allocation4 + $0xa1] sm:$0xff]
    %v5814 = vld [vmem:[#allocation4 + $0xa9] sm:$0x7f]
    %v5815 = vld [vmem:[#allocation4 + $0xb1] sm:$0xff]
    %v5816 = vld [vmem:[#allocation4 + $0xb9] sm:$0x7f]
    %v5817 = vld [vmem:[#allocation4 + $0xc1] sm:$0xff]
    %v5818 = vld [vmem:[#allocation4 + $0xc9] sm:$0x7f]
    %v5819 = vld [vmem:[#allocation4 + $0xd1] sm:$0xff]
    %v5820 = vld [vmem:[#allocation4 + $0xd9] sm:$0x7f]
    %v5821 = vld [vmem:[#allocation4 + $0xe1] sm:$0xff]
    %v5822 = vld [vmem:[#allocation4 + $0xe9] sm:$0x7f]
    %v5823 = vld [vmem:[#allocation4 + $0xf1] sm:$0xff]
    %v5824 = vld [vmem:[#allocation4 + $0xf9] sm:$0x7f]
    %v5825 = vld [vmem:[#allocation4 + $0x101] sm:$0xff]
    %v5826 = vld [vmem:[#allocation4 + $0x109] sm:$0x7f]
    %v5827 = vld [vmem:[#allocation4 + $0x111] sm:$0xff]
    %v5828 = vld [vmem:[#allocation4 + $0x119] sm:$0x7f]
    %v5829 = vld [vmem:[#allocation4 + $0x121] sm:$0xff]
    %v5830 = vld [vmem:[#allocation4 + $0x129] sm:$0x7f]
    %v5831 = vld [vmem:[#allocation4 + $0x131] sm:$0xff]
    %v5832 = vld [vmem:[#allocation4 + $0x139] sm:$0x7f]
    %v5833 = vld [vmem:[#allocation4 + $0x141] sm:$0xff]
    %v5834 = vld [vmem:[#allocation4 + $0x149] sm:$0x7f]
    %v5835 = vld [vmem:[#allocation4 + $0x151] sm:$0xff]
    %v5836 = vld [vmem:[#allocation4 + $0x159] sm:$0x7f]
    %v5837 = vld [vmem:[#allocation4 + $0x161] sm:$0xff]
    %v5838 = vld [vmem:[#allocation4 + $0x169] sm:$0x7f]
    %v5839 = vld [vmem:[#allocation4 + $0x171] sm:$0xff]
    %v5840 = vld [vmem:[#allocation4 + $0x179] sm:$0x7f]
    %v5841 = vld [vmem:[#allocation4 + $0x181] sm:$0xff]
    %v5842 = vld [vmem:[#allocation4 + $0x189] sm:$0x7f]
    %v5843 = vld [vmem:[#allocation4 + $0x191] sm:$0xff]
    %v5844 = vld [vmem:[#allocation4 + $0x199] sm:$0x7f]
    %v5845 = vld [vmem:[#allocation4 + $0x1a1] sm:$0xff]
    %v5846 = vld [vmem:[#allocation4 + $0x1a9] sm:$0x7f]
    %v5847 = vld [vmem:[#allocation4 + $0x1b1] sm:$0xff]
    %v5848 = vld [vmem:[#allocation4 + $0x1b9] sm:$0x7f]
    %v5849 = vld [vmem:[#allocation4 + $0x1c1] sm:$0xff]
    %v5850 = vld [vmem:[#allocation4 + $0x1c9] sm:$0x7f]
    %v5851 = vld [vmem:[#allocation4 + $0x1d1] sm:$0xff]
    %v5852 = vld [vmem:[#allocation4 + $0x1d9] sm:$0x7f]
    %v5853 = vld [vmem:[#allocation4 + $0x1e1] sm:$0xff]
    %v5854 = vld [vmem:[#allocation4 + $0x1e9] sm:$0x7f]
    %v5855 = vld [vmem:[#allocation4 + $0x1f1] sm:$0xff]
    %v5856 = vld [vmem:[#allocation4 + $0x1f9] sm:$0x7f]
    %5921 = vrot.lane.b32.xlu0 %v5793, 40
    %v5922 = vpop.permute.xlu0 %5921
    %5923 = vrot.lane.b32.xlu0 %v5794, 40
    %v5924 = vpop.permute.xlu0 %5923
    %5925 = vrot.lane.b32.xlu0 %v5795, 40
    %v5926 = vpop.permute.xlu0 %5925
    %5927 = vrot.lane.b32.xlu0 %v5796, 40
    %v5928 = vpop.permute.xlu0 %5927
    %5929 = vrot.lane.b32.xlu0 %v5797, 40
    %v5930 = vpop.permute.xlu0 %5929
    %5931 = vrot.lane.b32.xlu0 %v5798, 40
    %v5932 = vpop.permute.xlu0 %5931
    %5933 = vrot.lane.b32.xlu0 %v5799, 40
    %v5934 = vpop.permute.xlu0 %5933
    %5935 = vrot.lane.b32.xlu0 %v5800, 40
    %v5936 = vpop.permute.xlu0 %5935
    %5937 = vrot.lane.b32.xlu0 %v5801, 40
    %v5938 = vpop.permute.xlu0 %5937
    %5939 = vrot.lane.b32.xlu0 %v5802, 40
    %v5940 = vpop.permute.xlu0 %5939
    %5941 = vrot.lane.b32.xlu0 %v5803, 40
    %v5942 = vpop.permute.xlu0 %5941
    %5943 = vrot.lane.b32.xlu0 %v5804, 40
    %v5944 = vpop.permute.xlu0 %5943
    %5945 = vrot.lane.b32.xlu0 %v5805, 40
    %v5946 = vpop.permute.xlu0 %5945
    %5947 = vrot.lane.b32.xlu0 %v5806, 40
    %v5948 = vpop.permute.xlu0 %5947
    %5949 = vrot.lane.b32.xlu0 %v5807, 40
    %v5950 = vpop.permute.xlu0 %5949
    %5951 = vrot.lane.b32.xlu0 %v5808, 40
    %v5952 = vpop.permute.xlu0 %5951
    %5953 = vrot.lane.b32.xlu0 %v5809, 40
    %v5954 = vpop.permute.xlu0 %5953
    %5955 = vrot.lane.b32.xlu0 %v5810, 40
    %v5956 = vpop.permute.xlu0 %5955
    %5957 = vrot.lane.b32.xlu0 %v5811, 40
    %v5958 = vpop.permute.xlu0 %5957
    %5959 = vrot.lane.b32.xlu0 %v5812, 40
    %v5960 = vpop.permute.xlu0 %5959
    %5961 = vrot.lane.b32.xlu0 %v5813, 40
    %v5962 = vpop.permute.xlu0 %5961
    %5963 = vrot.lane.b32.xlu0 %v5814, 40
    %v5964 = vpop.permute.xlu0 %5963
    %5965 = vrot.lane.b32.xlu0 %v5815, 40
    %v5966 = vpop.permute.xlu0 %5965
    %5967 = vrot.lane.b32.xlu0 %v5816, 40
    %v5968 = vpop.permute.xlu0 %5967
    %5969 = vrot.lane.b32.xlu0 %v5817, 40
    %v5970 = vpop.permute.xlu0 %5969
    %5971 = vrot.lane.b32.xlu0 %v5818, 40
    %v5972 = vpop.permute.xlu0 %5971
    %5973 = vrot.lane.b32.xlu0 %v5819, 40
    %v5974 = vpop.permute.xlu0 %5973
    %5975 = vrot.lane.b32.xlu0 %v5820, 40
    %v5976 = vpop.permute.xlu0 %5975
    %5977 = vrot.lane.b32.xlu0 %v5821, 40
    %v5978 = vpop.permute.xlu0 %5977
    %5979 = vrot.lane.b32.xlu0 %v5822, 40
    %v5980 = vpop.permute.xlu0 %5979
    %5981 = vrot.lane.b32.xlu0 %v5823, 40
    %v5982 = vpop.permute.xlu0 %5981
    %5983 = vrot.lane.b32.xlu0 %v5824, 40
    %v5984 = vpop.permute.xlu0 %5983
    %5985 = vrot.lane.b32.xlu0 %v5825, 40
    %v5986 = vpop.permute.xlu0 %5985
    %5987 = vrot.lane.b32.xlu0 %v5826, 40
    %v5988 = vpop.permute.xlu0 %5987
    %5989 = vrot.lane.b32.xlu0 %v5827, 40
    %v5990 = vpop.permute.xlu0 %5989
    %5991 = vrot.lane.b32.xlu0 %v5828, 40
    %v5992 = vpop.permute.xlu0 %5991
    %5993 = vrot.lane.b32.xlu0 %v5829, 40
    %v5994 = vpop.permute.xlu0 %5993
    %5995 = vrot.lane.b32.xlu0 %v5830, 40
    %v5996 = vpop.permute.xlu0 %5995
    %5997 = vrot.lane.b32.xlu0 %v5831, 40
    %v5998 = vpop.permute.xlu0 %5997
    %5999 = vrot.lane.b32.xlu0 %v5832, 40
    %v6000 = vpop.permute.xlu0 %5999
    %6001 = vrot.lane.b32.xlu0 %v5833, 40
    %v6002 = vpop.permute.xlu0 %6001
    %6003 = vrot.lane.b32.xlu0 %v5834, 40
    %v6004 = vpop.permute.xlu0 %6003
    %6005 = vrot.lane.b32.xlu0 %v5835, 40
    %v6006 = vpop.permute.xlu0 %6005
    %6007 = vrot.lane.b32.xlu0 %v5836, 40
    %v6008 = vpop.permute.xlu0 %6007
    %6009 = vrot.lane.b32.xlu0 %v5837, 40
    %v6010 = vpop.permute.xlu0 %6009
    %6011 = vrot.lane.b32.xlu0 %v5838, 40
    %v6012 = vpop.permute.xlu0 %6011
    %6013 = vrot.lane.b32.xlu0 %v5839, 40
    %v6014 = vpop.permute.xlu0 %6013
    %6015 = vrot.lane.b32.xlu0 %v5840, 40
    %v6016 = vpop.permute.xlu0 %6015
    %6017 = vrot.lane.b32.xlu0 %v5841, 40
    %v6018 = vpop.permute.xlu0 %6017
    %6019 = vrot.lane.b32.xlu0 %v5842, 40
    %v6020 = vpop.permute.xlu0 %6019
    %6021 = vrot.lane.b32.xlu0 %v5843, 40
    %v6022 = vpop.permute.xlu0 %6021
    %6023 = vrot.lane.b32.xlu0 %v5844, 40
    %v6024 = vpop.permute.xlu0 %6023
    %6025 = vrot.lane.b32.xlu0 %v5845, 40
    %v6026 = vpop.permute.xlu0 %6025
    %6027 = vrot.lane.b32.xlu0 %v5846, 40
    %v6028 = vpop.permute.xlu0 %6027
    %6029 = vrot.lane.b32.xlu0 %v5847, 40
    %v6030 = vpop.permute.xlu0 %6029
    %6031 = vrot.lane.b32.xlu0 %v5848, 40
    %v6032 = vpop.permute.xlu0 %6031
    %6033 = vrot.lane.b32.xlu0 %v5849, 40
    %v6034 = vpop.permute.xlu0 %6033
    %6035 = vrot.lane.b32.xlu0 %v5850, 40
    %v6036 = vpop.permute.xlu0 %6035
    %6037 = vrot.lane.b32.xlu0 %v5851, 40
    %v6038 = vpop.permute.xlu0 %6037
    %6039 = vrot.lane.b32.xlu0 %v5852, 40
    %v6040 = vpop.permute.xlu0 %6039
    %6041 = vrot.lane.b32.xlu0 %v5853, 40
    %v6042 = vpop.permute.xlu0 %6041
    %6043 = vrot.lane.b32.xlu0 %v5854, 40
    %v6044 = vpop.permute.xlu0 %6043
    %6045 = vrot.lane.b32.xlu0 %v5855, 40
    %v6046 = vpop.permute.xlu0 %6045
    %6047 = vrot.lane.b32.xlu0 %v5856, 40
    %v6048 = vpop.permute.xlu0 %6047
    %vm6113 = vcmask 392512
    %6114 = vst.msk [vmem:[#allocation3] sm:$0xff] %vm6113, %v5922
    %vm6115 = vcmask 391488
    %6116 = vst.msk [vmem:[#allocation3 + $0x8] sm:$0x7f] %vm6115, %v5924
    %6117 = vst.msk [vmem:[#allocation3 + $0x10] sm:$0xff] %vm6113, %v5926
    %6118 = vst.msk [vmem:[#allocation3 + $0x18] sm:$0x7f] %vm6115, %v5928
    %6119 = vst.msk [vmem:[#allocation3 + $0x20] sm:$0xff] %vm6113, %v5930
    %6120 = vst.msk [vmem:[#allocation3 + $0x28] sm:$0x7f] %vm6115, %v5932
    %6121 = vst.msk [vmem:[#allocation3 + $0x30] sm:$0xff] %vm6113, %v5934
    %6122 = vst.msk [vmem:[#allocation3 + $0x38] sm:$0x7f] %vm6115, %v5936
    %6123 = vst.msk [vmem:[#allocation3 + $0x40] sm:$0xff] %vm6113, %v5938
    %6124 = vst.msk [vmem:[#allocation3 + $0x48] sm:$0x7f] %vm6115, %v5940
    %6125 = vst.msk [vmem:[#allocation3 + $0x50] sm:$0xff] %vm6113, %v5942
    %6126 = vst.msk [vmem:[#allocation3 + $0x58] sm:$0x7f] %vm6115, %v5944
    %6127 = vst.msk [vmem:[#allocation3 + $0x60] sm:$0xff] %vm6113, %v5946
    %6128 = vst.msk [vmem:[#allocation3 + $0x68] sm:$0x7f] %vm6115, %v5948
    %6129 = vst.msk [vmem:[#allocation3 + $0x70] sm:$0xff] %vm6113, %v5950
    %6130 = vst.msk [vmem:[#allocation3 + $0x78] sm:$0x7f] %vm6115, %v5952
    %6131 = vst.msk [vmem:[#allocation3 + $0x80] sm:$0xff] %vm6113, %v5954
    %6132 = vst.msk [vmem:[#allocation3 + $0x88] sm:$0x7f] %vm6115, %v5956
    %6133 = vst.msk [vmem:[#allocation3 + $0x90] sm:$0xff] %vm6113, %v5958
    %6134 = vst.msk [vmem:[#allocation3 + $0x98] sm:$0x7f] %vm6115, %v5960
    %6135 = vst.msk [vmem:[#allocation3 + $0xa0] sm:$0xff] %vm6113, %v5962
    %6136 = vst.msk [vmem:[#allocation3 + $0xa8] sm:$0x7f] %vm6115, %v5964
    %6137 = vst.msk [vmem:[#allocation3 + $0xb0] sm:$0xff] %vm6113, %v5966
    %6138 = vst.msk [vmem:[#allocation3 + $0xb8] sm:$0x7f] %vm6115, %v5968
    %6139 = vst.msk [vmem:[#allocation3 + $0xc0] sm:$0xff] %vm6113, %v5970
    %6140 = vst.msk [vmem:[#allocation3 + $0xc8] sm:$0x7f] %vm6115, %v5972
    %6141 = vst.msk [vmem:[#allocation3 + $0xd0] sm:$0xff] %vm6113, %v5974
    %6142 = vst.msk [vmem:[#allocation3 + $0xd8] sm:$0x7f] %vm6115, %v5976
    %6143 = vst.msk [vmem:[#allocation3 + $0xe0] sm:$0xff] %vm6113, %v5978
    %6144 = vst.msk [vmem:[#allocation3 + $0xe8] sm:$0x7f] %vm6115, %v5980
    %6145 = vst.msk [vmem:[#allocation3 + $0xf0] sm:$0xff] %vm6113, %v5982
    %6146 = vst.msk [vmem:[#allocation3 + $0xf8] sm:$0x7f] %vm6115, %v5984
    %6147 = vst.msk [vmem:[#allocation3 + $0x100] sm:$0xff] %vm6113, %v5986
    %6148 = vst.msk [vmem:[#allocation3 + $0x108] sm:$0x7f] %vm6115, %v5988
    %6149 = vst.msk [vmem:[#allocation3 + $0x110] sm:$0xff] %vm6113, %v5990
    %6150 = vst.msk [vmem:[#allocation3 + $0x118] sm:$0x7f] %vm6115, %v5992
    %6151 = vst.msk [vmem:[#allocation3 + $0x120] sm:$0xff] %vm6113, %v5994
    %6152 = vst.msk [vmem:[#allocation3 + $0x128] sm:$0x7f] %vm6115, %v5996
    %6153 = vst.msk [vmem:[#allocation3 + $0x130] sm:$0xff] %vm6113, %v5998
    %6154 = vst.msk [vmem:[#allocation3 + $0x138] sm:$0x7f] %vm6115, %v6000
    %6155 = vst.msk [vmem:[#allocation3 + $0x140] sm:$0xff] %vm6113, %v6002
    %6156 = vst.msk [vmem:[#allocation3 + $0x148] sm:$0x7f] %vm6115, %v6004
    %6157 = vst.msk [vmem:[#allocation3 + $0x150] sm:$0xff] %vm6113, %v6006
    %6158 = vst.msk [vmem:[#allocation3 + $0x158] sm:$0x7f] %vm6115, %v6008
    %6159 = vst.msk [vmem:[#allocation3 + $0x160] sm:$0xff] %vm6113, %v6010
    %6160 = vst.msk [vmem:[#allocation3 + $0x168] sm:$0x7f] %vm6115, %v6012
    %6161 = vst.msk [vmem:[#allocation3 + $0x170] sm:$0xff] %vm6113, %v6014
    %6162 = vst.msk [vmem:[#allocation3 + $0x178] sm:$0x7f] %vm6115, %v6016
    %6163 = vst.msk [vmem:[#allocation3 + $0x180] sm:$0xff] %vm6113, %v6018
    %6164 = vst.msk [vmem:[#allocation3 + $0x188] sm:$0x7f] %vm6115, %v6020
    %6165 = vst.msk [vmem:[#allocation3 + $0x190] sm:$0xff] %vm6113, %v6022
    %6166 = vst.msk [vmem:[#allocation3 + $0x198] sm:$0x7f] %vm6115, %v6024
    %6167 = vst.msk [vmem:[#allocation3 + $0x1a0] sm:$0xff] %vm6113, %v6026
    %6168 = vst.msk [vmem:[#allocation3 + $0x1a8] sm:$0x7f] %vm6115, %v6028
    %6169 = vst.msk [vmem:[#allocation3 + $0x1b0] sm:$0xff] %vm6113, %v6030
    %6170 = vst.msk [vmem:[#allocation3 + $0x1b8] sm:$0x7f] %vm6115, %v6032
    %6171 = vst.msk [vmem:[#allocation3 + $0x1c0] sm:$0xff] %vm6113, %v6034
    %6172 = vst.msk [vmem:[#allocation3 + $0x1c8] sm:$0x7f] %vm6115, %v6036
    %6173 = vst.msk [vmem:[#allocation3 + $0x1d0] sm:$0xff] %vm6113, %v6038
    %6174 = vst.msk [vmem:[#allocation3 + $0x1d8] sm:$0x7f] %vm6115, %v6040
    %6175 = vst.msk [vmem:[#allocation3 + $0x1e0] sm:$0xff] %vm6113, %v6042
    %6176 = vst.msk [vmem:[#allocation3 + $0x1e8] sm:$0x7f] %vm6115, %v6044
    %6177 = vst.msk [vmem:[#allocation3 + $0x1f0] sm:$0xff] %vm6113, %v6046
    %6178 = vst.msk [vmem:[#allocation3 + $0x1f8] sm:$0x7f] %vm6115, %v6048
    %s6179 = scalar_lea.vmem [#allocation4], 16
    %v6180 = vld [vmem:[%s6179] sm:$0xff]
    %v6181 = vld [vmem:[%s6179 + $0x8] sm:$0x7f]
    %v6182 = vld [vmem:[%s6179 + $0x10] sm:$0xff]
    %v6183 = vld [vmem:[%s6179 + $0x18] sm:$0x7f]
    %v6184 = vld [vmem:[%s6179 + $0x20] sm:$0xff]
    %v6185 = vld [vmem:[%s6179 + $0x28] sm:$0x7f]
    %v6186 = vld [vmem:[%s6179 + $0x30] sm:$0xff]
    %v6187 = vld [vmem:[%s6179 + $0x38] sm:$0x7f]
    %v6188 = vld [vmem:[%s6179 + $0x40] sm:$0xff]
    %v6189 = vld [vmem:[%s6179 + $0x48] sm:$0x7f]
    %v6190 = vld [vmem:[%s6179 + $0x50] sm:$0xff]
    %v6191 = vld [vmem:[%s6179 + $0x58] sm:$0x7f]
    %v6192 = vld [vmem:[%s6179 + $0x60] sm:$0xff]
    %v6193 = vld [vmem:[%s6179 + $0x68] sm:$0x7f]
    %v6194 = vld [vmem:[%s6179 + $0x70] sm:$0xff]
    %v6195 = vld [vmem:[%s6179 + $0x78] sm:$0x7f]
    %v6196 = vld [vmem:[%s6179 + $0x80] sm:$0xff]
    %v6197 = vld [vmem:[%s6179 + $0x88] sm:$0x7f]
    %v6198 = vld [vmem:[%s6179 + $0x90] sm:$0xff]
    %v6199 = vld [vmem:[%s6179 + $0x98] sm:$0x7f]
    %v6200 = vld [vmem:[%s6179 + $0xa0] sm:$0xff]
    %v6201 = vld [vmem:[%s6179 + $0xa8] sm:$0x7f]
    %v6202 = vld [vmem:[%s6179 + $0xb0] sm:$0xff]
    %v6203 = vld [vmem:[%s6179 + $0xb8] sm:$0x7f]
    %v6204 = vld [vmem:[%s6179 + $0xc0] sm:$0xff]
    %v6205 = vld [vmem:[%s6179 + $0xc8] sm:$0x7f]
    %v6206 = vld [vmem:[%s6179 + $0xd0] sm:$0xff]
    %v6207 = vld [vmem:[%s6179 + $0xd8] sm:$0x7f]
    %v6208 = vld [vmem:[%s6179 + $0xe0] sm:$0xff]
    %v6209 = vld [vmem:[%s6179 + $0xe8] sm:$0x7f]
    %v6210 = vld [vmem:[%s6179 + $0x100] sm:$0xff]
    %v6211 = vld [vmem:[%s6179 + $0x108] sm:$0x7f]
    %v6212 = vld [vmem:[%s6179 + $0x110] sm:$0xff]
    %v6213 = vld [vmem:[%s6179 + $0x118] sm:$0x7f]
    %v6214 = vld [vmem:[%s6179 + $0x120] sm:$0xff]
    %v6215 = vld [vmem:[%s6179 + $0x128] sm:$0x7f]
    %v6216 = vld [vmem:[%s6179 + $0x130] sm:$0xff]
    %v6217 = vld [vmem:[%s6179 + $0x138] sm:$0x7f]
    %v6218 = vld [vmem:[%s6179 + $0x140] sm:$0xff]
    %v6219 = vld [vmem:[%s6179 + $0x148] sm:$0x7f]
    %v6220 = vld [vmem:[%s6179 + $0x150] sm:$0xff]
    %v6221 = vld [vmem:[%s6179 + $0x158] sm:$0x7f]
    %v6222 = vld [vmem:[%s6179 + $0x160] sm:$0xff]
    %v6223 = vld [vmem:[%s6179 + $0x168] sm:$0x7f]
    %v6224 = vld [vmem:[%s6179 + $0x170] sm:$0xff]
    %v6225 = vld [vmem:[%s6179 + $0x178] sm:$0x7f]
    %v6226 = vld [vmem:[%s6179 + $0x180] sm:$0xff]
    %v6227 = vld [vmem:[%s6179 + $0x188] sm:$0x7f]
    %v6228 = vld [vmem:[%s6179 + $0x190] sm:$0xff]
    %v6229 = vld [vmem:[%s6179 + $0x198] sm:$0x7f]
    %v6230 = vld [vmem:[%s6179 + $0x1a0] sm:$0xff]
    %v6231 = vld [vmem:[%s6179 + $0x1a8] sm:$0x7f]
    %v6232 = vld [vmem:[%s6179 + $0x1b0] sm:$0xff]
    %v6233 = vld [vmem:[%s6179 + $0x1b8] sm:$0x7f]
    %v6234 = vld [vmem:[%s6179 + $0x1c0] sm:$0xff]
    %v6235 = vld [vmem:[%s6179 + $0x1c8] sm:$0x7f]
    %v6236 = vld [vmem:[%s6179 + $0x1d0] sm:$0xff]
    %v6237 = vld [vmem:[%s6179 + $0x1d8] sm:$0x7f]
    %v6238 = vld [vmem:[%s6179 + $0x1e0] sm:$0xff]
    %v6239 = vld [vmem:[%s6179 + $0x1e8] sm:$0x7f]
    %6300 = vrot.lane.b32.xlu0 %v6180, 48
    %v6301 = vpop.permute.xlu0 %6300
    %6302 = vrot.lane.b32.xlu0 %v6181, 48
    %v6303 = vpop.permute.xlu0 %6302
    %6304 = vrot.lane.b32.xlu0 %v6182, 48
    %v6305 = vpop.permute.xlu0 %6304
    %6306 = vrot.lane.b32.xlu0 %v6183, 48
    %v6307 = vpop.permute.xlu0 %6306
    %6308 = vrot.lane.b32.xlu0 %v6184, 48
    %v6309 = vpop.permute.xlu0 %6308
    %6310 = vrot.lane.b32.xlu0 %v6185, 48
    %v6311 = vpop.permute.xlu0 %6310
    %6312 = vrot.lane.b32.xlu0 %v6186, 48
    %v6313 = vpop.permute.xlu0 %6312
    %6314 = vrot.lane.b32.xlu0 %v6187, 48
    %v6315 = vpop.permute.xlu0 %6314
    %6316 = vrot.lane.b32.xlu0 %v6188, 48
    %v6317 = vpop.permute.xlu0 %6316
    %6318 = vrot.lane.b32.xlu0 %v6189, 48
    %v6319 = vpop.permute.xlu0 %6318
    %6320 = vrot.lane.b32.xlu0 %v6190, 48
    %v6321 = vpop.permute.xlu0 %6320
    %6322 = vrot.lane.b32.xlu0 %v6191, 48
    %v6323 = vpop.permute.xlu0 %6322
    %6324 = vrot.lane.b32.xlu0 %v6192, 48
    %v6325 = vpop.permute.xlu0 %6324
    %6326 = vrot.lane.b32.xlu0 %v6193, 48
    %v6327 = vpop.permute.xlu0 %6326
    %6328 = vrot.lane.b32.xlu0 %v6194, 48
    %v6329 = vpop.permute.xlu0 %6328
    %6330 = vrot.lane.b32.xlu0 %v6195, 48
    %v6331 = vpop.permute.xlu0 %6330
    %6332 = vrot.lane.b32.xlu0 %v6196, 48
    %v6333 = vpop.permute.xlu0 %6332
    %6334 = vrot.lane.b32.xlu0 %v6197, 48
    %v6335 = vpop.permute.xlu0 %6334
    %6336 = vrot.lane.b32.xlu0 %v6198, 48
    %v6337 = vpop.permute.xlu0 %6336
    %6338 = vrot.lane.b32.xlu0 %v6199, 48
    %v6339 = vpop.permute.xlu0 %6338
    %6340 = vrot.lane.b32.xlu0 %v6200, 48
    %v6341 = vpop.permute.xlu0 %6340
    %6342 = vrot.lane.b32.xlu0 %v6201, 48
    %v6343 = vpop.permute.xlu0 %6342
    %6344 = vrot.lane.b32.xlu0 %v6202, 48
    %v6345 = vpop.permute.xlu0 %6344
    %6346 = vrot.lane.b32.xlu0 %v6203, 48
    %v6347 = vpop.permute.xlu0 %6346
    %6348 = vrot.lane.b32.xlu0 %v6204, 48
    %v6349 = vpop.permute.xlu0 %6348
    %6350 = vrot.lane.b32.xlu0 %v6205, 48
    %v6351 = vpop.permute.xlu0 %6350
    %6352 = vrot.lane.b32.xlu0 %v6206, 48
    %v6353 = vpop.permute.xlu0 %6352
    %6354 = vrot.lane.b32.xlu0 %v6207, 48
    %v6355 = vpop.permute.xlu0 %6354
    %6356 = vrot.lane.b32.xlu0 %v6208, 48
    %v6357 = vpop.permute.xlu0 %6356
    %6358 = vrot.lane.b32.xlu0 %v6209, 48
    %v6359 = vpop.permute.xlu0 %6358
    %6360 = vrot.lane.b32.xlu0 %v6210, 48
    %v6361 = vpop.permute.xlu0 %6360
    %6362 = vrot.lane.b32.xlu0 %v6211, 48
    %v6363 = vpop.permute.xlu0 %6362
    %6364 = vrot.lane.b32.xlu0 %v6212, 48
    %v6365 = vpop.permute.xlu0 %6364
    %6366 = vrot.lane.b32.xlu0 %v6213, 48
    %v6367 = vpop.permute.xlu0 %6366
    %6368 = vrot.lane.b32.xlu0 %v6214, 48
    %v6369 = vpop.permute.xlu0 %6368
    %6370 = vrot.lane.b32.xlu0 %v6215, 48
    %v6371 = vpop.permute.xlu0 %6370
    %6372 = vrot.lane.b32.xlu0 %v6216, 48
    %v6373 = vpop.permute.xlu0 %6372
    %6374 = vrot.lane.b32.xlu0 %v6217, 48
    %v6375 = vpop.permute.xlu0 %6374
    %6376 = vrot.lane.b32.xlu0 %v6218, 48
    %v6377 = vpop.permute.xlu0 %6376
    %6378 = vrot.lane.b32.xlu0 %v6219, 48
    %v6379 = vpop.permute.xlu0 %6378
    %6380 = vrot.lane.b32.xlu0 %v6220, 48
    %v6381 = vpop.permute.xlu0 %6380
    %6382 = vrot.lane.b32.xlu0 %v6221, 48
    %v6383 = vpop.permute.xlu0 %6382
    %6384 = vrot.lane.b32.xlu0 %v6222, 48
    %v6385 = vpop.permute.xlu0 %6384
    %6386 = vrot.lane.b32.xlu0 %v6223, 48
    %v6387 = vpop.permute.xlu0 %6386
    %6388 = vrot.lane.b32.xlu0 %v6224, 48
    %v6389 = vpop.permute.xlu0 %6388
    %6390 = vrot.lane.b32.xlu0 %v6225, 48
    %v6391 = vpop.permute.xlu0 %6390
    %6392 = vrot.lane.b32.xlu0 %v6226, 48
    %v6393 = vpop.permute.xlu0 %6392
    %6394 = vrot.lane.b32.xlu0 %v6227, 48
    %v6395 = vpop.permute.xlu0 %6394
    %6396 = vrot.lane.b32.xlu0 %v6228, 48
    %v6397 = vpop.permute.xlu0 %6396
    %6398 = vrot.lane.b32.xlu0 %v6229, 48
    %v6399 = vpop.permute.xlu0 %6398
    %6400 = vrot.lane.b32.xlu0 %v6230, 48
    %v6401 = vpop.permute.xlu0 %6400
    %6402 = vrot.lane.b32.xlu0 %v6231, 48
    %v6403 = vpop.permute.xlu0 %6402
    %6404 = vrot.lane.b32.xlu0 %v6232, 48
    %v6405 = vpop.permute.xlu0 %6404
    %6406 = vrot.lane.b32.xlu0 %v6233, 48
    %v6407 = vpop.permute.xlu0 %6406
    %6408 = vrot.lane.b32.xlu0 %v6234, 48
    %v6409 = vpop.permute.xlu0 %6408
    %6410 = vrot.lane.b32.xlu0 %v6235, 48
    %v6411 = vpop.permute.xlu0 %6410
    %6412 = vrot.lane.b32.xlu0 %v6236, 48
    %v6413 = vpop.permute.xlu0 %6412
    %6414 = vrot.lane.b32.xlu0 %v6237, 48
    %v6415 = vpop.permute.xlu0 %6414
    %6416 = vrot.lane.b32.xlu0 %v6238, 48
    %v6417 = vpop.permute.xlu0 %6416
    %6418 = vrot.lane.b32.xlu0 %v6239, 48
    %v6419 = vpop.permute.xlu0 %6418
    %vm6480 = vcmask 458112
    %6481 = vst.msk [vmem:[#allocation3 + $0x1] sm:$0xff] %vm6480, %v6301
    %vm6482 = vcmask 457088
    %6483 = vst.msk [vmem:[#allocation3 + $0x9] sm:$0x7f] %vm6482, %v6303
    %6484 = vst.msk [vmem:[#allocation3 + $0x11] sm:$0xff] %vm6480, %v6305
    %6485 = vst.msk [vmem:[#allocation3 + $0x19] sm:$0x7f] %vm6482, %v6307
    %6486 = vst.msk [vmem:[#allocation3 + $0x21] sm:$0xff] %vm6480, %v6309
    %6487 = vst.msk [vmem:[#allocation3 + $0x29] sm:$0x7f] %vm6482, %v6311
    %6488 = vst.msk [vmem:[#allocation3 + $0x31] sm:$0xff] %vm6480, %v6313
    %6489 = vst.msk [vmem:[#allocation3 + $0x39] sm:$0x7f] %vm6482, %v6315
    %6490 = vst.msk [vmem:[#allocation3 + $0x41] sm:$0xff] %vm6480, %v6317
    %6491 = vst.msk [vmem:[#allocation3 + $0x49] sm:$0x7f] %vm6482, %v6319
    %6492 = vst.msk [vmem:[#allocation3 + $0x51] sm:$0xff] %vm6480, %v6321
    %6493 = vst.msk [vmem:[#allocation3 + $0x59] sm:$0x7f] %vm6482, %v6323
    %6494 = vst.msk [vmem:[#allocation3 + $0x61] sm:$0xff] %vm6480, %v6325
    %6495 = vst.msk [vmem:[#allocation3 + $0x69] sm:$0x7f] %vm6482, %v6327
    %6496 = vst.msk [vmem:[#allocation3 + $0x71] sm:$0xff] %vm6480, %v6329
    %6497 = vst.msk [vmem:[#allocation3 + $0x79] sm:$0x7f] %vm6482, %v6331
    %6498 = vst.msk [vmem:[#allocation3 + $0x81] sm:$0xff] %vm6480, %v6333
    %6499 = vst.msk [vmem:[#allocation3 + $0x89] sm:$0x7f] %vm6482, %v6335
    %6500 = vst.msk [vmem:[#allocation3 + $0x91] sm:$0xff] %vm6480, %v6337
    %6501 = vst.msk [vmem:[#allocation3 + $0x99] sm:$0x7f] %vm6482, %v6339
    %6502 = vst.msk [vmem:[#allocation3 + $0xa1] sm:$0xff] %vm6480, %v6341
    %6503 = vst.msk [vmem:[#allocation3 + $0xa9] sm:$0x7f] %vm6482, %v6343
    %6504 = vst.msk [vmem:[#allocation3 + $0xb1] sm:$0xff] %vm6480, %v6345
    %6505 = vst.msk [vmem:[#allocation3 + $0xb9] sm:$0x7f] %vm6482, %v6347
    %6506 = vst.msk [vmem:[#allocation3 + $0xc1] sm:$0xff] %vm6480, %v6349
    %6507 = vst.msk [vmem:[#allocation3 + $0xc9] sm:$0x7f] %vm6482, %v6351
    %6508 = vst.msk [vmem:[#allocation3 + $0xd1] sm:$0xff] %vm6480, %v6353
    %6509 = vst.msk [vmem:[#allocation3 + $0xd9] sm:$0x7f] %vm6482, %v6355
    %6510 = vst.msk [vmem:[#allocation3 + $0xe1] sm:$0xff] %vm6480, %v6357
    %6511 = vst.msk [vmem:[#allocation3 + $0xe9] sm:$0x7f] %vm6482, %v6359
    %6512 = vst.msk [vmem:[#allocation3 + $0x101] sm:$0xff] %vm6480, %v6361
    %6513 = vst.msk [vmem:[#allocation3 + $0x109] sm:$0x7f] %vm6482, %v6363
    %6514 = vst.msk [vmem:[#allocation3 + $0x111] sm:$0xff] %vm6480, %v6365
    %6515 = vst.msk [vmem:[#allocation3 + $0x119] sm:$0x7f] %vm6482, %v6367
    %6516 = vst.msk [vmem:[#allocation3 + $0x121] sm:$0xff] %vm6480, %v6369
    %6517 = vst.msk [vmem:[#allocation3 + $0x129] sm:$0x7f] %vm6482, %v6371
    %6518 = vst.msk [vmem:[#allocation3 + $0x131] sm:$0xff] %vm6480, %v6373
    %6519 = vst.msk [vmem:[#allocation3 + $0x139] sm:$0x7f] %vm6482, %v6375
    %6520 = vst.msk [vmem:[#allocation3 + $0x141] sm:$0xff] %vm6480, %v6377
    %6521 = vst.msk [vmem:[#allocation3 + $0x149] sm:$0x7f] %vm6482, %v6379
    %6522 = vst.msk [vmem:[#allocation3 + $0x151] sm:$0xff] %vm6480, %v6381
    %6523 = vst.msk [vmem:[#allocation3 + $0x159] sm:$0x7f] %vm6482, %v6383
    %6524 = vst.msk [vmem:[#allocation3 + $0x161] sm:$0xff] %vm6480, %v6385
    %6525 = vst.msk [vmem:[#allocation3 + $0x169] sm:$0x7f] %vm6482, %v6387
    %6526 = vst.msk [vmem:[#allocation3 + $0x171] sm:$0xff] %vm6480, %v6389
    %6527 = vst.msk [vmem:[#allocation3 + $0x179] sm:$0x7f] %vm6482, %v6391
    %6528 = vst.msk [vmem:[#allocation3 + $0x181] sm:$0xff] %vm6480, %v6393
    %6529 = vst.msk [vmem:[#allocation3 + $0x189] sm:$0x7f] %vm6482, %v6395
    %6530 = vst.msk [vmem:[#allocation3 + $0x191] sm:$0xff] %vm6480, %v6397
    %6531 = vst.msk [vmem:[#allocation3 + $0x199] sm:$0x7f] %vm6482, %v6399
    %6532 = vst.msk [vmem:[#allocation3 + $0x1a1] sm:$0xff] %vm6480, %v6401
    %6533 = vst.msk [vmem:[#allocation3 + $0x1a9] sm:$0x7f] %vm6482, %v6403
    %6534 = vst.msk [vmem:[#allocation3 + $0x1b1] sm:$0xff] %vm6480, %v6405
    %6535 = vst.msk [vmem:[#allocation3 + $0x1b9] sm:$0x7f] %vm6482, %v6407
    %6536 = vst.msk [vmem:[#allocation3 + $0x1c1] sm:$0xff] %vm6480, %v6409
    %6537 = vst.msk [vmem:[#allocation3 + $0x1c9] sm:$0x7f] %vm6482, %v6411
    %6538 = vst.msk [vmem:[#allocation3 + $0x1d1] sm:$0xff] %vm6480, %v6413
    %6539 = vst.msk [vmem:[#allocation3 + $0x1d9] sm:$0x7f] %vm6482, %v6415
    %6540 = vst.msk [vmem:[#allocation3 + $0x1e1] sm:$0xff] %vm6480, %v6417
    %6541 = vst.msk [vmem:[#allocation3 + $0x1e9] sm:$0x7f] %vm6482, %v6419
    %v6542 = vld [vmem:[%s6179] sm:$0xff]
    %v6543 = vld [vmem:[%s6179 + $0x8] sm:$0xff]
    %v6544 = vld [vmem:[%s6179 + $0x10] sm:$0xff]
    %v6545 = vld [vmem:[%s6179 + $0x18] sm:$0xff]
    %v6546 = vld [vmem:[%s6179 + $0x20] sm:$0xff]
    %v6547 = vld [vmem:[%s6179 + $0x28] sm:$0xff]
    %v6548 = vld [vmem:[%s6179 + $0x30] sm:$0xff]
    %v6549 = vld [vmem:[%s6179 + $0x38] sm:$0xff]
    %v6550 = vld [vmem:[%s6179 + $0x40] sm:$0xff]
    %v6551 = vld [vmem:[%s6179 + $0x48] sm:$0xff]
    %v6552 = vld [vmem:[%s6179 + $0x50] sm:$0xff]
    %v6553 = vld [vmem:[%s6179 + $0x58] sm:$0xff]
    %v6554 = vld [vmem:[%s6179 + $0x60] sm:$0xff]
    %v6555 = vld [vmem:[%s6179 + $0x68] sm:$0xff]
    %v6556 = vld [vmem:[%s6179 + $0x70] sm:$0xff]
    %v6557 = vld [vmem:[%s6179 + $0x78] sm:$0xff]
    %v6558 = vld [vmem:[%s6179 + $0x80] sm:$0xff]
    %v6559 = vld [vmem:[%s6179 + $0x88] sm:$0xff]
    %v6560 = vld [vmem:[%s6179 + $0x90] sm:$0xff]
    %v6561 = vld [vmem:[%s6179 + $0x98] sm:$0xff]
    %v6562 = vld [vmem:[%s6179 + $0xa0] sm:$0xff]
    %v6563 = vld [vmem:[%s6179 + $0xa8] sm:$0xff]
    %v6564 = vld [vmem:[%s6179 + $0xb0] sm:$0xff]
    %v6565 = vld [vmem:[%s6179 + $0xb8] sm:$0xff]
    %v6566 = vld [vmem:[%s6179 + $0xc0] sm:$0xff]
    %v6567 = vld [vmem:[%s6179 + $0xc8] sm:$0xff]
    %v6568 = vld [vmem:[%s6179 + $0xd0] sm:$0xff]
    %v6569 = vld [vmem:[%s6179 + $0xd8] sm:$0xff]
    %v6570 = vld [vmem:[%s6179 + $0xe0] sm:$0xff]
    %v6571 = vld [vmem:[%s6179 + $0xe8] sm:$0xff]
    %v6572 = vld [vmem:[%s6179 + $0x100] sm:$0xff]
    %v6573 = vld [vmem:[%s6179 + $0x108] sm:$0xff]
    %v6574 = vld [vmem:[%s6179 + $0x110] sm:$0xff]
    %v6575 = vld [vmem:[%s6179 + $0x118] sm:$0xff]
    %v6576 = vld [vmem:[%s6179 + $0x120] sm:$0xff]
    %v6577 = vld [vmem:[%s6179 + $0x128] sm:$0xff]
    %v6578 = vld [vmem:[%s6179 + $0x130] sm:$0xff]
    %v6579 = vld [vmem:[%s6179 + $0x138] sm:$0xff]
    %v6580 = vld [vmem:[%s6179 + $0x140] sm:$0xff]
    %v6581 = vld [vmem:[%s6179 + $0x148] sm:$0xff]
    %v6582 = vld [vmem:[%s6179 + $0x150] sm:$0xff]
    %v6583 = vld [vmem:[%s6179 + $0x158] sm:$0xff]
    %v6584 = vld [vmem:[%s6179 + $0x160] sm:$0xff]
    %v6585 = vld [vmem:[%s6179 + $0x168] sm:$0xff]
    %v6586 = vld [vmem:[%s6179 + $0x170] sm:$0xff]
    %v6587 = vld [vmem:[%s6179 + $0x178] sm:$0xff]
    %v6588 = vld [vmem:[%s6179 + $0x180] sm:$0xff]
    %v6589 = vld [vmem:[%s6179 + $0x188] sm:$0xff]
    %v6590 = vld [vmem:[%s6179 + $0x190] sm:$0xff]
    %v6591 = vld [vmem:[%s6179 + $0x198] sm:$0xff]
    %v6592 = vld [vmem:[%s6179 + $0x1a0] sm:$0xff]
    %v6593 = vld [vmem:[%s6179 + $0x1a8] sm:$0xff]
    %v6594 = vld [vmem:[%s6179 + $0x1b0] sm:$0xff]
    %v6595 = vld [vmem:[%s6179 + $0x1b8] sm:$0xff]
    %v6596 = vld [vmem:[%s6179 + $0x1c0] sm:$0xff]
    %v6597 = vld [vmem:[%s6179 + $0x1c8] sm:$0xff]
    %v6598 = vld [vmem:[%s6179 + $0x1d0] sm:$0xff]
    %v6599 = vld [vmem:[%s6179 + $0x1d8] sm:$0xff]
    %v6600 = vld [vmem:[%s6179 + $0x1e0] sm:$0xff]
    %v6601 = vld [vmem:[%s6179 + $0x1e8] sm:$0xff]
    %6662 = vrot.lane.b32.xlu0 %v6542, 56
    %v6663 = vpop.permute.xlu0 %6662
    %6664 = vrot.lane.b32.xlu0 %v6543, 56
    %v6665 = vpop.permute.xlu0 %6664
    %6666 = vrot.lane.b32.xlu0 %v6544, 56
    %v6667 = vpop.permute.xlu0 %6666
    %6668 = vrot.lane.b32.xlu0 %v6545, 56
    %v6669 = vpop.permute.xlu0 %6668
    %6670 = vrot.lane.b32.xlu0 %v6546, 56
    %v6671 = vpop.permute.xlu0 %6670
    %6672 = vrot.lane.b32.xlu0 %v6547, 56
    %v6673 = vpop.permute.xlu0 %6672
    %6674 = vrot.lane.b32.xlu0 %v6548, 56
    %v6675 = vpop.permute.xlu0 %6674
    %6676 = vrot.lane.b32.xlu0 %v6549, 56
    %v6677 = vpop.permute.xlu0 %6676
    %6678 = vrot.lane.b32.xlu0 %v6550, 56
    %v6679 = vpop.permute.xlu0 %6678
    %6680 = vrot.lane.b32.xlu0 %v6551, 56
    %v6681 = vpop.permute.xlu0 %6680
    %6682 = vrot.lane.b32.xlu0 %v6552, 56
    %v6683 = vpop.permute.xlu0 %6682
    %6684 = vrot.lane.b32.xlu0 %v6553, 56
    %v6685 = vpop.permute.xlu0 %6684
    %6686 = vrot.lane.b32.xlu0 %v6554, 56
    %v6687 = vpop.permute.xlu0 %6686
    %6688 = vrot.lane.b32.xlu0 %v6555, 56
    %v6689 = vpop.permute.xlu0 %6688
    %6690 = vrot.lane.b32.xlu0 %v6556, 56
    %v6691 = vpop.permute.xlu0 %6690
    %6692 = vrot.lane.b32.xlu0 %v6557, 56
    %v6693 = vpop.permute.xlu0 %6692
    %6694 = vrot.lane.b32.xlu0 %v6558, 56
    %v6695 = vpop.permute.xlu0 %6694
    %6696 = vrot.lane.b32.xlu0 %v6559, 56
    %v6697 = vpop.permute.xlu0 %6696
    %6698 = vrot.lane.b32.xlu0 %v6560, 56
    %v6699 = vpop.permute.xlu0 %6698
    %6700 = vrot.lane.b32.xlu0 %v6561, 56
    %v6701 = vpop.permute.xlu0 %6700
    %6702 = vrot.lane.b32.xlu0 %v6562, 56
    %v6703 = vpop.permute.xlu0 %6702
    %6704 = vrot.lane.b32.xlu0 %v6563, 56
    %v6705 = vpop.permute.xlu0 %6704
    %6706 = vrot.lane.b32.xlu0 %v6564, 56
    %v6707 = vpop.permute.xlu0 %6706
    %6708 = vrot.lane.b32.xlu0 %v6565, 56
    %v6709 = vpop.permute.xlu0 %6708
    %6710 = vrot.lane.b32.xlu0 %v6566, 56
    %v6711 = vpop.permute.xlu0 %6710
    %6712 = vrot.lane.b32.xlu0 %v6567, 56
    %v6713 = vpop.permute.xlu0 %6712
    %6714 = vrot.lane.b32.xlu0 %v6568, 56
    %v6715 = vpop.permute.xlu0 %6714
    %6716 = vrot.lane.b32.xlu0 %v6569, 56
    %v6717 = vpop.permute.xlu0 %6716
    %6718 = vrot.lane.b32.xlu0 %v6570, 56
    %v6719 = vpop.permute.xlu0 %6718
    %6720 = vrot.lane.b32.xlu0 %v6571, 56
    %v6721 = vpop.permute.xlu0 %6720
    %6722 = vrot.lane.b32.xlu0 %v6572, 56
    %v6723 = vpop.permute.xlu0 %6722
    %6724 = vrot.lane.b32.xlu0 %v6573, 56
    %v6725 = vpop.permute.xlu0 %6724
    %6726 = vrot.lane.b32.xlu0 %v6574, 56
    %v6727 = vpop.permute.xlu0 %6726
    %6728 = vrot.lane.b32.xlu0 %v6575, 56
    %v6729 = vpop.permute.xlu0 %6728
    %6730 = vrot.lane.b32.xlu0 %v6576, 56
    %v6731 = vpop.permute.xlu0 %6730
    %6732 = vrot.lane.b32.xlu0 %v6577, 56
    %v6733 = vpop.permute.xlu0 %6732
    %6734 = vrot.lane.b32.xlu0 %v6578, 56
    %v6735 = vpop.permute.xlu0 %6734
    %6736 = vrot.lane.b32.xlu0 %v6579, 56
    %v6737 = vpop.permute.xlu0 %6736
    %6738 = vrot.lane.b32.xlu0 %v6580, 56
    %v6739 = vpop.permute.xlu0 %6738
    %6740 = vrot.lane.b32.xlu0 %v6581, 56
    %v6741 = vpop.permute.xlu0 %6740
    %6742 = vrot.lane.b32.xlu0 %v6582, 56
    %v6743 = vpop.permute.xlu0 %6742
    %6744 = vrot.lane.b32.xlu0 %v6583, 56
    %v6745 = vpop.permute.xlu0 %6744
    %6746 = vrot.lane.b32.xlu0 %v6584, 56
    %v6747 = vpop.permute.xlu0 %6746
    %6748 = vrot.lane.b32.xlu0 %v6585, 56
    %v6749 = vpop.permute.xlu0 %6748
    %6750 = vrot.lane.b32.xlu0 %v6586, 56
    %v6751 = vpop.permute.xlu0 %6750
    %6752 = vrot.lane.b32.xlu0 %v6587, 56
    %v6753 = vpop.permute.xlu0 %6752
    %6754 = vrot.lane.b32.xlu0 %v6588, 56
    %v6755 = vpop.permute.xlu0 %6754
    %6756 = vrot.lane.b32.xlu0 %v6589, 56
    %v6757 = vpop.permute.xlu0 %6756
    %6758 = vrot.lane.b32.xlu0 %v6590, 56
    %v6759 = vpop.permute.xlu0 %6758
    %6760 = vrot.lane.b32.xlu0 %v6591, 56
    %v6761 = vpop.permute.xlu0 %6760
    %6762 = vrot.lane.b32.xlu0 %v6592, 56
    %v6763 = vpop.permute.xlu0 %6762
    %6764 = vrot.lane.b32.xlu0 %v6593, 56
    %v6765 = vpop.permute.xlu0 %6764
    %6766 = vrot.lane.b32.xlu0 %v6594, 56
    %v6767 = vpop.permute.xlu0 %6766
    %6768 = vrot.lane.b32.xlu0 %v6595, 56
    %v6769 = vpop.permute.xlu0 %6768
    %6770 = vrot.lane.b32.xlu0 %v6596, 56
    %v6771 = vpop.permute.xlu0 %6770
    %6772 = vrot.lane.b32.xlu0 %v6597, 56
    %v6773 = vpop.permute.xlu0 %6772
    %6774 = vrot.lane.b32.xlu0 %v6598, 56
    %v6775 = vpop.permute.xlu0 %6774
    %6776 = vrot.lane.b32.xlu0 %v6599, 56
    %v6777 = vpop.permute.xlu0 %6776
    %6778 = vrot.lane.b32.xlu0 %v6600, 56
    %v6779 = vpop.permute.xlu0 %6778
    %6780 = vrot.lane.b32.xlu0 %v6601, 56
    %v6781 = vpop.permute.xlu0 %6780
    %vm6842 = vcmask 523712
    %6843 = vst.msk [vmem:[#allocation3] sm:$0xff] %vm6842, %v6663
    %6844 = vst.msk [vmem:[#allocation3 + $0x8] sm:$0xff] %vm6842, %v6665
    %6845 = vst.msk [vmem:[#allocation3 + $0x10] sm:$0xff] %vm6842, %v6667
    %6846 = vst.msk [vmem:[#allocation3 + $0x18] sm:$0xff] %vm6842, %v6669
    %6847 = vst.msk [vmem:[#allocation3 + $0x20] sm:$0xff] %vm6842, %v6671
    %6848 = vst.msk [vmem:[#allocation3 + $0x28] sm:$0xff] %vm6842, %v6673
    %6849 = vst.msk [vmem:[#allocation3 + $0x30] sm:$0xff] %vm6842, %v6675
    %6850 = vst.msk [vmem:[#allocation3 + $0x38] sm:$0xff] %vm6842, %v6677
    %6851 = vst.msk [vmem:[#allocation3 + $0x40] sm:$0xff] %vm6842, %v6679
    %6852 = vst.msk [vmem:[#allocation3 + $0x48] sm:$0xff] %vm6842, %v6681
    %6853 = vst.msk [vmem:[#allocation3 + $0x50] sm:$0xff] %vm6842, %v6683
    %6854 = vst.msk [vmem:[#allocation3 + $0x58] sm:$0xff] %vm6842, %v6685
    %6855 = vst.msk [vmem:[#allocation3 + $0x60] sm:$0xff] %vm6842, %v6687
    %6856 = vst.msk [vmem:[#allocation3 + $0x68] sm:$0xff] %vm6842, %v6689
    %6857 = vst.msk [vmem:[#allocation3 + $0x70] sm:$0xff] %vm6842, %v6691
    %6858 = vst.msk [vmem:[#allocation3 + $0x78] sm:$0xff] %vm6842, %v6693
    %6859 = vst.msk [vmem:[#allocation3 + $0x80] sm:$0xff] %vm6842, %v6695
    %6860 = vst.msk [vmem:[#allocation3 + $0x88] sm:$0xff] %vm6842, %v6697
    %6861 = vst.msk [vmem:[#allocation3 + $0x90] sm:$0xff] %vm6842, %v6699
    %6862 = vst.msk [vmem:[#allocation3 + $0x98] sm:$0xff] %vm6842, %v6701
    %6863 = vst.msk [vmem:[#allocation3 + $0xa0] sm:$0xff] %vm6842, %v6703
    %6864 = vst.msk [vmem:[#allocation3 + $0xa8] sm:$0xff] %vm6842, %v6705
    %6865 = vst.msk [vmem:[#allocation3 + $0xb0] sm:$0xff] %vm6842, %v6707
    %6866 = vst.msk [vmem:[#allocation3 + $0xb8] sm:$0xff] %vm6842, %v6709
    %6867 = vst.msk [vmem:[#allocation3 + $0xc0] sm:$0xff] %vm6842, %v6711
    %6868 = vst.msk [vmem:[#allocation3 + $0xc8] sm:$0xff] %vm6842, %v6713
    %6869 = vst.msk [vmem:[#allocation3 + $0xd0] sm:$0xff] %vm6842, %v6715
    %6870 = vst.msk [vmem:[#allocation3 + $0xd8] sm:$0xff] %vm6842, %v6717
    %6871 = vst.msk [vmem:[#allocation3 + $0xe0] sm:$0xff] %vm6842, %v6719
    %6872 = vst.msk [vmem:[#allocation3 + $0xe8] sm:$0xff] %vm6842, %v6721
    %6873 = vst.msk [vmem:[#allocation3 + $0x100] sm:$0xff] %vm6842, %v6723
    %6874 = vst.msk [vmem:[#allocation3 + $0x108] sm:$0xff] %vm6842, %v6725
    %6875 = vst.msk [vmem:[#allocation3 + $0x110] sm:$0xff] %vm6842, %v6727
    %6876 = vst.msk [vmem:[#allocation3 + $0x118] sm:$0xff] %vm6842, %v6729
    %6877 = vst.msk [vmem:[#allocation3 + $0x120] sm:$0xff] %vm6842, %v6731
    %6878 = vst.msk [vmem:[#allocation3 + $0x128] sm:$0xff] %vm6842, %v6733
    %6879 = vst.msk [vmem:[#allocation3 + $0x130] sm:$0xff] %vm6842, %v6735
    %6880 = vst.msk [vmem:[#allocation3 + $0x138] sm:$0xff] %vm6842, %v6737
    %6881 = vst.msk [vmem:[#allocation3 + $0x140] sm:$0xff] %vm6842, %v6739
    %6882 = vst.msk [vmem:[#allocation3 + $0x148] sm:$0xff] %vm6842, %v6741
    %6883 = vst.msk [vmem:[#allocation3 + $0x150] sm:$0xff] %vm6842, %v6743
    %6884 = vst.msk [vmem:[#allocation3 + $0x158] sm:$0xff] %vm6842, %v6745
    %6885 = vst.msk [vmem:[#allocation3 + $0x160] sm:$0xff] %vm6842, %v6747
    %6886 = vst.msk [vmem:[#allocation3 + $0x168] sm:$0xff] %vm6842, %v6749
    %6887 = vst.msk [vmem:[#allocation3 + $0x170] sm:$0xff] %vm6842, %v6751
    %6888 = vst.msk [vmem:[#allocation3 + $0x178] sm:$0xff] %vm6842, %v6753
    %6889 = vst.msk [vmem:[#allocation3 + $0x180] sm:$0xff] %vm6842, %v6755
    %6890 = vst.msk [vmem:[#allocation3 + $0x188] sm:$0xff] %vm6842, %v6757
    %6891 = vst.msk [vmem:[#allocation3 + $0x190] sm:$0xff] %vm6842, %v6759
    %6892 = vst.msk [vmem:[#allocation3 + $0x198] sm:$0xff] %vm6842, %v6761
    %6893 = vst.msk [vmem:[#allocation3 + $0x1a0] sm:$0xff] %vm6842, %v6763
    %6894 = vst.msk [vmem:[#allocation3 + $0x1a8] sm:$0xff] %vm6842, %v6765
    %6895 = vst.msk [vmem:[#allocation3 + $0x1b0] sm:$0xff] %vm6842, %v6767
    %6896 = vst.msk [vmem:[#allocation3 + $0x1b8] sm:$0xff] %vm6842, %v6769
    %6897 = vst.msk [vmem:[#allocation3 + $0x1c0] sm:$0xff] %vm6842, %v6771
    %6898 = vst.msk [vmem:[#allocation3 + $0x1c8] sm:$0xff] %vm6842, %v6773
    %6899 = vst.msk [vmem:[#allocation3 + $0x1d0] sm:$0xff] %vm6842, %v6775
    %6900 = vst.msk [vmem:[#allocation3 + $0x1d8] sm:$0xff] %vm6842, %v6777
    %6901 = vst.msk [vmem:[#allocation3 + $0x1e0] sm:$0xff] %vm6842, %v6779
    %6902 = vst.msk [vmem:[#allocation3 + $0x1e8] sm:$0xff] %vm6842, %v6781
    %v6903 = vld [vmem:[%s6179 + $0x1] sm:$0xff]
    %v6904 = vld [vmem:[%s6179 + $0x9] sm:$0x7f]
    %v6905 = vld [vmem:[%s6179 + $0x11] sm:$0xff]
    %v6906 = vld [vmem:[%s6179 + $0x19] sm:$0x7f]
    %v6907 = vld [vmem:[%s6179 + $0x21] sm:$0xff]
    %v6908 = vld [vmem:[%s6179 + $0x29] sm:$0x7f]
    %v6909 = vld [vmem:[%s6179 + $0x31] sm:$0xff]
    %v6910 = vld [vmem:[%s6179 + $0x39] sm:$0x7f]
    %v6911 = vld [vmem:[%s6179 + $0x41] sm:$0xff]
    %v6912 = vld [vmem:[%s6179 + $0x49] sm:$0x7f]
    %v6913 = vld [vmem:[%s6179 + $0x51] sm:$0xff]
    %v6914 = vld [vmem:[%s6179 + $0x59] sm:$0x7f]
    %v6915 = vld [vmem:[%s6179 + $0x61] sm:$0xff]
    %v6916 = vld [vmem:[%s6179 + $0x69] sm:$0x7f]
    %v6917 = vld [vmem:[%s6179 + $0x71] sm:$0xff]
    %v6918 = vld [vmem:[%s6179 + $0x79] sm:$0x7f]
    %v6919 = vld [vmem:[%s6179 + $0x81] sm:$0xff]
    %v6920 = vld [vmem:[%s6179 + $0x89] sm:$0x7f]
    %v6921 = vld [vmem:[%s6179 + $0x91] sm:$0xff]
    %v6922 = vld [vmem:[%s6179 + $0x99] sm:$0x7f]
    %v6923 = vld [vmem:[%s6179 + $0xa1] sm:$0xff]
    %v6924 = vld [vmem:[%s6179 + $0xa9] sm:$0x7f]
    %v6925 = vld [vmem:[%s6179 + $0xb1] sm:$0xff]
    %v6926 = vld [vmem:[%s6179 + $0xb9] sm:$0x7f]
    %v6927 = vld [vmem:[%s6179 + $0xc1] sm:$0xff]
    %v6928 = vld [vmem:[%s6179 + $0xc9] sm:$0x7f]
    %v6929 = vld [vmem:[%s6179 + $0xd1] sm:$0xff]
    %v6930 = vld [vmem:[%s6179 + $0xd9] sm:$0x7f]
    %v6931 = vld [vmem:[%s6179 + $0xe1] sm:$0xff]
    %v6932 = vld [vmem:[%s6179 + $0xe9] sm:$0x7f]
    %v6933 = vld [vmem:[%s6179 + $0x101] sm:$0xff]
    %v6934 = vld [vmem:[%s6179 + $0x109] sm:$0x7f]
    %v6935 = vld [vmem:[%s6179 + $0x111] sm:$0xff]
    %v6936 = vld [vmem:[%s6179 + $0x119] sm:$0x7f]
    %v6937 = vld [vmem:[%s6179 + $0x121] sm:$0xff]
    %v6938 = vld [vmem:[%s6179 + $0x129] sm:$0x7f]
    %v6939 = vld [vmem:[%s6179 + $0x131] sm:$0xff]
    %v6940 = vld [vmem:[%s6179 + $0x139] sm:$0x7f]
    %v6941 = vld [vmem:[%s6179 + $0x141] sm:$0xff]
    %v6942 = vld [vmem:[%s6179 + $0x149] sm:$0x7f]
    %v6943 = vld [vmem:[%s6179 + $0x151] sm:$0xff]
    %v6944 = vld [vmem:[%s6179 + $0x159] sm:$0x7f]
    %v6945 = vld [vmem:[%s6179 + $0x161] sm:$0xff]
    %v6946 = vld [vmem:[%s6179 + $0x169] sm:$0x7f]
    %v6947 = vld [vmem:[%s6179 + $0x171] sm:$0xff]
    %v6948 = vld [vmem:[%s6179 + $0x179] sm:$0x7f]
    %v6949 = vld [vmem:[%s6179 + $0x181] sm:$0xff]
    %v6950 = vld [vmem:[%s6179 + $0x189] sm:$0x7f]
    %v6951 = vld [vmem:[%s6179 + $0x191] sm:$0xff]
    %v6952 = vld [vmem:[%s6179 + $0x199] sm:$0x7f]
    %v6953 = vld [vmem:[%s6179 + $0x1a1] sm:$0xff]
    %v6954 = vld [vmem:[%s6179 + $0x1a9] sm:$0x7f]
    %v6955 = vld [vmem:[%s6179 + $0x1b1] sm:$0xff]
    %v6956 = vld [vmem:[%s6179 + $0x1b9] sm:$0x7f]
    %v6957 = vld [vmem:[%s6179 + $0x1c1] sm:$0xff]
    %v6958 = vld [vmem:[%s6179 + $0x1c9] sm:$0x7f]
    %v6959 = vld [vmem:[%s6179 + $0x1d1] sm:$0xff]
    %v6960 = vld [vmem:[%s6179 + $0x1d9] sm:$0x7f]
    %v6961 = vld [vmem:[%s6179 + $0x1e1] sm:$0xff]
    %v6962 = vld [vmem:[%s6179 + $0x1e9] sm:$0x7f]
    %7023 = vrot.lane.b32.xlu0 %v6903, 64
    %v7024 = vpop.permute.xlu0 %7023
    %7025 = vrot.lane.b32.xlu0 %v6904, 64
    %v7026 = vpop.permute.xlu0 %7025
    %7027 = vrot.lane.b32.xlu0 %v6905, 64
    %v7028 = vpop.permute.xlu0 %7027
    %7029 = vrot.lane.b32.xlu0 %v6906, 64
    %v7030 = vpop.permute.xlu0 %7029
    %7031 = vrot.lane.b32.xlu0 %v6907, 64
    %v7032 = vpop.permute.xlu0 %7031
    %7033 = vrot.lane.b32.xlu0 %v6908, 64
    %v7034 = vpop.permute.xlu0 %7033
    %7035 = vrot.lane.b32.xlu0 %v6909, 64
    %v7036 = vpop.permute.xlu0 %7035
    %7037 = vrot.lane.b32.xlu0 %v6910, 64
    %v7038 = vpop.permute.xlu0 %7037
    %7039 = vrot.lane.b32.xlu0 %v6911, 64
    %v7040 = vpop.permute.xlu0 %7039
    %7041 = vrot.lane.b32.xlu0 %v6912, 64
    %v7042 = vpop.permute.xlu0 %7041
    %7043 = vrot.lane.b32.xlu0 %v6913, 64
    %v7044 = vpop.permute.xlu0 %7043
    %7045 = vrot.lane.b32.xlu0 %v6914, 64
    %v7046 = vpop.permute.xlu0 %7045
    %7047 = vrot.lane.b32.xlu0 %v6915, 64
    %v7048 = vpop.permute.xlu0 %7047
    %7049 = vrot.lane.b32.xlu0 %v6916, 64
    %v7050 = vpop.permute.xlu0 %7049
    %7051 = vrot.lane.b32.xlu0 %v6917, 64
    %v7052 = vpop.permute.xlu0 %7051
    %7053 = vrot.lane.b32.xlu0 %v6918, 64
    %v7054 = vpop.permute.xlu0 %7053
    %7055 = vrot.lane.b32.xlu0 %v6919, 64
    %v7056 = vpop.permute.xlu0 %7055
    %7057 = vrot.lane.b32.xlu0 %v6920, 64
    %v7058 = vpop.permute.xlu0 %7057
    %7059 = vrot.lane.b32.xlu0 %v6921, 64
    %v7060 = vpop.permute.xlu0 %7059
    %7061 = vrot.lane.b32.xlu0 %v6922, 64
    %v7062 = vpop.permute.xlu0 %7061
    %7063 = vrot.lane.b32.xlu0 %v6923, 64
    %v7064 = vpop.permute.xlu0 %7063
    %7065 = vrot.lane.b32.xlu0 %v6924, 64
    %v7066 = vpop.permute.xlu0 %7065
    %7067 = vrot.lane.b32.xlu0 %v6925, 64
    %v7068 = vpop.permute.xlu0 %7067
    %7069 = vrot.lane.b32.xlu0 %v6926, 64
    %v7070 = vpop.permute.xlu0 %7069
    %7071 = vrot.lane.b32.xlu0 %v6927, 64
    %v7072 = vpop.permute.xlu0 %7071
    %7073 = vrot.lane.b32.xlu0 %v6928, 64
    %v7074 = vpop.permute.xlu0 %7073
    %7075 = vrot.lane.b32.xlu0 %v6929, 64
    %v7076 = vpop.permute.xlu0 %7075
    %7077 = vrot.lane.b32.xlu0 %v6930, 64
    %v7078 = vpop.permute.xlu0 %7077
    %7079 = vrot.lane.b32.xlu0 %v6931, 64
    %v7080 = vpop.permute.xlu0 %7079
    %7081 = vrot.lane.b32.xlu0 %v6932, 64
    %v7082 = vpop.permute.xlu0 %7081
    %7083 = vrot.lane.b32.xlu0 %v6933, 64
    %v7084 = vpop.permute.xlu0 %7083
    %7085 = vrot.lane.b32.xlu0 %v6934, 64
    %v7086 = vpop.permute.xlu0 %7085
    %7087 = vrot.lane.b32.xlu0 %v6935, 64
    %v7088 = vpop.permute.xlu0 %7087
    %7089 = vrot.lane.b32.xlu0 %v6936, 64
    %v7090 = vpop.permute.xlu0 %7089
    %7091 = vrot.lane.b32.xlu0 %v6937, 64
    %v7092 = vpop.permute.xlu0 %7091
    %7093 = vrot.lane.b32.xlu0 %v6938, 64
    %v7094 = vpop.permute.xlu0 %7093
    %7095 = vrot.lane.b32.xlu0 %v6939, 64
    %v7096 = vpop.permute.xlu0 %7095
    %7097 = vrot.lane.b32.xlu0 %v6940, 64
    %v7098 = vpop.permute.xlu0 %7097
    %7099 = vrot.lane.b32.xlu0 %v6941, 64
    %v7100 = vpop.permute.xlu0 %7099
    %7101 = vrot.lane.b32.xlu0 %v6942, 64
    %v7102 = vpop.permute.xlu0 %7101
    %7103 = vrot.lane.b32.xlu0 %v6943, 64
    %v7104 = vpop.permute.xlu0 %7103
    %7105 = vrot.lane.b32.xlu0 %v6944, 64
    %v7106 = vpop.permute.xlu0 %7105
    %7107 = vrot.lane.b32.xlu0 %v6945, 64
    %v7108 = vpop.permute.xlu0 %7107
    %7109 = vrot.lane.b32.xlu0 %v6946, 64
    %v7110 = vpop.permute.xlu0 %7109
    %7111 = vrot.lane.b32.xlu0 %v6947, 64
    %v7112 = vpop.permute.xlu0 %7111
    %7113 = vrot.lane.b32.xlu0 %v6948, 64
    %v7114 = vpop.permute.xlu0 %7113
    %7115 = vrot.lane.b32.xlu0 %v6949, 64
    %v7116 = vpop.permute.xlu0 %7115
    %7117 = vrot.lane.b32.xlu0 %v6950, 64
    %v7118 = vpop.permute.xlu0 %7117
    %7119 = vrot.lane.b32.xlu0 %v6951, 64
    %v7120 = vpop.permute.xlu0 %7119
    %7121 = vrot.lane.b32.xlu0 %v6952, 64
    %v7122 = vpop.permute.xlu0 %7121
    %7123 = vrot.lane.b32.xlu0 %v6953, 64
    %v7124 = vpop.permute.xlu0 %7123
    %7125 = vrot.lane.b32.xlu0 %v6954, 64
    %v7126 = vpop.permute.xlu0 %7125
    %7127 = vrot.lane.b32.xlu0 %v6955, 64
    %v7128 = vpop.permute.xlu0 %7127
    %7129 = vrot.lane.b32.xlu0 %v6956, 64
    %v7130 = vpop.permute.xlu0 %7129
    %7131 = vrot.lane.b32.xlu0 %v6957, 64
    %v7132 = vpop.permute.xlu0 %7131
    %7133 = vrot.lane.b32.xlu0 %v6958, 64
    %v7134 = vpop.permute.xlu0 %7133
    %7135 = vrot.lane.b32.xlu0 %v6959, 64
    %v7136 = vpop.permute.xlu0 %7135
    %7137 = vrot.lane.b32.xlu0 %v6960, 64
    %v7138 = vpop.permute.xlu0 %7137
    %7139 = vrot.lane.b32.xlu0 %v6961, 64
    %v7140 = vpop.permute.xlu0 %7139
    %7141 = vrot.lane.b32.xlu0 %v6962, 64
    %v7142 = vpop.permute.xlu0 %7141
    %vm7203 = vcmask 589312
    %7204 = vst.msk [vmem:[#allocation3] sm:$0xff] %vm7203, %v7024
    %vm7205 = vcmask 588288
    %7206 = vst.msk [vmem:[#allocation3 + $0x8] sm:$0x7f] %vm7205, %v7026
    %7207 = vst.msk [vmem:[#allocation3 + $0x10] sm:$0xff] %vm7203, %v7028
    %7208 = vst.msk [vmem:[#allocation3 + $0x18] sm:$0x7f] %vm7205, %v7030
    %7209 = vst.msk [vmem:[#allocation3 + $0x20] sm:$0xff] %vm7203, %v7032
    %7210 = vst.msk [vmem:[#allocation3 + $0x28] sm:$0x7f] %vm7205, %v7034
    %7211 = vst.msk [vmem:[#allocation3 + $0x30] sm:$0xff] %vm7203, %v7036
    %7212 = vst.msk [vmem:[#allocation3 + $0x38] sm:$0x7f] %vm7205, %v7038
    %7213 = vst.msk [vmem:[#allocation3 + $0x40] sm:$0xff] %vm7203, %v7040
    %7214 = vst.msk [vmem:[#allocation3 + $0x48] sm:$0x7f] %vm7205, %v7042
    %7215 = vst.msk [vmem:[#allocation3 + $0x50] sm:$0xff] %vm7203, %v7044
    %7216 = vst.msk [vmem:[#allocation3 + $0x58] sm:$0x7f] %vm7205, %v7046
    %7217 = vst.msk [vmem:[#allocation3 + $0x60] sm:$0xff] %vm7203, %v7048
    %7218 = vst.msk [vmem:[#allocation3 + $0x68] sm:$0x7f] %vm7205, %v7050
    %7219 = vst.msk [vmem:[#allocation3 + $0x70] sm:$0xff] %vm7203, %v7052
    %7220 = vst.msk [vmem:[#allocation3 + $0x78] sm:$0x7f] %vm7205, %v7054
    %7221 = vst.msk [vmem:[#allocation3 + $0x80] sm:$0xff] %vm7203, %v7056
    %7222 = vst.msk [vmem:[#allocation3 + $0x88] sm:$0x7f] %vm7205, %v7058
    %7223 = vst.msk [vmem:[#allocation3 + $0x90] sm:$0xff] %vm7203, %v7060
    %7224 = vst.msk [vmem:[#allocation3 + $0x98] sm:$0x7f] %vm7205, %v7062
    %7225 = vst.msk [vmem:[#allocation3 + $0xa0] sm:$0xff] %vm7203, %v7064
    %7226 = vst.msk [vmem:[#allocation3 + $0xa8] sm:$0x7f] %vm7205, %v7066
    %7227 = vst.msk [vmem:[#allocation3 + $0xb0] sm:$0xff] %vm7203, %v7068
    %7228 = vst.msk [vmem:[#allocation3 + $0xb8] sm:$0x7f] %vm7205, %v7070
    %7229 = vst.msk [vmem:[#allocation3 + $0xc0] sm:$0xff] %vm7203, %v7072
    %7230 = vst.msk [vmem:[#allocation3 + $0xc8] sm:$0x7f] %vm7205, %v7074
    %7231 = vst.msk [vmem:[#allocation3 + $0xd0] sm:$0xff] %vm7203, %v7076
    %7232 = vst.msk [vmem:[#allocation3 + $0xd8] sm:$0x7f] %vm7205, %v7078
    %7233 = vst.msk [vmem:[#allocation3 + $0xe0] sm:$0xff] %vm7203, %v7080
    %7234 = vst.msk [vmem:[#allocation3 + $0xe8] sm:$0x7f] %vm7205, %v7082
    %7235 = vst.msk [vmem:[#allocation3 + $0x100] sm:$0xff] %vm7203, %v7084
    %7236 = vst.msk [vmem:[#allocation3 + $0x108] sm:$0x7f] %vm7205, %v7086
    %7237 = vst.msk [vmem:[#allocation3 + $0x110] sm:$0xff] %vm7203, %v7088
    %7238 = vst.msk [vmem:[#allocation3 + $0x118] sm:$0x7f] %vm7205, %v7090
    %7239 = vst.msk [vmem:[#allocation3 + $0x120] sm:$0xff] %vm7203, %v7092
    %7240 = vst.msk [vmem:[#allocation3 + $0x128] sm:$0x7f] %vm7205, %v7094
    %7241 = vst.msk [vmem:[#allocation3 + $0x130] sm:$0xff] %vm7203, %v7096
    %7242 = vst.msk [vmem:[#allocation3 + $0x138] sm:$0x7f] %vm7205, %v7098
    %7243 = vst.msk [vmem:[#allocation3 + $0x140] sm:$0xff] %vm7203, %v7100
    %7244 = vst.msk [vmem:[#allocation3 + $0x148] sm:$0x7f] %vm7205, %v7102
    %7245 = vst.msk [vmem:[#allocation3 + $0x150] sm:$0xff] %vm7203, %v7104
    %7246 = vst.msk [vmem:[#allocation3 + $0x158] sm:$0x7f] %vm7205, %v7106
    %7247 = vst.msk [vmem:[#allocation3 + $0x160] sm:$0xff] %vm7203, %v7108
    %7248 = vst.msk [vmem:[#allocation3 + $0x168] sm:$0x7f] %vm7205, %v7110
    %7249 = vst.msk [vmem:[#allocation3 + $0x170] sm:$0xff] %vm7203, %v7112
    %7250 = vst.msk [vmem:[#allocation3 + $0x178] sm:$0x7f] %vm7205, %v7114
    %7251 = vst.msk [vmem:[#allocation3 + $0x180] sm:$0xff] %vm7203, %v7116
    %7252 = vst.msk [vmem:[#allocation3 + $0x188] sm:$0x7f] %vm7205, %v7118
    %7253 = vst.msk [vmem:[#allocation3 + $0x190] sm:$0xff] %vm7203, %v7120
    %7254 = vst.msk [vmem:[#allocation3 + $0x198] sm:$0x7f] %vm7205, %v7122
    %7255 = vst.msk [vmem:[#allocation3 + $0x1a0] sm:$0xff] %vm7203, %v7124
    %7256 = vst.msk [vmem:[#allocation3 + $0x1a8] sm:$0x7f] %vm7205, %v7126
    %7257 = vst.msk [vmem:[#allocation3 + $0x1b0] sm:$0xff] %vm7203, %v7128
    %7258 = vst.msk [vmem:[#allocation3 + $0x1b8] sm:$0x7f] %vm7205, %v7130
    %7259 = vst.msk [vmem:[#allocation3 + $0x1c0] sm:$0xff] %vm7203, %v7132
    %7260 = vst.msk [vmem:[#allocation3 + $0x1c8] sm:$0x7f] %vm7205, %v7134
    %7261 = vst.msk [vmem:[#allocation3 + $0x1d0] sm:$0xff] %vm7203, %v7136
    %7262 = vst.msk [vmem:[#allocation3 + $0x1d8] sm:$0x7f] %vm7205, %v7138
    %7263 = vst.msk [vmem:[#allocation3 + $0x1e0] sm:$0xff] %vm7203, %v7140
    %7264 = vst.msk [vmem:[#allocation3 + $0x1e8] sm:$0x7f] %vm7205, %v7142
    %v7265 = vld [vmem:[#allocation3] sm:$0xff]
    %v7266 = vld [vmem:[#allocation3 + $0x8] sm:$0xff]
    %v7267 = vld [vmem:[#allocation3 + $0x10] sm:$0xff]
    %v7268 = vld [vmem:[#allocation3 + $0x18] sm:$0xff]
    %v7269 = vld [vmem:[#allocation3 + $0x20] sm:$0xff]
    %v7270 = vld [vmem:[#allocation3 + $0x28] sm:$0xff]
    %v7271 = vld [vmem:[#allocation3 + $0x30] sm:$0xff]
    %v7272 = vld [vmem:[#allocation3 + $0x38] sm:$0xff]
    %v7273 = vld [vmem:[#allocation3 + $0x40] sm:$0xff]
    %v7274 = vld [vmem:[#allocation3 + $0x48] sm:$0xff]
    %v7275 = vld [vmem:[#allocation3 + $0x50] sm:$0xff]
    %v7276 = vld [vmem:[#allocation3 + $0x58] sm:$0xff]
    %v7277 = vld [vmem:[#allocation3 + $0x60] sm:$0xff]
    %v7278 = vld [vmem:[#allocation3 + $0x68] sm:$0xff]
    %v7279 = vld [vmem:[#allocation3 + $0x70] sm:$0xff]
    %v7280 = vld [vmem:[#allocation3 + $0x78] sm:$0xff]
    %v7281 = vld [vmem:[#allocation3 + $0x80] sm:$0xff]
    %v7282 = vld [vmem:[#allocation3 + $0x88] sm:$0xff]
    %v7283 = vld [vmem:[#allocation3 + $0x90] sm:$0xff]
    %v7284 = vld [vmem:[#allocation3 + $0x98] sm:$0xff]
    %v7285 = vld [vmem:[#allocation3 + $0xa0] sm:$0xff]
    %v7286 = vld [vmem:[#allocation3 + $0xa8] sm:$0xff]
    %v7287 = vld [vmem:[#allocation3 + $0xb0] sm:$0xff]
    %v7288 = vld [vmem:[#allocation3 + $0xb8] sm:$0xff]
    %v7289 = vld [vmem:[#allocation3 + $0xc0] sm:$0xff]
    %v7290 = vld [vmem:[#allocation3 + $0xc8] sm:$0xff]
    %v7291 = vld [vmem:[#allocation3 + $0xd0] sm:$0xff]
    %v7292 = vld [vmem:[#allocation3 + $0xd8] sm:$0xff]
    %v7293 = vld [vmem:[#allocation3 + $0xe0] sm:$0xff]
    %v7294 = vld [vmem:[#allocation3 + $0xe8] sm:$0xff]
    %v7295 = vld [vmem:[#allocation3 + $0xf0] sm:$0xff]
    %v7296 = vld [vmem:[#allocation3 + $0xf8] sm:$0xff]
    %v7297 = vld [vmem:[#allocation3 + $0x100] sm:$0xff]
    %v7298 = vld [vmem:[#allocation3 + $0x108] sm:$0xff]
    %v7299 = vld [vmem:[#allocation3 + $0x110] sm:$0xff]
    %v7300 = vld [vmem:[#allocation3 + $0x118] sm:$0xff]
    %v7301 = vld [vmem:[#allocation3 + $0x120] sm:$0xff]
    %v7302 = vld [vmem:[#allocation3 + $0x128] sm:$0xff]
    %v7303 = vld [vmem:[#allocation3 + $0x130] sm:$0xff]
    %v7304 = vld [vmem:[#allocation3 + $0x138] sm:$0xff]
    %v7305 = vld [vmem:[#allocation3 + $0x140] sm:$0xff]
    %v7306 = vld [vmem:[#allocation3 + $0x148] sm:$0xff]
    %v7307 = vld [vmem:[#allocation3 + $0x150] sm:$0xff]
    %v7308 = vld [vmem:[#allocation3 + $0x158] sm:$0xff]
    %v7309 = vld [vmem:[#allocation3 + $0x160] sm:$0xff]
    %v7310 = vld [vmem:[#allocation3 + $0x168] sm:$0xff]
    %v7311 = vld [vmem:[#allocation3 + $0x170] sm:$0xff]
    %v7312 = vld [vmem:[#allocation3 + $0x178] sm:$0xff]
    %v7313 = vld [vmem:[#allocation3 + $0x180] sm:$0xff]
    %v7314 = vld [vmem:[#allocation3 + $0x188] sm:$0xff]
    %v7315 = vld [vmem:[#allocation3 + $0x190] sm:$0xff]
    %v7316 = vld [vmem:[#allocation3 + $0x198] sm:$0xff]
    %v7317 = vld [vmem:[#allocation3 + $0x1a0] sm:$0xff]
    %v7318 = vld [vmem:[#allocation3 + $0x1a8] sm:$0xff]
    %v7319 = vld [vmem:[#allocation3 + $0x1b0] sm:$0xff]
    %v7320 = vld [vmem:[#allocation3 + $0x1b8] sm:$0xff]
    %v7321 = vld [vmem:[#allocation3 + $0x1c0] sm:$0xff]
    %v7322 = vld [vmem:[#allocation3 + $0x1c8] sm:$0xff]
    %v7323 = vld [vmem:[#allocation3 + $0x1d0] sm:$0xff]
    %v7324 = vld [vmem:[#allocation3 + $0x1d8] sm:$0xff]
    %v7325 = vld [vmem:[#allocation3 + $0x1e0] sm:$0xff]
    %v7326 = vld [vmem:[#allocation3 + $0x1e8] sm:$0xff]
    %v7327 = vld [vmem:[#allocation3 + $0x1f0] sm:$0xff]
    %v7328 = vld [vmem:[#allocation3 + $0x1f8] sm:$0xff]
    %v7329 = vld [vmem:[%s4] sm:$0xff]
    %v7330 = vld [vmem:[%s4 + $0x8] sm:$0xff]
    %v7331 = vld [vmem:[%s4 + $0x10] sm:$0xff]
    %v7332 = vld [vmem:[%s4 + $0x18] sm:$0xff]
    %v7333 = vld [vmem:[%s4 + $0x20] sm:$0xff]
    %v7334 = vld [vmem:[%s4 + $0x28] sm:$0xff]
    %v7335 = vld [vmem:[%s4 + $0x30] sm:$0xff]
    %v7336 = vld [vmem:[%s4 + $0x38] sm:$0xff]
    %v7337 = vld [vmem:[%s4 + $0x40] sm:$0xff]
    %v7338 = vld [vmem:[%s5] sm:$0x1]
    %v7340 = vlaneseq
    %v7341 = vshrl.u32 %v7340, 7
    %v7342 = vsub.s32 0, %v7341
    %v7343 = vrot.slane %v7338, %v7342
    %v7346 = vsel %vm109, %v7265, 0
    %v7349 = vsel %vm109, %v7266, 0
    %v7352 = vsel %vm109, %v7267, 0
    %v7355 = vsel %vm109, %v7268, 0
    %v7358 = vsel %vm109, %v7269, 0
    %v7361 = vsel %vm109, %v7270, 0
    %v7364 = vsel %vm109, %v7271, 0
    %v7367 = vsel %vm109, %v7272, 0
    %v7370 = vsel %vm109, %v7273, 0
    %v7373 = vsel %vm109, %v7274, 0
    %v7376 = vsel %vm109, %v7275, 0
    %v7379 = vsel %vm109, %v7276, 0
    %v7382 = vsel %vm109, %v7277, 0
    %v7385 = vsel %vm109, %v7278, 0
    %v7388 = vsel %vm109, %v7279, 0
    %v7391 = vsel %vm109, %v7280, 0
    %v7394 = vsel %vm109, %v7281, 0
    %v7397 = vsel %vm109, %v7282, 0
    %v7400 = vsel %vm109, %v7283, 0
    %v7403 = vsel %vm109, %v7284, 0
    %v7406 = vsel %vm109, %v7285, 0
    %v7409 = vsel %vm109, %v7286, 0
    %v7412 = vsel %vm109, %v7287, 0
    %v7415 = vsel %vm109, %v7288, 0
    %v7418 = vsel %vm109, %v7289, 0
    %v7421 = vsel %vm109, %v7290, 0
    %v7424 = vsel %vm109, %v7291, 0
    %v7427 = vsel %vm109, %v7292, 0
    %v7430 = vsel %vm109, %v7293, 0
    %v7433 = vsel %vm109, %v7294, 0
    %v7436 = vsel %vm109, %v7295, 0
    %v7439 = vsel %vm109, %v7296, 0
    %v7442 = vsel %vm109, %v7297, 0
    %v7445 = vsel %vm109, %v7298, 0
    %v7448 = vsel %vm109, %v7299, 0
    %v7451 = vsel %vm109, %v7300, 0
    %v7454 = vsel %vm109, %v7301, 0
    %v7457 = vsel %vm109, %v7302, 0
    %v7460 = vsel %vm109, %v7303, 0
    %v7463 = vsel %vm109, %v7304, 0
    %v7466 = vsel %vm109, %v7305, 0
    %v7469 = vsel %vm109, %v7306, 0
    %v7472 = vsel %vm109, %v7307, 0
    %v7475 = vsel %vm109, %v7308, 0
    %v7478 = vsel %vm109, %v7309, 0
    %v7481 = vsel %vm109, %v7310, 0
    %v7484 = vsel %vm109, %v7311, 0
    %v7487 = vsel %vm109, %v7312, 0
    %v7490 = vsel %vm109, %v7313, 0
    %v7493 = vsel %vm109, %v7314, 0
    %v7496 = vsel %vm109, %v7315, 0
    %v7499 = vsel %vm109, %v7316, 0
    %v7502 = vsel %vm109, %v7317, 0
    %v7505 = vsel %vm109, %v7318, 0
    %v7508 = vsel %vm109, %v7319, 0
    %v7511 = vsel %vm109, %v7320, 0
    %v7514 = vsel %vm109, %v7321, 0
    %v7517 = vsel %vm109, %v7322, 0
    %v7520 = vsel %vm109, %v7323, 0
    %v7523 = vsel %vm109, %v7324, 0
    %v7526 = vsel %vm109, %v7325, 0
    %v7529 = vsel %vm109, %v7326, 0
    %v7532 = vsel %vm109, %v7327, 0
    %v7535 = vsel %vm109, %v7328, 0
    %7537 = vmatprep.subr.mxu0 0.0
    %7538 = vmatpush1.msra.mxu0 0.0
    %7539 = vmatprep.subr.mxu0 0.0
    %7540 = vmatpush1.msra.mxu0 0.0
    %7541 = vmatprep.subr.mxu0 0.0
    %7542 = vmatpush1.msra.mxu0 0.0
    %7543 = vmatprep.subr.mxu0 0.0
    %7544 = vmatpush1.msra.mxu0 0.0
    %7545 = vmatprep.subr.mxu0 0.0
    %7546 = vmatpush1.msra.mxu0 0.0
    %7547 = vmatprep.subr.mxu0 0.0
    %7548 = vmatpush1.msra.mxu0 0.0
    %7549 = vmatprep.subr.mxu0 0.0
    %7550 = vmatpush1.msra.mxu0 0.0
    %7551 = vmatprep.subr.mxu0 0.0
    %7552 = vmatpush1.msra.mxu0 %v7337
    %7553 = vmatprep.subr.mxu0 0.0
    %7554 = vmatpush1.msra.mxu0 %v7336
    %7555 = vmatprep.subr.mxu0 0.0
    %7556 = vmatpush1.msra.mxu0 %v7335
    %7557 = vmatprep.subr.mxu0 0.0
    %7558 = vmatpush1.msra.mxu0 %v7334
    %7559 = vmatprep.subr.mxu0 0.0
    %7560 = vmatpush1.msra.mxu0 %v7333
    %7561 = vmatprep.subr.mxu0 0.0
    %7562 = vmatpush1.msra.mxu0 %v7332
    %7563 = vmatprep.subr.mxu0 0.0
    %7564 = vmatpush1.msra.mxu0 %v7331
    %7565 = vmatprep.subr.mxu0 0.0
    %7566 = vmatpush1.msra.mxu0 %v7330
    %7567 = vmatprep.subr.mxu0 0.0
    %7568 = vmatpush1.msra.mxu0 %v7329
    %7569 = vmatprep.subr.mxu0 0.0
    %7570 = vmatpush2.msra.mxu0 0.0
    %7571 = vmatprep.subr.mxu0 0.0
    %7572 = vmatpush2.msra.mxu0 0.0
    %7573 = vmatprep.subr.mxu0 0.0
    %7574 = vmatpush2.msra.mxu0 0.0
    %7575 = vmatprep.subr.mxu0 0.0
    %7576 = vmatpush2.msra.mxu0 0.0
    %7577 = vmatprep.subr.mxu0 0.0
    %7578 = vmatpush2.msra.mxu0 0.0
    %7579 = vmatprep.subr.mxu0 0.0
    %7580 = vmatpush2.msra.mxu0 0.0
    %7581 = vmatprep.subr.mxu0 0.0
    %7582 = vmatpush2.msra.mxu0 0.0
    %7583 = vmatprep.subr.mxu0 0.0
    %7584 = vmatpush2.msra.mxu0 0.0
    %7585 = vmatprep.subr.mxu0 0.0
    %7586 = vmatpush2.msra.mxu0 0.0
    %7587 = vmatprep.subr.mxu0 0.0
    %7588 = vmatpush2.msra.mxu0 0.0
    %7589 = vmatprep.subr.mxu0 0.0
    %7590 = vmatpush2.msra.mxu0 0.0
    %7591 = vmatprep.subr.mxu0 0.0
    %7592 = vmatpush2.msra.mxu0 0.0
    %7593 = vmatprep.subr.mxu0 0.0
    %7594 = vmatpush2.msra.mxu0 0.0
    %7595 = vmatprep.subr.mxu0 0.0
    %7596 = vmatpush2.msra.mxu0 0.0
    %7597 = vmatprep.subr.mxu0 0.0
    %7598 = vmatpush2.msra.mxu0 0.0
    %7599 = vmatprep.subr.mxu0 0.0
    %7600 = vmatpush2.msra.mxu0 0.0
    %7601 = vmatprep.mubr.f32.mxu0 0.0
    %7602 = vmatmul.mubr.f32.gmra.mxu0 %v7346
    %v7603 = vpop.f32.mrf.mxu0
    %v7604 = vadd.f32 %v7343, %v7603
    %v7605 = vpop.f32.mrf.mxu0
    %7606 = vmatprep.mubr.f32.mxu0 0.0
    %7607 = vmatmul.mubr.f32.gmra.mxu0 %v7349
    %v7608 = vpop.f32.mrf.mxu0
    %v7609 = vadd.f32 %v7343, %v7608
    %v7610 = vpop.f32.mrf.mxu0
    %7611 = vmatprep.mubr.f32.mxu0 0.0
    %7612 = vmatmul.mubr.f32.gmra.mxu0 %v7352
    %v7613 = vpop.f32.mrf.mxu0
    %v7614 = vadd.f32 %v7343, %v7613
    %v7615 = vpop.f32.mrf.mxu0
    %7616 = vmatprep.mubr.f32.mxu0 0.0
    %7617 = vmatmul.mubr.f32.gmra.mxu0 %v7355
    %v7618 = vpop.f32.mrf.mxu0
    %v7619 = vadd.f32 %v7343, %v7618
    %v7620 = vpop.f32.mrf.mxu0
    %7621 = vmatprep.mubr.f32.mxu0 0.0
    %7622 = vmatmul.mubr.f32.gmra.mxu0 %v7358
    %v7623 = vpop.f32.mrf.mxu0
    %v7624 = vadd.f32 %v7343, %v7623
    %v7625 = vpop.f32.mrf.mxu0
    %7626 = vmatprep.mubr.f32.mxu0 0.0
    %7627 = vmatmul.mubr.f32.gmra.mxu0 %v7361
    %v7628 = vpop.f32.mrf.mxu0
    %v7629 = vadd.f32 %v7343, %v7628
    %v7630 = vpop.f32.mrf.mxu0
    %7631 = vmatprep.mubr.f32.mxu0 0.0
    %7632 = vmatmul.mubr.f32.gmra.mxu0 %v7364
    %v7633 = vpop.f32.mrf.mxu0
    %v7634 = vadd.f32 %v7343, %v7633
    %v7635 = vpop.f32.mrf.mxu0
    %7636 = vmatprep.mubr.f32.mxu0 0.0
    %7637 = vmatmul.mubr.f32.gmra.mxu0 %v7367
    %v7638 = vpop.f32.mrf.mxu0
    %v7639 = vadd.f32 %v7343, %v7638
    %v7640 = vpop.f32.mrf.mxu0
    %7641 = vmatprep.mubr.f32.mxu0 0.0
    %7642 = vmatmul.mubr.f32.gmra.mxu0 %v7370
    %v7643 = vpop.f32.mrf.mxu0
    %v7644 = vadd.f32 %v7343, %v7643
    %v7645 = vpop.f32.mrf.mxu0
    %7646 = vmatprep.mubr.f32.mxu0 0.0
    %7647 = vmatmul.mubr.f32.gmra.mxu0 %v7373
    %v7648 = vpop.f32.mrf.mxu0
    %v7649 = vadd.f32 %v7343, %v7648
    %v7650 = vpop.f32.mrf.mxu0
    %7651 = vmatprep.mubr.f32.mxu0 0.0
    %7652 = vmatmul.mubr.f32.gmra.mxu0 %v7376
    %v7653 = vpop.f32.mrf.mxu0
    %v7654 = vadd.f32 %v7343, %v7653
    %v7655 = vpop.f32.mrf.mxu0
    %7656 = vmatprep.mubr.f32.mxu0 0.0
    %7657 = vmatmul.mubr.f32.gmra.mxu0 %v7379
    %v7658 = vpop.f32.mrf.mxu0
    %v7659 = vadd.f32 %v7343, %v7658
    %v7660 = vpop.f32.mrf.mxu0
    %7661 = vmatprep.mubr.f32.mxu0 0.0
    %7662 = vmatmul.mubr.f32.gmra.mxu0 %v7382
    %v7663 = vpop.f32.mrf.mxu0
    %v7664 = vadd.f32 %v7343, %v7663
    %v7665 = vpop.f32.mrf.mxu0
    %7666 = vmatprep.mubr.f32.mxu0 0.0
    %7667 = vmatmul.mubr.f32.gmra.mxu0 %v7385
    %v7668 = vpop.f32.mrf.mxu0
    %v7669 = vadd.f32 %v7343, %v7668
    %v7670 = vpop.f32.mrf.mxu0
    %7671 = vmatprep.mubr.f32.mxu0 0.0
    %7672 = vmatmul.mubr.f32.gmra.mxu0 %v7388
    %v7673 = vpop.f32.mrf.mxu0
    %v7674 = vadd.f32 %v7343, %v7673
    %v7675 = vpop.f32.mrf.mxu0
    %7676 = vmatprep.mubr.f32.mxu0 0.0
    %7677 = vmatmul.mubr.f32.gmra.mxu0 %v7391
    %v7678 = vpop.f32.mrf.mxu0
    %v7679 = vadd.f32 %v7343, %v7678
    %v7680 = vpop.f32.mrf.mxu0
    %7681 = vmatprep.mubr.f32.mxu0 0.0
    %7682 = vmatmul.mubr.f32.gmra.mxu0 %v7394
    %v7683 = vpop.f32.mrf.mxu0
    %v7684 = vadd.f32 %v7343, %v7683
    %v7685 = vpop.f32.mrf.mxu0
    %7686 = vmatprep.mubr.f32.mxu0 0.0
    %7687 = vmatmul.mubr.f32.gmra.mxu0 %v7397
    %v7688 = vpop.f32.mrf.mxu0
    %v7689 = vadd.f32 %v7343, %v7688
    %v7690 = vpop.f32.mrf.mxu0
    %7691 = vmatprep.mubr.f32.mxu0 0.0
    %7692 = vmatmul.mubr.f32.gmra.mxu0 %v7400
    %v7693 = vpop.f32.mrf.mxu0
    %v7694 = vadd.f32 %v7343, %v7693
    %v7695 = vpop.f32.mrf.mxu0
    %7696 = vmatprep.mubr.f32.mxu0 0.0
    %7697 = vmatmul.mubr.f32.gmra.mxu0 %v7403
    %v7698 = vpop.f32.mrf.mxu0
    %v7699 = vadd.f32 %v7343, %v7698
    %v7700 = vpop.f32.mrf.mxu0
    %7701 = vmatprep.mubr.f32.mxu0 0.0
    %7702 = vmatmul.mubr.f32.gmra.mxu0 %v7406
    %v7703 = vpop.f32.mrf.mxu0
    %v7704 = vadd.f32 %v7343, %v7703
    %v7705 = vpop.f32.mrf.mxu0
    %7706 = vmatprep.mubr.f32.mxu0 0.0
    %7707 = vmatmul.mubr.f32.gmra.mxu0 %v7409
    %v7708 = vpop.f32.mrf.mxu0
    %v7709 = vadd.f32 %v7343, %v7708
    %v7710 = vpop.f32.mrf.mxu0
    %7711 = vmatprep.mubr.f32.mxu0 0.0
    %7712 = vmatmul.mubr.f32.gmra.mxu0 %v7412
    %v7713 = vpop.f32.mrf.mxu0
    %v7714 = vadd.f32 %v7343, %v7713
    %v7715 = vpop.f32.mrf.mxu0
    %7716 = vmatprep.mubr.f32.mxu0 0.0
    %7717 = vmatmul.mubr.f32.gmra.mxu0 %v7415
    %v7718 = vpop.f32.mrf.mxu0
    %v7719 = vadd.f32 %v7343, %v7718
    %v7720 = vpop.f32.mrf.mxu0
    %7721 = vmatprep.mubr.f32.mxu0 0.0
    %7722 = vmatmul.mubr.f32.gmra.mxu0 %v7418
    %v7723 = vpop.f32.mrf.mxu0
    %v7724 = vadd.f32 %v7343, %v7723
    %v7725 = vpop.f32.mrf.mxu0
    %7726 = vmatprep.mubr.f32.mxu0 0.0
    %7727 = vmatmul.mubr.f32.gmra.mxu0 %v7421
    %v7728 = vpop.f32.mrf.mxu0
    %v7729 = vadd.f32 %v7343, %v7728
    %v7730 = vpop.f32.mrf.mxu0
    %7731 = vmatprep.mubr.f32.mxu0 0.0
    %7732 = vmatmul.mubr.f32.gmra.mxu0 %v7424
    %v7733 = vpop.f32.mrf.mxu0
    %v7734 = vadd.f32 %v7343, %v7733
    %v7735 = vpop.f32.mrf.mxu0
    %7736 = vmatprep.mubr.f32.mxu0 0.0
    %7737 = vmatmul.mubr.f32.gmra.mxu0 %v7427
    %v7738 = vpop.f32.mrf.mxu0
    %v7739 = vadd.f32 %v7343, %v7738
    %v7740 = vpop.f32.mrf.mxu0
    %7741 = vmatprep.mubr.f32.mxu0 0.0
    %7742 = vmatmul.mubr.f32.gmra.mxu0 %v7430
    %v7743 = vpop.f32.mrf.mxu0
    %v7744 = vadd.f32 %v7343, %v7743
    %v7745 = vpop.f32.mrf.mxu0
    %7746 = vmatprep.mubr.f32.mxu0 0.0
    %7747 = vmatmul.mubr.f32.gmra.mxu0 %v7433
    %v7748 = vpop.f32.mrf.mxu0
    %v7749 = vadd.f32 %v7343, %v7748
    %v7750 = vpop.f32.mrf.mxu0
    %7751 = vmatprep.mubr.f32.mxu0 0.0
    %7752 = vmatmul.mubr.f32.gmra.mxu0 %v7436
    %v7753 = vpop.f32.mrf.mxu0
    %v7754 = vadd.f32 %v7343, %v7753
    %v7755 = vpop.f32.mrf.mxu0
    %7756 = vmatprep.mubr.f32.mxu0 0.0
    %7757 = vmatmul.mubr.f32.gmra.mxu0 %v7439
    %v7758 = vpop.f32.mrf.mxu0
    %v7759 = vadd.f32 %v7343, %v7758
    %v7760 = vpop.f32.mrf.mxu0
    %7761 = vmatprep.mubr.f32.mxu0 0.0
    %7762 = vmatmul.mubr.f32.gmra.mxu0 %v7442
    %v7763 = vpop.f32.mrf.mxu0
    %v7764 = vadd.f32 %v7343, %v7763
    %v7765 = vpop.f32.mrf.mxu0
    %7766 = vmatprep.mubr.f32.mxu0 0.0
    %7767 = vmatmul.mubr.f32.gmra.mxu0 %v7445
    %v7768 = vpop.f32.mrf.mxu0
    %v7769 = vadd.f32 %v7343, %v7768
    %v7770 = vpop.f32.mrf.mxu0
    %7771 = vmatprep.mubr.f32.mxu0 0.0
    %7772 = vmatmul.mubr.f32.gmra.mxu0 %v7448
    %v7773 = vpop.f32.mrf.mxu0
    %v7774 = vadd.f32 %v7343, %v7773
    %v7775 = vpop.f32.mrf.mxu0
    %7776 = vmatprep.mubr.f32.mxu0 0.0
    %7777 = vmatmul.mubr.f32.gmra.mxu0 %v7451
    %v7778 = vpop.f32.mrf.mxu0
    %v7779 = vadd.f32 %v7343, %v7778
    %v7780 = vpop.f32.mrf.mxu0
    %7781 = vmatprep.mubr.f32.mxu0 0.0
    %7782 = vmatmul.mubr.f32.gmra.mxu0 %v7454
    %v7783 = vpop.f32.mrf.mxu0
    %v7784 = vadd.f32 %v7343, %v7783
    %v7785 = vpop.f32.mrf.mxu0
    %7786 = vmatprep.mubr.f32.mxu0 0.0
    %7787 = vmatmul.mubr.f32.gmra.mxu0 %v7457
    %v7788 = vpop.f32.mrf.mxu0
    %v7789 = vadd.f32 %v7343, %v7788
    %v7790 = vpop.f32.mrf.mxu0
    %7791 = vmatprep.mubr.f32.mxu0 0.0
    %7792 = vmatmul.mubr.f32.gmra.mxu0 %v7460
    %v7793 = vpop.f32.mrf.mxu0
    %v7794 = vadd.f32 %v7343, %v7793
    %v7795 = vpop.f32.mrf.mxu0
    %7796 = vmatprep.mubr.f32.mxu0 0.0
    %7797 = vmatmul.mubr.f32.gmra.mxu0 %v7463
    %v7798 = vpop.f32.mrf.mxu0
    %v7799 = vadd.f32 %v7343, %v7798
    %v7800 = vpop.f32.mrf.mxu0
    %7801 = vmatprep.mubr.f32.mxu0 0.0
    %7802 = vmatmul.mubr.f32.gmra.mxu0 %v7466
    %v7803 = vpop.f32.mrf.mxu0
    %v7804 = vadd.f32 %v7343, %v7803
    %v7805 = vpop.f32.mrf.mxu0
    %7806 = vmatprep.mubr.f32.mxu0 0.0
    %7807 = vmatmul.mubr.f32.gmra.mxu0 %v7469
    %v7808 = vpop.f32.mrf.mxu0
    %v7809 = vadd.f32 %v7343, %v7808
    %v7810 = vpop.f32.mrf.mxu0
    %7811 = vmatprep.mubr.f32.mxu0 0.0
    %7812 = vmatmul.mubr.f32.gmra.mxu0 %v7472
    %v7813 = vpop.f32.mrf.mxu0
    %v7814 = vadd.f32 %v7343, %v7813
    %v7815 = vpop.f32.mrf.mxu0
    %7816 = vmatprep.mubr.f32.mxu0 0.0
    %7817 = vmatmul.mubr.f32.gmra.mxu0 %v7475
    %v7818 = vpop.f32.mrf.mxu0
    %v7819 = vadd.f32 %v7343, %v7818
    %v7820 = vpop.f32.mrf.mxu0
    %7821 = vmatprep.mubr.f32.mxu0 0.0
    %7822 = vmatmul.mubr.f32.gmra.mxu0 %v7478
    %v7823 = vpop.f32.mrf.mxu0
    %v7824 = vadd.f32 %v7343, %v7823
    %v7825 = vpop.f32.mrf.mxu0
    %7826 = vmatprep.mubr.f32.mxu0 0.0
    %7827 = vmatmul.mubr.f32.gmra.mxu0 %v7481
    %v7828 = vpop.f32.mrf.mxu0
    %v7829 = vadd.f32 %v7343, %v7828
    %v7830 = vpop.f32.mrf.mxu0
    %7831 = vmatprep.mubr.f32.mxu0 0.0
    %7832 = vmatmul.mubr.f32.gmra.mxu0 %v7484
    %v7833 = vpop.f32.mrf.mxu0
    %v7834 = vadd.f32 %v7343, %v7833
    %v7835 = vpop.f32.mrf.mxu0
    %7836 = vmatprep.mubr.f32.mxu0 0.0
    %7837 = vmatmul.mubr.f32.gmra.mxu0 %v7487
    %v7838 = vpop.f32.mrf.mxu0
    %v7839 = vadd.f32 %v7343, %v7838
    %v7840 = vpop.f32.mrf.mxu0
    %7841 = vmatprep.mubr.f32.mxu0 0.0
    %7842 = vmatmul.mubr.f32.gmra.mxu0 %v7490
    %v7843 = vpop.f32.mrf.mxu0
    %v7844 = vadd.f32 %v7343, %v7843
    %v7845 = vpop.f32.mrf.mxu0
    %7846 = vmatprep.mubr.f32.mxu0 0.0
    %7847 = vmatmul.mubr.f32.gmra.mxu0 %v7493
    %v7848 = vpop.f32.mrf.mxu0
    %v7849 = vadd.f32 %v7343, %v7848
    %v7850 = vpop.f32.mrf.mxu0
    %7851 = vmatprep.mubr.f32.mxu0 0.0
    %7852 = vmatmul.mubr.f32.gmra.mxu0 %v7496
    %v7853 = vpop.f32.mrf.mxu0
    %v7854 = vadd.f32 %v7343, %v7853
    %v7855 = vpop.f32.mrf.mxu0
    %7856 = vmatprep.mubr.f32.mxu0 0.0
    %7857 = vmatmul.mubr.f32.gmra.mxu0 %v7499
    %v7858 = vpop.f32.mrf.mxu0
    %v7859 = vadd.f32 %v7343, %v7858
    %v7860 = vpop.f32.mrf.mxu0
    %7861 = vmatprep.mubr.f32.mxu0 0.0
    %7862 = vmatmul.mubr.f32.gmra.mxu0 %v7502
    %v7863 = vpop.f32.mrf.mxu0
    %v7864 = vadd.f32 %v7343, %v7863
    %v7865 = vpop.f32.mrf.mxu0
    %7866 = vmatprep.mubr.f32.mxu0 0.0
    %7867 = vmatmul.mubr.f32.gmra.mxu0 %v7505
    %v7868 = vpop.f32.mrf.mxu0
    %v7869 = vadd.f32 %v7343, %v7868
    %v7870 = vpop.f32.mrf.mxu0
    %7871 = vmatprep.mubr.f32.mxu0 0.0
    %7872 = vmatmul.mubr.f32.gmra.mxu0 %v7508
    %v7873 = vpop.f32.mrf.mxu0
    %v7874 = vadd.f32 %v7343, %v7873
    %v7875 = vpop.f32.mrf.mxu0
    %7876 = vmatprep.mubr.f32.mxu0 0.0
    %7877 = vmatmul.mubr.f32.gmra.mxu0 %v7511
    %v7878 = vpop.f32.mrf.mxu0
    %v7879 = vadd.f32 %v7343, %v7878
    %v7880 = vpop.f32.mrf.mxu0
    %7881 = vmatprep.mubr.f32.mxu0 0.0
    %7882 = vmatmul.mubr.f32.gmra.mxu0 %v7514
    %v7883 = vpop.f32.mrf.mxu0
    %v7884 = vadd.f32 %v7343, %v7883
    %v7885 = vpop.f32.mrf.mxu0
    %7886 = vmatprep.mubr.f32.mxu0 0.0
    %7887 = vmatmul.mubr.f32.gmra.mxu0 %v7517
    %v7888 = vpop.f32.mrf.mxu0
    %v7889 = vadd.f32 %v7343, %v7888
    %v7890 = vpop.f32.mrf.mxu0
    %7891 = vmatprep.mubr.f32.mxu0 0.0
    %7892 = vmatmul.mubr.f32.gmra.mxu0 %v7520
    %v7893 = vpop.f32.mrf.mxu0
    %v7894 = vadd.f32 %v7343, %v7893
    %v7895 = vpop.f32.mrf.mxu0
    %7896 = vmatprep.mubr.f32.mxu0 0.0
    %7897 = vmatmul.mubr.f32.gmra.mxu0 %v7523
    %v7898 = vpop.f32.mrf.mxu0
    %v7899 = vadd.f32 %v7343, %v7898
    %v7900 = vpop.f32.mrf.mxu0
    %7901 = vmatprep.mubr.f32.mxu0 0.0
    %7902 = vmatmul.mubr.f32.gmra.mxu0 %v7526
    %v7903 = vpop.f32.mrf.mxu0
    %v7904 = vadd.f32 %v7343, %v7903
    %v7905 = vpop.f32.mrf.mxu0
    %7906 = vmatprep.mubr.f32.mxu0 0.0
    %7907 = vmatmul.mubr.f32.gmra.mxu0 %v7529
    %v7908 = vpop.f32.mrf.mxu0
    %v7909 = vadd.f32 %v7343, %v7908
    %v7910 = vpop.f32.mrf.mxu0
    %7911 = vmatprep.mubr.f32.mxu0 0.0
    %7912 = vmatmul.mubr.f32.gmra.mxu0 %v7532
    %v7913 = vpop.f32.mrf.mxu0
    %v7914 = vadd.f32 %v7343, %v7913
    %v7915 = vpop.f32.mrf.mxu0
    %7916 = vmatprep.mubr.f32.mxu0 0.0
    %7917 = vmatmul.mubr.f32.gmra.mxu0 %v7535
    %v7918 = vpop.f32.mrf.mxu0
    %v7919 = vadd.f32 %v7343, %v7918
    %v7920 = vpop.f32.mrf.mxu0
    %7921 = vdwg.mxu0
    %vm7922 = vcmp.gt.f32.partialorder %v7604, 0.0
    %vm7923 = vcmp.gt.f32.partialorder %v7609, 0.0
    %vm7924 = vcmp.gt.f32.partialorder %v7614, 0.0
    %vm7925 = vcmp.gt.f32.partialorder %v7619, 0.0
    %vm7926 = vcmp.gt.f32.partialorder %v7624, 0.0
    %vm7927 = vcmp.gt.f32.partialorder %v7629, 0.0
    %vm7928 = vcmp.gt.f32.partialorder %v7634, 0.0
    %vm7929 = vcmp.gt.f32.partialorder %v7639, 0.0
    %vm7930 = vcmp.gt.f32.partialorder %v7644, 0.0
    %vm7931 = vcmp.gt.f32.partialorder %v7649, 0.0
    %vm7932 = vcmp.gt.f32.partialorder %v7654, 0.0
    %vm7933 = vcmp.gt.f32.partialorder %v7659, 0.0
    %vm7934 = vcmp.gt.f32.partialorder %v7664, 0.0
    %vm7935 = vcmp.gt.f32.partialorder %v7669, 0.0
    %vm7936 = vcmp.gt.f32.partialorder %v7674, 0.0
    %vm7937 = vcmp.gt.f32.partialorder %v7679, 0.0
    %vm7938 = vcmp.gt.f32.partialorder %v7684, 0.0
    %vm7939 = vcmp.gt.f32.partialorder %v7689, 0.0
    %vm7940 = vcmp.gt.f32.partialorder %v7694, 0.0
    %vm7941 = vcmp.gt.f32.partialorder %v7699, 0.0
    %vm7942 = vcmp.gt.f32.partialorder %v7704, 0.0
    %vm7943 = vcmp.gt.f32.partialorder %v7709, 0.0
    %vm7944 = vcmp.gt.f32.partialorder %v7714, 0.0
    %vm7945 = vcmp.gt.f32.partialorder %v7719, 0.0
    %vm7946 = vcmp.gt.f32.partialorder %v7724, 0.0
    %vm7947 = vcmp.gt.f32.partialorder %v7729, 0.0
    %vm7948 = vcmp.gt.f32.partialorder %v7734, 0.0
    %vm7949 = vcmp.gt.f32.partialorder %v7739, 0.0
    %vm7950 = vcmp.gt.f32.partialorder %v7744, 0.0
    %vm7951 = vcmp.gt.f32.partialorder %v7749, 0.0
    %vm7952 = vcmp.gt.f32.partialorder %v7754, 0.0
    %vm7953 = vcmp.gt.f32.partialorder %v7759, 0.0
    %vm7954 = vcmp.gt.f32.partialorder %v7764, 0.0
    %vm7955 = vcmp.gt.f32.partialorder %v7769, 0.0
    %vm7956 = vcmp.gt.f32.partialorder %v7774, 0.0
    %vm7957 = vcmp.gt.f32.partialorder %v7779, 0.0
    %vm7958 = vcmp.gt.f32.partialorder %v7784, 0.0
    %vm7959 = vcmp.gt.f32.partialorder %v7789, 0.0
    %vm7960 = vcmp.gt.f32.partialorder %v7794, 0.0
    %vm7961 = vcmp.gt.f32.partialorder %v7799, 0.0
    %vm7962 = vcmp.gt.f32.partialorder %v7804, 0.0
    %vm7963 = vcmp.gt.f32.partialorder %v7809, 0.0
    %vm7964 = vcmp.gt.f32.partialorder %v7814, 0.0
    %vm7965 = vcmp.gt.f32.partialorder %v7819, 0.0
    %vm7966 = vcmp.gt.f32.partialorder %v7824, 0.0
    %vm7967 = vcmp.gt.f32.partialorder %v7829, 0.0
    %vm7968 = vcmp.gt.f32.partialorder %v7834, 0.0
    %vm7969 = vcmp.gt.f32.partialorder %v7839, 0.0
    %vm7970 = vcmp.gt.f32.partialorder %v7844, 0.0
    %vm7971 = vcmp.gt.f32.partialorder %v7849, 0.0
    %vm7972 = vcmp.gt.f32.partialorder %v7854, 0.0
    %vm7973 = vcmp.gt.f32.partialorder %v7859, 0.0
    %vm7974 = vcmp.gt.f32.partialorder %v7864, 0.0
    %vm7975 = vcmp.gt.f32.partialorder %v7869, 0.0
    %vm7976 = vcmp.gt.f32.partialorder %v7874, 0.0
    %vm7977 = vcmp.gt.f32.partialorder %v7879, 0.0
    %vm7978 = vcmp.gt.f32.partialorder %v7884, 0.0
    %vm7979 = vcmp.gt.f32.partialorder %v7889, 0.0
    %vm7980 = vcmp.gt.f32.partialorder %v7894, 0.0
    %vm7981 = vcmp.gt.f32.partialorder %v7899, 0.0
    %vm7982 = vcmp.gt.f32.partialorder %v7904, 0.0
    %vm7983 = vcmp.gt.f32.partialorder %v7909, 0.0
    %vm7984 = vcmp.gt.f32.partialorder %v7914, 0.0
    %vm7985 = vcmp.gt.f32.partialorder %v7919, 0.0
    %v7986 = vstv %s4176
    %v7987 = vmul.f32 %v7986, %v7604
    %v7988 = vmul.f32 %v7986, %v7609
    %v7989 = vmul.f32 %v7986, %v7614
    %v7990 = vmul.f32 %v7986, %v7619
    %v7991 = vmul.f32 %v7986, %v7624
    %v7992 = vmul.f32 %v7986, %v7629
    %v7993 = vmul.f32 %v7986, %v7634
    %v7994 = vmul.f32 %v7986, %v7639
    %v7995 = vmul.f32 %v7986, %v7644
    %v7996 = vmul.f32 %v7986, %v7649
    %v7997 = vmul.f32 %v7986, %v7654
    %v7998 = vmul.f32 %v7986, %v7659
    %v7999 = vmul.f32 %v7986, %v7664
    %v8000 = vmul.f32 %v7986, %v7669
    %v8001 = vmul.f32 %v7986, %v7674
    %v8002 = vmul.f32 %v7986, %v7679
    %v8003 = vmul.f32 %v7986, %v7684
    %v8004 = vmul.f32 %v7986, %v7689
    %v8005 = vmul.f32 %v7986, %v7694
    %v8006 = vmul.f32 %v7986, %v7699
    %v8007 = vmul.f32 %v7986, %v7704
    %v8008 = vmul.f32 %v7986, %v7709
    %v8009 = vmul.f32 %v7986, %v7714
    %v8010 = vmul.f32 %v7986, %v7719
    %v8011 = vmul.f32 %v7986, %v7724
    %v8012 = vmul.f32 %v7986, %v7729
    %v8013 = vmul.f32 %v7986, %v7734
    %v8014 = vmul.f32 %v7986, %v7739
    %v8015 = vmul.f32 %v7986, %v7744
    %v8016 = vmul.f32 %v7986, %v7749
    %v8017 = vmul.f32 %v7986, %v7754
    %v8018 = vmul.f32 %v7986, %v7759
    %v8019 = vmul.f32 %v7986, %v7764
    %v8020 = vmul.f32 %v7986, %v7769
    %v8021 = vmul.f32 %v7986, %v7774
    %v8022 = vmul.f32 %v7986, %v7779
    %v8023 = vmul.f32 %v7986, %v7784
    %v8024 = vmul.f32 %v7986, %v7789
    %v8025 = vmul.f32 %v7986, %v7794
    %v8026 = vmul.f32 %v7986, %v7799
    %v8027 = vmul.f32 %v7986, %v7804
    %v8028 = vmul.f32 %v7986, %v7809
    %v8029 = vmul.f32 %v7986, %v7814
    %v8030 = vmul.f32 %v7986, %v7819
    %v8031 = vmul.f32 %v7986, %v7824
    %v8032 = vmul.f32 %v7986, %v7829
    %v8033 = vmul.f32 %v7986, %v7834
    %v8034 = vmul.f32 %v7986, %v7839
    %v8035 = vmul.f32 %v7986, %v7844
    %v8036 = vmul.f32 %v7986, %v7849
    %v8037 = vmul.f32 %v7986, %v7854
    %v8038 = vmul.f32 %v7986, %v7859
    %v8039 = vmul.f32 %v7986, %v7864
    %v8040 = vmul.f32 %v7986, %v7869
    %v8041 = vmul.f32 %v7986, %v7874
    %v8042 = vmul.f32 %v7986, %v7879
    %v8043 = vmul.f32 %v7986, %v7884
    %v8044 = vmul.f32 %v7986, %v7889
    %v8045 = vmul.f32 %v7986, %v7894
    %v8046 = vmul.f32 %v7986, %v7899
    %v8047 = vmul.f32 %v7986, %v7904
    %v8048 = vmul.f32 %v7986, %v7909
    %v8049 = vmul.f32 %v7986, %v7914
    %v8050 = vmul.f32 %v7986, %v7919
    %v8051 = vsel %vm7922, %v7604, %v7987
    %v8052 = vsel %vm7923, %v7609, %v7988
    %v8053 = vsel %vm7924, %v7614, %v7989
    %v8054 = vsel %vm7925, %v7619, %v7990
    %v8055 = vsel %vm7926, %v7624, %v7991
    %v8056 = vsel %vm7927, %v7629, %v7992
    %v8057 = vsel %vm7928, %v7634, %v7993
    %v8058 = vsel %vm7929, %v7639, %v7994
    %v8059 = vsel %vm7930, %v7644, %v7995
    %v8060 = vsel %vm7931, %v7649, %v7996
    %v8061 = vsel %vm7932, %v7654, %v7997
    %v8062 = vsel %vm7933, %v7659, %v7998
    %v8063 = vsel %vm7934, %v7664, %v7999
    %v8064 = vsel %vm7935, %v7669, %v8000
    %v8065 = vsel %vm7936, %v7674, %v8001
    %v8066 = vsel %vm7937, %v7679, %v8002
    %v8067 = vsel %vm7938, %v7684, %v8003
    %v8068 = vsel %vm7939, %v7689, %v8004
    %v8069 = vsel %vm7940, %v7694, %v8005
    %v8070 = vsel %vm7941, %v7699, %v8006
    %v8071 = vsel %vm7942, %v7704, %v8007
    %v8072 = vsel %vm7943, %v7709, %v8008
    %v8073 = vsel %vm7944, %v7714, %v8009
    %v8074 = vsel %vm7945, %v7719, %v8010
    %v8075 = vsel %vm7946, %v7724, %v8011
    %v8076 = vsel %vm7947, %v7729, %v8012
    %v8077 = vsel %vm7948, %v7734, %v8013
    %v8078 = vsel %vm7949, %v7739, %v8014
    %v8079 = vsel %vm7950, %v7744, %v8015
    %v8080 = vsel %vm7951, %v7749, %v8016
    %v8081 = vsel %vm7952, %v7754, %v8017
    %v8082 = vsel %vm7953, %v7759, %v8018
    %v8083 = vsel %vm7954, %v7764, %v8019
    %v8084 = vsel %vm7955, %v7769, %v8020
    %v8085 = vsel %vm7956, %v7774, %v8021
    %v8086 = vsel %vm7957, %v7779, %v8022
    %v8087 = vsel %vm7958, %v7784, %v8023
    %v8088 = vsel %vm7959, %v7789, %v8024
    %v8089 = vsel %vm7960, %v7794, %v8025
    %v8090 = vsel %vm7961, %v7799, %v8026
    %v8091 = vsel %vm7962, %v7804, %v8027
    %v8092 = vsel %vm7963, %v7809, %v8028
    %v8093 = vsel %vm7964, %v7814, %v8029
    %v8094 = vsel %vm7965, %v7819, %v8030
    %v8095 = vsel %vm7966, %v7824, %v8031
    %v8096 = vsel %vm7967, %v7829, %v8032
    %v8097 = vsel %vm7968, %v7834, %v8033
    %v8098 = vsel %vm7969, %v7839, %v8034
    %v8099 = vsel %vm7970, %v7844, %v8035
    %v8100 = vsel %vm7971, %v7849, %v8036
    %v8101 = vsel %vm7972, %v7854, %v8037
    %v8102 = vsel %vm7973, %v7859, %v8038
    %v8103 = vsel %vm7974, %v7864, %v8039
    %v8104 = vsel %vm7975, %v7869, %v8040
    %v8105 = vsel %vm7976, %v7874, %v8041
    %v8106 = vsel %vm7977, %v7879, %v8042
    %v8107 = vsel %vm7978, %v7884, %v8043
    %v8108 = vsel %vm7979, %v7889, %v8044
    %v8109 = vsel %vm7980, %v7894, %v8045
    %v8110 = vsel %vm7981, %v7899, %v8046
    %v8111 = vsel %vm7982, %v7904, %v8047
    %v8112 = vsel %vm7983, %v7909, %v8048
    %v8113 = vsel %vm7984, %v7914, %v8049
    %v8114 = vsel %vm7985, %v7919, %v8050
    %8115 = vst.msk [vmem:[#allocation4] sm:$0xff] %vm4111, %v8051
    %8116 = vst.msk [vmem:[#allocation4 + $0x8] sm:$0xff] %vm4111, %v8052
    %8117 = vst.msk [vmem:[#allocation4 + $0x10] sm:$0xff] %vm4111, %v8053
    %8118 = vst.msk [vmem:[#allocation4 + $0x18] sm:$0xff] %vm4111, %v8054
    %8119 = vst.msk [vmem:[#allocation4 + $0x20] sm:$0xff] %vm4111, %v8055
    %8120 = vst.msk [vmem:[#allocation4 + $0x28] sm:$0xff] %vm4111, %v8056
    %8121 = vst.msk [vmem:[#allocation4 + $0x30] sm:$0xff] %vm4111, %v8057
    %8122 = vst.msk [vmem:[#allocation4 + $0x38] sm:$0xff] %vm4111, %v8058
    %8123 = vst.msk [vmem:[#allocation4 + $0x40] sm:$0xff] %vm4111, %v8059
    %8124 = vst.msk [vmem:[#allocation4 + $0x48] sm:$0xff] %vm4111, %v8060
    %8125 = vst.msk [vmem:[#allocation4 + $0x50] sm:$0xff] %vm4111, %v8061
    %8126 = vst.msk [vmem:[#allocation4 + $0x58] sm:$0xff] %vm4111, %v8062
    %8127 = vst.msk [vmem:[#allocation4 + $0x60] sm:$0xff] %vm4111, %v8063
    %8128 = vst.msk [vmem:[#allocation4 + $0x68] sm:$0xff] %vm4111, %v8064
    %8129 = vst.msk [vmem:[#allocation4 + $0x70] sm:$0xff] %vm4111, %v8065
    %8130 = vst.msk [vmem:[#allocation4 + $0x78] sm:$0xff] %vm4111, %v8066
    %8131 = vst.msk [vmem:[#allocation4 + $0x80] sm:$0xff] %vm4111, %v8067
    %8132 = vst.msk [vmem:[#allocation4 + $0x88] sm:$0xff] %vm4111, %v8068
    %8133 = vst.msk [vmem:[#allocation4 + $0x90] sm:$0xff] %vm4111, %v8069
    %8134 = vst.msk [vmem:[#allocation4 + $0x98] sm:$0xff] %vm4111, %v8070
    %8135 = vst.msk [vmem:[#allocation4 + $0xa0] sm:$0xff] %vm4111, %v8071
    %8136 = vst.msk [vmem:[#allocation4 + $0xa8] sm:$0xff] %vm4111, %v8072
    %8137 = vst.msk [vmem:[#allocation4 + $0xb0] sm:$0xff] %vm4111, %v8073
    %8138 = vst.msk [vmem:[#allocation4 + $0xb8] sm:$0xff] %vm4111, %v8074
    %8139 = vst.msk [vmem:[#allocation4 + $0xc0] sm:$0xff] %vm4111, %v8075
    %8140 = vst.msk [vmem:[#allocation4 + $0xc8] sm:$0xff] %vm4111, %v8076
    %8141 = vst.msk [vmem:[#allocation4 + $0xd0] sm:$0xff] %vm4111, %v8077
    %8142 = vst.msk [vmem:[#allocation4 + $0xd8] sm:$0xff] %vm4111, %v8078
    %8143 = vst.msk [vmem:[#allocation4 + $0xe0] sm:$0xff] %vm4111, %v8079
    %8144 = vst.msk [vmem:[#allocation4 + $0xe8] sm:$0xff] %vm4111, %v8080
    %8145 = vst.msk [vmem:[#allocation4 + $0xf0] sm:$0xff] %vm4111, %v8081
    %8146 = vst.msk [vmem:[#allocation4 + $0xf8] sm:$0xff] %vm4111, %v8082
    %8147 = vst.msk [vmem:[#allocation4 + $0x100] sm:$0xff] %vm4111, %v8083
    %8148 = vst.msk [vmem:[#allocation4 + $0x108] sm:$0xff] %vm4111, %v8084
    %8149 = vst.msk [vmem:[#allocation4 + $0x110] sm:$0xff] %vm4111, %v8085
    %8150 = vst.msk [vmem:[#allocation4 + $0x118] sm:$0xff] %vm4111, %v8086
    %8151 = vst.msk [vmem:[#allocation4 + $0x120] sm:$0xff] %vm4111, %v8087
    %8152 = vst.msk [vmem:[#allocation4 + $0x128] sm:$0xff] %vm4111, %v8088
    %8153 = vst.msk [vmem:[#allocation4 + $0x130] sm:$0xff] %vm4111, %v8089
    %8154 = vst.msk [vmem:[#allocation4 + $0x138] sm:$0xff] %vm4111, %v8090
    %8155 = vst.msk [vmem:[#allocation4 + $0x140] sm:$0xff] %vm4111, %v8091
    %8156 = vst.msk [vmem:[#allocation4 + $0x148] sm:$0xff] %vm4111, %v8092
    %8157 = vst.msk [vmem:[#allocation4 + $0x150] sm:$0xff] %vm4111, %v8093
    %8158 = vst.msk [vmem:[#allocation4 + $0x158] sm:$0xff] %vm4111, %v8094
    %8159 = vst.msk [vmem:[#allocation4 + $0x160] sm:$0xff] %vm4111, %v8095
    %8160 = vst.msk [vmem:[#allocation4 + $0x168] sm:$0xff] %vm4111, %v8096
    %8161 = vst.msk [vmem:[#allocation4 + $0x170] sm:$0xff] %vm4111, %v8097
    %8162 = vst.msk [vmem:[#allocation4 + $0x178] sm:$0xff] %vm4111, %v8098
    %8163 = vst.msk [vmem:[#allocation4 + $0x180] sm:$0xff] %vm4111, %v8099
    %8164 = vst.msk [vmem:[#allocation4 + $0x188] sm:$0xff] %vm4111, %v8100
    %8165 = vst.msk [vmem:[#allocation4 + $0x190] sm:$0xff] %vm4111, %v8101
    %8166 = vst.msk [vmem:[#allocation4 + $0x198] sm:$0xff] %vm4111, %v8102
    %8167 = vst.msk [vmem:[#allocation4 + $0x1a0] sm:$0xff] %vm4111, %v8103
    %8168 = vst.msk [vmem:[#allocation4 + $0x1a8] sm:$0xff] %vm4111, %v8104
    %8169 = vst.msk [vmem:[#allocation4 + $0x1b0] sm:$0xff] %vm4111, %v8105
    %8170 = vst.msk [vmem:[#allocation4 + $0x1b8] sm:$0xff] %vm4111, %v8106
    %8171 = vst.msk [vmem:[#allocation4 + $0x1c0] sm:$0xff] %vm4111, %v8107
    %8172 = vst.msk [vmem:[#allocation4 + $0x1c8] sm:$0xff] %vm4111, %v8108
    %8173 = vst.msk [vmem:[#allocation4 + $0x1d0] sm:$0xff] %vm4111, %v8109
    %8174 = vst.msk [vmem:[#allocation4 + $0x1d8] sm:$0xff] %vm4111, %v8110
    %8175 = vst.msk [vmem:[#allocation4 + $0x1e0] sm:$0xff] %vm4111, %v8111
    %8176 = vst.msk [vmem:[#allocation4 + $0x1e8] sm:$0xff] %vm4111, %v8112
    %8177 = vst.msk [vmem:[#allocation4 + $0x1f0] sm:$0xff] %vm4111, %v8113
    %8178 = vst.msk [vmem:[#allocation4 + $0x1f8] sm:$0xff] %vm4111, %v8114
    %s8179 = sld [smem:[#allocation6 + $0x2]]
    %v8180 = vld [vmem:[#allocation4] sm:$0xff]
    %v8181 = vld [vmem:[#allocation4 + $0x8] sm:$0x7f]
    %v8182 = vld [vmem:[#allocation4 + $0x10] sm:$0xff]
    %v8183 = vld [vmem:[#allocation4 + $0x18] sm:$0x7f]
    %v8184 = vld [vmem:[#allocation4 + $0x20] sm:$0xff]
    %v8185 = vld [vmem:[#allocation4 + $0x28] sm:$0x7f]
    %v8186 = vld [vmem:[#allocation4 + $0x30] sm:$0xff]
    %v8187 = vld [vmem:[#allocation4 + $0x38] sm:$0x7f]
    %v8188 = vld [vmem:[#allocation4 + $0x40] sm:$0xff]
    %v8189 = vld [vmem:[#allocation4 + $0x48] sm:$0x7f]
    %v8190 = vld [vmem:[#allocation4 + $0x50] sm:$0xff]
    %v8191 = vld [vmem:[#allocation4 + $0x58] sm:$0x7f]
    %v8192 = vld [vmem:[#allocation4 + $0x60] sm:$0xff]
    %v8193 = vld [vmem:[#allocation4 + $0x68] sm:$0x7f]
    %v8194 = vld [vmem:[#allocation4 + $0x70] sm:$0xff]
    %v8195 = vld [vmem:[#allocation4 + $0x78] sm:$0x7f]
    %v8196 = vld [vmem:[#allocation4 + $0x80] sm:$0xff]
    %v8197 = vld [vmem:[#allocation4 + $0x88] sm:$0x7f]
    %v8198 = vld [vmem:[#allocation4 + $0x90] sm:$0xff]
    %v8199 = vld [vmem:[#allocation4 + $0x98] sm:$0x7f]
    %v8200 = vld [vmem:[#allocation4 + $0xa0] sm:$0xff]
    %v8201 = vld [vmem:[#allocation4 + $0xa8] sm:$0x7f]
    %v8202 = vld [vmem:[#allocation4 + $0xb0] sm:$0xff]
    %v8203 = vld [vmem:[#allocation4 + $0xb8] sm:$0x7f]
    %v8204 = vld [vmem:[#allocation4 + $0xc0] sm:$0xff]
    %v8205 = vld [vmem:[#allocation4 + $0xc8] sm:$0x7f]
    %v8206 = vld [vmem:[#allocation4 + $0xd0] sm:$0xff]
    %v8207 = vld [vmem:[#allocation4 + $0xd8] sm:$0x7f]
    %v8208 = vld [vmem:[#allocation4 + $0xe0] sm:$0xff]
    %v8209 = vld [vmem:[#allocation4 + $0xe8] sm:$0x7f]
    %v8210 = vld [vmem:[#allocation4 + $0x100] sm:$0xff]
    %v8211 = vld [vmem:[#allocation4 + $0x108] sm:$0x7f]
    %v8212 = vld [vmem:[#allocation4 + $0x110] sm:$0xff]
    %v8213 = vld [vmem:[#allocation4 + $0x118] sm:$0x7f]
    %v8214 = vld [vmem:[#allocation4 + $0x120] sm:$0xff]
    %v8215 = vld [vmem:[#allocation4 + $0x128] sm:$0x7f]
    %v8216 = vld [vmem:[#allocation4 + $0x130] sm:$0xff]
    %v8217 = vld [vmem:[#allocation4 + $0x138] sm:$0x7f]
    %v8218 = vld [vmem:[#allocation4 + $0x140] sm:$0xff]
    %v8219 = vld [vmem:[#allocation4 + $0x148] sm:$0x7f]
    %v8220 = vld [vmem:[#allocation4 + $0x150] sm:$0xff]
    %v8221 = vld [vmem:[#allocation4 + $0x158] sm:$0x7f]
    %v8222 = vld [vmem:[#allocation4 + $0x160] sm:$0xff]
    %v8223 = vld [vmem:[#allocation4 + $0x168] sm:$0x7f]
    %v8224 = vld [vmem:[#allocation4 + $0x170] sm:$0xff]
    %v8225 = vld [vmem:[#allocation4 + $0x178] sm:$0x7f]
    %v8226 = vld [vmem:[#allocation4 + $0x180] sm:$0xff]
    %v8227 = vld [vmem:[#allocation4 + $0x188] sm:$0x7f]
    %v8228 = vld [vmem:[#allocation4 + $0x190] sm:$0xff]
    %v8229 = vld [vmem:[#allocation4 + $0x198] sm:$0x7f]
    %v8230 = vld [vmem:[#allocation4 + $0x1a0] sm:$0xff]
    %v8231 = vld [vmem:[#allocation4 + $0x1a8] sm:$0x7f]
    %v8232 = vld [vmem:[#allocation4 + $0x1b0] sm:$0xff]
    %v8233 = vld [vmem:[#allocation4 + $0x1b8] sm:$0x7f]
    %v8234 = vld [vmem:[#allocation4 + $0x1c0] sm:$0xff]
    %v8235 = vld [vmem:[#allocation4 + $0x1c8] sm:$0x7f]
    %v8236 = vld [vmem:[#allocation4 + $0x1d0] sm:$0xff]
    %v8237 = vld [vmem:[#allocation4 + $0x1d8] sm:$0x7f]
    %v8238 = vld [vmem:[#allocation4 + $0x1e0] sm:$0xff]
    %v8239 = vld [vmem:[#allocation4 + $0x1e8] sm:$0x7f]
    %8240 = vst.msk [vmem:[%s4237 + $0x1] sm:$0xff] %vm4111, %v8180
    %8241 = vst.msk [vmem:[%s4237 + $0x9] sm:$0x7f] %vm4239, %v8181
    %8242 = vst.msk [vmem:[%s4237 + $0x11] sm:$0xff] %vm4111, %v8182
    %8243 = vst.msk [vmem:[%s4237 + $0x19] sm:$0x7f] %vm4239, %v8183
    %8244 = vst.msk [vmem:[%s4237 + $0x21] sm:$0xff] %vm4111, %v8184
    %8245 = vst.msk [vmem:[%s4237 + $0x29] sm:$0x7f] %vm4239, %v8185
    %8246 = vst.msk [vmem:[%s4237 + $0x31] sm:$0xff] %vm4111, %v8186
    %8247 = vst.msk [vmem:[%s4237 + $0x39] sm:$0x7f] %vm4239, %v8187
    %8248 = vst.msk [vmem:[%s4237 + $0x41] sm:$0xff] %vm4111, %v8188
    %8249 = vst.msk [vmem:[%s4237 + $0x49] sm:$0x7f] %vm4239, %v8189
    %8250 = vst.msk [vmem:[%s4237 + $0x51] sm:$0xff] %vm4111, %v8190
    %8251 = vst.msk [vmem:[%s4237 + $0x59] sm:$0x7f] %vm4239, %v8191
    %8252 = vst.msk [vmem:[%s4237 + $0x61] sm:$0xff] %vm4111, %v8192
    %8253 = vst.msk [vmem:[%s4237 + $0x69] sm:$0x7f] %vm4239, %v8193
    %8254 = vst.msk [vmem:[%s4237 + $0x71] sm:$0xff] %vm4111, %v8194
    %8255 = vst.msk [vmem:[%s4237 + $0x79] sm:$0x7f] %vm4239, %v8195
    %8256 = vst.msk [vmem:[%s4237 + $0x81] sm:$0xff] %vm4111, %v8196
    %8257 = vst.msk [vmem:[%s4237 + $0x89] sm:$0x7f] %vm4239, %v8197
    %8258 = vst.msk [vmem:[%s4237 + $0x91] sm:$0xff] %vm4111, %v8198
    %8259 = vst.msk [vmem:[%s4237 + $0x99] sm:$0x7f] %vm4239, %v8199
    %8260 = vst.msk [vmem:[%s4237 + $0xa1] sm:$0xff] %vm4111, %v8200
    %8261 = vst.msk [vmem:[%s4237 + $0xa9] sm:$0x7f] %vm4239, %v8201
    %8262 = vst.msk [vmem:[%s4237 + $0xb1] sm:$0xff] %vm4111, %v8202
    %8263 = vst.msk [vmem:[%s4237 + $0xb9] sm:$0x7f] %vm4239, %v8203
    %8264 = vst.msk [vmem:[%s4237 + $0xc1] sm:$0xff] %vm4111, %v8204
    %8265 = vst.msk [vmem:[%s4237 + $0xc9] sm:$0x7f] %vm4239, %v8205
    %8266 = vst.msk [vmem:[%s4237 + $0xd1] sm:$0xff] %vm4111, %v8206
    %8267 = vst.msk [vmem:[%s4237 + $0xd9] sm:$0x7f] %vm4239, %v8207
    %8268 = vst.msk [vmem:[%s4237 + $0xe1] sm:$0xff] %vm4111, %v8208
    %8269 = vst.msk [vmem:[%s4237 + $0xe9] sm:$0x7f] %vm4239, %v8209
    %8270 = vst.msk [vmem:[%s4237 + $0x101] sm:$0xff] %vm4111, %v8210
    %8271 = vst.msk [vmem:[%s4237 + $0x109] sm:$0x7f] %vm4239, %v8211
    %8272 = vst.msk [vmem:[%s4237 + $0x111] sm:$0xff] %vm4111, %v8212
    %8273 = vst.msk [vmem:[%s4237 + $0x119] sm:$0x7f] %vm4239, %v8213
    %8274 = vst.msk [vmem:[%s4237 + $0x121] sm:$0xff] %vm4111, %v8214
    %8275 = vst.msk [vmem:[%s4237 + $0x129] sm:$0x7f] %vm4239, %v8215
    %8276 = vst.msk [vmem:[%s4237 + $0x131] sm:$0xff] %vm4111, %v8216
    %8277 = vst.msk [vmem:[%s4237 + $0x139] sm:$0x7f] %vm4239, %v8217
    %8278 = vst.msk [vmem:[%s4237 + $0x141] sm:$0xff] %vm4111, %v8218
    %8279 = vst.msk [vmem:[%s4237 + $0x149] sm:$0x7f] %vm4239, %v8219
    %8280 = vst.msk [vmem:[%s4237 + $0x151] sm:$0xff] %vm4111, %v8220
    %8281 = vst.msk [vmem:[%s4237 + $0x159] sm:$0x7f] %vm4239, %v8221
    %8282 = vst.msk [vmem:[%s4237 + $0x161] sm:$0xff] %vm4111, %v8222
    %8283 = vst.msk [vmem:[%s4237 + $0x169] sm:$0x7f] %vm4239, %v8223
    %8284 = vst.msk [vmem:[%s4237 + $0x171] sm:$0xff] %vm4111, %v8224
    %8285 = vst.msk [vmem:[%s4237 + $0x179] sm:$0x7f] %vm4239, %v8225
    %8286 = vst.msk [vmem:[%s4237 + $0x181] sm:$0xff] %vm4111, %v8226
    %8287 = vst.msk [vmem:[%s4237 + $0x189] sm:$0x7f] %vm4239, %v8227
    %8288 = vst.msk [vmem:[%s4237 + $0x191] sm:$0xff] %vm4111, %v8228
    %8289 = vst.msk [vmem:[%s4237 + $0x199] sm:$0x7f] %vm4239, %v8229
    %8290 = vst.msk [vmem:[%s4237 + $0x1a1] sm:$0xff] %vm4111, %v8230
    %8291 = vst.msk [vmem:[%s4237 + $0x1a9] sm:$0x7f] %vm4239, %v8231
    %8292 = vst.msk [vmem:[%s4237 + $0x1b1] sm:$0xff] %vm4111, %v8232
    %8293 = vst.msk [vmem:[%s4237 + $0x1b9] sm:$0x7f] %vm4239, %v8233
    %8294 = vst.msk [vmem:[%s4237 + $0x1c1] sm:$0xff] %vm4111, %v8234
    %8295 = vst.msk [vmem:[%s4237 + $0x1c9] sm:$0x7f] %vm4239, %v8235
    %8296 = vst.msk [vmem:[%s4237 + $0x1d1] sm:$0xff] %vm4111, %v8236
    %8297 = vst.msk [vmem:[%s4237 + $0x1d9] sm:$0x7f] %vm4239, %v8237
    %8298 = vst.msk [vmem:[%s4237 + $0x1e1] sm:$0xff] %vm4111, %v8238
    %8299 = vst.msk [vmem:[%s4237 + $0x1e9] sm:$0x7f] %vm4239, %v8239
    %v8300 = vld [vmem:[#allocation4] sm:$0xff]
    %v8301 = vld [vmem:[#allocation4 + $0x8] sm:$0xff]
    %v8302 = vld [vmem:[#allocation4 + $0x10] sm:$0xff]
    %v8303 = vld [vmem:[#allocation4 + $0x18] sm:$0xff]
    %v8304 = vld [vmem:[#allocation4 + $0x20] sm:$0xff]
    %v8305 = vld [vmem:[#allocation4 + $0x28] sm:$0xff]
    %v8306 = vld [vmem:[#allocation4 + $0x30] sm:$0xff]
    %v8307 = vld [vmem:[#allocation4 + $0x38] sm:$0xff]
    %v8308 = vld [vmem:[#allocation4 + $0x40] sm:$0xff]
    %v8309 = vld [vmem:[#allocation4 + $0x48] sm:$0xff]
    %v8310 = vld [vmem:[#allocation4 + $0x50] sm:$0xff]
    %v8311 = vld [vmem:[#allocation4 + $0x58] sm:$0xff]
    %v8312 = vld [vmem:[#allocation4 + $0x60] sm:$0xff]
    %v8313 = vld [vmem:[#allocation4 + $0x68] sm:$0xff]
    %v8314 = vld [vmem:[#allocation4 + $0x70] sm:$0xff]
    %v8315 = vld [vmem:[#allocation4 + $0x78] sm:$0xff]
    %v8316 = vld [vmem:[#allocation4 + $0x80] sm:$0xff]
    %v8317 = vld [vmem:[#allocation4 + $0x88] sm:$0xff]
    %v8318 = vld [vmem:[#allocation4 + $0x90] sm:$0xff]
    %v8319 = vld [vmem:[#allocation4 + $0x98] sm:$0xff]
    %v8320 = vld [vmem:[#allocation4 + $0xa0] sm:$0xff]
    %v8321 = vld [vmem:[#allocation4 + $0xa8] sm:$0xff]
    %v8322 = vld [vmem:[#allocation4 + $0xb0] sm:$0xff]
    %v8323 = vld [vmem:[#allocation4 + $0xb8] sm:$0xff]
    %v8324 = vld [vmem:[#allocation4 + $0xc0] sm:$0xff]
    %v8325 = vld [vmem:[#allocation4 + $0xc8] sm:$0xff]
    %v8326 = vld [vmem:[#allocation4 + $0xd0] sm:$0xff]
    %v8327 = vld [vmem:[#allocation4 + $0xd8] sm:$0xff]
    %v8328 = vld [vmem:[#allocation4 + $0xe0] sm:$0xff]
    %v8329 = vld [vmem:[#allocation4 + $0xe8] sm:$0xff]
    %v8330 = vld [vmem:[#allocation4 + $0x100] sm:$0xff]
    %v8331 = vld [vmem:[#allocation4 + $0x108] sm:$0xff]
    %v8332 = vld [vmem:[#allocation4 + $0x110] sm:$0xff]
    %v8333 = vld [vmem:[#allocation4 + $0x118] sm:$0xff]
    %v8334 = vld [vmem:[#allocation4 + $0x120] sm:$0xff]
    %v8335 = vld [vmem:[#allocation4 + $0x128] sm:$0xff]
    %v8336 = vld [vmem:[#allocation4 + $0x130] sm:$0xff]
    %v8337 = vld [vmem:[#allocation4 + $0x138] sm:$0xff]
    %v8338 = vld [vmem:[#allocation4 + $0x140] sm:$0xff]
    %v8339 = vld [vmem:[#allocation4 + $0x148] sm:$0xff]
    %v8340 = vld [vmem:[#allocation4 + $0x150] sm:$0xff]
    %v8341 = vld [vmem:[#allocation4 + $0x158] sm:$0xff]
    %v8342 = vld [vmem:[#allocation4 + $0x160] sm:$0xff]
    %v8343 = vld [vmem:[#allocation4 + $0x168] sm:$0xff]
    %v8344 = vld [vmem:[#allocation4 + $0x170] sm:$0xff]
    %v8345 = vld [vmem:[#allocation4 + $0x178] sm:$0xff]
    %v8346 = vld [vmem:[#allocation4 + $0x180] sm:$0xff]
    %v8347 = vld [vmem:[#allocation4 + $0x188] sm:$0xff]
    %v8348 = vld [vmem:[#allocation4 + $0x190] sm:$0xff]
    %v8349 = vld [vmem:[#allocation4 + $0x198] sm:$0xff]
    %v8350 = vld [vmem:[#allocation4 + $0x1a0] sm:$0xff]
    %v8351 = vld [vmem:[#allocation4 + $0x1a8] sm:$0xff]
    %v8352 = vld [vmem:[#allocation4 + $0x1b0] sm:$0xff]
    %v8353 = vld [vmem:[#allocation4 + $0x1b8] sm:$0xff]
    %v8354 = vld [vmem:[#allocation4 + $0x1c0] sm:$0xff]
    %v8355 = vld [vmem:[#allocation4 + $0x1c8] sm:$0xff]
    %v8356 = vld [vmem:[#allocation4 + $0x1d0] sm:$0xff]
    %v8357 = vld [vmem:[#allocation4 + $0x1d8] sm:$0xff]
    %v8358 = vld [vmem:[#allocation4 + $0x1e0] sm:$0xff]
    %v8359 = vld [vmem:[#allocation4 + $0x1e8] sm:$0xff]
    %8420 = vrot.lane.b32.xlu0 %v8300, 8
    %v8421 = vpop.permute.xlu0 %8420
    %8422 = vrot.lane.b32.xlu0 %v8301, 8
    %v8423 = vpop.permute.xlu0 %8422
    %8424 = vrot.lane.b32.xlu0 %v8302, 8
    %v8425 = vpop.permute.xlu0 %8424
    %8426 = vrot.lane.b32.xlu0 %v8303, 8
    %v8427 = vpop.permute.xlu0 %8426
    %8428 = vrot.lane.b32.xlu0 %v8304, 8
    %v8429 = vpop.permute.xlu0 %8428
    %8430 = vrot.lane.b32.xlu0 %v8305, 8
    %v8431 = vpop.permute.xlu0 %8430
    %8432 = vrot.lane.b32.xlu0 %v8306, 8
    %v8433 = vpop.permute.xlu0 %8432
    %8434 = vrot.lane.b32.xlu0 %v8307, 8
    %v8435 = vpop.permute.xlu0 %8434
    %8436 = vrot.lane.b32.xlu0 %v8308, 8
    %v8437 = vpop.permute.xlu0 %8436
    %8438 = vrot.lane.b32.xlu0 %v8309, 8
    %v8439 = vpop.permute.xlu0 %8438
    %8440 = vrot.lane.b32.xlu0 %v8310, 8
    %v8441 = vpop.permute.xlu0 %8440
    %8442 = vrot.lane.b32.xlu0 %v8311, 8
    %v8443 = vpop.permute.xlu0 %8442
    %8444 = vrot.lane.b32.xlu0 %v8312, 8
    %v8445 = vpop.permute.xlu0 %8444
    %8446 = vrot.lane.b32.xlu0 %v8313, 8
    %v8447 = vpop.permute.xlu0 %8446
    %8448 = vrot.lane.b32.xlu0 %v8314, 8
    %v8449 = vpop.permute.xlu0 %8448
    %8450 = vrot.lane.b32.xlu0 %v8315, 8
    %v8451 = vpop.permute.xlu0 %8450
    %8452 = vrot.lane.b32.xlu0 %v8316, 8
    %v8453 = vpop.permute.xlu0 %8452
    %8454 = vrot.lane.b32.xlu0 %v8317, 8
    %v8455 = vpop.permute.xlu0 %8454
    %8456 = vrot.lane.b32.xlu0 %v8318, 8
    %v8457 = vpop.permute.xlu0 %8456
    %8458 = vrot.lane.b32.xlu0 %v8319, 8
    %v8459 = vpop.permute.xlu0 %8458
    %8460 = vrot.lane.b32.xlu0 %v8320, 8
    %v8461 = vpop.permute.xlu0 %8460
    %8462 = vrot.lane.b32.xlu0 %v8321, 8
    %v8463 = vpop.permute.xlu0 %8462
    %8464 = vrot.lane.b32.xlu0 %v8322, 8
    %v8465 = vpop.permute.xlu0 %8464
    %8466 = vrot.lane.b32.xlu0 %v8323, 8
    %v8467 = vpop.permute.xlu0 %8466
    %8468 = vrot.lane.b32.xlu0 %v8324, 8
    %v8469 = vpop.permute.xlu0 %8468
    %8470 = vrot.lane.b32.xlu0 %v8325, 8
    %v8471 = vpop.permute.xlu0 %8470
    %8472 = vrot.lane.b32.xlu0 %v8326, 8
    %v8473 = vpop.permute.xlu0 %8472
    %8474 = vrot.lane.b32.xlu0 %v8327, 8
    %v8475 = vpop.permute.xlu0 %8474
    %8476 = vrot.lane.b32.xlu0 %v8328, 8
    %v8477 = vpop.permute.xlu0 %8476
    %8478 = vrot.lane.b32.xlu0 %v8329, 8
    %v8479 = vpop.permute.xlu0 %8478
    %8480 = vrot.lane.b32.xlu0 %v8330, 8
    %v8481 = vpop.permute.xlu0 %8480
    %8482 = vrot.lane.b32.xlu0 %v8331, 8
    %v8483 = vpop.permute.xlu0 %8482
    %8484 = vrot.lane.b32.xlu0 %v8332, 8
    %v8485 = vpop.permute.xlu0 %8484
    %8486 = vrot.lane.b32.xlu0 %v8333, 8
    %v8487 = vpop.permute.xlu0 %8486
    %8488 = vrot.lane.b32.xlu0 %v8334, 8
    %v8489 = vpop.permute.xlu0 %8488
    %8490 = vrot.lane.b32.xlu0 %v8335, 8
    %v8491 = vpop.permute.xlu0 %8490
    %8492 = vrot.lane.b32.xlu0 %v8336, 8
    %v8493 = vpop.permute.xlu0 %8492
    %8494 = vrot.lane.b32.xlu0 %v8337, 8
    %v8495 = vpop.permute.xlu0 %8494
    %8496 = vrot.lane.b32.xlu0 %v8338, 8
    %v8497 = vpop.permute.xlu0 %8496
    %8498 = vrot.lane.b32.xlu0 %v8339, 8
    %v8499 = vpop.permute.xlu0 %8498
    %8500 = vrot.lane.b32.xlu0 %v8340, 8
    %v8501 = vpop.permute.xlu0 %8500
    %8502 = vrot.lane.b32.xlu0 %v8341, 8
    %v8503 = vpop.permute.xlu0 %8502
    %8504 = vrot.lane.b32.xlu0 %v8342, 8
    %v8505 = vpop.permute.xlu0 %8504
    %8506 = vrot.lane.b32.xlu0 %v8343, 8
    %v8507 = vpop.permute.xlu0 %8506
    %8508 = vrot.lane.b32.xlu0 %v8344, 8
    %v8509 = vpop.permute.xlu0 %8508
    %8510 = vrot.lane.b32.xlu0 %v8345, 8
    %v8511 = vpop.permute.xlu0 %8510
    %8512 = vrot.lane.b32.xlu0 %v8346, 8
    %v8513 = vpop.permute.xlu0 %8512
    %8514 = vrot.lane.b32.xlu0 %v8347, 8
    %v8515 = vpop.permute.xlu0 %8514
    %8516 = vrot.lane.b32.xlu0 %v8348, 8
    %v8517 = vpop.permute.xlu0 %8516
    %8518 = vrot.lane.b32.xlu0 %v8349, 8
    %v8519 = vpop.permute.xlu0 %8518
    %8520 = vrot.lane.b32.xlu0 %v8350, 8
    %v8521 = vpop.permute.xlu0 %8520
    %8522 = vrot.lane.b32.xlu0 %v8351, 8
    %v8523 = vpop.permute.xlu0 %8522
    %8524 = vrot.lane.b32.xlu0 %v8352, 8
    %v8525 = vpop.permute.xlu0 %8524
    %8526 = vrot.lane.b32.xlu0 %v8353, 8
    %v8527 = vpop.permute.xlu0 %8526
    %8528 = vrot.lane.b32.xlu0 %v8354, 8
    %v8529 = vpop.permute.xlu0 %8528
    %8530 = vrot.lane.b32.xlu0 %v8355, 8
    %v8531 = vpop.permute.xlu0 %8530
    %8532 = vrot.lane.b32.xlu0 %v8356, 8
    %v8533 = vpop.permute.xlu0 %8532
    %8534 = vrot.lane.b32.xlu0 %v8357, 8
    %v8535 = vpop.permute.xlu0 %8534
    %8536 = vrot.lane.b32.xlu0 %v8358, 8
    %v8537 = vpop.permute.xlu0 %8536
    %8538 = vrot.lane.b32.xlu0 %v8359, 8
    %v8539 = vpop.permute.xlu0 %8538
    %8600 = vst.msk [vmem:[%s4237] sm:$0xff] %vm4599, %v8421
    %8601 = vst.msk [vmem:[%s4237 + $0x8] sm:$0xff] %vm4599, %v8423
    %8602 = vst.msk [vmem:[%s4237 + $0x10] sm:$0xff] %vm4599, %v8425
    %8603 = vst.msk [vmem:[%s4237 + $0x18] sm:$0xff] %vm4599, %v8427
    %8604 = vst.msk [vmem:[%s4237 + $0x20] sm:$0xff] %vm4599, %v8429
    %8605 = vst.msk [vmem:[%s4237 + $0x28] sm:$0xff] %vm4599, %v8431
    %8606 = vst.msk [vmem:[%s4237 + $0x30] sm:$0xff] %vm4599, %v8433
    %8607 = vst.msk [vmem:[%s4237 + $0x38] sm:$0xff] %vm4599, %v8435
    %8608 = vst.msk [vmem:[%s4237 + $0x40] sm:$0xff] %vm4599, %v8437
    %8609 = vst.msk [vmem:[%s4237 + $0x48] sm:$0xff] %vm4599, %v8439
    %8610 = vst.msk [vmem:[%s4237 + $0x50] sm:$0xff] %vm4599, %v8441
    %8611 = vst.msk [vmem:[%s4237 + $0x58] sm:$0xff] %vm4599, %v8443
    %8612 = vst.msk [vmem:[%s4237 + $0x60] sm:$0xff] %vm4599, %v8445
    %8613 = vst.msk [vmem:[%s4237 + $0x68] sm:$0xff] %vm4599, %v8447
    %8614 = vst.msk [vmem:[%s4237 + $0x70] sm:$0xff] %vm4599, %v8449
    %8615 = vst.msk [vmem:[%s4237 + $0x78] sm:$0xff] %vm4599, %v8451
    %8616 = vst.msk [vmem:[%s4237 + $0x80] sm:$0xff] %vm4599, %v8453
    %8617 = vst.msk [vmem:[%s4237 + $0x88] sm:$0xff] %vm4599, %v8455
    %8618 = vst.msk [vmem:[%s4237 + $0x90] sm:$0xff] %vm4599, %v8457
    %8619 = vst.msk [vmem:[%s4237 + $0x98] sm:$0xff] %vm4599, %v8459
    %8620 = vst.msk [vmem:[%s4237 + $0xa0] sm:$0xff] %vm4599, %v8461
    %8621 = vst.msk [vmem:[%s4237 + $0xa8] sm:$0xff] %vm4599, %v8463
    %8622 = vst.msk [vmem:[%s4237 + $0xb0] sm:$0xff] %vm4599, %v8465
    %8623 = vst.msk [vmem:[%s4237 + $0xb8] sm:$0xff] %vm4599, %v8467
    %8624 = vst.msk [vmem:[%s4237 + $0xc0] sm:$0xff] %vm4599, %v8469
    %8625 = vst.msk [vmem:[%s4237 + $0xc8] sm:$0xff] %vm4599, %v8471
    %8626 = vst.msk [vmem:[%s4237 + $0xd0] sm:$0xff] %vm4599, %v8473
    %8627 = vst.msk [vmem:[%s4237 + $0xd8] sm:$0xff] %vm4599, %v8475
    %8628 = vst.msk [vmem:[%s4237 + $0xe0] sm:$0xff] %vm4599, %v8477
    %8629 = vst.msk [vmem:[%s4237 + $0xe8] sm:$0xff] %vm4599, %v8479
    %8630 = vst.msk [vmem:[%s4237 + $0x100] sm:$0xff] %vm4599, %v8481
    %8631 = vst.msk [vmem:[%s4237 + $0x108] sm:$0xff] %vm4599, %v8483
    %8632 = vst.msk [vmem:[%s4237 + $0x110] sm:$0xff] %vm4599, %v8485
    %8633 = vst.msk [vmem:[%s4237 + $0x118] sm:$0xff] %vm4599, %v8487
    %8634 = vst.msk [vmem:[%s4237 + $0x120] sm:$0xff] %vm4599, %v8489
    %8635 = vst.msk [vmem:[%s4237 + $0x128] sm:$0xff] %vm4599, %v8491
    %8636 = vst.msk [vmem:[%s4237 + $0x130] sm:$0xff] %vm4599, %v8493
    %8637 = vst.msk [vmem:[%s4237 + $0x138] sm:$0xff] %vm4599, %v8495
    %8638 = vst.msk [vmem:[%s4237 + $0x140] sm:$0xff] %vm4599, %v8497
    %8639 = vst.msk [vmem:[%s4237 + $0x148] sm:$0xff] %vm4599, %v8499
    %8640 = vst.msk [vmem:[%s4237 + $0x150] sm:$0xff] %vm4599, %v8501
    %8641 = vst.msk [vmem:[%s4237 + $0x158] sm:$0xff] %vm4599, %v8503
    %8642 = vst.msk [vmem:[%s4237 + $0x160] sm:$0xff] %vm4599, %v8505
    %8643 = vst.msk [vmem:[%s4237 + $0x168] sm:$0xff] %vm4599, %v8507
    %8644 = vst.msk [vmem:[%s4237 + $0x170] sm:$0xff] %vm4599, %v8509
    %8645 = vst.msk [vmem:[%s4237 + $0x178] sm:$0xff] %vm4599, %v8511
    %8646 = vst.msk [vmem:[%s4237 + $0x180] sm:$0xff] %vm4599, %v8513
    %8647 = vst.msk [vmem:[%s4237 + $0x188] sm:$0xff] %vm4599, %v8515
    %8648 = vst.msk [vmem:[%s4237 + $0x190] sm:$0xff] %vm4599, %v8517
    %8649 = vst.msk [vmem:[%s4237 + $0x198] sm:$0xff] %vm4599, %v8519
    %8650 = vst.msk [vmem:[%s4237 + $0x1a0] sm:$0xff] %vm4599, %v8521
    %8651 = vst.msk [vmem:[%s4237 + $0x1a8] sm:$0xff] %vm4599, %v8523
    %8652 = vst.msk [vmem:[%s4237 + $0x1b0] sm:$0xff] %vm4599, %v8525
    %8653 = vst.msk [vmem:[%s4237 + $0x1b8] sm:$0xff] %vm4599, %v8527
    %8654 = vst.msk [vmem:[%s4237 + $0x1c0] sm:$0xff] %vm4599, %v8529
    %8655 = vst.msk [vmem:[%s4237 + $0x1c8] sm:$0xff] %vm4599, %v8531
    %8656 = vst.msk [vmem:[%s4237 + $0x1d0] sm:$0xff] %vm4599, %v8533
    %8657 = vst.msk [vmem:[%s4237 + $0x1d8] sm:$0xff] %vm4599, %v8535
    %8658 = vst.msk [vmem:[%s4237 + $0x1e0] sm:$0xff] %vm4599, %v8537
    %8659 = vst.msk [vmem:[%s4237 + $0x1e8] sm:$0xff] %vm4599, %v8539
    %v8660 = vld [vmem:[#allocation4 + $0x1] sm:$0xff]
    %v8661 = vld [vmem:[#allocation4 + $0x9] sm:$0x7f]
    %v8662 = vld [vmem:[#allocation4 + $0x11] sm:$0xff]
    %v8663 = vld [vmem:[#allocation4 + $0x19] sm:$0x7f]
    %v8664 = vld [vmem:[#allocation4 + $0x21] sm:$0xff]
    %v8665 = vld [vmem:[#allocation4 + $0x29] sm:$0x7f]
    %v8666 = vld [vmem:[#allocation4 + $0x31] sm:$0xff]
    %v8667 = vld [vmem:[#allocation4 + $0x39] sm:$0x7f]
    %v8668 = vld [vmem:[#allocation4 + $0x41] sm:$0xff]
    %v8669 = vld [vmem:[#allocation4 + $0x49] sm:$0x7f]
    %v8670 = vld [vmem:[#allocation4 + $0x51] sm:$0xff]
    %v8671 = vld [vmem:[#allocation4 + $0x59] sm:$0x7f]
    %v8672 = vld [vmem:[#allocation4 + $0x61] sm:$0xff]
    %v8673 = vld [vmem:[#allocation4 + $0x69] sm:$0x7f]
    %v8674 = vld [vmem:[#allocation4 + $0x71] sm:$0xff]
    %v8675 = vld [vmem:[#allocation4 + $0x79] sm:$0x7f]
    %v8676 = vld [vmem:[#allocation4 + $0x81] sm:$0xff]
    %v8677 = vld [vmem:[#allocation4 + $0x89] sm:$0x7f]
    %v8678 = vld [vmem:[#allocation4 + $0x91] sm:$0xff]
    %v8679 = vld [vmem:[#allocation4 + $0x99] sm:$0x7f]
    %v8680 = vld [vmem:[#allocation4 + $0xa1] sm:$0xff]
    %v8681 = vld [vmem:[#allocation4 + $0xa9] sm:$0x7f]
    %v8682 = vld [vmem:[#allocation4 + $0xb1] sm:$0xff]
    %v8683 = vld [vmem:[#allocation4 + $0xb9] sm:$0x7f]
    %v8684 = vld [vmem:[#allocation4 + $0xc1] sm:$0xff]
    %v8685 = vld [vmem:[#allocation4 + $0xc9] sm:$0x7f]
    %v8686 = vld [vmem:[#allocation4 + $0xd1] sm:$0xff]
    %v8687 = vld [vmem:[#allocation4 + $0xd9] sm:$0x7f]
    %v8688 = vld [vmem:[#allocation4 + $0xe1] sm:$0xff]
    %v8689 = vld [vmem:[#allocation4 + $0xe9] sm:$0x7f]
    %v8690 = vld [vmem:[#allocation4 + $0x101] sm:$0xff]
    %v8691 = vld [vmem:[#allocation4 + $0x109] sm:$0x7f]
    %v8692 = vld [vmem:[#allocation4 + $0x111] sm:$0xff]
    %v8693 = vld [vmem:[#allocation4 + $0x119] sm:$0x7f]
    %v8694 = vld [vmem:[#allocation4 + $0x121] sm:$0xff]
    %v8695 = vld [vmem:[#allocation4 + $0x129] sm:$0x7f]
    %v8696 = vld [vmem:[#allocation4 + $0x131] sm:$0xff]
    %v8697 = vld [vmem:[#allocation4 + $0x139] sm:$0x7f]
    %v8698 = vld [vmem:[#allocation4 + $0x141] sm:$0xff]
    %v8699 = vld [vmem:[#allocation4 + $0x149] sm:$0x7f]
    %v8700 = vld [vmem:[#allocation4 + $0x151] sm:$0xff]
    %v8701 = vld [vmem:[#allocation4 + $0x159] sm:$0x7f]
    %v8702 = vld [vmem:[#allocation4 + $0x161] sm:$0xff]
    %v8703 = vld [vmem:[#allocation4 + $0x169] sm:$0x7f]
    %v8704 = vld [vmem:[#allocation4 + $0x171] sm:$0xff]
    %v8705 = vld [vmem:[#allocation4 + $0x179] sm:$0x7f]
    %v8706 = vld [vmem:[#allocation4 + $0x181] sm:$0xff]
    %v8707 = vld [vmem:[#allocation4 + $0x189] sm:$0x7f]
    %v8708 = vld [vmem:[#allocation4 + $0x191] sm:$0xff]
    %v8709 = vld [vmem:[#allocation4 + $0x199] sm:$0x7f]
    %v8710 = vld [vmem:[#allocation4 + $0x1a1] sm:$0xff]
    %v8711 = vld [vmem:[#allocation4 + $0x1a9] sm:$0x7f]
    %v8712 = vld [vmem:[#allocation4 + $0x1b1] sm:$0xff]
    %v8713 = vld [vmem:[#allocation4 + $0x1b9] sm:$0x7f]
    %v8714 = vld [vmem:[#allocation4 + $0x1c1] sm:$0xff]
    %v8715 = vld [vmem:[#allocation4 + $0x1c9] sm:$0x7f]
    %v8716 = vld [vmem:[#allocation4 + $0x1d1] sm:$0xff]
    %v8717 = vld [vmem:[#allocation4 + $0x1d9] sm:$0x7f]
    %v8718 = vld [vmem:[#allocation4 + $0x1e1] sm:$0xff]
    %v8719 = vld [vmem:[#allocation4 + $0x1e9] sm:$0x7f]
    %8780 = vrot.lane.b32.xlu0 %v8660, 16
    %v8781 = vpop.permute.xlu0 %8780
    %8782 = vrot.lane.b32.xlu0 %v8661, 16
    %v8783 = vpop.permute.xlu0 %8782
    %8784 = vrot.lane.b32.xlu0 %v8662, 16
    %v8785 = vpop.permute.xlu0 %8784
    %8786 = vrot.lane.b32.xlu0 %v8663, 16
    %v8787 = vpop.permute.xlu0 %8786
    %8788 = vrot.lane.b32.xlu0 %v8664, 16
    %v8789 = vpop.permute.xlu0 %8788
    %8790 = vrot.lane.b32.xlu0 %v8665, 16
    %v8791 = vpop.permute.xlu0 %8790
    %8792 = vrot.lane.b32.xlu0 %v8666, 16
    %v8793 = vpop.permute.xlu0 %8792
    %8794 = vrot.lane.b32.xlu0 %v8667, 16
    %v8795 = vpop.permute.xlu0 %8794
    %8796 = vrot.lane.b32.xlu0 %v8668, 16
    %v8797 = vpop.permute.xlu0 %8796
    %8798 = vrot.lane.b32.xlu0 %v8669, 16
    %v8799 = vpop.permute.xlu0 %8798
    %8800 = vrot.lane.b32.xlu0 %v8670, 16
    %v8801 = vpop.permute.xlu0 %8800
    %8802 = vrot.lane.b32.xlu0 %v8671, 16
    %v8803 = vpop.permute.xlu0 %8802
    %8804 = vrot.lane.b32.xlu0 %v8672, 16
    %v8805 = vpop.permute.xlu0 %8804
    %8806 = vrot.lane.b32.xlu0 %v8673, 16
    %v8807 = vpop.permute.xlu0 %8806
    %8808 = vrot.lane.b32.xlu0 %v8674, 16
    %v8809 = vpop.permute.xlu0 %8808
    %8810 = vrot.lane.b32.xlu0 %v8675, 16
    %v8811 = vpop.permute.xlu0 %8810
    %8812 = vrot.lane.b32.xlu0 %v8676, 16
    %v8813 = vpop.permute.xlu0 %8812
    %8814 = vrot.lane.b32.xlu0 %v8677, 16
    %v8815 = vpop.permute.xlu0 %8814
    %8816 = vrot.lane.b32.xlu0 %v8678, 16
    %v8817 = vpop.permute.xlu0 %8816
    %8818 = vrot.lane.b32.xlu0 %v8679, 16
    %v8819 = vpop.permute.xlu0 %8818
    %8820 = vrot.lane.b32.xlu0 %v8680, 16
    %v8821 = vpop.permute.xlu0 %8820
    %8822 = vrot.lane.b32.xlu0 %v8681, 16
    %v8823 = vpop.permute.xlu0 %8822
    %8824 = vrot.lane.b32.xlu0 %v8682, 16
    %v8825 = vpop.permute.xlu0 %8824
    %8826 = vrot.lane.b32.xlu0 %v8683, 16
    %v8827 = vpop.permute.xlu0 %8826
    %8828 = vrot.lane.b32.xlu0 %v8684, 16
    %v8829 = vpop.permute.xlu0 %8828
    %8830 = vrot.lane.b32.xlu0 %v8685, 16
    %v8831 = vpop.permute.xlu0 %8830
    %8832 = vrot.lane.b32.xlu0 %v8686, 16
    %v8833 = vpop.permute.xlu0 %8832
    %8834 = vrot.lane.b32.xlu0 %v8687, 16
    %v8835 = vpop.permute.xlu0 %8834
    %8836 = vrot.lane.b32.xlu0 %v8688, 16
    %v8837 = vpop.permute.xlu0 %8836
    %8838 = vrot.lane.b32.xlu0 %v8689, 16
    %v8839 = vpop.permute.xlu0 %8838
    %8840 = vrot.lane.b32.xlu0 %v8690, 16
    %v8841 = vpop.permute.xlu0 %8840
    %8842 = vrot.lane.b32.xlu0 %v8691, 16
    %v8843 = vpop.permute.xlu0 %8842
    %8844 = vrot.lane.b32.xlu0 %v8692, 16
    %v8845 = vpop.permute.xlu0 %8844
    %8846 = vrot.lane.b32.xlu0 %v8693, 16
    %v8847 = vpop.permute.xlu0 %8846
    %8848 = vrot.lane.b32.xlu0 %v8694, 16
    %v8849 = vpop.permute.xlu0 %8848
    %8850 = vrot.lane.b32.xlu0 %v8695, 16
    %v8851 = vpop.permute.xlu0 %8850
    %8852 = vrot.lane.b32.xlu0 %v8696, 16
    %v8853 = vpop.permute.xlu0 %8852
    %8854 = vrot.lane.b32.xlu0 %v8697, 16
    %v8855 = vpop.permute.xlu0 %8854
    %8856 = vrot.lane.b32.xlu0 %v8698, 16
    %v8857 = vpop.permute.xlu0 %8856
    %8858 = vrot.lane.b32.xlu0 %v8699, 16
    %v8859 = vpop.permute.xlu0 %8858
    %8860 = vrot.lane.b32.xlu0 %v8700, 16
    %v8861 = vpop.permute.xlu0 %8860
    %8862 = vrot.lane.b32.xlu0 %v8701, 16
    %v8863 = vpop.permute.xlu0 %8862
    %8864 = vrot.lane.b32.xlu0 %v8702, 16
    %v8865 = vpop.permute.xlu0 %8864
    %8866 = vrot.lane.b32.xlu0 %v8703, 16
    %v8867 = vpop.permute.xlu0 %8866
    %8868 = vrot.lane.b32.xlu0 %v8704, 16
    %v8869 = vpop.permute.xlu0 %8868
    %8870 = vrot.lane.b32.xlu0 %v8705, 16
    %v8871 = vpop.permute.xlu0 %8870
    %8872 = vrot.lane.b32.xlu0 %v8706, 16
    %v8873 = vpop.permute.xlu0 %8872
    %8874 = vrot.lane.b32.xlu0 %v8707, 16
    %v8875 = vpop.permute.xlu0 %8874
    %8876 = vrot.lane.b32.xlu0 %v8708, 16
    %v8877 = vpop.permute.xlu0 %8876
    %8878 = vrot.lane.b32.xlu0 %v8709, 16
    %v8879 = vpop.permute.xlu0 %8878
    %8880 = vrot.lane.b32.xlu0 %v8710, 16
    %v8881 = vpop.permute.xlu0 %8880
    %8882 = vrot.lane.b32.xlu0 %v8711, 16
    %v8883 = vpop.permute.xlu0 %8882
    %8884 = vrot.lane.b32.xlu0 %v8712, 16
    %v8885 = vpop.permute.xlu0 %8884
    %8886 = vrot.lane.b32.xlu0 %v8713, 16
    %v8887 = vpop.permute.xlu0 %8886
    %8888 = vrot.lane.b32.xlu0 %v8714, 16
    %v8889 = vpop.permute.xlu0 %8888
    %8890 = vrot.lane.b32.xlu0 %v8715, 16
    %v8891 = vpop.permute.xlu0 %8890
    %8892 = vrot.lane.b32.xlu0 %v8716, 16
    %v8893 = vpop.permute.xlu0 %8892
    %8894 = vrot.lane.b32.xlu0 %v8717, 16
    %v8895 = vpop.permute.xlu0 %8894
    %8896 = vrot.lane.b32.xlu0 %v8718, 16
    %v8897 = vpop.permute.xlu0 %8896
    %8898 = vrot.lane.b32.xlu0 %v8719, 16
    %v8899 = vpop.permute.xlu0 %8898
    %8960 = vst.msk [vmem:[%s4237] sm:$0xff] %vm4960, %v8781
    %8961 = vst.msk [vmem:[%s4237 + $0x8] sm:$0x7f] %vm4962, %v8783
    %8962 = vst.msk [vmem:[%s4237 + $0x10] sm:$0xff] %vm4960, %v8785
    %8963 = vst.msk [vmem:[%s4237 + $0x18] sm:$0x7f] %vm4962, %v8787
    %8964 = vst.msk [vmem:[%s4237 + $0x20] sm:$0xff] %vm4960, %v8789
    %8965 = vst.msk [vmem:[%s4237 + $0x28] sm:$0x7f] %vm4962, %v8791
    %8966 = vst.msk [vmem:[%s4237 + $0x30] sm:$0xff] %vm4960, %v8793
    %8967 = vst.msk [vmem:[%s4237 + $0x38] sm:$0x7f] %vm4962, %v8795
    %8968 = vst.msk [vmem:[%s4237 + $0x40] sm:$0xff] %vm4960, %v8797
    %8969 = vst.msk [vmem:[%s4237 + $0x48] sm:$0x7f] %vm4962, %v8799
    %8970 = vst.msk [vmem:[%s4237 + $0x50] sm:$0xff] %vm4960, %v8801
    %8971 = vst.msk [vmem:[%s4237 + $0x58] sm:$0x7f] %vm4962, %v8803
    %8972 = vst.msk [vmem:[%s4237 + $0x60] sm:$0xff] %vm4960, %v8805
    %8973 = vst.msk [vmem:[%s4237 + $0x68] sm:$0x7f] %vm4962, %v8807
    %8974 = vst.msk [vmem:[%s4237 + $0x70] sm:$0xff] %vm4960, %v8809
    %8975 = vst.msk [vmem:[%s4237 + $0x78] sm:$0x7f] %vm4962, %v8811
    %8976 = vst.msk [vmem:[%s4237 + $0x80] sm:$0xff] %vm4960, %v8813
    %8977 = vst.msk [vmem:[%s4237 + $0x88] sm:$0x7f] %vm4962, %v8815
    %8978 = vst.msk [vmem:[%s4237 + $0x90] sm:$0xff] %vm4960, %v8817
    %8979 = vst.msk [vmem:[%s4237 + $0x98] sm:$0x7f] %vm4962, %v8819
    %8980 = vst.msk [vmem:[%s4237 + $0xa0] sm:$0xff] %vm4960, %v8821
    %8981 = vst.msk [vmem:[%s4237 + $0xa8] sm:$0x7f] %vm4962, %v8823
    %8982 = vst.msk [vmem:[%s4237 + $0xb0] sm:$0xff] %vm4960, %v8825
    %8983 = vst.msk [vmem:[%s4237 + $0xb8] sm:$0x7f] %vm4962, %v8827
    %8984 = vst.msk [vmem:[%s4237 + $0xc0] sm:$0xff] %vm4960, %v8829
    %8985 = vst.msk [vmem:[%s4237 + $0xc8] sm:$0x7f] %vm4962, %v8831
    %8986 = vst.msk [vmem:[%s4237 + $0xd0] sm:$0xff] %vm4960, %v8833
    %8987 = vst.msk [vmem:[%s4237 + $0xd8] sm:$0x7f] %vm4962, %v8835
    %8988 = vst.msk [vmem:[%s4237 + $0xe0] sm:$0xff] %vm4960, %v8837
    %8989 = vst.msk [vmem:[%s4237 + $0xe8] sm:$0x7f] %vm4962, %v8839
    %8990 = vst.msk [vmem:[%s4237 + $0x100] sm:$0xff] %vm4960, %v8841
    %8991 = vst.msk [vmem:[%s4237 + $0x108] sm:$0x7f] %vm4962, %v8843
    %8992 = vst.msk [vmem:[%s4237 + $0x110] sm:$0xff] %vm4960, %v8845
    %8993 = vst.msk [vmem:[%s4237 + $0x118] sm:$0x7f] %vm4962, %v8847
    %8994 = vst.msk [vmem:[%s4237 + $0x120] sm:$0xff] %vm4960, %v8849
    %8995 = vst.msk [vmem:[%s4237 + $0x128] sm:$0x7f] %vm4962, %v8851
    %8996 = vst.msk [vmem:[%s4237 + $0x130] sm:$0xff] %vm4960, %v8853
    %8997 = vst.msk [vmem:[%s4237 + $0x138] sm:$0x7f] %vm4962, %v8855
    %8998 = vst.msk [vmem:[%s4237 + $0x140] sm:$0xff] %vm4960, %v8857
    %8999 = vst.msk [vmem:[%s4237 + $0x148] sm:$0x7f] %vm4962, %v8859
    %9000 = vst.msk [vmem:[%s4237 + $0x150] sm:$0xff] %vm4960, %v8861
    %9001 = vst.msk [vmem:[%s4237 + $0x158] sm:$0x7f] %vm4962, %v8863
    %9002 = vst.msk [vmem:[%s4237 + $0x160] sm:$0xff] %vm4960, %v8865
    %9003 = vst.msk [vmem:[%s4237 + $0x168] sm:$0x7f] %vm4962, %v8867
    %9004 = vst.msk [vmem:[%s4237 + $0x170] sm:$0xff] %vm4960, %v8869
    %9005 = vst.msk [vmem:[%s4237 + $0x178] sm:$0x7f] %vm4962, %v8871
    %9006 = vst.msk [vmem:[%s4237 + $0x180] sm:$0xff] %vm4960, %v8873
    %9007 = vst.msk [vmem:[%s4237 + $0x188] sm:$0x7f] %vm4962, %v8875
    %9008 = vst.msk [vmem:[%s4237 + $0x190] sm:$0xff] %vm4960, %v8877
    %9009 = vst.msk [vmem:[%s4237 + $0x198] sm:$0x7f] %vm4962, %v8879
    %9010 = vst.msk [vmem:[%s4237 + $0x1a0] sm:$0xff] %vm4960, %v8881
    %9011 = vst.msk [vmem:[%s4237 + $0x1a8] sm:$0x7f] %vm4962, %v8883
    %9012 = vst.msk [vmem:[%s4237 + $0x1b0] sm:$0xff] %vm4960, %v8885
    %9013 = vst.msk [vmem:[%s4237 + $0x1b8] sm:$0x7f] %vm4962, %v8887
    %9014 = vst.msk [vmem:[%s4237 + $0x1c0] sm:$0xff] %vm4960, %v8889
    %9015 = vst.msk [vmem:[%s4237 + $0x1c8] sm:$0x7f] %vm4962, %v8891
    %9016 = vst.msk [vmem:[%s4237 + $0x1d0] sm:$0xff] %vm4960, %v8893
    %9017 = vst.msk [vmem:[%s4237 + $0x1d8] sm:$0x7f] %vm4962, %v8895
    %9018 = vst.msk [vmem:[%s4237 + $0x1e0] sm:$0xff] %vm4960, %v8897
    %9019 = vst.msk [vmem:[%s4237 + $0x1e8] sm:$0x7f] %vm4962, %v8899
    %v9020 = vld [vmem:[#allocation4] sm:$0xff]
    %v9021 = vld [vmem:[#allocation4 + $0x8] sm:$0x7f]
    %v9022 = vld [vmem:[#allocation4 + $0x10] sm:$0xff]
    %v9023 = vld [vmem:[#allocation4 + $0x18] sm:$0x7f]
    %v9024 = vld [vmem:[#allocation4 + $0x20] sm:$0xff]
    %v9025 = vld [vmem:[#allocation4 + $0x28] sm:$0x7f]
    %v9026 = vld [vmem:[#allocation4 + $0x30] sm:$0xff]
    %v9027 = vld [vmem:[#allocation4 + $0x38] sm:$0x7f]
    %v9028 = vld [vmem:[#allocation4 + $0x40] sm:$0xff]
    %v9029 = vld [vmem:[#allocation4 + $0x48] sm:$0x7f]
    %v9030 = vld [vmem:[#allocation4 + $0x50] sm:$0xff]
    %v9031 = vld [vmem:[#allocation4 + $0x58] sm:$0x7f]
    %v9032 = vld [vmem:[#allocation4 + $0x60] sm:$0xff]
    %v9033 = vld [vmem:[#allocation4 + $0x68] sm:$0x7f]
    %v9034 = vld [vmem:[#allocation4 + $0x70] sm:$0xff]
    %v9035 = vld [vmem:[#allocation4 + $0x78] sm:$0x7f]
    %v9036 = vld [vmem:[#allocation4 + $0x80] sm:$0xff]
    %v9037 = vld [vmem:[#allocation4 + $0x88] sm:$0x7f]
    %v9038 = vld [vmem:[#allocation4 + $0x90] sm:$0xff]
    %v9039 = vld [vmem:[#allocation4 + $0x98] sm:$0x7f]
    %v9040 = vld [vmem:[#allocation4 + $0xa0] sm:$0xff]
    %v9041 = vld [vmem:[#allocation4 + $0xa8] sm:$0x7f]
    %v9042 = vld [vmem:[#allocation4 + $0xb0] sm:$0xff]
    %v9043 = vld [vmem:[#allocation4 + $0xb8] sm:$0x7f]
    %v9044 = vld [vmem:[#allocation4 + $0xc0] sm:$0xff]
    %v9045 = vld [vmem:[#allocation4 + $0xc8] sm:$0x7f]
    %v9046 = vld [vmem:[#allocation4 + $0xd0] sm:$0xff]
    %v9047 = vld [vmem:[#allocation4 + $0xd8] sm:$0x7f]
    %v9048 = vld [vmem:[#allocation4 + $0xe0] sm:$0xff]
    %v9049 = vld [vmem:[#allocation4 + $0xe8] sm:$0x7f]
    %v9050 = vld [vmem:[#allocation4 + $0xf0] sm:$0xff]
    %v9051 = vld [vmem:[#allocation4 + $0xf8] sm:$0x7f]
    %v9052 = vld [vmem:[#allocation4 + $0x100] sm:$0xff]
    %v9053 = vld [vmem:[#allocation4 + $0x108] sm:$0x7f]
    %v9054 = vld [vmem:[#allocation4 + $0x110] sm:$0xff]
    %v9055 = vld [vmem:[#allocation4 + $0x118] sm:$0x7f]
    %v9056 = vld [vmem:[#allocation4 + $0x120] sm:$0xff]
    %v9057 = vld [vmem:[#allocation4 + $0x128] sm:$0x7f]
    %v9058 = vld [vmem:[#allocation4 + $0x130] sm:$0xff]
    %v9059 = vld [vmem:[#allocation4 + $0x138] sm:$0x7f]
    %v9060 = vld [vmem:[#allocation4 + $0x140] sm:$0xff]
    %v9061 = vld [vmem:[#allocation4 + $0x148] sm:$0x7f]
    %v9062 = vld [vmem:[#allocation4 + $0x150] sm:$0xff]
    %v9063 = vld [vmem:[#allocation4 + $0x158] sm:$0x7f]
    %v9064 = vld [vmem:[#allocation4 + $0x160] sm:$0xff]
    %v9065 = vld [vmem:[#allocation4 + $0x168] sm:$0x7f]
    %v9066 = vld [vmem:[#allocation4 + $0x170] sm:$0xff]
    %v9067 = vld [vmem:[#allocation4 + $0x178] sm:$0x7f]
    %v9068 = vld [vmem:[#allocation4 + $0x180] sm:$0xff]
    %v9069 = vld [vmem:[#allocation4 + $0x188] sm:$0x7f]
    %v9070 = vld [vmem:[#allocation4 + $0x190] sm:$0xff]
    %v9071 = vld [vmem:[#allocation4 + $0x198] sm:$0x7f]
    %v9072 = vld [vmem:[#allocation4 + $0x1a0] sm:$0xff]
    %v9073 = vld [vmem:[#allocation4 + $0x1a8] sm:$0x7f]
    %v9074 = vld [vmem:[#allocation4 + $0x1b0] sm:$0xff]
    %v9075 = vld [vmem:[#allocation4 + $0x1b8] sm:$0x7f]
    %v9076 = vld [vmem:[#allocation4 + $0x1c0] sm:$0xff]
    %v9077 = vld [vmem:[#allocation4 + $0x1c8] sm:$0x7f]
    %v9078 = vld [vmem:[#allocation4 + $0x1d0] sm:$0xff]
    %v9079 = vld [vmem:[#allocation4 + $0x1d8] sm:$0x7f]
    %v9080 = vld [vmem:[#allocation4 + $0x1e0] sm:$0xff]
    %v9081 = vld [vmem:[#allocation4 + $0x1e8] sm:$0x7f]
    %v9082 = vld [vmem:[#allocation4 + $0x1f0] sm:$0xff]
    %v9083 = vld [vmem:[#allocation4 + $0x1f8] sm:$0x7f]
    %9148 = vrot.lane.b32.xlu0 %v9020, 24
    %v9149 = vpop.permute.xlu0 %9148
    %9150 = vrot.lane.b32.xlu0 %v9021, 24
    %v9151 = vpop.permute.xlu0 %9150
    %9152 = vrot.lane.b32.xlu0 %v9022, 24
    %v9153 = vpop.permute.xlu0 %9152
    %9154 = vrot.lane.b32.xlu0 %v9023, 24
    %v9155 = vpop.permute.xlu0 %9154
    %9156 = vrot.lane.b32.xlu0 %v9024, 24
    %v9157 = vpop.permute.xlu0 %9156
    %9158 = vrot.lane.b32.xlu0 %v9025, 24
    %v9159 = vpop.permute.xlu0 %9158
    %9160 = vrot.lane.b32.xlu0 %v9026, 24
    %v9161 = vpop.permute.xlu0 %9160
    %9162 = vrot.lane.b32.xlu0 %v9027, 24
    %v9163 = vpop.permute.xlu0 %9162
    %9164 = vrot.lane.b32.xlu0 %v9028, 24
    %v9165 = vpop.permute.xlu0 %9164
    %9166 = vrot.lane.b32.xlu0 %v9029, 24
    %v9167 = vpop.permute.xlu0 %9166
    %9168 = vrot.lane.b32.xlu0 %v9030, 24
    %v9169 = vpop.permute.xlu0 %9168
    %9170 = vrot.lane.b32.xlu0 %v9031, 24
    %v9171 = vpop.permute.xlu0 %9170
    %9172 = vrot.lane.b32.xlu0 %v9032, 24
    %v9173 = vpop.permute.xlu0 %9172
    %9174 = vrot.lane.b32.xlu0 %v9033, 24
    %v9175 = vpop.permute.xlu0 %9174
    %9176 = vrot.lane.b32.xlu0 %v9034, 24
    %v9177 = vpop.permute.xlu0 %9176
    %9178 = vrot.lane.b32.xlu0 %v9035, 24
    %v9179 = vpop.permute.xlu0 %9178
    %9180 = vrot.lane.b32.xlu0 %v9036, 24
    %v9181 = vpop.permute.xlu0 %9180
    %9182 = vrot.lane.b32.xlu0 %v9037, 24
    %v9183 = vpop.permute.xlu0 %9182
    %9184 = vrot.lane.b32.xlu0 %v9038, 24
    %v9185 = vpop.permute.xlu0 %9184
    %9186 = vrot.lane.b32.xlu0 %v9039, 24
    %v9187 = vpop.permute.xlu0 %9186
    %9188 = vrot.lane.b32.xlu0 %v9040, 24
    %v9189 = vpop.permute.xlu0 %9188
    %9190 = vrot.lane.b32.xlu0 %v9041, 24
    %v9191 = vpop.permute.xlu0 %9190
    %9192 = vrot.lane.b32.xlu0 %v9042, 24
    %v9193 = vpop.permute.xlu0 %9192
    %9194 = vrot.lane.b32.xlu0 %v9043, 24
    %v9195 = vpop.permute.xlu0 %9194
    %9196 = vrot.lane.b32.xlu0 %v9044, 24
    %v9197 = vpop.permute.xlu0 %9196
    %9198 = vrot.lane.b32.xlu0 %v9045, 24
    %v9199 = vpop.permute.xlu0 %9198
    %9200 = vrot.lane.b32.xlu0 %v9046, 24
    %v9201 = vpop.permute.xlu0 %9200
    %9202 = vrot.lane.b32.xlu0 %v9047, 24
    %v9203 = vpop.permute.xlu0 %9202
    %9204 = vrot.lane.b32.xlu0 %v9048, 24
    %v9205 = vpop.permute.xlu0 %9204
    %9206 = vrot.lane.b32.xlu0 %v9049, 24
    %v9207 = vpop.permute.xlu0 %9206
    %9208 = vrot.lane.b32.xlu0 %v9050, 24
    %v9209 = vpop.permute.xlu0 %9208
    %9210 = vrot.lane.b32.xlu0 %v9051, 24
    %v9211 = vpop.permute.xlu0 %9210
    %9212 = vrot.lane.b32.xlu0 %v9052, 24
    %v9213 = vpop.permute.xlu0 %9212
    %9214 = vrot.lane.b32.xlu0 %v9053, 24
    %v9215 = vpop.permute.xlu0 %9214
    %9216 = vrot.lane.b32.xlu0 %v9054, 24
    %v9217 = vpop.permute.xlu0 %9216
    %9218 = vrot.lane.b32.xlu0 %v9055, 24
    %v9219 = vpop.permute.xlu0 %9218
    %9220 = vrot.lane.b32.xlu0 %v9056, 24
    %v9221 = vpop.permute.xlu0 %9220
    %9222 = vrot.lane.b32.xlu0 %v9057, 24
    %v9223 = vpop.permute.xlu0 %9222
    %9224 = vrot.lane.b32.xlu0 %v9058, 24
    %v9225 = vpop.permute.xlu0 %9224
    %9226 = vrot.lane.b32.xlu0 %v9059, 24
    %v9227 = vpop.permute.xlu0 %9226
    %9228 = vrot.lane.b32.xlu0 %v9060, 24
    %v9229 = vpop.permute.xlu0 %9228
    %9230 = vrot.lane.b32.xlu0 %v9061, 24
    %v9231 = vpop.permute.xlu0 %9230
    %9232 = vrot.lane.b32.xlu0 %v9062, 24
    %v9233 = vpop.permute.xlu0 %9232
    %9234 = vrot.lane.b32.xlu0 %v9063, 24
    %v9235 = vpop.permute.xlu0 %9234
    %9236 = vrot.lane.b32.xlu0 %v9064, 24
    %v9237 = vpop.permute.xlu0 %9236
    %9238 = vrot.lane.b32.xlu0 %v9065, 24
    %v9239 = vpop.permute.xlu0 %9238
    %9240 = vrot.lane.b32.xlu0 %v9066, 24
    %v9241 = vpop.permute.xlu0 %9240
    %9242 = vrot.lane.b32.xlu0 %v9067, 24
    %v9243 = vpop.permute.xlu0 %9242
    %9244 = vrot.lane.b32.xlu0 %v9068, 24
    %v9245 = vpop.permute.xlu0 %9244
    %9246 = vrot.lane.b32.xlu0 %v9069, 24
    %v9247 = vpop.permute.xlu0 %9246
    %9248 = vrot.lane.b32.xlu0 %v9070, 24
    %v9249 = vpop.permute.xlu0 %9248
    %9250 = vrot.lane.b32.xlu0 %v9071, 24
    %v9251 = vpop.permute.xlu0 %9250
    %9252 = vrot.lane.b32.xlu0 %v9072, 24
    %v9253 = vpop.permute.xlu0 %9252
    %9254 = vrot.lane.b32.xlu0 %v9073, 24
    %v9255 = vpop.permute.xlu0 %9254
    %9256 = vrot.lane.b32.xlu0 %v9074, 24
    %v9257 = vpop.permute.xlu0 %9256
    %9258 = vrot.lane.b32.xlu0 %v9075, 24
    %v9259 = vpop.permute.xlu0 %9258
    %9260 = vrot.lane.b32.xlu0 %v9076, 24
    %v9261 = vpop.permute.xlu0 %9260
    %9262 = vrot.lane.b32.xlu0 %v9077, 24
    %v9263 = vpop.permute.xlu0 %9262
    %9264 = vrot.lane.b32.xlu0 %v9078, 24
    %v9265 = vpop.permute.xlu0 %9264
    %9266 = vrot.lane.b32.xlu0 %v9079, 24
    %v9267 = vpop.permute.xlu0 %9266
    %9268 = vrot.lane.b32.xlu0 %v9080, 24
    %v9269 = vpop.permute.xlu0 %9268
    %9270 = vrot.lane.b32.xlu0 %v9081, 24
    %v9271 = vpop.permute.xlu0 %9270
    %9272 = vrot.lane.b32.xlu0 %v9082, 24
    %v9273 = vpop.permute.xlu0 %9272
    %9274 = vrot.lane.b32.xlu0 %v9083, 24
    %v9275 = vpop.permute.xlu0 %9274
    %9340 = vst.msk [vmem:[#allocation3 + $0x1] sm:$0xff] %vm5342, %v9149
    %9341 = vst.msk [vmem:[#allocation3 + $0x9] sm:$0x7f] %vm5344, %v9151
    %9342 = vst.msk [vmem:[#allocation3 + $0x11] sm:$0xff] %vm5342, %v9153
    %9343 = vst.msk [vmem:[#allocation3 + $0x19] sm:$0x7f] %vm5344, %v9155
    %9344 = vst.msk [vmem:[#allocation3 + $0x21] sm:$0xff] %vm5342, %v9157
    %9345 = vst.msk [vmem:[#allocation3 + $0x29] sm:$0x7f] %vm5344, %v9159
    %9346 = vst.msk [vmem:[#allocation3 + $0x31] sm:$0xff] %vm5342, %v9161
    %9347 = vst.msk [vmem:[#allocation3 + $0x39] sm:$0x7f] %vm5344, %v9163
    %9348 = vst.msk [vmem:[#allocation3 + $0x41] sm:$0xff] %vm5342, %v9165
    %9349 = vst.msk [vmem:[#allocation3 + $0x49] sm:$0x7f] %vm5344, %v9167
    %9350 = vst.msk [vmem:[#allocation3 + $0x51] sm:$0xff] %vm5342, %v9169
    %9351 = vst.msk [vmem:[#allocation3 + $0x59] sm:$0x7f] %vm5344, %v9171
    %9352 = vst.msk [vmem:[#allocation3 + $0x61] sm:$0xff] %vm5342, %v9173
    %9353 = vst.msk [vmem:[#allocation3 + $0x69] sm:$0x7f] %vm5344, %v9175
    %9354 = vst.msk [vmem:[#allocation3 + $0x71] sm:$0xff] %vm5342, %v9177
    %9355 = vst.msk [vmem:[#allocation3 + $0x79] sm:$0x7f] %vm5344, %v9179
    %9356 = vst.msk [vmem:[#allocation3 + $0x81] sm:$0xff] %vm5342, %v9181
    %9357 = vst.msk [vmem:[#allocation3 + $0x89] sm:$0x7f] %vm5344, %v9183
    %9358 = vst.msk [vmem:[#allocation3 + $0x91] sm:$0xff] %vm5342, %v9185
    %9359 = vst.msk [vmem:[#allocation3 + $0x99] sm:$0x7f] %vm5344, %v9187
    %9360 = vst.msk [vmem:[#allocation3 + $0xa1] sm:$0xff] %vm5342, %v9189
    %9361 = vst.msk [vmem:[#allocation3 + $0xa9] sm:$0x7f] %vm5344, %v9191
    %9362 = vst.msk [vmem:[#allocation3 + $0xb1] sm:$0xff] %vm5342, %v9193
    %9363 = vst.msk [vmem:[#allocation3 + $0xb9] sm:$0x7f] %vm5344, %v9195
    %9364 = vst.msk [vmem:[#allocation3 + $0xc1] sm:$0xff] %vm5342, %v9197
    %9365 = vst.msk [vmem:[#allocation3 + $0xc9] sm:$0x7f] %vm5344, %v9199
    %9366 = vst.msk [vmem:[#allocation3 + $0xd1] sm:$0xff] %vm5342, %v9201
    %9367 = vst.msk [vmem:[#allocation3 + $0xd9] sm:$0x7f] %vm5344, %v9203
    %9368 = vst.msk [vmem:[#allocation3 + $0xe1] sm:$0xff] %vm5342, %v9205
    %9369 = vst.msk [vmem:[#allocation3 + $0xe9] sm:$0x7f] %vm5344, %v9207
    %9370 = vst.msk [vmem:[#allocation3 + $0xf1] sm:$0xff] %vm5342, %v9209
    %9371 = vst.msk [vmem:[#allocation3 + $0xf9] sm:$0x7f] %vm5344, %v9211
    %9372 = vst.msk [vmem:[#allocation3 + $0x101] sm:$0xff] %vm5342, %v9213
    %9373 = vst.msk [vmem:[#allocation3 + $0x109] sm:$0x7f] %vm5344, %v9215
    %9374 = vst.msk [vmem:[#allocation3 + $0x111] sm:$0xff] %vm5342, %v9217
    %9375 = vst.msk [vmem:[#allocation3 + $0x119] sm:$0x7f] %vm5344, %v9219
    %9376 = vst.msk [vmem:[#allocation3 + $0x121] sm:$0xff] %vm5342, %v9221
    %9377 = vst.msk [vmem:[#allocation3 + $0x129] sm:$0x7f] %vm5344, %v9223
    %9378 = vst.msk [vmem:[#allocation3 + $0x131] sm:$0xff] %vm5342, %v9225
    %9379 = vst.msk [vmem:[#allocation3 + $0x139] sm:$0x7f] %vm5344, %v9227
    %9380 = vst.msk [vmem:[#allocation3 + $0x141] sm:$0xff] %vm5342, %v9229
    %9381 = vst.msk [vmem:[#allocation3 + $0x149] sm:$0x7f] %vm5344, %v9231
    %9382 = vst.msk [vmem:[#allocation3 + $0x151] sm:$0xff] %vm5342, %v9233
    %9383 = vst.msk [vmem:[#allocation3 + $0x159] sm:$0x7f] %vm5344, %v9235
    %9384 = vst.msk [vmem:[#allocation3 + $0x161] sm:$0xff] %vm5342, %v9237
    %9385 = vst.msk [vmem:[#allocation3 + $0x169] sm:$0x7f] %vm5344, %v9239
    %9386 = vst.msk [vmem:[#allocation3 + $0x171] sm:$0xff] %vm5342, %v9241
    %9387 = vst.msk [vmem:[#allocation3 + $0x179] sm:$0x7f] %vm5344, %v9243
    %9388 = vst.msk [vmem:[#allocation3 + $0x181] sm:$0xff] %vm5342, %v9245
    %9389 = vst.msk [vmem:[#allocation3 + $0x189] sm:$0x7f] %vm5344, %v9247
    %9390 = vst.msk [vmem:[#allocation3 + $0x191] sm:$0xff] %vm5342, %v9249
    %9391 = vst.msk [vmem:[#allocation3 + $0x199] sm:$0x7f] %vm5344, %v9251
    %9392 = vst.msk [vmem:[#allocation3 + $0x1a1] sm:$0xff] %vm5342, %v9253
    %9393 = vst.msk [vmem:[#allocation3 + $0x1a9] sm:$0x7f] %vm5344, %v9255
    %9394 = vst.msk [vmem:[#allocation3 + $0x1b1] sm:$0xff] %vm5342, %v9257
    %9395 = vst.msk [vmem:[#allocation3 + $0x1b9] sm:$0x7f] %vm5344, %v9259
    %9396 = vst.msk [vmem:[#allocation3 + $0x1c1] sm:$0xff] %vm5342, %v9261
    %9397 = vst.msk [vmem:[#allocation3 + $0x1c9] sm:$0x7f] %vm5344, %v9263
    %9398 = vst.msk [vmem:[#allocation3 + $0x1d1] sm:$0xff] %vm5342, %v9265
    %9399 = vst.msk [vmem:[#allocation3 + $0x1d9] sm:$0x7f] %vm5344, %v9267
    %9400 = vst.msk [vmem:[#allocation3 + $0x1e1] sm:$0xff] %vm5342, %v9269
    %9401 = vst.msk [vmem:[#allocation3 + $0x1e9] sm:$0x7f] %vm5344, %v9271
    %9402 = vst.msk [vmem:[#allocation3 + $0x1f1] sm:$0xff] %vm5342, %v9273
    %9403 = vst.msk [vmem:[#allocation3 + $0x1f9] sm:$0x7f] %vm5344, %v9275
    %v9404 = vld [vmem:[#allocation4] sm:$0xff]
    %v9405 = vld [vmem:[#allocation4 + $0x8] sm:$0xff]
    %v9406 = vld [vmem:[#allocation4 + $0x10] sm:$0xff]
    %v9407 = vld [vmem:[#allocation4 + $0x18] sm:$0xff]
    %v9408 = vld [vmem:[#allocation4 + $0x20] sm:$0xff]
    %v9409 = vld [vmem:[#allocation4 + $0x28] sm:$0xff]
    %v9410 = vld [vmem:[#allocation4 + $0x30] sm:$0xff]
    %v9411 = vld [vmem:[#allocation4 + $0x38] sm:$0xff]
    %v9412 = vld [vmem:[#allocation4 + $0x40] sm:$0xff]
    %v9413 = vld [vmem:[#allocation4 + $0x48] sm:$0xff]
    %v9414 = vld [vmem:[#allocation4 + $0x50] sm:$0xff]
    %v9415 = vld [vmem:[#allocation4 + $0x58] sm:$0xff]
    %v9416 = vld [vmem:[#allocation4 + $0x60] sm:$0xff]
    %v9417 = vld [vmem:[#allocation4 + $0x68] sm:$0xff]
    %v9418 = vld [vmem:[#allocation4 + $0x70] sm:$0xff]
    %v9419 = vld [vmem:[#allocation4 + $0x78] sm:$0xff]
    %v9420 = vld [vmem:[#allocation4 + $0x80] sm:$0xff]
    %v9421 = vld [vmem:[#allocation4 + $0x88] sm:$0xff]
    %v9422 = vld [vmem:[#allocation4 + $0x90] sm:$0xff]
    %v9423 = vld [vmem:[#allocation4 + $0x98] sm:$0xff]
    %v9424 = vld [vmem:[#allocation4 + $0xa0] sm:$0xff]
    %v9425 = vld [vmem:[#allocation4 + $0xa8] sm:$0xff]
    %v9426 = vld [vmem:[#allocation4 + $0xb0] sm:$0xff]
    %v9427 = vld [vmem:[#allocation4 + $0xb8] sm:$0xff]
    %v9428 = vld [vmem:[#allocation4 + $0xc0] sm:$0xff]
    %v9429 = vld [vmem:[#allocation4 + $0xc8] sm:$0xff]
    %v9430 = vld [vmem:[#allocation4 + $0xd0] sm:$0xff]
    %v9431 = vld [vmem:[#allocation4 + $0xd8] sm:$0xff]
    %v9432 = vld [vmem:[#allocation4 + $0xe0] sm:$0xff]
    %v9433 = vld [vmem:[#allocation4 + $0xe8] sm:$0xff]
    %v9434 = vld [vmem:[#allocation4 + $0xf0] sm:$0xff]
    %v9435 = vld [vmem:[#allocation4 + $0xf8] sm:$0xff]
    %v9436 = vld [vmem:[#allocation4 + $0x100] sm:$0xff]
    %v9437 = vld [vmem:[#allocation4 + $0x108] sm:$0xff]
    %v9438 = vld [vmem:[#allocation4 + $0x110] sm:$0xff]
    %v9439 = vld [vmem:[#allocation4 + $0x118] sm:$0xff]
    %v9440 = vld [vmem:[#allocation4 + $0x120] sm:$0xff]
    %v9441 = vld [vmem:[#allocation4 + $0x128] sm:$0xff]
    %v9442 = vld [vmem:[#allocation4 + $0x130] sm:$0xff]
    %v9443 = vld [vmem:[#allocation4 + $0x138] sm:$0xff]
    %v9444 = vld [vmem:[#allocation4 + $0x140] sm:$0xff]
    %v9445 = vld [vmem:[#allocation4 + $0x148] sm:$0xff]
    %v9446 = vld [vmem:[#allocation4 + $0x150] sm:$0xff]
    %v9447 = vld [vmem:[#allocation4 + $0x158] sm:$0xff]
    %v9448 = vld [vmem:[#allocation4 + $0x160] sm:$0xff]
    %v9449 = vld [vmem:[#allocation4 + $0x168] sm:$0xff]
    %v9450 = vld [vmem:[#allocation4 + $0x170] sm:$0xff]
    %v9451 = vld [vmem:[#allocation4 + $0x178] sm:$0xff]
    %v9452 = vld [vmem:[#allocation4 + $0x180] sm:$0xff]
    %v9453 = vld [vmem:[#allocation4 + $0x188] sm:$0xff]
    %v9454 = vld [vmem:[#allocation4 + $0x190] sm:$0xff]
    %v9455 = vld [vmem:[#allocation4 + $0x198] sm:$0xff]
    %v9456 = vld [vmem:[#allocation4 + $0x1a0] sm:$0xff]
    %v9457 = vld [vmem:[#allocation4 + $0x1a8] sm:$0xff]
    %v9458 = vld [vmem:[#allocation4 + $0x1b0] sm:$0xff]
    %v9459 = vld [vmem:[#allocation4 + $0x1b8] sm:$0xff]
    %v9460 = vld [vmem:[#allocation4 + $0x1c0] sm:$0xff]
    %v9461 = vld [vmem:[#allocation4 + $0x1c8] sm:$0xff]
    %v9462 = vld [vmem:[#allocation4 + $0x1d0] sm:$0xff]
    %v9463 = vld [vmem:[#allocation4 + $0x1d8] sm:$0xff]
    %v9464 = vld [vmem:[#allocation4 + $0x1e0] sm:$0xff]
    %v9465 = vld [vmem:[#allocation4 + $0x1e8] sm:$0xff]
    %v9466 = vld [vmem:[#allocation4 + $0x1f0] sm:$0xff]
    %v9467 = vld [vmem:[#allocation4 + $0x1f8] sm:$0xff]
    %9532 = vrot.lane.b32.xlu0 %v9404, 32
    %v9533 = vpop.permute.xlu0 %9532
    %9534 = vrot.lane.b32.xlu0 %v9405, 32
    %v9535 = vpop.permute.xlu0 %9534
    %9536 = vrot.lane.b32.xlu0 %v9406, 32
    %v9537 = vpop.permute.xlu0 %9536
    %9538 = vrot.lane.b32.xlu0 %v9407, 32
    %v9539 = vpop.permute.xlu0 %9538
    %9540 = vrot.lane.b32.xlu0 %v9408, 32
    %v9541 = vpop.permute.xlu0 %9540
    %9542 = vrot.lane.b32.xlu0 %v9409, 32
    %v9543 = vpop.permute.xlu0 %9542
    %9544 = vrot.lane.b32.xlu0 %v9410, 32
    %v9545 = vpop.permute.xlu0 %9544
    %9546 = vrot.lane.b32.xlu0 %v9411, 32
    %v9547 = vpop.permute.xlu0 %9546
    %9548 = vrot.lane.b32.xlu0 %v9412, 32
    %v9549 = vpop.permute.xlu0 %9548
    %9550 = vrot.lane.b32.xlu0 %v9413, 32
    %v9551 = vpop.permute.xlu0 %9550
    %9552 = vrot.lane.b32.xlu0 %v9414, 32
    %v9553 = vpop.permute.xlu0 %9552
    %9554 = vrot.lane.b32.xlu0 %v9415, 32
    %v9555 = vpop.permute.xlu0 %9554
    %9556 = vrot.lane.b32.xlu0 %v9416, 32
    %v9557 = vpop.permute.xlu0 %9556
    %9558 = vrot.lane.b32.xlu0 %v9417, 32
    %v9559 = vpop.permute.xlu0 %9558
    %9560 = vrot.lane.b32.xlu0 %v9418, 32
    %v9561 = vpop.permute.xlu0 %9560
    %9562 = vrot.lane.b32.xlu0 %v9419, 32
    %v9563 = vpop.permute.xlu0 %9562
    %9564 = vrot.lane.b32.xlu0 %v9420, 32
    %v9565 = vpop.permute.xlu0 %9564
    %9566 = vrot.lane.b32.xlu0 %v9421, 32
    %v9567 = vpop.permute.xlu0 %9566
    %9568 = vrot.lane.b32.xlu0 %v9422, 32
    %v9569 = vpop.permute.xlu0 %9568
    %9570 = vrot.lane.b32.xlu0 %v9423, 32
    %v9571 = vpop.permute.xlu0 %9570
    %9572 = vrot.lane.b32.xlu0 %v9424, 32
    %v9573 = vpop.permute.xlu0 %9572
    %9574 = vrot.lane.b32.xlu0 %v9425, 32
    %v9575 = vpop.permute.xlu0 %9574
    %9576 = vrot.lane.b32.xlu0 %v9426, 32
    %v9577 = vpop.permute.xlu0 %9576
    %9578 = vrot.lane.b32.xlu0 %v9427, 32
    %v9579 = vpop.permute.xlu0 %9578
    %9580 = vrot.lane.b32.xlu0 %v9428, 32
    %v9581 = vpop.permute.xlu0 %9580
    %9582 = vrot.lane.b32.xlu0 %v9429, 32
    %v9583 = vpop.permute.xlu0 %9582
    %9584 = vrot.lane.b32.xlu0 %v9430, 32
    %v9585 = vpop.permute.xlu0 %9584
    %9586 = vrot.lane.b32.xlu0 %v9431, 32
    %v9587 = vpop.permute.xlu0 %9586
    %9588 = vrot.lane.b32.xlu0 %v9432, 32
    %v9589 = vpop.permute.xlu0 %9588
    %9590 = vrot.lane.b32.xlu0 %v9433, 32
    %v9591 = vpop.permute.xlu0 %9590
    %9592 = vrot.lane.b32.xlu0 %v9434, 32
    %v9593 = vpop.permute.xlu0 %9592
    %9594 = vrot.lane.b32.xlu0 %v9435, 32
    %v9595 = vpop.permute.xlu0 %9594
    %9596 = vrot.lane.b32.xlu0 %v9436, 32
    %v9597 = vpop.permute.xlu0 %9596
    %9598 = vrot.lane.b32.xlu0 %v9437, 32
    %v9599 = vpop.permute.xlu0 %9598
    %9600 = vrot.lane.b32.xlu0 %v9438, 32
    %v9601 = vpop.permute.xlu0 %9600
    %9602 = vrot.lane.b32.xlu0 %v9439, 32
    %v9603 = vpop.permute.xlu0 %9602
    %9604 = vrot.lane.b32.xlu0 %v9440, 32
    %v9605 = vpop.permute.xlu0 %9604
    %9606 = vrot.lane.b32.xlu0 %v9441, 32
    %v9607 = vpop.permute.xlu0 %9606
    %9608 = vrot.lane.b32.xlu0 %v9442, 32
    %v9609 = vpop.permute.xlu0 %9608
    %9610 = vrot.lane.b32.xlu0 %v9443, 32
    %v9611 = vpop.permute.xlu0 %9610
    %9612 = vrot.lane.b32.xlu0 %v9444, 32
    %v9613 = vpop.permute.xlu0 %9612
    %9614 = vrot.lane.b32.xlu0 %v9445, 32
    %v9615 = vpop.permute.xlu0 %9614
    %9616 = vrot.lane.b32.xlu0 %v9446, 32
    %v9617 = vpop.permute.xlu0 %9616
    %9618 = vrot.lane.b32.xlu0 %v9447, 32
    %v9619 = vpop.permute.xlu0 %9618
    %9620 = vrot.lane.b32.xlu0 %v9448, 32
    %v9621 = vpop.permute.xlu0 %9620
    %9622 = vrot.lane.b32.xlu0 %v9449, 32
    %v9623 = vpop.permute.xlu0 %9622
    %9624 = vrot.lane.b32.xlu0 %v9450, 32
    %v9625 = vpop.permute.xlu0 %9624
    %9626 = vrot.lane.b32.xlu0 %v9451, 32
    %v9627 = vpop.permute.xlu0 %9626
    %9628 = vrot.lane.b32.xlu0 %v9452, 32
    %v9629 = vpop.permute.xlu0 %9628
    %9630 = vrot.lane.b32.xlu0 %v9453, 32
    %v9631 = vpop.permute.xlu0 %9630
    %9632 = vrot.lane.b32.xlu0 %v9454, 32
    %v9633 = vpop.permute.xlu0 %9632
    %9634 = vrot.lane.b32.xlu0 %v9455, 32
    %v9635 = vpop.permute.xlu0 %9634
    %9636 = vrot.lane.b32.xlu0 %v9456, 32
    %v9637 = vpop.permute.xlu0 %9636
    %9638 = vrot.lane.b32.xlu0 %v9457, 32
    %v9639 = vpop.permute.xlu0 %9638
    %9640 = vrot.lane.b32.xlu0 %v9458, 32
    %v9641 = vpop.permute.xlu0 %9640
    %9642 = vrot.lane.b32.xlu0 %v9459, 32
    %v9643 = vpop.permute.xlu0 %9642
    %9644 = vrot.lane.b32.xlu0 %v9460, 32
    %v9645 = vpop.permute.xlu0 %9644
    %9646 = vrot.lane.b32.xlu0 %v9461, 32
    %v9647 = vpop.permute.xlu0 %9646
    %9648 = vrot.lane.b32.xlu0 %v9462, 32
    %v9649 = vpop.permute.xlu0 %9648
    %9650 = vrot.lane.b32.xlu0 %v9463, 32
    %v9651 = vpop.permute.xlu0 %9650
    %9652 = vrot.lane.b32.xlu0 %v9464, 32
    %v9653 = vpop.permute.xlu0 %9652
    %9654 = vrot.lane.b32.xlu0 %v9465, 32
    %v9655 = vpop.permute.xlu0 %9654
    %9656 = vrot.lane.b32.xlu0 %v9466, 32
    %v9657 = vpop.permute.xlu0 %9656
    %9658 = vrot.lane.b32.xlu0 %v9467, 32
    %v9659 = vpop.permute.xlu0 %9658
    %9724 = vst.msk [vmem:[#allocation3] sm:$0xff] %vm5728, %v9533
    %9725 = vst.msk [vmem:[#allocation3 + $0x8] sm:$0xff] %vm5728, %v9535
    %9726 = vst.msk [vmem:[#allocation3 + $0x10] sm:$0xff] %vm5728, %v9537
    %9727 = vst.msk [vmem:[#allocation3 + $0x18] sm:$0xff] %vm5728, %v9539
    %9728 = vst.msk [vmem:[#allocation3 + $0x20] sm:$0xff] %vm5728, %v9541
    %9729 = vst.msk [vmem:[#allocation3 + $0x28] sm:$0xff] %vm5728, %v9543
    %9730 = vst.msk [vmem:[#allocation3 + $0x30] sm:$0xff] %vm5728, %v9545
    %9731 = vst.msk [vmem:[#allocation3 + $0x38] sm:$0xff] %vm5728, %v9547
    %9732 = vst.msk [vmem:[#allocation3 + $0x40] sm:$0xff] %vm5728, %v9549
    %9733 = vst.msk [vmem:[#allocation3 + $0x48] sm:$0xff] %vm5728, %v9551
    %9734 = vst.msk [vmem:[#allocation3 + $0x50] sm:$0xff] %vm5728, %v9553
    %9735 = vst.msk [vmem:[#allocation3 + $0x58] sm:$0xff] %vm5728, %v9555
    %9736 = vst.msk [vmem:[#allocation3 + $0x60] sm:$0xff] %vm5728, %v9557
    %9737 = vst.msk [vmem:[#allocation3 + $0x68] sm:$0xff] %vm5728, %v9559
    %9738 = vst.msk [vmem:[#allocation3 + $0x70] sm:$0xff] %vm5728, %v9561
    %9739 = vst.msk [vmem:[#allocation3 + $0x78] sm:$0xff] %vm5728, %v9563
    %9740 = vst.msk [vmem:[#allocation3 + $0x80] sm:$0xff] %vm5728, %v9565
    %9741 = vst.msk [vmem:[#allocation3 + $0x88] sm:$0xff] %vm5728, %v9567
    %9742 = vst.msk [vmem:[#allocation3 + $0x90] sm:$0xff] %vm5728, %v9569
    %9743 = vst.msk [vmem:[#allocation3 + $0x98] sm:$0xff] %vm5728, %v9571
    %9744 = vst.msk [vmem:[#allocation3 + $0xa0] sm:$0xff] %vm5728, %v9573
    %9745 = vst.msk [vmem:[#allocation3 + $0xa8] sm:$0xff] %vm5728, %v9575
    %9746 = vst.msk [vmem:[#allocation3 + $0xb0] sm:$0xff] %vm5728, %v9577
    %9747 = vst.msk [vmem:[#allocation3 + $0xb8] sm:$0xff] %vm5728, %v9579
    %9748 = vst.msk [vmem:[#allocation3 + $0xc0] sm:$0xff] %vm5728, %v9581
    %9749 = vst.msk [vmem:[#allocation3 + $0xc8] sm:$0xff] %vm5728, %v9583
    %9750 = vst.msk [vmem:[#allocation3 + $0xd0] sm:$0xff] %vm5728, %v9585
    %9751 = vst.msk [vmem:[#allocation3 + $0xd8] sm:$0xff] %vm5728, %v9587
    %9752 = vst.msk [vmem:[#allocation3 + $0xe0] sm:$0xff] %vm5728, %v9589
    %9753 = vst.msk [vmem:[#allocation3 + $0xe8] sm:$0xff] %vm5728, %v9591
    %9754 = vst.msk [vmem:[#allocation3 + $0xf0] sm:$0xff] %vm5728, %v9593
    %9755 = vst.msk [vmem:[#allocation3 + $0xf8] sm:$0xff] %vm5728, %v9595
    %9756 = vst.msk [vmem:[#allocation3 + $0x100] sm:$0xff] %vm5728, %v9597
    %9757 = vst.msk [vmem:[#allocation3 + $0x108] sm:$0xff] %vm5728, %v9599
    %9758 = vst.msk [vmem:[#allocation3 + $0x110] sm:$0xff] %vm5728, %v9601
    %9759 = vst.msk [vmem:[#allocation3 + $0x118] sm:$0xff] %vm5728, %v9603
    %9760 = vst.msk [vmem:[#allocation3 + $0x120] sm:$0xff] %vm5728, %v9605
    %9761 = vst.msk [vmem:[#allocation3 + $0x128] sm:$0xff] %vm5728, %v9607
    %9762 = vst.msk [vmem:[#allocation3 + $0x130] sm:$0xff] %vm5728, %v9609
    %9763 = vst.msk [vmem:[#allocation3 + $0x138] sm:$0xff] %vm5728, %v9611
    %9764 = vst.msk [vmem:[#allocation3 + $0x140] sm:$0xff] %vm5728, %v9613
    %9765 = vst.msk [vmem:[#allocation3 + $0x148] sm:$0xff] %vm5728, %v9615
    %9766 = vst.msk [vmem:[#allocation3 + $0x150] sm:$0xff] %vm5728, %v9617
    %9767 = vst.msk [vmem:[#allocation3 + $0x158] sm:$0xff] %vm5728, %v9619
    %9768 = vst.msk [vmem:[#allocation3 + $0x160] sm:$0xff] %vm5728, %v9621
    %9769 = vst.msk [vmem:[#allocation3 + $0x168] sm:$0xff] %vm5728, %v9623
    %9770 = vst.msk [vmem:[#allocation3 + $0x170] sm:$0xff] %vm5728, %v9625
    %9771 = vst.msk [vmem:[#allocation3 + $0x178] sm:$0xff] %vm5728, %v9627
    %9772 = vst.msk [vmem:[#allocation3 + $0x180] sm:$0xff] %vm5728, %v9629
    %9773 = vst.msk [vmem:[#allocation3 + $0x188] sm:$0xff] %vm5728, %v9631
    %9774 = vst.msk [vmem:[#allocation3 + $0x190] sm:$0xff] %vm5728, %v9633
    %9775 = vst.msk [vmem:[#allocation3 + $0x198] sm:$0xff] %vm5728, %v9635
    %9776 = vst.msk [vmem:[#allocation3 + $0x1a0] sm:$0xff] %vm5728, %v9637
    %9777 = vst.msk [vmem:[#allocation3 + $0x1a8] sm:$0xff] %vm5728, %v9639
    %9778 = vst.msk [vmem:[#allocation3 + $0x1b0] sm:$0xff] %vm5728, %v9641
    %9779 = vst.msk [vmem:[#allocation3 + $0x1b8] sm:$0xff] %vm5728, %v9643
    %9780 = vst.msk [vmem:[#allocation3 + $0x1c0] sm:$0xff] %vm5728, %v9645
    %9781 = vst.msk [vmem:[#allocation3 + $0x1c8] sm:$0xff] %vm5728, %v9647
    %9782 = vst.msk [vmem:[#allocation3 + $0x1d0] sm:$0xff] %vm5728, %v9649
    %9783 = vst.msk [vmem:[#allocation3 + $0x1d8] sm:$0xff] %vm5728, %v9651
    %9784 = vst.msk [vmem:[#allocation3 + $0x1e0] sm:$0xff] %vm5728, %v9653
    %9785 = vst.msk [vmem:[#allocation3 + $0x1e8] sm:$0xff] %vm5728, %v9655
    %9786 = vst.msk [vmem:[#allocation3 + $0x1f0] sm:$0xff] %vm5728, %v9657
    %9787 = vst.msk [vmem:[#allocation3 + $0x1f8] sm:$0xff] %vm5728, %v9659
    %v9788 = vld [vmem:[#allocation4 + $0x1] sm:$0xff]
    %v9789 = vld [vmem:[#allocation4 + $0x9] sm:$0x7f]
    %v9790 = vld [vmem:[#allocation4 + $0x11] sm:$0xff]
    %v9791 = vld [vmem:[#allocation4 + $0x19] sm:$0x7f]
    %v9792 = vld [vmem:[#allocation4 + $0x21] sm:$0xff]
    %v9793 = vld [vmem:[#allocation4 + $0x29] sm:$0x7f]
    %v9794 = vld [vmem:[#allocation4 + $0x31] sm:$0xff]
    %v9795 = vld [vmem:[#allocation4 + $0x39] sm:$0x7f]
    %v9796 = vld [vmem:[#allocation4 + $0x41] sm:$0xff]
    %v9797 = vld [vmem:[#allocation4 + $0x49] sm:$0x7f]
    %v9798 = vld [vmem:[#allocation4 + $0x51] sm:$0xff]
    %v9799 = vld [vmem:[#allocation4 + $0x59] sm:$0x7f]
    %v9800 = vld [vmem:[#allocation4 + $0x61] sm:$0xff]
    %v9801 = vld [vmem:[#allocation4 + $0x69] sm:$0x7f]
    %v9802 = vld [vmem:[#allocation4 + $0x71] sm:$0xff]
    %v9803 = vld [vmem:[#allocation4 + $0x79] sm:$0x7f]
    %v9804 = vld [vmem:[#allocation4 + $0x81] sm:$0xff]
    %v9805 = vld [vmem:[#allocation4 + $0x89] sm:$0x7f]
    %v9806 = vld [vmem:[#allocation4 + $0x91] sm:$0xff]
    %v9807 = vld [vmem:[#allocation4 + $0x99] sm:$0x7f]
    %v9808 = vld [vmem:[#allocation4 + $0xa1] sm:$0xff]
    %v9809 = vld [vmem:[#allocation4 + $0xa9] sm:$0x7f]
    %v9810 = vld [vmem:[#allocation4 + $0xb1] sm:$0xff]
    %v9811 = vld [vmem:[#allocation4 + $0xb9] sm:$0x7f]
    %v9812 = vld [vmem:[#allocation4 + $0xc1] sm:$0xff]
    %v9813 = vld [vmem:[#allocation4 + $0xc9] sm:$0x7f]
    %v9814 = vld [vmem:[#allocation4 + $0xd1] sm:$0xff]
    %v9815 = vld [vmem:[#allocation4 + $0xd9] sm:$0x7f]
    %v9816 = vld [vmem:[#allocation4 + $0xe1] sm:$0xff]
    %v9817 = vld [vmem:[#allocation4 + $0xe9] sm:$0x7f]
    %v9818 = vld [vmem:[#allocation4 + $0xf1] sm:$0xff]
    %v9819 = vld [vmem:[#allocation4 + $0xf9] sm:$0x7f]
    %v9820 = vld [vmem:[#allocation4 + $0x101] sm:$0xff]
    %v9821 = vld [vmem:[#allocation4 + $0x109] sm:$0x7f]
    %v9822 = vld [vmem:[#allocation4 + $0x111] sm:$0xff]
    %v9823 = vld [vmem:[#allocation4 + $0x119] sm:$0x7f]
    %v9824 = vld [vmem:[#allocation4 + $0x121] sm:$0xff]
    %v9825 = vld [vmem:[#allocation4 + $0x129] sm:$0x7f]
    %v9826 = vld [vmem:[#allocation4 + $0x131] sm:$0xff]
    %v9827 = vld [vmem:[#allocation4 + $0x139] sm:$0x7f]
    %v9828 = vld [vmem:[#allocation4 + $0x141] sm:$0xff]
    %v9829 = vld [vmem:[#allocation4 + $0x149] sm:$0x7f]
    %v9830 = vld [vmem:[#allocation4 + $0x151] sm:$0xff]
    %v9831 = vld [vmem:[#allocation4 + $0x159] sm:$0x7f]
    %v9832 = vld [vmem:[#allocation4 + $0x161] sm:$0xff]
    %v9833 = vld [vmem:[#allocation4 + $0x169] sm:$0x7f]
    %v9834 = vld [vmem:[#allocation4 + $0x171] sm:$0xff]
    %v9835 = vld [vmem:[#allocation4 + $0x179] sm:$0x7f]
    %v9836 = vld [vmem:[#allocation4 + $0x181] sm:$0xff]
    %v9837 = vld [vmem:[#allocation4 + $0x189] sm:$0x7f]
    %v9838 = vld [vmem:[#allocation4 + $0x191] sm:$0xff]
    %v9839 = vld [vmem:[#allocation4 + $0x199] sm:$0x7f]
    %v9840 = vld [vmem:[#allocation4 + $0x1a1] sm:$0xff]
    %v9841 = vld [vmem:[#allocation4 + $0x1a9] sm:$0x7f]
    %v9842 = vld [vmem:[#allocation4 + $0x1b1] sm:$0xff]
    %v9843 = vld [vmem:[#allocation4 + $0x1b9] sm:$0x7f]
    %v9844 = vld [vmem:[#allocation4 + $0x1c1] sm:$0xff]
    %v9845 = vld [vmem:[#allocation4 + $0x1c9] sm:$0x7f]
    %v9846 = vld [vmem:[#allocation4 + $0x1d1] sm:$0xff]
    %v9847 = vld [vmem:[#allocation4 + $0x1d9] sm:$0x7f]
    %v9848 = vld [vmem:[#allocation4 + $0x1e1] sm:$0xff]
    %v9849 = vld [vmem:[#allocation4 + $0x1e9] sm:$0x7f]
    %v9850 = vld [vmem:[#allocation4 + $0x1f1] sm:$0xff]
    %v9851 = vld [vmem:[#allocation4 + $0x1f9] sm:$0x7f]
    %9916 = vrot.lane.b32.xlu0 %v9788, 40
    %v9917 = vpop.permute.xlu0 %9916
    %9918 = vrot.lane.b32.xlu0 %v9789, 40
    %v9919 = vpop.permute.xlu0 %9918
    %9920 = vrot.lane.b32.xlu0 %v9790, 40
    %v9921 = vpop.permute.xlu0 %9920
    %9922 = vrot.lane.b32.xlu0 %v9791, 40
    %v9923 = vpop.permute.xlu0 %9922
    %9924 = vrot.lane.b32.xlu0 %v9792, 40
    %v9925 = vpop.permute.xlu0 %9924
    %9926 = vrot.lane.b32.xlu0 %v9793, 40
    %v9927 = vpop.permute.xlu0 %9926
    %9928 = vrot.lane.b32.xlu0 %v9794, 40
    %v9929 = vpop.permute.xlu0 %9928
    %9930 = vrot.lane.b32.xlu0 %v9795, 40
    %v9931 = vpop.permute.xlu0 %9930
    %9932 = vrot.lane.b32.xlu0 %v9796, 40
    %v9933 = vpop.permute.xlu0 %9932
    %9934 = vrot.lane.b32.xlu0 %v9797, 40
    %v9935 = vpop.permute.xlu0 %9934
    %9936 = vrot.lane.b32.xlu0 %v9798, 40
    %v9937 = vpop.permute.xlu0 %9936
    %9938 = vrot.lane.b32.xlu0 %v9799, 40
    %v9939 = vpop.permute.xlu0 %9938
    %9940 = vrot.lane.b32.xlu0 %v9800, 40
    %v9941 = vpop.permute.xlu0 %9940
    %9942 = vrot.lane.b32.xlu0 %v9801, 40
    %v9943 = vpop.permute.xlu0 %9942
    %9944 = vrot.lane.b32.xlu0 %v9802, 40
    %v9945 = vpop.permute.xlu0 %9944
    %9946 = vrot.lane.b32.xlu0 %v9803, 40
    %v9947 = vpop.permute.xlu0 %9946
    %9948 = vrot.lane.b32.xlu0 %v9804, 40
    %v9949 = vpop.permute.xlu0 %9948
    %9950 = vrot.lane.b32.xlu0 %v9805, 40
    %v9951 = vpop.permute.xlu0 %9950
    %9952 = vrot.lane.b32.xlu0 %v9806, 40
    %v9953 = vpop.permute.xlu0 %9952
    %9954 = vrot.lane.b32.xlu0 %v9807, 40
    %v9955 = vpop.permute.xlu0 %9954
    %9956 = vrot.lane.b32.xlu0 %v9808, 40
    %v9957 = vpop.permute.xlu0 %9956
    %9958 = vrot.lane.b32.xlu0 %v9809, 40
    %v9959 = vpop.permute.xlu0 %9958
    %9960 = vrot.lane.b32.xlu0 %v9810, 40
    %v9961 = vpop.permute.xlu0 %9960
    %9962 = vrot.lane.b32.xlu0 %v9811, 40
    %v9963 = vpop.permute.xlu0 %9962
    %9964 = vrot.lane.b32.xlu0 %v9812, 40
    %v9965 = vpop.permute.xlu0 %9964
    %9966 = vrot.lane.b32.xlu0 %v9813, 40
    %v9967 = vpop.permute.xlu0 %9966
    %9968 = vrot.lane.b32.xlu0 %v9814, 40
    %v9969 = vpop.permute.xlu0 %9968
    %9970 = vrot.lane.b32.xlu0 %v9815, 40
    %v9971 = vpop.permute.xlu0 %9970
    %9972 = vrot.lane.b32.xlu0 %v9816, 40
    %v9973 = vpop.permute.xlu0 %9972
    %9974 = vrot.lane.b32.xlu0 %v9817, 40
    %v9975 = vpop.permute.xlu0 %9974
    %9976 = vrot.lane.b32.xlu0 %v9818, 40
    %v9977 = vpop.permute.xlu0 %9976
    %9978 = vrot.lane.b32.xlu0 %v9819, 40
    %v9979 = vpop.permute.xlu0 %9978
    %9980 = vrot.lane.b32.xlu0 %v9820, 40
    %v9981 = vpop.permute.xlu0 %9980
    %9982 = vrot.lane.b32.xlu0 %v9821, 40
    %v9983 = vpop.permute.xlu0 %9982
    %9984 = vrot.lane.b32.xlu0 %v9822, 40
    %v9985 = vpop.permute.xlu0 %9984
    %9986 = vrot.lane.b32.xlu0 %v9823, 40
    %v9987 = vpop.permute.xlu0 %9986
    %9988 = vrot.lane.b32.xlu0 %v9824, 40
    %v9989 = vpop.permute.xlu0 %9988
    %9990 = vrot.lane.b32.xlu0 %v9825, 40
    %v9991 = vpop.permute.xlu0 %9990
    %9992 = vrot.lane.b32.xlu0 %v9826, 40
    %v9993 = vpop.permute.xlu0 %9992
    %9994 = vrot.lane.b32.xlu0 %v9827, 40
    %v9995 = vpop.permute.xlu0 %9994
    %9996 = vrot.lane.b32.xlu0 %v9828, 40
    %v9997 = vpop.permute.xlu0 %9996
    %9998 = vrot.lane.b32.xlu0 %v9829, 40
    %v9999 = vpop.permute.xlu0 %9998
    %10000 = vrot.lane.b32.xlu0 %v9830, 40
    %v10001 = vpop.permute.xlu0 %10000
    %10002 = vrot.lane.b32.xlu0 %v9831, 40
    %v10003 = vpop.permute.xlu0 %10002
    %10004 = vrot.lane.b32.xlu0 %v9832, 40
    %v10005 = vpop.permute.xlu0 %10004
    %10006 = vrot.lane.b32.xlu0 %v9833, 40
    %v10007 = vpop.permute.xlu0 %10006
    %10008 = vrot.lane.b32.xlu0 %v9834, 40
    %v10009 = vpop.permute.xlu0 %10008
    %10010 = vrot.lane.b32.xlu0 %v9835, 40
    %v10011 = vpop.permute.xlu0 %10010
    %10012 = vrot.lane.b32.xlu0 %v9836, 40
    %v10013 = vpop.permute.xlu0 %10012
    %10014 = vrot.lane.b32.xlu0 %v9837, 40
    %v10015 = vpop.permute.xlu0 %10014
    %10016 = vrot.lane.b32.xlu0 %v9838, 40
    %v10017 = vpop.permute.xlu0 %10016
    %10018 = vrot.lane.b32.xlu0 %v9839, 40
    %v10019 = vpop.permute.xlu0 %10018
    %10020 = vrot.lane.b32.xlu0 %v9840, 40
    %v10021 = vpop.permute.xlu0 %10020
    %10022 = vrot.lane.b32.xlu0 %v9841, 40
    %v10023 = vpop.permute.xlu0 %10022
    %10024 = vrot.lane.b32.xlu0 %v9842, 40
    %v10025 = vpop.permute.xlu0 %10024
    %10026 = vrot.lane.b32.xlu0 %v9843, 40
    %v10027 = vpop.permute.xlu0 %10026
    %10028 = vrot.lane.b32.xlu0 %v9844, 40
    %v10029 = vpop.permute.xlu0 %10028
    %10030 = vrot.lane.b32.xlu0 %v9845, 40
    %v10031 = vpop.permute.xlu0 %10030
    %10032 = vrot.lane.b32.xlu0 %v9846, 40
    %v10033 = vpop.permute.xlu0 %10032
    %10034 = vrot.lane.b32.xlu0 %v9847, 40
    %v10035 = vpop.permute.xlu0 %10034
    %10036 = vrot.lane.b32.xlu0 %v9848, 40
    %v10037 = vpop.permute.xlu0 %10036
    %10038 = vrot.lane.b32.xlu0 %v9849, 40
    %v10039 = vpop.permute.xlu0 %10038
    %10040 = vrot.lane.b32.xlu0 %v9850, 40
    %v10041 = vpop.permute.xlu0 %10040
    %10042 = vrot.lane.b32.xlu0 %v9851, 40
    %v10043 = vpop.permute.xlu0 %10042
    %10108 = vst.msk [vmem:[#allocation3] sm:$0xff] %vm6113, %v9917
    %10109 = vst.msk [vmem:[#allocation3 + $0x8] sm:$0x7f] %vm6115, %v9919
    %10110 = vst.msk [vmem:[#allocation3 + $0x10] sm:$0xff] %vm6113, %v9921
    %10111 = vst.msk [vmem:[#allocation3 + $0x18] sm:$0x7f] %vm6115, %v9923
    %10112 = vst.msk [vmem:[#allocation3 + $0x20] sm:$0xff] %vm6113, %v9925
    %10113 = vst.msk [vmem:[#allocation3 + $0x28] sm:$0x7f] %vm6115, %v9927
    %10114 = vst.msk [vmem:[#allocation3 + $0x30] sm:$0xff] %vm6113, %v9929
    %10115 = vst.msk [vmem:[#allocation3 + $0x38] sm:$0x7f] %vm6115, %v9931
    %10116 = vst.msk [vmem:[#allocation3 + $0x40] sm:$0xff] %vm6113, %v9933
    %10117 = vst.msk [vmem:[#allocation3 + $0x48] sm:$0x7f] %vm6115, %v9935
    %10118 = vst.msk [vmem:[#allocation3 + $0x50] sm:$0xff] %vm6113, %v9937
    %10119 = vst.msk [vmem:[#allocation3 + $0x58] sm:$0x7f] %vm6115, %v9939
    %10120 = vst.msk [vmem:[#allocation3 + $0x60] sm:$0xff] %vm6113, %v9941
    %10121 = vst.msk [vmem:[#allocation3 + $0x68] sm:$0x7f] %vm6115, %v9943
    %10122 = vst.msk [vmem:[#allocation3 + $0x70] sm:$0xff] %vm6113, %v9945
    %10123 = vst.msk [vmem:[#allocation3 + $0x78] sm:$0x7f] %vm6115, %v9947
    %10124 = vst.msk [vmem:[#allocation3 + $0x80] sm:$0xff] %vm6113, %v9949
    %10125 = vst.msk [vmem:[#allocation3 + $0x88] sm:$0x7f] %vm6115, %v9951
    %10126 = vst.msk [vmem:[#allocation3 + $0x90] sm:$0xff] %vm6113, %v9953
    %10127 = vst.msk [vmem:[#allocation3 + $0x98] sm:$0x7f] %vm6115, %v9955
    %10128 = vst.msk [vmem:[#allocation3 + $0xa0] sm:$0xff] %vm6113, %v9957
    %10129 = vst.msk [vmem:[#allocation3 + $0xa8] sm:$0x7f] %vm6115, %v9959
    %10130 = vst.msk [vmem:[#allocation3 + $0xb0] sm:$0xff] %vm6113, %v9961
    %10131 = vst.msk [vmem:[#allocation3 + $0xb8] sm:$0x7f] %vm6115, %v9963
    %10132 = vst.msk [vmem:[#allocation3 + $0xc0] sm:$0xff] %vm6113, %v9965
    %10133 = vst.msk [vmem:[#allocation3 + $0xc8] sm:$0x7f] %vm6115, %v9967
    %10134 = vst.msk [vmem:[#allocation3 + $0xd0] sm:$0xff] %vm6113, %v9969
    %10135 = vst.msk [vmem:[#allocation3 + $0xd8] sm:$0x7f] %vm6115, %v9971
    %10136 = vst.msk [vmem:[#allocation3 + $0xe0] sm:$0xff] %vm6113, %v9973
    %10137 = vst.msk [vmem:[#allocation3 + $0xe8] sm:$0x7f] %vm6115, %v9975
    %10138 = vst.msk [vmem:[#allocation3 + $0xf0] sm:$0xff] %vm6113, %v9977
    %10139 = vst.msk [vmem:[#allocation3 + $0xf8] sm:$0x7f] %vm6115, %v9979
    %10140 = vst.msk [vmem:[#allocation3 + $0x100] sm:$0xff] %vm6113, %v9981
    %10141 = vst.msk [vmem:[#allocation3 + $0x108] sm:$0x7f] %vm6115, %v9983
    %10142 = vst.msk [vmem:[#allocation3 + $0x110] sm:$0xff] %vm6113, %v9985
    %10143 = vst.msk [vmem:[#allocation3 + $0x118] sm:$0x7f] %vm6115, %v9987
    %10144 = vst.msk [vmem:[#allocation3 + $0x120] sm:$0xff] %vm6113, %v9989
    %10145 = vst.msk [vmem:[#allocation3 + $0x128] sm:$0x7f] %vm6115, %v9991
    %10146 = vst.msk [vmem:[#allocation3 + $0x130] sm:$0xff] %vm6113, %v9993
    %10147 = vst.msk [vmem:[#allocation3 + $0x138] sm:$0x7f] %vm6115, %v9995
    %10148 = vst.msk [vmem:[#allocation3 + $0x140] sm:$0xff] %vm6113, %v9997
    %10149 = vst.msk [vmem:[#allocation3 + $0x148] sm:$0x7f] %vm6115, %v9999
    %10150 = vst.msk [vmem:[#allocation3 + $0x150] sm:$0xff] %vm6113, %v10001
    %10151 = vst.msk [vmem:[#allocation3 + $0x158] sm:$0x7f] %vm6115, %v10003
    %10152 = vst.msk [vmem:[#allocation3 + $0x160] sm:$0xff] %vm6113, %v10005
    %10153 = vst.msk [vmem:[#allocation3 + $0x168] sm:$0x7f] %vm6115, %v10007
    %10154 = vst.msk [vmem:[#allocation3 + $0x170] sm:$0xff] %vm6113, %v10009
    %10155 = vst.msk [vmem:[#allocation3 + $0x178] sm:$0x7f] %vm6115, %v10011
    %10156 = vst.msk [vmem:[#allocation3 + $0x180] sm:$0xff] %vm6113, %v10013
    %10157 = vst.msk [vmem:[#allocation3 + $0x188] sm:$0x7f] %vm6115, %v10015
    %10158 = vst.msk [vmem:[#allocation3 + $0x190] sm:$0xff] %vm6113, %v10017
    %10159 = vst.msk [vmem:[#allocation3 + $0x198] sm:$0x7f] %vm6115, %v10019
    %10160 = vst.msk [vmem:[#allocation3 + $0x1a0] sm:$0xff] %vm6113, %v10021
    %10161 = vst.msk [vmem:[#allocation3 + $0x1a8] sm:$0x7f] %vm6115, %v10023
    %10162 = vst.msk [vmem:[#allocation3 + $0x1b0] sm:$0xff] %vm6113, %v10025
    %10163 = vst.msk [vmem:[#allocation3 + $0x1b8] sm:$0x7f] %vm6115, %v10027
    %10164 = vst.msk [vmem:[#allocation3 + $0x1c0] sm:$0xff] %vm6113, %v10029
    %10165 = vst.msk [vmem:[#allocation3 + $0x1c8] sm:$0x7f] %vm6115, %v10031
    %10166 = vst.msk [vmem:[#allocation3 + $0x1d0] sm:$0xff] %vm6113, %v10033
    %10167 = vst.msk [vmem:[#allocation3 + $0x1d8] sm:$0x7f] %vm6115, %v10035
    %10168 = vst.msk [vmem:[#allocation3 + $0x1e0] sm:$0xff] %vm6113, %v10037
    %10169 = vst.msk [vmem:[#allocation3 + $0x1e8] sm:$0x7f] %vm6115, %v10039
    %10170 = vst.msk [vmem:[#allocation3 + $0x1f0] sm:$0xff] %vm6113, %v10041
    %10171 = vst.msk [vmem:[#allocation3 + $0x1f8] sm:$0x7f] %vm6115, %v10043
    %v10172 = vld [vmem:[%s6179] sm:$0xff]
    %v10173 = vld [vmem:[%s6179 + $0x8] sm:$0x7f]
    %v10174 = vld [vmem:[%s6179 + $0x10] sm:$0xff]
    %v10175 = vld [vmem:[%s6179 + $0x18] sm:$0x7f]
    %v10176 = vld [vmem:[%s6179 + $0x20] sm:$0xff]
    %v10177 = vld [vmem:[%s6179 + $0x28] sm:$0x7f]
    %v10178 = vld [vmem:[%s6179 + $0x30] sm:$0xff]
    %v10179 = vld [vmem:[%s6179 + $0x38] sm:$0x7f]
    %v10180 = vld [vmem:[%s6179 + $0x40] sm:$0xff]
    %v10181 = vld [vmem:[%s6179 + $0x48] sm:$0x7f]
    %v10182 = vld [vmem:[%s6179 + $0x50] sm:$0xff]
    %v10183 = vld [vmem:[%s6179 + $0x58] sm:$0x7f]
    %v10184 = vld [vmem:[%s6179 + $0x60] sm:$0xff]
    %v10185 = vld [vmem:[%s6179 + $0x68] sm:$0x7f]
    %v10186 = vld [vmem:[%s6179 + $0x70] sm:$0xff]
    %v10187 = vld [vmem:[%s6179 + $0x78] sm:$0x7f]
    %v10188 = vld [vmem:[%s6179 + $0x80] sm:$0xff]
    %v10189 = vld [vmem:[%s6179 + $0x88] sm:$0x7f]
    %v10190 = vld [vmem:[%s6179 + $0x90] sm:$0xff]
    %v10191 = vld [vmem:[%s6179 + $0x98] sm:$0x7f]
    %v10192 = vld [vmem:[%s6179 + $0xa0] sm:$0xff]
    %v10193 = vld [vmem:[%s6179 + $0xa8] sm:$0x7f]
    %v10194 = vld [vmem:[%s6179 + $0xb0] sm:$0xff]
    %v10195 = vld [vmem:[%s6179 + $0xb8] sm:$0x7f]
    %v10196 = vld [vmem:[%s6179 + $0xc0] sm:$0xff]
    %v10197 = vld [vmem:[%s6179 + $0xc8] sm:$0x7f]
    %v10198 = vld [vmem:[%s6179 + $0xd0] sm:$0xff]
    %v10199 = vld [vmem:[%s6179 + $0xd8] sm:$0x7f]
    %v10200 = vld [vmem:[%s6179 + $0xe0] sm:$0xff]
    %v10201 = vld [vmem:[%s6179 + $0xe8] sm:$0x7f]
    %v10202 = vld [vmem:[%s6179 + $0x100] sm:$0xff]
    %v10203 = vld [vmem:[%s6179 + $0x108] sm:$0x7f]
    %v10204 = vld [vmem:[%s6179 + $0x110] sm:$0xff]
    %v10205 = vld [vmem:[%s6179 + $0x118] sm:$0x7f]
    %v10206 = vld [vmem:[%s6179 + $0x120] sm:$0xff]
    %v10207 = vld [vmem:[%s6179 + $0x128] sm:$0x7f]
    %v10208 = vld [vmem:[%s6179 + $0x130] sm:$0xff]
    %v10209 = vld [vmem:[%s6179 + $0x138] sm:$0x7f]
    %v10210 = vld [vmem:[%s6179 + $0x140] sm:$0xff]
    %v10211 = vld [vmem:[%s6179 + $0x148] sm:$0x7f]
    %v10212 = vld [vmem:[%s6179 + $0x150] sm:$0xff]
    %v10213 = vld [vmem:[%s6179 + $0x158] sm:$0x7f]
    %v10214 = vld [vmem:[%s6179 + $0x160] sm:$0xff]
    %v10215 = vld [vmem:[%s6179 + $0x168] sm:$0x7f]
    %v10216 = vld [vmem:[%s6179 + $0x170] sm:$0xff]
    %v10217 = vld [vmem:[%s6179 + $0x178] sm:$0x7f]
    %v10218 = vld [vmem:[%s6179 + $0x180] sm:$0xff]
    %v10219 = vld [vmem:[%s6179 + $0x188] sm:$0x7f]
    %v10220 = vld [vmem:[%s6179 + $0x190] sm:$0xff]
    %v10221 = vld [vmem:[%s6179 + $0x198] sm:$0x7f]
    %v10222 = vld [vmem:[%s6179 + $0x1a0] sm:$0xff]
    %v10223 = vld [vmem:[%s6179 + $0x1a8] sm:$0x7f]
    %v10224 = vld [vmem:[%s6179 + $0x1b0] sm:$0xff]
    %v10225 = vld [vmem:[%s6179 + $0x1b8] sm:$0x7f]
    %v10226 = vld [vmem:[%s6179 + $0x1c0] sm:$0xff]
    %v10227 = vld [vmem:[%s6179 + $0x1c8] sm:$0x7f]
    %v10228 = vld [vmem:[%s6179 + $0x1d0] sm:$0xff]
    %v10229 = vld [vmem:[%s6179 + $0x1d8] sm:$0x7f]
    %v10230 = vld [vmem:[%s6179 + $0x1e0] sm:$0xff]
    %v10231 = vld [vmem:[%s6179 + $0x1e8] sm:$0x7f]
    %10292 = vrot.lane.b32.xlu0 %v10172, 48
    %v10293 = vpop.permute.xlu0 %10292
    %10294 = vrot.lane.b32.xlu0 %v10173, 48
    %v10295 = vpop.permute.xlu0 %10294
    %10296 = vrot.lane.b32.xlu0 %v10174, 48
    %v10297 = vpop.permute.xlu0 %10296
    %10298 = vrot.lane.b32.xlu0 %v10175, 48
    %v10299 = vpop.permute.xlu0 %10298
    %10300 = vrot.lane.b32.xlu0 %v10176, 48
    %v10301 = vpop.permute.xlu0 %10300
    %10302 = vrot.lane.b32.xlu0 %v10177, 48
    %v10303 = vpop.permute.xlu0 %10302
    %10304 = vrot.lane.b32.xlu0 %v10178, 48
    %v10305 = vpop.permute.xlu0 %10304
    %10306 = vrot.lane.b32.xlu0 %v10179, 48
    %v10307 = vpop.permute.xlu0 %10306
    %10308 = vrot.lane.b32.xlu0 %v10180, 48
    %v10309 = vpop.permute.xlu0 %10308
    %10310 = vrot.lane.b32.xlu0 %v10181, 48
    %v10311 = vpop.permute.xlu0 %10310
    %10312 = vrot.lane.b32.xlu0 %v10182, 48
    %v10313 = vpop.permute.xlu0 %10312
    %10314 = vrot.lane.b32.xlu0 %v10183, 48
    %v10315 = vpop.permute.xlu0 %10314
    %10316 = vrot.lane.b32.xlu0 %v10184, 48
    %v10317 = vpop.permute.xlu0 %10316
    %10318 = vrot.lane.b32.xlu0 %v10185, 48
    %v10319 = vpop.permute.xlu0 %10318
    %10320 = vrot.lane.b32.xlu0 %v10186, 48
    %v10321 = vpop.permute.xlu0 %10320
    %10322 = vrot.lane.b32.xlu0 %v10187, 48
    %v10323 = vpop.permute.xlu0 %10322
    %10324 = vrot.lane.b32.xlu0 %v10188, 48
    %v10325 = vpop.permute.xlu0 %10324
    %10326 = vrot.lane.b32.xlu0 %v10189, 48
    %v10327 = vpop.permute.xlu0 %10326
    %10328 = vrot.lane.b32.xlu0 %v10190, 48
    %v10329 = vpop.permute.xlu0 %10328
    %10330 = vrot.lane.b32.xlu0 %v10191, 48
    %v10331 = vpop.permute.xlu0 %10330
    %10332 = vrot.lane.b32.xlu0 %v10192, 48
    %v10333 = vpop.permute.xlu0 %10332
    %10334 = vrot.lane.b32.xlu0 %v10193, 48
    %v10335 = vpop.permute.xlu0 %10334
    %10336 = vrot.lane.b32.xlu0 %v10194, 48
    %v10337 = vpop.permute.xlu0 %10336
    %10338 = vrot.lane.b32.xlu0 %v10195, 48
    %v10339 = vpop.permute.xlu0 %10338
    %10340 = vrot.lane.b32.xlu0 %v10196, 48
    %v10341 = vpop.permute.xlu0 %10340
    %10342 = vrot.lane.b32.xlu0 %v10197, 48
    %v10343 = vpop.permute.xlu0 %10342
    %10344 = vrot.lane.b32.xlu0 %v10198, 48
    %v10345 = vpop.permute.xlu0 %10344
    %10346 = vrot.lane.b32.xlu0 %v10199, 48
    %v10347 = vpop.permute.xlu0 %10346
    %10348 = vrot.lane.b32.xlu0 %v10200, 48
    %v10349 = vpop.permute.xlu0 %10348
    %10350 = vrot.lane.b32.xlu0 %v10201, 48
    %v10351 = vpop.permute.xlu0 %10350
    %10352 = vrot.lane.b32.xlu0 %v10202, 48
    %v10353 = vpop.permute.xlu0 %10352
    %10354 = vrot.lane.b32.xlu0 %v10203, 48
    %v10355 = vpop.permute.xlu0 %10354
    %10356 = vrot.lane.b32.xlu0 %v10204, 48
    %v10357 = vpop.permute.xlu0 %10356
    %10358 = vrot.lane.b32.xlu0 %v10205, 48
    %v10359 = vpop.permute.xlu0 %10358
    %10360 = vrot.lane.b32.xlu0 %v10206, 48
    %v10361 = vpop.permute.xlu0 %10360
    %10362 = vrot.lane.b32.xlu0 %v10207, 48
    %v10363 = vpop.permute.xlu0 %10362
    %10364 = vrot.lane.b32.xlu0 %v10208, 48
    %v10365 = vpop.permute.xlu0 %10364
    %10366 = vrot.lane.b32.xlu0 %v10209, 48
    %v10367 = vpop.permute.xlu0 %10366
    %10368 = vrot.lane.b32.xlu0 %v10210, 48
    %v10369 = vpop.permute.xlu0 %10368
    %10370 = vrot.lane.b32.xlu0 %v10211, 48
    %v10371 = vpop.permute.xlu0 %10370
    %10372 = vrot.lane.b32.xlu0 %v10212, 48
    %v10373 = vpop.permute.xlu0 %10372
    %10374 = vrot.lane.b32.xlu0 %v10213, 48
    %v10375 = vpop.permute.xlu0 %10374
    %10376 = vrot.lane.b32.xlu0 %v10214, 48
    %v10377 = vpop.permute.xlu0 %10376
    %10378 = vrot.lane.b32.xlu0 %v10215, 48
    %v10379 = vpop.permute.xlu0 %10378
    %10380 = vrot.lane.b32.xlu0 %v10216, 48
    %v10381 = vpop.permute.xlu0 %10380
    %10382 = vrot.lane.b32.xlu0 %v10217, 48
    %v10383 = vpop.permute.xlu0 %10382
    %10384 = vrot.lane.b32.xlu0 %v10218, 48
    %v10385 = vpop.permute.xlu0 %10384
    %10386 = vrot.lane.b32.xlu0 %v10219, 48
    %v10387 = vpop.permute.xlu0 %10386
    %10388 = vrot.lane.b32.xlu0 %v10220, 48
    %v10389 = vpop.permute.xlu0 %10388
    %10390 = vrot.lane.b32.xlu0 %v10221, 48
    %v10391 = vpop.permute.xlu0 %10390
    %10392 = vrot.lane.b32.xlu0 %v10222, 48
    %v10393 = vpop.permute.xlu0 %10392
    %10394 = vrot.lane.b32.xlu0 %v10223, 48
    %v10395 = vpop.permute.xlu0 %10394
    %10396 = vrot.lane.b32.xlu0 %v10224, 48
    %v10397 = vpop.permute.xlu0 %10396
    %10398 = vrot.lane.b32.xlu0 %v10225, 48
    %v10399 = vpop.permute.xlu0 %10398
    %10400 = vrot.lane.b32.xlu0 %v10226, 48
    %v10401 = vpop.permute.xlu0 %10400
    %10402 = vrot.lane.b32.xlu0 %v10227, 48
    %v10403 = vpop.permute.xlu0 %10402
    %10404 = vrot.lane.b32.xlu0 %v10228, 48
    %v10405 = vpop.permute.xlu0 %10404
    %10406 = vrot.lane.b32.xlu0 %v10229, 48
    %v10407 = vpop.permute.xlu0 %10406
    %10408 = vrot.lane.b32.xlu0 %v10230, 48
    %v10409 = vpop.permute.xlu0 %10408
    %10410 = vrot.lane.b32.xlu0 %v10231, 48
    %v10411 = vpop.permute.xlu0 %10410
    %10472 = vst.msk [vmem:[#allocation3 + $0x1] sm:$0xff] %vm6480, %v10293
    %10473 = vst.msk [vmem:[#allocation3 + $0x9] sm:$0x7f] %vm6482, %v10295
    %10474 = vst.msk [vmem:[#allocation3 + $0x11] sm:$0xff] %vm6480, %v10297
    %10475 = vst.msk [vmem:[#allocation3 + $0x19] sm:$0x7f] %vm6482, %v10299
    %10476 = vst.msk [vmem:[#allocation3 + $0x21] sm:$0xff] %vm6480, %v10301
    %10477 = vst.msk [vmem:[#allocation3 + $0x29] sm:$0x7f] %vm6482, %v10303
    %10478 = vst.msk [vmem:[#allocation3 + $0x31] sm:$0xff] %vm6480, %v10305
    %10479 = vst.msk [vmem:[#allocation3 + $0x39] sm:$0x7f] %vm6482, %v10307
    %10480 = vst.msk [vmem:[#allocation3 + $0x41] sm:$0xff] %vm6480, %v10309
    %10481 = vst.msk [vmem:[#allocation3 + $0x49] sm:$0x7f] %vm6482, %v10311
    %10482 = vst.msk [vmem:[#allocation3 + $0x51] sm:$0xff] %vm6480, %v10313
    %10483 = vst.msk [vmem:[#allocation3 + $0x59] sm:$0x7f] %vm6482, %v10315
    %10484 = vst.msk [vmem:[#allocation3 + $0x61] sm:$0xff] %vm6480, %v10317
    %10485 = vst.msk [vmem:[#allocation3 + $0x69] sm:$0x7f] %vm6482, %v10319
    %10486 = vst.msk [vmem:[#allocation3 + $0x71] sm:$0xff] %vm6480, %v10321
    %10487 = vst.msk [vmem:[#allocation3 + $0x79] sm:$0x7f] %vm6482, %v10323
    %10488 = vst.msk [vmem:[#allocation3 + $0x81] sm:$0xff] %vm6480, %v10325
    %10489 = vst.msk [vmem:[#allocation3 + $0x89] sm:$0x7f] %vm6482, %v10327
    %10490 = vst.msk [vmem:[#allocation3 + $0x91] sm:$0xff] %vm6480, %v10329
    %10491 = vst.msk [vmem:[#allocation3 + $0x99] sm:$0x7f] %vm6482, %v10331
    %10492 = vst.msk [vmem:[#allocation3 + $0xa1] sm:$0xff] %vm6480, %v10333
    %10493 = vst.msk [vmem:[#allocation3 + $0xa9] sm:$0x7f] %vm6482, %v10335
    %10494 = vst.msk [vmem:[#allocation3 + $0xb1] sm:$0xff] %vm6480, %v10337
    %10495 = vst.msk [vmem:[#allocation3 + $0xb9] sm:$0x7f] %vm6482, %v10339
    %10496 = vst.msk [vmem:[#allocation3 + $0xc1] sm:$0xff] %vm6480, %v10341
    %10497 = vst.msk [vmem:[#allocation3 + $0xc9] sm:$0x7f] %vm6482, %v10343
    %10498 = vst.msk [vmem:[#allocation3 + $0xd1] sm:$0xff] %vm6480, %v10345
    %10499 = vst.msk [vmem:[#allocation3 + $0xd9] sm:$0x7f] %vm6482, %v10347
    %10500 = vst.msk [vmem:[#allocation3 + $0xe1] sm:$0xff] %vm6480, %v10349
    %10501 = vst.msk [vmem:[#allocation3 + $0xe9] sm:$0x7f] %vm6482, %v10351
    %10502 = vst.msk [vmem:[#allocation3 + $0x101] sm:$0xff] %vm6480, %v10353
    %10503 = vst.msk [vmem:[#allocation3 + $0x109] sm:$0x7f] %vm6482, %v10355
    %10504 = vst.msk [vmem:[#allocation3 + $0x111] sm:$0xff] %vm6480, %v10357
    %10505 = vst.msk [vmem:[#allocation3 + $0x119] sm:$0x7f] %vm6482, %v10359
    %10506 = vst.msk [vmem:[#allocation3 + $0x121] sm:$0xff] %vm6480, %v10361
    %10507 = vst.msk [vmem:[#allocation3 + $0x129] sm:$0x7f] %vm6482, %v10363
    %10508 = vst.msk [vmem:[#allocation3 + $0x131] sm:$0xff] %vm6480, %v10365
    %10509 = vst.msk [vmem:[#allocation3 + $0x139] sm:$0x7f] %vm6482, %v10367
    %10510 = vst.msk [vmem:[#allocation3 + $0x141] sm:$0xff] %vm6480, %v10369
    %10511 = vst.msk [vmem:[#allocation3 + $0x149] sm:$0x7f] %vm6482, %v10371
    %10512 = vst.msk [vmem:[#allocation3 + $0x151] sm:$0xff] %vm6480, %v10373
    %10513 = vst.msk [vmem:[#allocation3 + $0x159] sm:$0x7f] %vm6482, %v10375
    %10514 = vst.msk [vmem:[#allocation3 + $0x161] sm:$0xff] %vm6480, %v10377
    %10515 = vst.msk [vmem:[#allocation3 + $0x169] sm:$0x7f] %vm6482, %v10379
    %10516 = vst.msk [vmem:[#allocation3 + $0x171] sm:$0xff] %vm6480, %v10381
    %10517 = vst.msk [vmem:[#allocation3 + $0x179] sm:$0x7f] %vm6482, %v10383
    %10518 = vst.msk [vmem:[#allocation3 + $0x181] sm:$0xff] %vm6480, %v10385
    %10519 = vst.msk [vmem:[#allocation3 + $0x189] sm:$0x7f] %vm6482, %v10387
    %10520 = vst.msk [vmem:[#allocation3 + $0x191] sm:$0xff] %vm6480, %v10389
    %10521 = vst.msk [vmem:[#allocation3 + $0x199] sm:$0x7f] %vm6482, %v10391
    %10522 = vst.msk [vmem:[#allocation3 + $0x1a1] sm:$0xff] %vm6480, %v10393
    %10523 = vst.msk [vmem:[#allocation3 + $0x1a9] sm:$0x7f] %vm6482, %v10395
    %10524 = vst.msk [vmem:[#allocation3 + $0x1b1] sm:$0xff] %vm6480, %v10397
    %10525 = vst.msk [vmem:[#allocation3 + $0x1b9] sm:$0x7f] %vm6482, %v10399
    %10526 = vst.msk [vmem:[#allocation3 + $0x1c1] sm:$0xff] %vm6480, %v10401
    %10527 = vst.msk [vmem:[#allocation3 + $0x1c9] sm:$0x7f] %vm6482, %v10403
    %10528 = vst.msk [vmem:[#allocation3 + $0x1d1] sm:$0xff] %vm6480, %v10405
    %10529 = vst.msk [vmem:[#allocation3 + $0x1d9] sm:$0x7f] %vm6482, %v10407
    %10530 = vst.msk [vmem:[#allocation3 + $0x1e1] sm:$0xff] %vm6480, %v10409
    %10531 = vst.msk [vmem:[#allocation3 + $0x1e9] sm:$0x7f] %vm6482, %v10411
    %v10532 = vld [vmem:[%s6179] sm:$0xff]
    %v10533 = vld [vmem:[%s6179 + $0x8] sm:$0xff]
    %v10534 = vld [vmem:[%s6179 + $0x10] sm:$0xff]
    %v10535 = vld [vmem:[%s6179 + $0x18] sm:$0xff]
    %v10536 = vld [vmem:[%s6179 + $0x20] sm:$0xff]
    %v10537 = vld [vmem:[%s6179 + $0x28] sm:$0xff]
    %v10538 = vld [vmem:[%s6179 + $0x30] sm:$0xff]
    %v10539 = vld [vmem:[%s6179 + $0x38] sm:$0xff]
    %v10540 = vld [vmem:[%s6179 + $0x40] sm:$0xff]
    %v10541 = vld [vmem:[%s6179 + $0x48] sm:$0xff]
    %v10542 = vld [vmem:[%s6179 + $0x50] sm:$0xff]
    %v10543 = vld [vmem:[%s6179 + $0x58] sm:$0xff]
    %v10544 = vld [vmem:[%s6179 + $0x60] sm:$0xff]
    %v10545 = vld [vmem:[%s6179 + $0x68] sm:$0xff]
    %v10546 = vld [vmem:[%s6179 + $0x70] sm:$0xff]
    %v10547 = vld [vmem:[%s6179 + $0x78] sm:$0xff]
    %v10548 = vld [vmem:[%s6179 + $0x80] sm:$0xff]
    %v10549 = vld [vmem:[%s6179 + $0x88] sm:$0xff]
    %v10550 = vld [vmem:[%s6179 + $0x90] sm:$0xff]
    %v10551 = vld [vmem:[%s6179 + $0x98] sm:$0xff]
    %v10552 = vld [vmem:[%s6179 + $0xa0] sm:$0xff]
    %v10553 = vld [vmem:[%s6179 + $0xa8] sm:$0xff]
    %v10554 = vld [vmem:[%s6179 + $0xb0] sm:$0xff]
    %v10555 = vld [vmem:[%s6179 + $0xb8] sm:$0xff]
    %v10556 = vld [vmem:[%s6179 + $0xc0] sm:$0xff]
    %v10557 = vld [vmem:[%s6179 + $0xc8] sm:$0xff]
    %v10558 = vld [vmem:[%s6179 + $0xd0] sm:$0xff]
    %v10559 = vld [vmem:[%s6179 + $0xd8] sm:$0xff]
    %v10560 = vld [vmem:[%s6179 + $0xe0] sm:$0xff]
    %v10561 = vld [vmem:[%s6179 + $0xe8] sm:$0xff]
    %v10562 = vld [vmem:[%s6179 + $0x100] sm:$0xff]
    %v10563 = vld [vmem:[%s6179 + $0x108] sm:$0xff]
    %v10564 = vld [vmem:[%s6179 + $0x110] sm:$0xff]
    %v10565 = vld [vmem:[%s6179 + $0x118] sm:$0xff]
    %v10566 = vld [vmem:[%s6179 + $0x120] sm:$0xff]
    %v10567 = vld [vmem:[%s6179 + $0x128] sm:$0xff]
    %v10568 = vld [vmem:[%s6179 + $0x130] sm:$0xff]
    %v10569 = vld [vmem:[%s6179 + $0x138] sm:$0xff]
    %v10570 = vld [vmem:[%s6179 + $0x140] sm:$0xff]
    %v10571 = vld [vmem:[%s6179 + $0x148] sm:$0xff]
    %v10572 = vld [vmem:[%s6179 + $0x150] sm:$0xff]
    %v10573 = vld [vmem:[%s6179 + $0x158] sm:$0xff]
    %v10574 = vld [vmem:[%s6179 + $0x160] sm:$0xff]
    %v10575 = vld [vmem:[%s6179 + $0x168] sm:$0xff]
    %v10576 = vld [vmem:[%s6179 + $0x170] sm:$0xff]
    %v10577 = vld [vmem:[%s6179 + $0x178] sm:$0xff]
    %v10578 = vld [vmem:[%s6179 + $0x180] sm:$0xff]
    %v10579 = vld [vmem:[%s6179 + $0x188] sm:$0xff]
    %v10580 = vld [vmem:[%s6179 + $0x190] sm:$0xff]
    %v10581 = vld [vmem:[%s6179 + $0x198] sm:$0xff]
    %v10582 = vld [vmem:[%s6179 + $0x1a0] sm:$0xff]
    %v10583 = vld [vmem:[%s6179 + $0x1a8] sm:$0xff]
    %v10584 = vld [vmem:[%s6179 + $0x1b0] sm:$0xff]
    %v10585 = vld [vmem:[%s6179 + $0x1b8] sm:$0xff]
    %v10586 = vld [vmem:[%s6179 + $0x1c0] sm:$0xff]
    %v10587 = vld [vmem:[%s6179 + $0x1c8] sm:$0xff]
    %v10588 = vld [vmem:[%s6179 + $0x1d0] sm:$0xff]
    %v10589 = vld [vmem:[%s6179 + $0x1d8] sm:$0xff]
    %v10590 = vld [vmem:[%s6179 + $0x1e0] sm:$0xff]
    %v10591 = vld [vmem:[%s6179 + $0x1e8] sm:$0xff]
    %10652 = vrot.lane.b32.xlu0 %v10532, 56
    %v10653 = vpop.permute.xlu0 %10652
    %10654 = vrot.lane.b32.xlu0 %v10533, 56
    %v10655 = vpop.permute.xlu0 %10654
    %10656 = vrot.lane.b32.xlu0 %v10534, 56
    %v10657 = vpop.permute.xlu0 %10656
    %10658 = vrot.lane.b32.xlu0 %v10535, 56
    %v10659 = vpop.permute.xlu0 %10658
    %10660 = vrot.lane.b32.xlu0 %v10536, 56
    %v10661 = vpop.permute.xlu0 %10660
    %10662 = vrot.lane.b32.xlu0 %v10537, 56
    %v10663 = vpop.permute.xlu0 %10662
    %10664 = vrot.lane.b32.xlu0 %v10538, 56
    %v10665 = vpop.permute.xlu0 %10664
    %10666 = vrot.lane.b32.xlu0 %v10539, 56
    %v10667 = vpop.permute.xlu0 %10666
    %10668 = vrot.lane.b32.xlu0 %v10540, 56
    %v10669 = vpop.permute.xlu0 %10668
    %10670 = vrot.lane.b32.xlu0 %v10541, 56
    %v10671 = vpop.permute.xlu0 %10670
    %10672 = vrot.lane.b32.xlu0 %v10542, 56
    %v10673 = vpop.permute.xlu0 %10672
    %10674 = vrot.lane.b32.xlu0 %v10543, 56
    %v10675 = vpop.permute.xlu0 %10674
    %10676 = vrot.lane.b32.xlu0 %v10544, 56
    %v10677 = vpop.permute.xlu0 %10676
    %10678 = vrot.lane.b32.xlu0 %v10545, 56
    %v10679 = vpop.permute.xlu0 %10678
    %10680 = vrot.lane.b32.xlu0 %v10546, 56
    %v10681 = vpop.permute.xlu0 %10680
    %10682 = vrot.lane.b32.xlu0 %v10547, 56
    %v10683 = vpop.permute.xlu0 %10682
    %10684 = vrot.lane.b32.xlu0 %v10548, 56
    %v10685 = vpop.permute.xlu0 %10684
    %10686 = vrot.lane.b32.xlu0 %v10549, 56
    %v10687 = vpop.permute.xlu0 %10686
    %10688 = vrot.lane.b32.xlu0 %v10550, 56
    %v10689 = vpop.permute.xlu0 %10688
    %10690 = vrot.lane.b32.xlu0 %v10551, 56
    %v10691 = vpop.permute.xlu0 %10690
    %10692 = vrot.lane.b32.xlu0 %v10552, 56
    %v10693 = vpop.permute.xlu0 %10692
    %10694 = vrot.lane.b32.xlu0 %v10553, 56
    %v10695 = vpop.permute.xlu0 %10694
    %10696 = vrot.lane.b32.xlu0 %v10554, 56
    %v10697 = vpop.permute.xlu0 %10696
    %10698 = vrot.lane.b32.xlu0 %v10555, 56
    %v10699 = vpop.permute.xlu0 %10698
    %10700 = vrot.lane.b32.xlu0 %v10556, 56
    %v10701 = vpop.permute.xlu0 %10700
    %10702 = vrot.lane.b32.xlu0 %v10557, 56
    %v10703 = vpop.permute.xlu0 %10702
    %10704 = vrot.lane.b32.xlu0 %v10558, 56
    %v10705 = vpop.permute.xlu0 %10704
    %10706 = vrot.lane.b32.xlu0 %v10559, 56
    %v10707 = vpop.permute.xlu0 %10706
    %10708 = vrot.lane.b32.xlu0 %v10560, 56
    %v10709 = vpop.permute.xlu0 %10708
    %10710 = vrot.lane.b32.xlu0 %v10561, 56
    %v10711 = vpop.permute.xlu0 %10710
    %10712 = vrot.lane.b32.xlu0 %v10562, 56
    %v10713 = vpop.permute.xlu0 %10712
    %10714 = vrot.lane.b32.xlu0 %v10563, 56
    %v10715 = vpop.permute.xlu0 %10714
    %10716 = vrot.lane.b32.xlu0 %v10564, 56
    %v10717 = vpop.permute.xlu0 %10716
    %10718 = vrot.lane.b32.xlu0 %v10565, 56
    %v10719 = vpop.permute.xlu0 %10718
    %10720 = vrot.lane.b32.xlu0 %v10566, 56
    %v10721 = vpop.permute.xlu0 %10720
    %10722 = vrot.lane.b32.xlu0 %v10567, 56
    %v10723 = vpop.permute.xlu0 %10722
    %10724 = vrot.lane.b32.xlu0 %v10568, 56
    %v10725 = vpop.permute.xlu0 %10724
    %10726 = vrot.lane.b32.xlu0 %v10569, 56
    %v10727 = vpop.permute.xlu0 %10726
    %10728 = vrot.lane.b32.xlu0 %v10570, 56
    %v10729 = vpop.permute.xlu0 %10728
    %10730 = vrot.lane.b32.xlu0 %v10571, 56
    %v10731 = vpop.permute.xlu0 %10730
    %10732 = vrot.lane.b32.xlu0 %v10572, 56
    %v10733 = vpop.permute.xlu0 %10732
    %10734 = vrot.lane.b32.xlu0 %v10573, 56
    %v10735 = vpop.permute.xlu0 %10734
    %10736 = vrot.lane.b32.xlu0 %v10574, 56
    %v10737 = vpop.permute.xlu0 %10736
    %10738 = vrot.lane.b32.xlu0 %v10575, 56
    %v10739 = vpop.permute.xlu0 %10738
    %10740 = vrot.lane.b32.xlu0 %v10576, 56
    %v10741 = vpop.permute.xlu0 %10740
    %10742 = vrot.lane.b32.xlu0 %v10577, 56
    %v10743 = vpop.permute.xlu0 %10742
    %10744 = vrot.lane.b32.xlu0 %v10578, 56
    %v10745 = vpop.permute.xlu0 %10744
    %10746 = vrot.lane.b32.xlu0 %v10579, 56
    %v10747 = vpop.permute.xlu0 %10746
    %10748 = vrot.lane.b32.xlu0 %v10580, 56
    %v10749 = vpop.permute.xlu0 %10748
    %10750 = vrot.lane.b32.xlu0 %v10581, 56
    %v10751 = vpop.permute.xlu0 %10750
    %10752 = vrot.lane.b32.xlu0 %v10582, 56
    %v10753 = vpop.permute.xlu0 %10752
    %10754 = vrot.lane.b32.xlu0 %v10583, 56
    %v10755 = vpop.permute.xlu0 %10754
    %10756 = vrot.lane.b32.xlu0 %v10584, 56
    %v10757 = vpop.permute.xlu0 %10756
    %10758 = vrot.lane.b32.xlu0 %v10585, 56
    %v10759 = vpop.permute.xlu0 %10758
    %10760 = vrot.lane.b32.xlu0 %v10586, 56
    %v10761 = vpop.permute.xlu0 %10760
    %10762 = vrot.lane.b32.xlu0 %v10587, 56
    %v10763 = vpop.permute.xlu0 %10762
    %10764 = vrot.lane.b32.xlu0 %v10588, 56
    %v10765 = vpop.permute.xlu0 %10764
    %10766 = vrot.lane.b32.xlu0 %v10589, 56
    %v10767 = vpop.permute.xlu0 %10766
    %10768 = vrot.lane.b32.xlu0 %v10590, 56
    %v10769 = vpop.permute.xlu0 %10768
    %10770 = vrot.lane.b32.xlu0 %v10591, 56
    %v10771 = vpop.permute.xlu0 %10770
    %10832 = vst.msk [vmem:[#allocation3] sm:$0xff] %vm6842, %v10653
    %10833 = vst.msk [vmem:[#allocation3 + $0x8] sm:$0xff] %vm6842, %v10655
    %10834 = vst.msk [vmem:[#allocation3 + $0x10] sm:$0xff] %vm6842, %v10657
    %10835 = vst.msk [vmem:[#allocation3 + $0x18] sm:$0xff] %vm6842, %v10659
    %10836 = vst.msk [vmem:[#allocation3 + $0x20] sm:$0xff] %vm6842, %v10661
    %10837 = vst.msk [vmem:[#allocation3 + $0x28] sm:$0xff] %vm6842, %v10663
    %10838 = vst.msk [vmem:[#allocation3 + $0x30] sm:$0xff] %vm6842, %v10665
    %10839 = vst.msk [vmem:[#allocation3 + $0x38] sm:$0xff] %vm6842, %v10667
    %10840 = vst.msk [vmem:[#allocation3 + $0x40] sm:$0xff] %vm6842, %v10669
    %10841 = vst.msk [vmem:[#allocation3 + $0x48] sm:$0xff] %vm6842, %v10671
    %10842 = vst.msk [vmem:[#allocation3 + $0x50] sm:$0xff] %vm6842, %v10673
    %10843 = vst.msk [vmem:[#allocation3 + $0x58] sm:$0xff] %vm6842, %v10675
    %10844 = vst.msk [vmem:[#allocation3 + $0x60] sm:$0xff] %vm6842, %v10677
    %10845 = vst.msk [vmem:[#allocation3 + $0x68] sm:$0xff] %vm6842, %v10679
    %10846 = vst.msk [vmem:[#allocation3 + $0x70] sm:$0xff] %vm6842, %v10681
    %10847 = vst.msk [vmem:[#allocation3 + $0x78] sm:$0xff] %vm6842, %v10683
    %10848 = vst.msk [vmem:[#allocation3 + $0x80] sm:$0xff] %vm6842, %v10685
    %10849 = vst.msk [vmem:[#allocation3 + $0x88] sm:$0xff] %vm6842, %v10687
    %10850 = vst.msk [vmem:[#allocation3 + $0x90] sm:$0xff] %vm6842, %v10689
    %10851 = vst.msk [vmem:[#allocation3 + $0x98] sm:$0xff] %vm6842, %v10691
    %10852 = vst.msk [vmem:[#allocation3 + $0xa0] sm:$0xff] %vm6842, %v10693
    %10853 = vst.msk [vmem:[#allocation3 + $0xa8] sm:$0xff] %vm6842, %v10695
    %10854 = vst.msk [vmem:[#allocation3 + $0xb0] sm:$0xff] %vm6842, %v10697
    %10855 = vst.msk [vmem:[#allocation3 + $0xb8] sm:$0xff] %vm6842, %v10699
    %10856 = vst.msk [vmem:[#allocation3 + $0xc0] sm:$0xff] %vm6842, %v10701
    %10857 = vst.msk [vmem:[#allocation3 + $0xc8] sm:$0xff] %vm6842, %v10703
    %10858 = vst.msk [vmem:[#allocation3 + $0xd0] sm:$0xff] %vm6842, %v10705
    %10859 = vst.msk [vmem:[#allocation3 + $0xd8] sm:$0xff] %vm6842, %v10707
    %10860 = vst.msk [vmem:[#allocation3 + $0xe0] sm:$0xff] %vm6842, %v10709
    %10861 = vst.msk [vmem:[#allocation3 + $0xe8] sm:$0xff] %vm6842, %v10711
    %10862 = vst.msk [vmem:[#allocation3 + $0x100] sm:$0xff] %vm6842, %v10713
    %10863 = vst.msk [vmem:[#allocation3 + $0x108] sm:$0xff] %vm6842, %v10715
    %10864 = vst.msk [vmem:[#allocation3 + $0x110] sm:$0xff] %vm6842, %v10717
    %10865 = vst.msk [vmem:[#allocation3 + $0x118] sm:$0xff] %vm6842, %v10719
    %10866 = vst.msk [vmem:[#allocation3 + $0x120] sm:$0xff] %vm6842, %v10721
    %10867 = vst.msk [vmem:[#allocation3 + $0x128] sm:$0xff] %vm6842, %v10723
    %10868 = vst.msk [vmem:[#allocation3 + $0x130] sm:$0xff] %vm6842, %v10725
    %10869 = vst.msk [vmem:[#allocation3 + $0x138] sm:$0xff] %vm6842, %v10727
    %10870 = vst.msk [vmem:[#allocation3 + $0x140] sm:$0xff] %vm6842, %v10729
    %10871 = vst.msk [vmem:[#allocation3 + $0x148] sm:$0xff] %vm6842, %v10731
    %10872 = vst.msk [vmem:[#allocation3 + $0x150] sm:$0xff] %vm6842, %v10733
    %10873 = vst.msk [vmem:[#allocation3 + $0x158] sm:$0xff] %vm6842, %v10735
    %10874 = vst.msk [vmem:[#allocation3 + $0x160] sm:$0xff] %vm6842, %v10737
    %10875 = vst.msk [vmem:[#allocation3 + $0x168] sm:$0xff] %vm6842, %v10739
    %10876 = vst.msk [vmem:[#allocation3 + $0x170] sm:$0xff] %vm6842, %v10741
    %10877 = vst.msk [vmem:[#allocation3 + $0x178] sm:$0xff] %vm6842, %v10743
    %10878 = vst.msk [vmem:[#allocation3 + $0x180] sm:$0xff] %vm6842, %v10745
    %10879 = vst.msk [vmem:[#allocation3 + $0x188] sm:$0xff] %vm6842, %v10747
    %10880 = vst.msk [vmem:[#allocation3 + $0x190] sm:$0xff] %vm6842, %v10749
    %10881 = vst.msk [vmem:[#allocation3 + $0x198] sm:$0xff] %vm6842, %v10751
    %10882 = vst.msk [vmem:[#allocation3 + $0x1a0] sm:$0xff] %vm6842, %v10753
    %10883 = vst.msk [vmem:[#allocation3 + $0x1a8] sm:$0xff] %vm6842, %v10755
    %10884 = vst.msk [vmem:[#allocation3 + $0x1b0] sm:$0xff] %vm6842, %v10757
    %10885 = vst.msk [vmem:[#allocation3 + $0x1b8] sm:$0xff] %vm6842, %v10759
    %10886 = vst.msk [vmem:[#allocation3 + $0x1c0] sm:$0xff] %vm6842, %v10761
    %10887 = vst.msk [vmem:[#allocation3 + $0x1c8] sm:$0xff] %vm6842, %v10763
    %10888 = vst.msk [vmem:[#allocation3 + $0x1d0] sm:$0xff] %vm6842, %v10765
    %10889 = vst.msk [vmem:[#allocation3 + $0x1d8] sm:$0xff] %vm6842, %v10767
    %10890 = vst.msk [vmem:[#allocation3 + $0x1e0] sm:$0xff] %vm6842, %v10769
    %10891 = vst.msk [vmem:[#allocation3 + $0x1e8] sm:$0xff] %vm6842, %v10771
    %v10892 = vld [vmem:[%s6179 + $0x1] sm:$0xff]
    %v10893 = vld [vmem:[%s6179 + $0x9] sm:$0x7f]
    %v10894 = vld [vmem:[%s6179 + $0x11] sm:$0xff]
    %v10895 = vld [vmem:[%s6179 + $0x19] sm:$0x7f]
    %v10896 = vld [vmem:[%s6179 + $0x21] sm:$0xff]
    %v10897 = vld [vmem:[%s6179 + $0x29] sm:$0x7f]
    %v10898 = vld [vmem:[%s6179 + $0x31] sm:$0xff]
    %v10899 = vld [vmem:[%s6179 + $0x39] sm:$0x7f]
    %v10900 = vld [vmem:[%s6179 + $0x41] sm:$0xff]
    %v10901 = vld [vmem:[%s6179 + $0x49] sm:$0x7f]
    %v10902 = vld [vmem:[%s6179 + $0x51] sm:$0xff]
    %v10903 = vld [vmem:[%s6179 + $0x59] sm:$0x7f]
    %v10904 = vld [vmem:[%s6179 + $0x61] sm:$0xff]
    %v10905 = vld [vmem:[%s6179 + $0x69] sm:$0x7f]
    %v10906 = vld [vmem:[%s6179 + $0x71] sm:$0xff]
    %v10907 = vld [vmem:[%s6179 + $0x79] sm:$0x7f]
    %v10908 = vld [vmem:[%s6179 + $0x81] sm:$0xff]
    %v10909 = vld [vmem:[%s6179 + $0x89] sm:$0x7f]
    %v10910 = vld [vmem:[%s6179 + $0x91] sm:$0xff]
    %v10911 = vld [vmem:[%s6179 + $0x99] sm:$0x7f]
    %v10912 = vld [vmem:[%s6179 + $0xa1] sm:$0xff]
    %v10913 = vld [vmem:[%s6179 + $0xa9] sm:$0x7f]
    %v10914 = vld [vmem:[%s6179 + $0xb1] sm:$0xff]
    %v10915 = vld [vmem:[%s6179 + $0xb9] sm:$0x7f]
    %v10916 = vld [vmem:[%s6179 + $0xc1] sm:$0xff]
    %v10917 = vld [vmem:[%s6179 + $0xc9] sm:$0x7f]
    %v10918 = vld [vmem:[%s6179 + $0xd1] sm:$0xff]
    %v10919 = vld [vmem:[%s6179 + $0xd9] sm:$0x7f]
    %v10920 = vld [vmem:[%s6179 + $0xe1] sm:$0xff]
    %v10921 = vld [vmem:[%s6179 + $0xe9] sm:$0x7f]
    %v10922 = vld [vmem:[%s6179 + $0x101] sm:$0xff]
    %v10923 = vld [vmem:[%s6179 + $0x109] sm:$0x7f]
    %v10924 = vld [vmem:[%s6179 + $0x111] sm:$0xff]
    %v10925 = vld [vmem:[%s6179 + $0x119] sm:$0x7f]
    %v10926 = vld [vmem:[%s6179 + $0x121] sm:$0xff]
    %v10927 = vld [vmem:[%s6179 + $0x129] sm:$0x7f]
    %v10928 = vld [vmem:[%s6179 + $0x131] sm:$0xff]
    %v10929 = vld [vmem:[%s6179 + $0x139] sm:$0x7f]
    %v10930 = vld [vmem:[%s6179 + $0x141] sm:$0xff]
    %v10931 = vld [vmem:[%s6179 + $0x149] sm:$0x7f]
    %v10932 = vld [vmem:[%s6179 + $0x151] sm:$0xff]
    %v10933 = vld [vmem:[%s6179 + $0x159] sm:$0x7f]
    %v10934 = vld [vmem:[%s6179 + $0x161] sm:$0xff]
    %v10935 = vld [vmem:[%s6179 + $0x169] sm:$0x7f]
    %v10936 = vld [vmem:[%s6179 + $0x171] sm:$0xff]
    %v10937 = vld [vmem:[%s6179 + $0x179] sm:$0x7f]
    %v10938 = vld [vmem:[%s6179 + $0x181] sm:$0xff]
    %v10939 = vld [vmem:[%s6179 + $0x189] sm:$0x7f]
    %v10940 = vld [vmem:[%s6179 + $0x191] sm:$0xff]
    %v10941 = vld [vmem:[%s6179 + $0x199] sm:$0x7f]
    %v10942 = vld [vmem:[%s6179 + $0x1a1] sm:$0xff]
    %v10943 = vld [vmem:[%s6179 + $0x1a9] sm:$0x7f]
    %v10944 = vld [vmem:[%s6179 + $0x1b1] sm:$0xff]
    %v10945 = vld [vmem:[%s6179 + $0x1b9] sm:$0x7f]
    %v10946 = vld [vmem:[%s6179 + $0x1c1] sm:$0xff]
    %v10947 = vld [vmem:[%s6179 + $0x1c9] sm:$0x7f]
    %v10948 = vld [vmem:[%s6179 + $0x1d1] sm:$0xff]
    %v10949 = vld [vmem:[%s6179 + $0x1d9] sm:$0x7f]
    %v10950 = vld [vmem:[%s6179 + $0x1e1] sm:$0xff]
    %v10951 = vld [vmem:[%s6179 + $0x1e9] sm:$0x7f]
    %11012 = vrot.lane.b32.xlu0 %v10892, 64
    %v11013 = vpop.permute.xlu0 %11012
    %11014 = vrot.lane.b32.xlu0 %v10893, 64
    %v11015 = vpop.permute.xlu0 %11014
    %11016 = vrot.lane.b32.xlu0 %v10894, 64
    %v11017 = vpop.permute.xlu0 %11016
    %11018 = vrot.lane.b32.xlu0 %v10895, 64
    %v11019 = vpop.permute.xlu0 %11018
    %11020 = vrot.lane.b32.xlu0 %v10896, 64
    %v11021 = vpop.permute.xlu0 %11020
    %11022 = vrot.lane.b32.xlu0 %v10897, 64
    %v11023 = vpop.permute.xlu0 %11022
    %11024 = vrot.lane.b32.xlu0 %v10898, 64
    %v11025 = vpop.permute.xlu0 %11024
    %11026 = vrot.lane.b32.xlu0 %v10899, 64
    %v11027 = vpop.permute.xlu0 %11026
    %11028 = vrot.lane.b32.xlu0 %v10900, 64
    %v11029 = vpop.permute.xlu0 %11028
    %11030 = vrot.lane.b32.xlu0 %v10901, 64
    %v11031 = vpop.permute.xlu0 %11030
    %11032 = vrot.lane.b32.xlu0 %v10902, 64
    %v11033 = vpop.permute.xlu0 %11032
    %11034 = vrot.lane.b32.xlu0 %v10903, 64
    %v11035 = vpop.permute.xlu0 %11034
    %11036 = vrot.lane.b32.xlu0 %v10904, 64
    %v11037 = vpop.permute.xlu0 %11036
    %11038 = vrot.lane.b32.xlu0 %v10905, 64
    %v11039 = vpop.permute.xlu0 %11038
    %11040 = vrot.lane.b32.xlu0 %v10906, 64
    %v11041 = vpop.permute.xlu0 %11040
    %11042 = vrot.lane.b32.xlu0 %v10907, 64
    %v11043 = vpop.permute.xlu0 %11042
    %11044 = vrot.lane.b32.xlu0 %v10908, 64
    %v11045 = vpop.permute.xlu0 %11044
    %11046 = vrot.lane.b32.xlu0 %v10909, 64
    %v11047 = vpop.permute.xlu0 %11046
    %11048 = vrot.lane.b32.xlu0 %v10910, 64
    %v11049 = vpop.permute.xlu0 %11048
    %11050 = vrot.lane.b32.xlu0 %v10911, 64
    %v11051 = vpop.permute.xlu0 %11050
    %11052 = vrot.lane.b32.xlu0 %v10912, 64
    %v11053 = vpop.permute.xlu0 %11052
    %11054 = vrot.lane.b32.xlu0 %v10913, 64
    %v11055 = vpop.permute.xlu0 %11054
    %11056 = vrot.lane.b32.xlu0 %v10914, 64
    %v11057 = vpop.permute.xlu0 %11056
    %11058 = vrot.lane.b32.xlu0 %v10915, 64
    %v11059 = vpop.permute.xlu0 %11058
    %11060 = vrot.lane.b32.xlu0 %v10916, 64
    %v11061 = vpop.permute.xlu0 %11060
    %11062 = vrot.lane.b32.xlu0 %v10917, 64
    %v11063 = vpop.permute.xlu0 %11062
    %11064 = vrot.lane.b32.xlu0 %v10918, 64
    %v11065 = vpop.permute.xlu0 %11064
    %11066 = vrot.lane.b32.xlu0 %v10919, 64
    %v11067 = vpop.permute.xlu0 %11066
    %11068 = vrot.lane.b32.xlu0 %v10920, 64
    %v11069 = vpop.permute.xlu0 %11068
    %11070 = vrot.lane.b32.xlu0 %v10921, 64
    %v11071 = vpop.permute.xlu0 %11070
    %11072 = vrot.lane.b32.xlu0 %v10922, 64
    %v11073 = vpop.permute.xlu0 %11072
    %11074 = vrot.lane.b32.xlu0 %v10923, 64
    %v11075 = vpop.permute.xlu0 %11074
    %11076 = vrot.lane.b32.xlu0 %v10924, 64
    %v11077 = vpop.permute.xlu0 %11076
    %11078 = vrot.lane.b32.xlu0 %v10925, 64
    %v11079 = vpop.permute.xlu0 %11078
    %11080 = vrot.lane.b32.xlu0 %v10926, 64
    %v11081 = vpop.permute.xlu0 %11080
    %11082 = vrot.lane.b32.xlu0 %v10927, 64
    %v11083 = vpop.permute.xlu0 %11082
    %11084 = vrot.lane.b32.xlu0 %v10928, 64
    %v11085 = vpop.permute.xlu0 %11084
    %11086 = vrot.lane.b32.xlu0 %v10929, 64
    %v11087 = vpop.permute.xlu0 %11086
    %11088 = vrot.lane.b32.xlu0 %v10930, 64
    %v11089 = vpop.permute.xlu0 %11088
    %11090 = vrot.lane.b32.xlu0 %v10931, 64
    %v11091 = vpop.permute.xlu0 %11090
    %11092 = vrot.lane.b32.xlu0 %v10932, 64
    %v11093 = vpop.permute.xlu0 %11092
    %11094 = vrot.lane.b32.xlu0 %v10933, 64
    %v11095 = vpop.permute.xlu0 %11094
    %11096 = vrot.lane.b32.xlu0 %v10934, 64
    %v11097 = vpop.permute.xlu0 %11096
    %11098 = vrot.lane.b32.xlu0 %v10935, 64
    %v11099 = vpop.permute.xlu0 %11098
    %11100 = vrot.lane.b32.xlu0 %v10936, 64
    %v11101 = vpop.permute.xlu0 %11100
    %11102 = vrot.lane.b32.xlu0 %v10937, 64
    %v11103 = vpop.permute.xlu0 %11102
    %11104 = vrot.lane.b32.xlu0 %v10938, 64
    %v11105 = vpop.permute.xlu0 %11104
    %11106 = vrot.lane.b32.xlu0 %v10939, 64
    %v11107 = vpop.permute.xlu0 %11106
    %11108 = vrot.lane.b32.xlu0 %v10940, 64
    %v11109 = vpop.permute.xlu0 %11108
    %11110 = vrot.lane.b32.xlu0 %v10941, 64
    %v11111 = vpop.permute.xlu0 %11110
    %11112 = vrot.lane.b32.xlu0 %v10942, 64
    %v11113 = vpop.permute.xlu0 %11112
    %11114 = vrot.lane.b32.xlu0 %v10943, 64
    %v11115 = vpop.permute.xlu0 %11114
    %11116 = vrot.lane.b32.xlu0 %v10944, 64
    %v11117 = vpop.permute.xlu0 %11116
    %11118 = vrot.lane.b32.xlu0 %v10945, 64
    %v11119 = vpop.permute.xlu0 %11118
    %11120 = vrot.lane.b32.xlu0 %v10946, 64
    %v11121 = vpop.permute.xlu0 %11120
    %11122 = vrot.lane.b32.xlu0 %v10947, 64
    %v11123 = vpop.permute.xlu0 %11122
    %11124 = vrot.lane.b32.xlu0 %v10948, 64
    %v11125 = vpop.permute.xlu0 %11124
    %11126 = vrot.lane.b32.xlu0 %v10949, 64
    %v11127 = vpop.permute.xlu0 %11126
    %11128 = vrot.lane.b32.xlu0 %v10950, 64
    %v11129 = vpop.permute.xlu0 %11128
    %11130 = vrot.lane.b32.xlu0 %v10951, 64
    %v11131 = vpop.permute.xlu0 %11130
    %11192 = vst.msk [vmem:[#allocation3] sm:$0xff] %vm7203, %v11013
    %11193 = vst.msk [vmem:[#allocation3 + $0x8] sm:$0x7f] %vm7205, %v11015
    %11194 = vst.msk [vmem:[#allocation3 + $0x10] sm:$0xff] %vm7203, %v11017
    %11195 = vst.msk [vmem:[#allocation3 + $0x18] sm:$0x7f] %vm7205, %v11019
    %11196 = vst.msk [vmem:[#allocation3 + $0x20] sm:$0xff] %vm7203, %v11021
    %11197 = vst.msk [vmem:[#allocation3 + $0x28] sm:$0x7f] %vm7205, %v11023
    %11198 = vst.msk [vmem:[#allocation3 + $0x30] sm:$0xff] %vm7203, %v11025
    %11199 = vst.msk [vmem:[#allocation3 + $0x38] sm:$0x7f] %vm7205, %v11027
    %11200 = vst.msk [vmem:[#allocation3 + $0x40] sm:$0xff] %vm7203, %v11029
    %11201 = vst.msk [vmem:[#allocation3 + $0x48] sm:$0x7f] %vm7205, %v11031
    %11202 = vst.msk [vmem:[#allocation3 + $0x50] sm:$0xff] %vm7203, %v11033
    %11203 = vst.msk [vmem:[#allocation3 + $0x58] sm:$0x7f] %vm7205, %v11035
    %11204 = vst.msk [vmem:[#allocation3 + $0x60] sm:$0xff] %vm7203, %v11037
    %11205 = vst.msk [vmem:[#allocation3 + $0x68] sm:$0x7f] %vm7205, %v11039
    %11206 = vst.msk [vmem:[#allocation3 + $0x70] sm:$0xff] %vm7203, %v11041
    %11207 = vst.msk [vmem:[#allocation3 + $0x78] sm:$0x7f] %vm7205, %v11043
    %11208 = vst.msk [vmem:[#allocation3 + $0x80] sm:$0xff] %vm7203, %v11045
    %11209 = vst.msk [vmem:[#allocation3 + $0x88] sm:$0x7f] %vm7205, %v11047
    %11210 = vst.msk [vmem:[#allocation3 + $0x90] sm:$0xff] %vm7203, %v11049
    %11211 = vst.msk [vmem:[#allocation3 + $0x98] sm:$0x7f] %vm7205, %v11051
    %11212 = vst.msk [vmem:[#allocation3 + $0xa0] sm:$0xff] %vm7203, %v11053
    %11213 = vst.msk [vmem:[#allocation3 + $0xa8] sm:$0x7f] %vm7205, %v11055
    %11214 = vst.msk [vmem:[#allocation3 + $0xb0] sm:$0xff] %vm7203, %v11057
    %11215 = vst.msk [vmem:[#allocation3 + $0xb8] sm:$0x7f] %vm7205, %v11059
    %11216 = vst.msk [vmem:[#allocation3 + $0xc0] sm:$0xff] %vm7203, %v11061
    %11217 = vst.msk [vmem:[#allocation3 + $0xc8] sm:$0x7f] %vm7205, %v11063
    %11218 = vst.msk [vmem:[#allocation3 + $0xd0] sm:$0xff] %vm7203, %v11065
    %11219 = vst.msk [vmem:[#allocation3 + $0xd8] sm:$0x7f] %vm7205, %v11067
    %11220 = vst.msk [vmem:[#allocation3 + $0xe0] sm:$0xff] %vm7203, %v11069
    %11221 = vst.msk [vmem:[#allocation3 + $0xe8] sm:$0x7f] %vm7205, %v11071
    %11222 = vst.msk [vmem:[#allocation3 + $0x100] sm:$0xff] %vm7203, %v11073
    %11223 = vst.msk [vmem:[#allocation3 + $0x108] sm:$0x7f] %vm7205, %v11075
    %11224 = vst.msk [vmem:[#allocation3 + $0x110] sm:$0xff] %vm7203, %v11077
    %11225 = vst.msk [vmem:[#allocation3 + $0x118] sm:$0x7f] %vm7205, %v11079
    %11226 = vst.msk [vmem:[#allocation3 + $0x120] sm:$0xff] %vm7203, %v11081
    %11227 = vst.msk [vmem:[#allocation3 + $0x128] sm:$0x7f] %vm7205, %v11083
    %11228 = vst.msk [vmem:[#allocation3 + $0x130] sm:$0xff] %vm7203, %v11085
    %11229 = vst.msk [vmem:[#allocation3 + $0x138] sm:$0x7f] %vm7205, %v11087
    %11230 = vst.msk [vmem:[#allocation3 + $0x140] sm:$0xff] %vm7203, %v11089
    %11231 = vst.msk [vmem:[#allocation3 + $0x148] sm:$0x7f] %vm7205, %v11091
    %11232 = vst.msk [vmem:[#allocation3 + $0x150] sm:$0xff] %vm7203, %v11093
    %11233 = vst.msk [vmem:[#allocation3 + $0x158] sm:$0x7f] %vm7205, %v11095
    %11234 = vst.msk [vmem:[#allocation3 + $0x160] sm:$0xff] %vm7203, %v11097
    %11235 = vst.msk [vmem:[#allocation3 + $0x168] sm:$0x7f] %vm7205, %v11099
    %11236 = vst.msk [vmem:[#allocation3 + $0x170] sm:$0xff] %vm7203, %v11101
    %11237 = vst.msk [vmem:[#allocation3 + $0x178] sm:$0x7f] %vm7205, %v11103
    %11238 = vst.msk [vmem:[#allocation3 + $0x180] sm:$0xff] %vm7203, %v11105
    %11239 = vst.msk [vmem:[#allocation3 + $0x188] sm:$0x7f] %vm7205, %v11107
    %11240 = vst.msk [vmem:[#allocation3 + $0x190] sm:$0xff] %vm7203, %v11109
    %11241 = vst.msk [vmem:[#allocation3 + $0x198] sm:$0x7f] %vm7205, %v11111
    %11242 = vst.msk [vmem:[#allocation3 + $0x1a0] sm:$0xff] %vm7203, %v11113
    %11243 = vst.msk [vmem:[#allocation3 + $0x1a8] sm:$0x7f] %vm7205, %v11115
    %11244 = vst.msk [vmem:[#allocation3 + $0x1b0] sm:$0xff] %vm7203, %v11117
    %11245 = vst.msk [vmem:[#allocation3 + $0x1b8] sm:$0x7f] %vm7205, %v11119
    %11246 = vst.msk [vmem:[#allocation3 + $0x1c0] sm:$0xff] %vm7203, %v11121
    %11247 = vst.msk [vmem:[#allocation3 + $0x1c8] sm:$0x7f] %vm7205, %v11123
    %11248 = vst.msk [vmem:[#allocation3 + $0x1d0] sm:$0xff] %vm7203, %v11125
    %11249 = vst.msk [vmem:[#allocation3 + $0x1d8] sm:$0x7f] %vm7205, %v11127
    %11250 = vst.msk [vmem:[#allocation3 + $0x1e0] sm:$0xff] %vm7203, %v11129
    %11251 = vst.msk [vmem:[#allocation3 + $0x1e8] sm:$0x7f] %vm7205, %v11131
    %v11252 = vld [vmem:[#allocation3] sm:$0xff]
    %v11253 = vld [vmem:[#allocation3 + $0x8] sm:$0xff]
    %v11254 = vld [vmem:[#allocation3 + $0x10] sm:$0xff]
    %v11255 = vld [vmem:[#allocation3 + $0x18] sm:$0xff]
    %v11256 = vld [vmem:[#allocation3 + $0x20] sm:$0xff]
    %v11257 = vld [vmem:[#allocation3 + $0x28] sm:$0xff]
    %v11258 = vld [vmem:[#allocation3 + $0x30] sm:$0xff]
    %v11259 = vld [vmem:[#allocation3 + $0x38] sm:$0xff]
    %v11260 = vld [vmem:[#allocation3 + $0x40] sm:$0xff]
    %v11261 = vld [vmem:[#allocation3 + $0x48] sm:$0xff]
    %v11262 = vld [vmem:[#allocation3 + $0x50] sm:$0xff]
    %v11263 = vld [vmem:[#allocation3 + $0x58] sm:$0xff]
    %v11264 = vld [vmem:[#allocation3 + $0x60] sm:$0xff]
    %v11265 = vld [vmem:[#allocation3 + $0x68] sm:$0xff]
    %v11266 = vld [vmem:[#allocation3 + $0x70] sm:$0xff]
    %v11267 = vld [vmem:[#allocation3 + $0x78] sm:$0xff]
    %v11268 = vld [vmem:[#allocation3 + $0x80] sm:$0xff]
    %v11269 = vld [vmem:[#allocation3 + $0x88] sm:$0xff]
    %v11270 = vld [vmem:[#allocation3 + $0x90] sm:$0xff]
    %v11271 = vld [vmem:[#allocation3 + $0x98] sm:$0xff]
    %v11272 = vld [vmem:[#allocation3 + $0xa0] sm:$0xff]
    %v11273 = vld [vmem:[#allocation3 + $0xa8] sm:$0xff]
    %v11274 = vld [vmem:[#allocation3 + $0xb0] sm:$0xff]
    %v11275 = vld [vmem:[#allocation3 + $0xb8] sm:$0xff]
    %v11276 = vld [vmem:[#allocation3 + $0xc0] sm:$0xff]
    %v11277 = vld [vmem:[#allocation3 + $0xc8] sm:$0xff]
    %v11278 = vld [vmem:[#allocation3 + $0xd0] sm:$0xff]
    %v11279 = vld [vmem:[#allocation3 + $0xd8] sm:$0xff]
    %v11280 = vld [vmem:[#allocation3 + $0xe0] sm:$0xff]
    %v11281 = vld [vmem:[#allocation3 + $0xe8] sm:$0xff]
    %v11282 = vld [vmem:[#allocation3 + $0xf0] sm:$0xff]
    %v11283 = vld [vmem:[#allocation3 + $0xf8] sm:$0xff]
    %v11284 = vld [vmem:[#allocation3 + $0x100] sm:$0xff]
    %v11285 = vld [vmem:[#allocation3 + $0x108] sm:$0xff]
    %v11286 = vld [vmem:[#allocation3 + $0x110] sm:$0xff]
    %v11287 = vld [vmem:[#allocation3 + $0x118] sm:$0xff]
    %v11288 = vld [vmem:[#allocation3 + $0x120] sm:$0xff]
    %v11289 = vld [vmem:[#allocation3 + $0x128] sm:$0xff]
    %v11290 = vld [vmem:[#allocation3 + $0x130] sm:$0xff]
    %v11291 = vld [vmem:[#allocation3 + $0x138] sm:$0xff]
    %v11292 = vld [vmem:[#allocation3 + $0x140] sm:$0xff]
    %v11293 = vld [vmem:[#allocation3 + $0x148] sm:$0xff]
    %v11294 = vld [vmem:[#allocation3 + $0x150] sm:$0xff]
    %v11295 = vld [vmem:[#allocation3 + $0x158] sm:$0xff]
    %v11296 = vld [vmem:[#allocation3 + $0x160] sm:$0xff]
    %v11297 = vld [vmem:[#allocation3 + $0x168] sm:$0xff]
    %v11298 = vld [vmem:[#allocation3 + $0x170] sm:$0xff]
    %v11299 = vld [vmem:[#allocation3 + $0x178] sm:$0xff]
    %v11300 = vld [vmem:[#allocation3 + $0x180] sm:$0xff]
    %v11301 = vld [vmem:[#allocation3 + $0x188] sm:$0xff]
    %v11302 = vld [vmem:[#allocation3 + $0x190] sm:$0xff]
    %v11303 = vld [vmem:[#allocation3 + $0x198] sm:$0xff]
    %v11304 = vld [vmem:[#allocation3 + $0x1a0] sm:$0xff]
    %v11305 = vld [vmem:[#allocation3 + $0x1a8] sm:$0xff]
    %v11306 = vld [vmem:[#allocation3 + $0x1b0] sm:$0xff]
    %v11307 = vld [vmem:[#allocation3 + $0x1b8] sm:$0xff]
    %v11308 = vld [vmem:[#allocation3 + $0x1c0] sm:$0xff]
    %v11309 = vld [vmem:[#allocation3 + $0x1c8] sm:$0xff]
    %v11310 = vld [vmem:[#allocation3 + $0x1d0] sm:$0xff]
    %v11311 = vld [vmem:[#allocation3 + $0x1d8] sm:$0xff]
    %v11312 = vld [vmem:[#allocation3 + $0x1e0] sm:$0xff]
    %v11313 = vld [vmem:[#allocation3 + $0x1e8] sm:$0xff]
    %v11314 = vld [vmem:[#allocation3 + $0x1f0] sm:$0xff]
    %v11315 = vld [vmem:[#allocation3 + $0x1f8] sm:$0xff]
    %v11316 = vld [vmem:[%s6] sm:$0xff]
    %v11317 = vld [vmem:[%s6 + $0x8] sm:$0xff]
    %v11318 = vld [vmem:[%s6 + $0x10] sm:$0xff]
    %v11319 = vld [vmem:[%s6 + $0x18] sm:$0xff]
    %v11320 = vld [vmem:[%s6 + $0x20] sm:$0xff]
    %v11321 = vld [vmem:[%s6 + $0x28] sm:$0xff]
    %v11322 = vld [vmem:[%s6 + $0x30] sm:$0xff]
    %v11323 = vld [vmem:[%s6 + $0x38] sm:$0xff]
    %v11324 = vld [vmem:[%s6 + $0x40] sm:$0xff]
    %v11325 = vld [vmem:[#allocation5] sm:$0x1]
    %v11327 = vlaneseq
    %v11328 = vshrl.u32 %v11327, 7
    %v11329 = vsub.s32 0, %v11328
    %v11330 = vrot.slane %v11325, %v11329
    %v11333 = vsel %vm109, %v11252, 0
    %v11336 = vsel %vm109, %v11253, 0
    %v11339 = vsel %vm109, %v11254, 0
    %v11342 = vsel %vm109, %v11255, 0
    %v11345 = vsel %vm109, %v11256, 0
    %v11348 = vsel %vm109, %v11257, 0
    %v11351 = vsel %vm109, %v11258, 0
    %v11354 = vsel %vm109, %v11259, 0
    %v11357 = vsel %vm109, %v11260, 0
    %v11360 = vsel %vm109, %v11261, 0
    %v11363 = vsel %vm109, %v11262, 0
    %v11366 = vsel %vm109, %v11263, 0
    %v11369 = vsel %vm109, %v11264, 0
    %v11372 = vsel %vm109, %v11265, 0
    %v11375 = vsel %vm109, %v11266, 0
    %v11378 = vsel %vm109, %v11267, 0
    %v11381 = vsel %vm109, %v11268, 0
    %v11384 = vsel %vm109, %v11269, 0
    %v11387 = vsel %vm109, %v11270, 0
    %v11390 = vsel %vm109, %v11271, 0
    %v11393 = vsel %vm109, %v11272, 0
    %v11396 = vsel %vm109, %v11273, 0
    %v11399 = vsel %vm109, %v11274, 0
    %v11402 = vsel %vm109, %v11275, 0
    %v11405 = vsel %vm109, %v11276, 0
    %v11408 = vsel %vm109, %v11277, 0
    %v11411 = vsel %vm109, %v11278, 0
    %v11414 = vsel %vm109, %v11279, 0
    %v11417 = vsel %vm109, %v11280, 0
    %v11420 = vsel %vm109, %v11281, 0
    %v11423 = vsel %vm109, %v11282, 0
    %v11426 = vsel %vm109, %v11283, 0
    %v11429 = vsel %vm109, %v11284, 0
    %v11432 = vsel %vm109, %v11285, 0
    %v11435 = vsel %vm109, %v11286, 0
    %v11438 = vsel %vm109, %v11287, 0
    %v11441 = vsel %vm109, %v11288, 0
    %v11444 = vsel %vm109, %v11289, 0
    %v11447 = vsel %vm109, %v11290, 0
    %v11450 = vsel %vm109, %v11291, 0
    %v11453 = vsel %vm109, %v11292, 0
    %v11456 = vsel %vm109, %v11293, 0
    %v11459 = vsel %vm109, %v11294, 0
    %v11462 = vsel %vm109, %v11295, 0
    %v11465 = vsel %vm109, %v11296, 0
    %v11468 = vsel %vm109, %v11297, 0
    %v11471 = vsel %vm109, %v11298, 0
    %v11474 = vsel %vm109, %v11299, 0
    %v11477 = vsel %vm109, %v11300, 0
    %v11480 = vsel %vm109, %v11301, 0
    %v11483 = vsel %vm109, %v11302, 0
    %v11486 = vsel %vm109, %v11303, 0
    %v11489 = vsel %vm109, %v11304, 0
    %v11492 = vsel %vm109, %v11305, 0
    %v11495 = vsel %vm109, %v11306, 0
    %v11498 = vsel %vm109, %v11307, 0
    %v11501 = vsel %vm109, %v11308, 0
    %v11504 = vsel %vm109, %v11309, 0
    %v11507 = vsel %vm109, %v11310, 0
    %v11510 = vsel %vm109, %v11311, 0
    %v11513 = vsel %vm109, %v11312, 0
    %v11516 = vsel %vm109, %v11313, 0
    %v11519 = vsel %vm109, %v11314, 0
    %v11522 = vsel %vm109, %v11315, 0
    %11524 = vmatprep.subr.mxu0 0.0
    %11525 = vmatpush1.msra.mxu0 0.0
    %11526 = vmatprep.subr.mxu0 0.0
    %11527 = vmatpush1.msra.mxu0 0.0
    %11528 = vmatprep.subr.mxu0 0.0
    %11529 = vmatpush1.msra.mxu0 0.0
    %11530 = vmatprep.subr.mxu0 0.0
    %11531 = vmatpush1.msra.mxu0 0.0
    %11532 = vmatprep.subr.mxu0 0.0
    %11533 = vmatpush1.msra.mxu0 0.0
    %11534 = vmatprep.subr.mxu0 0.0
    %11535 = vmatpush1.msra.mxu0 0.0
    %11536 = vmatprep.subr.mxu0 0.0
    %11537 = vmatpush1.msra.mxu0 0.0
    %11538 = vmatprep.subr.mxu0 0.0
    %11539 = vmatpush1.msra.mxu0 %v11324
    %11540 = vmatprep.subr.mxu0 0.0
    %11541 = vmatpush1.msra.mxu0 %v11323
    %11542 = vmatprep.subr.mxu0 0.0
    %11543 = vmatpush1.msra.mxu0 %v11322
    %11544 = vmatprep.subr.mxu0 0.0
    %11545 = vmatpush1.msra.mxu0 %v11321
    %11546 = vmatprep.subr.mxu0 0.0
    %11547 = vmatpush1.msra.mxu0 %v11320
    %11548 = vmatprep.subr.mxu0 0.0
    %11549 = vmatpush1.msra.mxu0 %v11319
    %11550 = vmatprep.subr.mxu0 0.0
    %11551 = vmatpush1.msra.mxu0 %v11318
    %11552 = vmatprep.subr.mxu0 0.0
    %11553 = vmatpush1.msra.mxu0 %v11317
    %11554 = vmatprep.subr.mxu0 0.0
    %11555 = vmatpush1.msra.mxu0 %v11316
    %11556 = vmatprep.subr.mxu0 0.0
    %11557 = vmatpush2.msra.mxu0 0.0
    %11558 = vmatprep.subr.mxu0 0.0
    %11559 = vmatpush2.msra.mxu0 0.0
    %11560 = vmatprep.subr.mxu0 0.0
    %11561 = vmatpush2.msra.mxu0 0.0
    %11562 = vmatprep.subr.mxu0 0.0
    %11563 = vmatpush2.msra.mxu0 0.0
    %11564 = vmatprep.subr.mxu0 0.0
    %11565 = vmatpush2.msra.mxu0 0.0
    %11566 = vmatprep.subr.mxu0 0.0
    %11567 = vmatpush2.msra.mxu0 0.0
    %11568 = vmatprep.subr.mxu0 0.0
    %11569 = vmatpush2.msra.mxu0 0.0
    %11570 = vmatprep.subr.mxu0 0.0
    %11571 = vmatpush2.msra.mxu0 0.0
    %11572 = vmatprep.subr.mxu0 0.0
    %11573 = vmatpush2.msra.mxu0 0.0
    %11574 = vmatprep.subr.mxu0 0.0
    %11575 = vmatpush2.msra.mxu0 0.0
    %11576 = vmatprep.subr.mxu0 0.0
    %11577 = vmatpush2.msra.mxu0 0.0
    %11578 = vmatprep.subr.mxu0 0.0
    %11579 = vmatpush2.msra.mxu0 0.0
    %11580 = vmatprep.subr.mxu0 0.0
    %11581 = vmatpush2.msra.mxu0 0.0
    %11582 = vmatprep.subr.mxu0 0.0
    %11583 = vmatpush2.msra.mxu0 0.0
    %11584 = vmatprep.subr.mxu0 0.0
    %11585 = vmatpush2.msra.mxu0 0.0
    %11586 = vmatprep.subr.mxu0 0.0
    %11587 = vmatpush2.msra.mxu0 0.0
    %11588 = vmatprep.mubr.f32.mxu0 0.0
    %11589 = vmatmul.mubr.f32.gmra.mxu0 %v11333
    %v11590 = vpop.f32.mrf.mxu0
    %v11591 = vadd.f32 %v11330, %v11590
    %v11592 = vpop.f32.mrf.mxu0
    %11593 = vmatprep.mubr.f32.mxu0 0.0
    %11594 = vmatmul.mubr.f32.gmra.mxu0 %v11336
    %v11595 = vpop.f32.mrf.mxu0
    %v11596 = vadd.f32 %v11330, %v11595
    %v11597 = vpop.f32.mrf.mxu0
    %11598 = vmatprep.mubr.f32.mxu0 0.0
    %11599 = vmatmul.mubr.f32.gmra.mxu0 %v11339
    %v11600 = vpop.f32.mrf.mxu0
    %v11601 = vadd.f32 %v11330, %v11600
    %v11602 = vpop.f32.mrf.mxu0
    %11603 = vmatprep.mubr.f32.mxu0 0.0
    %11604 = vmatmul.mubr.f32.gmra.mxu0 %v11342
    %v11605 = vpop.f32.mrf.mxu0
    %v11606 = vadd.f32 %v11330, %v11605
    %v11607 = vpop.f32.mrf.mxu0
    %11608 = vmatprep.mubr.f32.mxu0 0.0
    %11609 = vmatmul.mubr.f32.gmra.mxu0 %v11345
    %v11610 = vpop.f32.mrf.mxu0
    %v11611 = vadd.f32 %v11330, %v11610
    %v11612 = vpop.f32.mrf.mxu0
    %11613 = vmatprep.mubr.f32.mxu0 0.0
    %11614 = vmatmul.mubr.f32.gmra.mxu0 %v11348
    %v11615 = vpop.f32.mrf.mxu0
    %v11616 = vadd.f32 %v11330, %v11615
    %v11617 = vpop.f32.mrf.mxu0
    %11618 = vmatprep.mubr.f32.mxu0 0.0
    %11619 = vmatmul.mubr.f32.gmra.mxu0 %v11351
    %v11620 = vpop.f32.mrf.mxu0
    %v11621 = vadd.f32 %v11330, %v11620
    %v11622 = vpop.f32.mrf.mxu0
    %11623 = vmatprep.mubr.f32.mxu0 0.0
    %11624 = vmatmul.mubr.f32.gmra.mxu0 %v11354
    %v11625 = vpop.f32.mrf.mxu0
    %v11626 = vadd.f32 %v11330, %v11625
    %v11627 = vpop.f32.mrf.mxu0
    %11628 = vmatprep.mubr.f32.mxu0 0.0
    %11629 = vmatmul.mubr.f32.gmra.mxu0 %v11357
    %v11630 = vpop.f32.mrf.mxu0
    %v11631 = vadd.f32 %v11330, %v11630
    %v11632 = vpop.f32.mrf.mxu0
    %11633 = vmatprep.mubr.f32.mxu0 0.0
    %11634 = vmatmul.mubr.f32.gmra.mxu0 %v11360
    %v11635 = vpop.f32.mrf.mxu0
    %v11636 = vadd.f32 %v11330, %v11635
    %v11637 = vpop.f32.mrf.mxu0
    %11638 = vmatprep.mubr.f32.mxu0 0.0
    %11639 = vmatmul.mubr.f32.gmra.mxu0 %v11363
    %v11640 = vpop.f32.mrf.mxu0
    %v11641 = vadd.f32 %v11330, %v11640
    %v11642 = vpop.f32.mrf.mxu0
    %11643 = vmatprep.mubr.f32.mxu0 0.0
    %11644 = vmatmul.mubr.f32.gmra.mxu0 %v11366
    %v11645 = vpop.f32.mrf.mxu0
    %v11646 = vadd.f32 %v11330, %v11645
    %v11647 = vpop.f32.mrf.mxu0
    %11648 = vmatprep.mubr.f32.mxu0 0.0
    %11649 = vmatmul.mubr.f32.gmra.mxu0 %v11369
    %v11650 = vpop.f32.mrf.mxu0
    %v11651 = vadd.f32 %v11330, %v11650
    %v11652 = vpop.f32.mrf.mxu0
    %11653 = vmatprep.mubr.f32.mxu0 0.0
    %11654 = vmatmul.mubr.f32.gmra.mxu0 %v11372
    %v11655 = vpop.f32.mrf.mxu0
    %v11656 = vadd.f32 %v11330, %v11655
    %v11657 = vpop.f32.mrf.mxu0
    %11658 = vmatprep.mubr.f32.mxu0 0.0
    %11659 = vmatmul.mubr.f32.gmra.mxu0 %v11375
    %v11660 = vpop.f32.mrf.mxu0
    %v11661 = vadd.f32 %v11330, %v11660
    %v11662 = vpop.f32.mrf.mxu0
    %11663 = vmatprep.mubr.f32.mxu0 0.0
    %11664 = vmatmul.mubr.f32.gmra.mxu0 %v11378
    %v11665 = vpop.f32.mrf.mxu0
    %v11666 = vadd.f32 %v11330, %v11665
    %v11667 = vpop.f32.mrf.mxu0
    %11668 = vmatprep.mubr.f32.mxu0 0.0
    %11669 = vmatmul.mubr.f32.gmra.mxu0 %v11381
    %v11670 = vpop.f32.mrf.mxu0
    %v11671 = vadd.f32 %v11330, %v11670
    %v11672 = vpop.f32.mrf.mxu0
    %11673 = vmatprep.mubr.f32.mxu0 0.0
    %11674 = vmatmul.mubr.f32.gmra.mxu0 %v11384
    %v11675 = vpop.f32.mrf.mxu0
    %v11676 = vadd.f32 %v11330, %v11675
    %v11677 = vpop.f32.mrf.mxu0
    %11678 = vmatprep.mubr.f32.mxu0 0.0
    %11679 = vmatmul.mubr.f32.gmra.mxu0 %v11387
    %v11680 = vpop.f32.mrf.mxu0
    %v11681 = vadd.f32 %v11330, %v11680
    %v11682 = vpop.f32.mrf.mxu0
    %11683 = vmatprep.mubr.f32.mxu0 0.0
    %11684 = vmatmul.mubr.f32.gmra.mxu0 %v11390
    %v11685 = vpop.f32.mrf.mxu0
    %v11686 = vadd.f32 %v11330, %v11685
    %v11687 = vpop.f32.mrf.mxu0
    %11688 = vmatprep.mubr.f32.mxu0 0.0
    %11689 = vmatmul.mubr.f32.gmra.mxu0 %v11393
    %v11690 = vpop.f32.mrf.mxu0
    %v11691 = vadd.f32 %v11330, %v11690
    %v11692 = vpop.f32.mrf.mxu0
    %11693 = vmatprep.mubr.f32.mxu0 0.0
    %11694 = vmatmul.mubr.f32.gmra.mxu0 %v11396
    %v11695 = vpop.f32.mrf.mxu0
    %v11696 = vadd.f32 %v11330, %v11695
    %v11697 = vpop.f32.mrf.mxu0
    %11698 = vmatprep.mubr.f32.mxu0 0.0
    %11699 = vmatmul.mubr.f32.gmra.mxu0 %v11399
    %v11700 = vpop.f32.mrf.mxu0
    %v11701 = vadd.f32 %v11330, %v11700
    %v11702 = vpop.f32.mrf.mxu0
    %11703 = vmatprep.mubr.f32.mxu0 0.0
    %11704 = vmatmul.mubr.f32.gmra.mxu0 %v11402
    %v11705 = vpop.f32.mrf.mxu0
    %v11706 = vadd.f32 %v11330, %v11705
    %v11707 = vpop.f32.mrf.mxu0
    %11708 = vmatprep.mubr.f32.mxu0 0.0
    %11709 = vmatmul.mubr.f32.gmra.mxu0 %v11405
    %v11710 = vpop.f32.mrf.mxu0
    %v11711 = vadd.f32 %v11330, %v11710
    %v11712 = vpop.f32.mrf.mxu0
    %11713 = vmatprep.mubr.f32.mxu0 0.0
    %11714 = vmatmul.mubr.f32.gmra.mxu0 %v11408
    %v11715 = vpop.f32.mrf.mxu0
    %v11716 = vadd.f32 %v11330, %v11715
    %v11717 = vpop.f32.mrf.mxu0
    %11718 = vmatprep.mubr.f32.mxu0 0.0
    %11719 = vmatmul.mubr.f32.gmra.mxu0 %v11411
    %v11720 = vpop.f32.mrf.mxu0
    %v11721 = vadd.f32 %v11330, %v11720
    %v11722 = vpop.f32.mrf.mxu0
    %11723 = vmatprep.mubr.f32.mxu0 0.0
    %11724 = vmatmul.mubr.f32.gmra.mxu0 %v11414
    %v11725 = vpop.f32.mrf.mxu0
    %v11726 = vadd.f32 %v11330, %v11725
    %v11727 = vpop.f32.mrf.mxu0
    %11728 = vmatprep.mubr.f32.mxu0 0.0
    %11729 = vmatmul.mubr.f32.gmra.mxu0 %v11417
    %v11730 = vpop.f32.mrf.mxu0
    %v11731 = vadd.f32 %v11330, %v11730
    %v11732 = vpop.f32.mrf.mxu0
    %11733 = vmatprep.mubr.f32.mxu0 0.0
    %11734 = vmatmul.mubr.f32.gmra.mxu0 %v11420
    %v11735 = vpop.f32.mrf.mxu0
    %v11736 = vadd.f32 %v11330, %v11735
    %v11737 = vpop.f32.mrf.mxu0
    %11738 = vmatprep.mubr.f32.mxu0 0.0
    %11739 = vmatmul.mubr.f32.gmra.mxu0 %v11423
    %v11740 = vpop.f32.mrf.mxu0
    %v11741 = vadd.f32 %v11330, %v11740
    %v11742 = vpop.f32.mrf.mxu0
    %11743 = vmatprep.mubr.f32.mxu0 0.0
    %11744 = vmatmul.mubr.f32.gmra.mxu0 %v11426
    %v11745 = vpop.f32.mrf.mxu0
    %v11746 = vadd.f32 %v11330, %v11745
    %v11747 = vpop.f32.mrf.mxu0
    %11748 = vmatprep.mubr.f32.mxu0 0.0
    %11749 = vmatmul.mubr.f32.gmra.mxu0 %v11429
    %v11750 = vpop.f32.mrf.mxu0
    %v11751 = vadd.f32 %v11330, %v11750
    %v11752 = vpop.f32.mrf.mxu0
    %11753 = vmatprep.mubr.f32.mxu0 0.0
    %11754 = vmatmul.mubr.f32.gmra.mxu0 %v11432
    %v11755 = vpop.f32.mrf.mxu0
    %v11756 = vadd.f32 %v11330, %v11755
    %v11757 = vpop.f32.mrf.mxu0
    %11758 = vmatprep.mubr.f32.mxu0 0.0
    %11759 = vmatmul.mubr.f32.gmra.mxu0 %v11435
    %v11760 = vpop.f32.mrf.mxu0
    %v11761 = vadd.f32 %v11330, %v11760
    %v11762 = vpop.f32.mrf.mxu0
    %11763 = vmatprep.mubr.f32.mxu0 0.0
    %11764 = vmatmul.mubr.f32.gmra.mxu0 %v11438
    %v11765 = vpop.f32.mrf.mxu0
    %v11766 = vadd.f32 %v11330, %v11765
    %v11767 = vpop.f32.mrf.mxu0
    %11768 = vmatprep.mubr.f32.mxu0 0.0
    %11769 = vmatmul.mubr.f32.gmra.mxu0 %v11441
    %v11770 = vpop.f32.mrf.mxu0
    %v11771 = vadd.f32 %v11330, %v11770
    %v11772 = vpop.f32.mrf.mxu0
    %11773 = vmatprep.mubr.f32.mxu0 0.0
    %11774 = vmatmul.mubr.f32.gmra.mxu0 %v11444
    %v11775 = vpop.f32.mrf.mxu0
    %v11776 = vadd.f32 %v11330, %v11775
    %v11777 = vpop.f32.mrf.mxu0
    %11778 = vmatprep.mubr.f32.mxu0 0.0
    %11779 = vmatmul.mubr.f32.gmra.mxu0 %v11447
    %v11780 = vpop.f32.mrf.mxu0
    %v11781 = vadd.f32 %v11330, %v11780
    %v11782 = vpop.f32.mrf.mxu0
    %11783 = vmatprep.mubr.f32.mxu0 0.0
    %11784 = vmatmul.mubr.f32.gmra.mxu0 %v11450
    %v11785 = vpop.f32.mrf.mxu0
    %v11786 = vadd.f32 %v11330, %v11785
    %v11787 = vpop.f32.mrf.mxu0
    %11788 = vmatprep.mubr.f32.mxu0 0.0
    %11789 = vmatmul.mubr.f32.gmra.mxu0 %v11453
    %v11790 = vpop.f32.mrf.mxu0
    %v11791 = vadd.f32 %v11330, %v11790
    %v11792 = vpop.f32.mrf.mxu0
    %11793 = vmatprep.mubr.f32.mxu0 0.0
    %11794 = vmatmul.mubr.f32.gmra.mxu0 %v11456
    %v11795 = vpop.f32.mrf.mxu0
    %v11796 = vadd.f32 %v11330, %v11795
    %v11797 = vpop.f32.mrf.mxu0
    %11798 = vmatprep.mubr.f32.mxu0 0.0
    %11799 = vmatmul.mubr.f32.gmra.mxu0 %v11459
    %v11800 = vpop.f32.mrf.mxu0
    %v11801 = vadd.f32 %v11330, %v11800
    %v11802 = vpop.f32.mrf.mxu0
    %11803 = vmatprep.mubr.f32.mxu0 0.0
    %11804 = vmatmul.mubr.f32.gmra.mxu0 %v11462
    %v11805 = vpop.f32.mrf.mxu0
    %v11806 = vadd.f32 %v11330, %v11805
    %v11807 = vpop.f32.mrf.mxu0
    %11808 = vmatprep.mubr.f32.mxu0 0.0
    %11809 = vmatmul.mubr.f32.gmra.mxu0 %v11465
    %v11810 = vpop.f32.mrf.mxu0
    %v11811 = vadd.f32 %v11330, %v11810
    %v11812 = vpop.f32.mrf.mxu0
    %11813 = vmatprep.mubr.f32.mxu0 0.0
    %11814 = vmatmul.mubr.f32.gmra.mxu0 %v11468
    %v11815 = vpop.f32.mrf.mxu0
    %v11816 = vadd.f32 %v11330, %v11815
    %v11817 = vpop.f32.mrf.mxu0
    %11818 = vmatprep.mubr.f32.mxu0 0.0
    %11819 = vmatmul.mubr.f32.gmra.mxu0 %v11471
    %v11820 = vpop.f32.mrf.mxu0
    %v11821 = vadd.f32 %v11330, %v11820
    %v11822 = vpop.f32.mrf.mxu0
    %11823 = vmatprep.mubr.f32.mxu0 0.0
    %11824 = vmatmul.mubr.f32.gmra.mxu0 %v11474
    %v11825 = vpop.f32.mrf.mxu0
    %v11826 = vadd.f32 %v11330, %v11825
    %v11827 = vpop.f32.mrf.mxu0
    %11828 = vmatprep.mubr.f32.mxu0 0.0
    %11829 = vmatmul.mubr.f32.gmra.mxu0 %v11477
    %v11830 = vpop.f32.mrf.mxu0
    %v11831 = vadd.f32 %v11330, %v11830
    %v11832 = vpop.f32.mrf.mxu0
    %11833 = vmatprep.mubr.f32.mxu0 0.0
    %11834 = vmatmul.mubr.f32.gmra.mxu0 %v11480
    %v11835 = vpop.f32.mrf.mxu0
    %v11836 = vadd.f32 %v11330, %v11835
    %v11837 = vpop.f32.mrf.mxu0
    %11838 = vmatprep.mubr.f32.mxu0 0.0
    %11839 = vmatmul.mubr.f32.gmra.mxu0 %v11483
    %v11840 = vpop.f32.mrf.mxu0
    %v11841 = vadd.f32 %v11330, %v11840
    %v11842 = vpop.f32.mrf.mxu0
    %11843 = vmatprep.mubr.f32.mxu0 0.0
    %11844 = vmatmul.mubr.f32.gmra.mxu0 %v11486
    %v11845 = vpop.f32.mrf.mxu0
    %v11846 = vadd.f32 %v11330, %v11845
    %v11847 = vpop.f32.mrf.mxu0
    %11848 = vmatprep.mubr.f32.mxu0 0.0
    %11849 = vmatmul.mubr.f32.gmra.mxu0 %v11489
    %v11850 = vpop.f32.mrf.mxu0
    %v11851 = vadd.f32 %v11330, %v11850
    %v11852 = vpop.f32.mrf.mxu0
    %11853 = vmatprep.mubr.f32.mxu0 0.0
    %11854 = vmatmul.mubr.f32.gmra.mxu0 %v11492
    %v11855 = vpop.f32.mrf.mxu0
    %v11856 = vadd.f32 %v11330, %v11855
    %v11857 = vpop.f32.mrf.mxu0
    %11858 = vmatprep.mubr.f32.mxu0 0.0
    %11859 = vmatmul.mubr.f32.gmra.mxu0 %v11495
    %v11860 = vpop.f32.mrf.mxu0
    %v11861 = vadd.f32 %v11330, %v11860
    %v11862 = vpop.f32.mrf.mxu0
    %11863 = vmatprep.mubr.f32.mxu0 0.0
    %11864 = vmatmul.mubr.f32.gmra.mxu0 %v11498
    %v11865 = vpop.f32.mrf.mxu0
    %v11866 = vadd.f32 %v11330, %v11865
    %v11867 = vpop.f32.mrf.mxu0
    %11868 = vmatprep.mubr.f32.mxu0 0.0
    %11869 = vmatmul.mubr.f32.gmra.mxu0 %v11501
    %v11870 = vpop.f32.mrf.mxu0
    %v11871 = vadd.f32 %v11330, %v11870
    %v11872 = vpop.f32.mrf.mxu0
    %11873 = vmatprep.mubr.f32.mxu0 0.0
    %11874 = vmatmul.mubr.f32.gmra.mxu0 %v11504
    %v11875 = vpop.f32.mrf.mxu0
    %v11876 = vadd.f32 %v11330, %v11875
    %v11877 = vpop.f32.mrf.mxu0
    %11878 = vmatprep.mubr.f32.mxu0 0.0
    %11879 = vmatmul.mubr.f32.gmra.mxu0 %v11507
    %v11880 = vpop.f32.mrf.mxu0
    %v11881 = vadd.f32 %v11330, %v11880
    %v11882 = vpop.f32.mrf.mxu0
    %11883 = vmatprep.mubr.f32.mxu0 0.0
    %11884 = vmatmul.mubr.f32.gmra.mxu0 %v11510
    %v11885 = vpop.f32.mrf.mxu0
    %v11886 = vadd.f32 %v11330, %v11885
    %v11887 = vpop.f32.mrf.mxu0
    %11888 = vmatprep.mubr.f32.mxu0 0.0
    %11889 = vmatmul.mubr.f32.gmra.mxu0 %v11513
    %v11890 = vpop.f32.mrf.mxu0
    %v11891 = vadd.f32 %v11330, %v11890
    %v11892 = vpop.f32.mrf.mxu0
    %11893 = vmatprep.mubr.f32.mxu0 0.0
    %11894 = vmatmul.mubr.f32.gmra.mxu0 %v11516
    %v11895 = vpop.f32.mrf.mxu0
    %v11896 = vadd.f32 %v11330, %v11895
    %v11897 = vpop.f32.mrf.mxu0
    %11898 = vmatprep.mubr.f32.mxu0 0.0
    %11899 = vmatmul.mubr.f32.gmra.mxu0 %v11519
    %v11900 = vpop.f32.mrf.mxu0
    %v11901 = vadd.f32 %v11330, %v11900
    %v11902 = vpop.f32.mrf.mxu0
    %11903 = vmatprep.mubr.f32.mxu0 0.0
    %11904 = vmatmul.mubr.f32.gmra.mxu0 %v11522
    %v11905 = vpop.f32.mrf.mxu0
    %v11906 = vadd.f32 %v11330, %v11905
    %v11907 = vpop.f32.mrf.mxu0
    %11908 = vdwg.mxu0
    %vm11909 = vcmp.gt.f32.partialorder %v11591, 0.0
    %vm11910 = vcmp.gt.f32.partialorder %v11596, 0.0
    %vm11911 = vcmp.gt.f32.partialorder %v11601, 0.0
    %vm11912 = vcmp.gt.f32.partialorder %v11606, 0.0
    %vm11913 = vcmp.gt.f32.partialorder %v11611, 0.0
    %vm11914 = vcmp.gt.f32.partialorder %v11616, 0.0
    %vm11915 = vcmp.gt.f32.partialorder %v11621, 0.0
    %vm11916 = vcmp.gt.f32.partialorder %v11626, 0.0
    %vm11917 = vcmp.gt.f32.partialorder %v11631, 0.0
    %vm11918 = vcmp.gt.f32.partialorder %v11636, 0.0
    %vm11919 = vcmp.gt.f32.partialorder %v11641, 0.0
    %vm11920 = vcmp.gt.f32.partialorder %v11646, 0.0
    %vm11921 = vcmp.gt.f32.partialorder %v11651, 0.0
    %vm11922 = vcmp.gt.f32.partialorder %v11656, 0.0
    %vm11923 = vcmp.gt.f32.partialorder %v11661, 0.0
    %vm11924 = vcmp.gt.f32.partialorder %v11666, 0.0
    %vm11925 = vcmp.gt.f32.partialorder %v11671, 0.0
    %vm11926 = vcmp.gt.f32.partialorder %v11676, 0.0
    %vm11927 = vcmp.gt.f32.partialorder %v11681, 0.0
    %vm11928 = vcmp.gt.f32.partialorder %v11686, 0.0
    %vm11929 = vcmp.gt.f32.partialorder %v11691, 0.0
    %vm11930 = vcmp.gt.f32.partialorder %v11696, 0.0
    %vm11931 = vcmp.gt.f32.partialorder %v11701, 0.0
    %vm11932 = vcmp.gt.f32.partialorder %v11706, 0.0
    %vm11933 = vcmp.gt.f32.partialorder %v11711, 0.0
    %vm11934 = vcmp.gt.f32.partialorder %v11716, 0.0
    %vm11935 = vcmp.gt.f32.partialorder %v11721, 0.0
    %vm11936 = vcmp.gt.f32.partialorder %v11726, 0.0
    %vm11937 = vcmp.gt.f32.partialorder %v11731, 0.0
    %vm11938 = vcmp.gt.f32.partialorder %v11736, 0.0
    %vm11939 = vcmp.gt.f32.partialorder %v11741, 0.0
    %vm11940 = vcmp.gt.f32.partialorder %v11746, 0.0
    %vm11941 = vcmp.gt.f32.partialorder %v11751, 0.0
    %vm11942 = vcmp.gt.f32.partialorder %v11756, 0.0
    %vm11943 = vcmp.gt.f32.partialorder %v11761, 0.0
    %vm11944 = vcmp.gt.f32.partialorder %v11766, 0.0
    %vm11945 = vcmp.gt.f32.partialorder %v11771, 0.0
    %vm11946 = vcmp.gt.f32.partialorder %v11776, 0.0
    %vm11947 = vcmp.gt.f32.partialorder %v11781, 0.0
    %vm11948 = vcmp.gt.f32.partialorder %v11786, 0.0
    %vm11949 = vcmp.gt.f32.partialorder %v11791, 0.0
    %vm11950 = vcmp.gt.f32.partialorder %v11796, 0.0
    %vm11951 = vcmp.gt.f32.partialorder %v11801, 0.0
    %vm11952 = vcmp.gt.f32.partialorder %v11806, 0.0
    %vm11953 = vcmp.gt.f32.partialorder %v11811, 0.0
    %vm11954 = vcmp.gt.f32.partialorder %v11816, 0.0
    %vm11955 = vcmp.gt.f32.partialorder %v11821, 0.0
    %vm11956 = vcmp.gt.f32.partialorder %v11826, 0.0
    %vm11957 = vcmp.gt.f32.partialorder %v11831, 0.0
    %vm11958 = vcmp.gt.f32.partialorder %v11836, 0.0
    %vm11959 = vcmp.gt.f32.partialorder %v11841, 0.0
    %vm11960 = vcmp.gt.f32.partialorder %v11846, 0.0
    %vm11961 = vcmp.gt.f32.partialorder %v11851, 0.0
    %vm11962 = vcmp.gt.f32.partialorder %v11856, 0.0
    %vm11963 = vcmp.gt.f32.partialorder %v11861, 0.0
    %vm11964 = vcmp.gt.f32.partialorder %v11866, 0.0
    %vm11965 = vcmp.gt.f32.partialorder %v11871, 0.0
    %vm11966 = vcmp.gt.f32.partialorder %v11876, 0.0
    %vm11967 = vcmp.gt.f32.partialorder %v11881, 0.0
    %vm11968 = vcmp.gt.f32.partialorder %v11886, 0.0
    %vm11969 = vcmp.gt.f32.partialorder %v11891, 0.0
    %vm11970 = vcmp.gt.f32.partialorder %v11896, 0.0
    %vm11971 = vcmp.gt.f32.partialorder %v11901, 0.0
    %vm11972 = vcmp.gt.f32.partialorder %v11906, 0.0
    %v11973 = vstv %s8179
    %v11974 = vmul.f32 %v11973, %v11591
    %v11975 = vmul.f32 %v11973, %v11596
    %v11976 = vmul.f32 %v11973, %v11601
    %v11977 = vmul.f32 %v11973, %v11606
    %v11978 = vmul.f32 %v11973, %v11611
    %v11979 = vmul.f32 %v11973, %v11616
    %v11980 = vmul.f32 %v11973, %v11621
    %v11981 = vmul.f32 %v11973, %v11626
    %v11982 = vmul.f32 %v11973, %v11631
    %v11983 = vmul.f32 %v11973, %v11636
    %v11984 = vmul.f32 %v11973, %v11641
    %v11985 = vmul.f32 %v11973, %v11646
    %v11986 = vmul.f32 %v11973, %v11651
    %v11987 = vmul.f32 %v11973, %v11656
    %v11988 = vmul.f32 %v11973, %v11661
    %v11989 = vmul.f32 %v11973, %v11666
    %v11990 = vmul.f32 %v11973, %v11671
    %v11991 = vmul.f32 %v11973, %v11676
    %v11992 = vmul.f32 %v11973, %v11681
    %v11993 = vmul.f32 %v11973, %v11686
    %v11994 = vmul.f32 %v11973, %v11691
    %v11995 = vmul.f32 %v11973, %v11696
    %v11996 = vmul.f32 %v11973, %v11701
    %v11997 = vmul.f32 %v11973, %v11706
    %v11998 = vmul.f32 %v11973, %v11711
    %v11999 = vmul.f32 %v11973, %v11716
    %v12000 = vmul.f32 %v11973, %v11721
    %v12001 = vmul.f32 %v11973, %v11726
    %v12002 = vmul.f32 %v11973, %v11731
    %v12003 = vmul.f32 %v11973, %v11736
    %v12004 = vmul.f32 %v11973, %v11741
    %v12005 = vmul.f32 %v11973, %v11746
    %v12006 = vmul.f32 %v11973, %v11751
    %v12007 = vmul.f32 %v11973, %v11756
    %v12008 = vmul.f32 %v11973, %v11761
    %v12009 = vmul.f32 %v11973, %v11766
    %v12010 = vmul.f32 %v11973, %v11771
    %v12011 = vmul.f32 %v11973, %v11776
    %v12012 = vmul.f32 %v11973, %v11781
    %v12013 = vmul.f32 %v11973, %v11786
    %v12014 = vmul.f32 %v11973, %v11791
    %v12015 = vmul.f32 %v11973, %v11796
    %v12016 = vmul.f32 %v11973, %v11801
    %v12017 = vmul.f32 %v11973, %v11806
    %v12018 = vmul.f32 %v11973, %v11811
    %v12019 = vmul.f32 %v11973, %v11816
    %v12020 = vmul.f32 %v11973, %v11821
    %v12021 = vmul.f32 %v11973, %v11826
    %v12022 = vmul.f32 %v11973, %v11831
    %v12023 = vmul.f32 %v11973, %v11836
    %v12024 = vmul.f32 %v11973, %v11841
    %v12025 = vmul.f32 %v11973, %v11846
    %v12026 = vmul.f32 %v11973, %v11851
    %v12027 = vmul.f32 %v11973, %v11856
    %v12028 = vmul.f32 %v11973, %v11861
    %v12029 = vmul.f32 %v11973, %v11866
    %v12030 = vmul.f32 %v11973, %v11871
    %v12031 = vmul.f32 %v11973, %v11876
    %v12032 = vmul.f32 %v11973, %v11881
    %v12033 = vmul.f32 %v11973, %v11886
    %v12034 = vmul.f32 %v11973, %v11891
    %v12035 = vmul.f32 %v11973, %v11896
    %v12036 = vmul.f32 %v11973, %v11901
    %v12037 = vmul.f32 %v11973, %v11906
    %v12038 = vsel %vm11909, %v11591, %v11974
    %v12039 = vsel %vm11910, %v11596, %v11975
    %v12040 = vsel %vm11911, %v11601, %v11976
    %v12041 = vsel %vm11912, %v11606, %v11977
    %v12042 = vsel %vm11913, %v11611, %v11978
    %v12043 = vsel %vm11914, %v11616, %v11979
    %v12044 = vsel %vm11915, %v11621, %v11980
    %v12045 = vsel %vm11916, %v11626, %v11981
    %v12046 = vsel %vm11917, %v11631, %v11982
    %v12047 = vsel %vm11918, %v11636, %v11983
    %v12048 = vsel %vm11919, %v11641, %v11984
    %v12049 = vsel %vm11920, %v11646, %v11985
    %v12050 = vsel %vm11921, %v11651, %v11986
    %v12051 = vsel %vm11922, %v11656, %v11987
    %v12052 = vsel %vm11923, %v11661, %v11988
    %v12053 = vsel %vm11924, %v11666, %v11989
    %v12054 = vsel %vm11925, %v11671, %v11990
    %v12055 = vsel %vm11926, %v11676, %v11991
    %v12056 = vsel %vm11927, %v11681, %v11992
    %v12057 = vsel %vm11928, %v11686, %v11993
    %v12058 = vsel %vm11929, %v11691, %v11994
    %v12059 = vsel %vm11930, %v11696, %v11995
    %v12060 = vsel %vm11931, %v11701, %v11996
    %v12061 = vsel %vm11932, %v11706, %v11997
    %v12062 = vsel %vm11933, %v11711, %v11998
    %v12063 = vsel %vm11934, %v11716, %v11999
    %v12064 = vsel %vm11935, %v11721, %v12000
    %v12065 = vsel %vm11936, %v11726, %v12001
    %v12066 = vsel %vm11937, %v11731, %v12002
    %v12067 = vsel %vm11938, %v11736, %v12003
    %v12068 = vsel %vm11939, %v11741, %v12004
    %v12069 = vsel %vm11940, %v11746, %v12005
    %v12070 = vsel %vm11941, %v11751, %v12006
    %v12071 = vsel %vm11942, %v11756, %v12007
    %v12072 = vsel %vm11943, %v11761, %v12008
    %v12073 = vsel %vm11944, %v11766, %v12009
    %v12074 = vsel %vm11945, %v11771, %v12010
    %v12075 = vsel %vm11946, %v11776, %v12011
    %v12076 = vsel %vm11947, %v11781, %v12012
    %v12077 = vsel %vm11948, %v11786, %v12013
    %v12078 = vsel %vm11949, %v11791, %v12014
    %v12079 = vsel %vm11950, %v11796, %v12015
    %v12080 = vsel %vm11951, %v11801, %v12016
    %v12081 = vsel %vm11952, %v11806, %v12017
    %v12082 = vsel %vm11953, %v11811, %v12018
    %v12083 = vsel %vm11954, %v11816, %v12019
    %v12084 = vsel %vm11955, %v11821, %v12020
    %v12085 = vsel %vm11956, %v11826, %v12021
    %v12086 = vsel %vm11957, %v11831, %v12022
    %v12087 = vsel %vm11958, %v11836, %v12023
    %v12088 = vsel %vm11959, %v11841, %v12024
    %v12089 = vsel %vm11960, %v11846, %v12025
    %v12090 = vsel %vm11961, %v11851, %v12026
    %v12091 = vsel %vm11962, %v11856, %v12027
    %v12092 = vsel %vm11963, %v11861, %v12028
    %v12093 = vsel %vm11964, %v11866, %v12029
    %v12094 = vsel %vm11965, %v11871, %v12030
    %v12095 = vsel %vm11966, %v11876, %v12031
    %v12096 = vsel %vm11967, %v11881, %v12032
    %v12097 = vsel %vm11968, %v11886, %v12033
    %v12098 = vsel %vm11969, %v11891, %v12034
    %v12099 = vsel %vm11970, %v11896, %v12035
    %v12100 = vsel %vm11971, %v11901, %v12036
    %v12101 = vsel %vm11972, %v11906, %v12037
    %12102 = vst.msk [vmem:[%s8] sm:$0xff] %vm236, %v12038
    %12103 = vst.msk [vmem:[%s8 + $0x8] sm:$0xff] %vm236, %v12039
    %12104 = vst.msk [vmem:[%s8 + $0x10] sm:$0xff] %vm236, %v12040
    %12105 = vst.msk [vmem:[%s8 + $0x18] sm:$0xff] %vm236, %v12041
    %12106 = vst.msk [vmem:[%s8 + $0x20] sm:$0xff] %vm236, %v12042
    %12107 = vst.msk [vmem:[%s8 + $0x28] sm:$0xff] %vm236, %v12043
    %12108 = vst.msk [vmem:[%s8 + $0x30] sm:$0xff] %vm236, %v12044
    %12109 = vst.msk [vmem:[%s8 + $0x38] sm:$0xff] %vm236, %v12045
    %12110 = vst.msk [vmem:[%s8 + $0x40] sm:$0xff] %vm236, %v12046
    %12111 = vst.msk [vmem:[%s8 + $0x48] sm:$0xff] %vm236, %v12047
    %12112 = vst.msk [vmem:[%s8 + $0x50] sm:$0xff] %vm236, %v12048
    %12113 = vst.msk [vmem:[%s8 + $0x58] sm:$0xff] %vm236, %v12049
    %12114 = vst.msk [vmem:[%s8 + $0x60] sm:$0xff] %vm236, %v12050
    %12115 = vst.msk [vmem:[%s8 + $0x68] sm:$0xff] %vm236, %v12051
    %12116 = vst.msk [vmem:[%s8 + $0x70] sm:$0xff] %vm236, %v12052
    %12117 = vst.msk [vmem:[%s8 + $0x78] sm:$0xff] %vm236, %v12053
    %12118 = vst.msk [vmem:[%s8 + $0x80] sm:$0xff] %vm236, %v12054
    %12119 = vst.msk [vmem:[%s8 + $0x88] sm:$0xff] %vm236, %v12055
    %12120 = vst.msk [vmem:[%s8 + $0x90] sm:$0xff] %vm236, %v12056
    %12121 = vst.msk [vmem:[%s8 + $0x98] sm:$0xff] %vm236, %v12057
    %12122 = vst.msk [vmem:[%s8 + $0xa0] sm:$0xff] %vm236, %v12058
    %12123 = vst.msk [vmem:[%s8 + $0xa8] sm:$0xff] %vm236, %v12059
    %12124 = vst.msk [vmem:[%s8 + $0xb0] sm:$0xff] %vm236, %v12060
    %12125 = vst.msk [vmem:[%s8 + $0xb8] sm:$0xff] %vm236, %v12061
    %12126 = vst.msk [vmem:[%s8 + $0xc0] sm:$0xff] %vm236, %v12062
    %12127 = vst.msk [vmem:[%s8 + $0xc8] sm:$0xff] %vm236, %v12063
    %12128 = vst.msk [vmem:[%s8 + $0xd0] sm:$0xff] %vm236, %v12064
    %12129 = vst.msk [vmem:[%s8 + $0xd8] sm:$0xff] %vm236, %v12065
    %12130 = vst.msk [vmem:[%s8 + $0xe0] sm:$0xff] %vm236, %v12066
    %12131 = vst.msk [vmem:[%s8 + $0xe8] sm:$0xff] %vm236, %v12067
    %12132 = vst.msk [vmem:[%s8 + $0xf0] sm:$0xff] %vm236, %v12068
    %12133 = vst.msk [vmem:[%s8 + $0xf8] sm:$0xff] %vm236, %v12069
    %12134 = vst.msk [vmem:[%s8 + $0x100] sm:$0xff] %vm236, %v12070
    %12135 = vst.msk [vmem:[%s8 + $0x108] sm:$0xff] %vm236, %v12071
    %12136 = vst.msk [vmem:[%s8 + $0x110] sm:$0xff] %vm236, %v12072
    %12137 = vst.msk [vmem:[%s8 + $0x118] sm:$0xff] %vm236, %v12073
    %12138 = vst.msk [vmem:[%s8 + $0x120] sm:$0xff] %vm236, %v12074
    %12139 = vst.msk [vmem:[%s8 + $0x128] sm:$0xff] %vm236, %v12075
    %12140 = vst.msk [vmem:[%s8 + $0x130] sm:$0xff] %vm236, %v12076
    %12141 = vst.msk [vmem:[%s8 + $0x138] sm:$0xff] %vm236, %v12077
    %12142 = vst.msk [vmem:[%s8 + $0x140] sm:$0xff] %vm236, %v12078
    %12143 = vst.msk [vmem:[%s8 + $0x148] sm:$0xff] %vm236, %v12079
    %12144 = vst.msk [vmem:[%s8 + $0x150] sm:$0xff] %vm236, %v12080
    %12145 = vst.msk [vmem:[%s8 + $0x158] sm:$0xff] %vm236, %v12081
    %12146 = vst.msk [vmem:[%s8 + $0x160] sm:$0xff] %vm236, %v12082
    %12147 = vst.msk [vmem:[%s8 + $0x168] sm:$0xff] %vm236, %v12083
    %12148 = vst.msk [vmem:[%s8 + $0x170] sm:$0xff] %vm236, %v12084
    %12149 = vst.msk [vmem:[%s8 + $0x178] sm:$0xff] %vm236, %v12085
    %12150 = vst.msk [vmem:[%s8 + $0x180] sm:$0xff] %vm236, %v12086
    %12151 = vst.msk [vmem:[%s8 + $0x188] sm:$0xff] %vm236, %v12087
    %12152 = vst.msk [vmem:[%s8 + $0x190] sm:$0xff] %vm236, %v12088
    %12153 = vst.msk [vmem:[%s8 + $0x198] sm:$0xff] %vm236, %v12089
    %12154 = vst.msk [vmem:[%s8 + $0x1a0] sm:$0xff] %vm236, %v12090
    %12155 = vst.msk [vmem:[%s8 + $0x1a8] sm:$0xff] %vm236, %v12091
    %12156 = vst.msk [vmem:[%s8 + $0x1b0] sm:$0xff] %vm236, %v12092
    %12157 = vst.msk [vmem:[%s8 + $0x1b8] sm:$0xff] %vm236, %v12093
    %12158 = vst.msk [vmem:[%s8 + $0x1c0] sm:$0xff] %vm236, %v12094
    %12159 = vst.msk [vmem:[%s8 + $0x1c8] sm:$0xff] %vm236, %v12095
    %12160 = vst.msk [vmem:[%s8 + $0x1d0] sm:$0xff] %vm236, %v12096
    %12161 = vst.msk [vmem:[%s8 + $0x1d8] sm:$0xff] %vm236, %v12097
    %12162 = vst.msk [vmem:[%s8 + $0x1e0] sm:$0xff] %vm236, %v12098
    %12163 = vst.msk [vmem:[%s8 + $0x1e8] sm:$0xff] %vm236, %v12099
    %12164 = vst.msk [vmem:[%s8 + $0x1f0] sm:$0xff] %vm236, %v12100
    %12165 = vst.msk [vmem:[%s8 + $0x1f8] sm:$0xff] %vm236, %v12101
    // Predicated region
    $region38: #{convolution_4_forward.1} parent=1 // pred_check
      _
    $region39: #{convolution_4_forward.1} parent=1 // pred_check_branch
      %12167 = sbr.rel (0) target = $region41
    $region40: #{convolution_4_forward.1} parent=1 // pred_region
      _
    $region41: #{convolution_4_forward.1} parent=1 // pred_fallthru
      _
    // Predicated region
    $region42: #{convolution_4_forward.1} parent=1 // pred_check
      _
    $region43: #{convolution_4_forward.1} parent=1 // pred_check_branch
      %12169 = sbr.rel (0) target = $region45
    $region44: #{convolution_4_forward.1} parent=1 // pred_region
      _
    $region45: #{convolution_4_forward.1} parent=1 // pred_fallthru
      _
    %12170 = vsyncpa [#allocation7], 1

</llo_original>
